<compile_context>
chip_gen: v7x
topology: tpu7x:2x2x1
jax: 0.10.0
libtpu: 0.0.40
codegen_flags: <defaults>
</compile_context>

<pallas_src>
import functools

import jax
import jax.numpy as jnp
from jax.experimental import pallas as pl
from jax.experimental.pallas import tpu as pltpu


# ----------------------------- Pallas kernel -------------------------------- #

def _conv_fused_kernel(x_ref, w_ref, b_ref, o_ref, *,
                       tap_offsets, rows_acc, wh, wo, inv_valid, act):
    """One conv layer for a single sample, activation fused into the epilogue.

    x_ref : (1, Mflat, Ck)   bf16  spatially-flattened (phase-concat) input
    w_ref : (T, Ck, Cout)    bf16  per-tap-group weights
    b_ref : (1, Cout)        f32   bias (ignored for act == "in_lrelu")
    o_ref : (1, rows_acc, Cout)    output rows laid out on the (Ho, Wh) grid
    """
    acc = None
    for t, off in enumerate(tap_offsets):
        xt = x_ref[0, off:off + rows_acc, :]                   # (rows_acc, Ck)
        d = jnp.dot(xt, w_ref[t], preferred_element_type=jnp.float32)
        acc = d if acc is None else acc + d                    # f32 accumulator

    if act == "lrelu":
        acc = acc + b_ref[...]
        acc = jnp.where(acc >= 0.0, acc, 0.2 * acc)
    elif act == "in_lrelu":
        # bias elided: a per-channel constant is exactly removed by the mean sub.
        row_ids = jax.lax.broadcasted_iota(jnp.int32, (rows_acc, 1), 0)
        valid = (row_ids % wh) < wo                            # mask overhang cols
        m1 = jnp.sum(jnp.where(valid, acc, 0.0), axis=0, keepdims=True) * inv_valid
        m2 = jnp.sum(jnp.where(valid, acc * acc, 0.0), axis=0,
                     keepdims=True) * inv_valid
        var = m2 - m1 * m1                                     # one-pass variance
        acc = (acc - m1) * jax.lax.rsqrt(var + 1e-5)
        acc = jnp.where(acc >= 0.0, acc, 0.2 * acc)
    elif act == "sigmoid":
        acc = acc + b_ref[...]
        acc = pl.reciprocal(1.0 + jnp.exp(-acc), approx=True)  # exp/recip on EUP

    o_ref[0, :, :] = acc.astype(o_ref.dtype)


# ------------------------------- wrapper ------------------------------------ #

def conv2d_pallas(x_nhwc, w_hwio, b, *, stride, pad, act):
    """Conv2d(kernel=4) with fused activation / InstanceNorm; NHWC in, NHWC out."""
    N, H, W, Cin = x_nhwc.shape
    kh, kw, _, Cout = w_hwio.shape
    Hp, Wp = H + 2 * pad, W + 2 * pad
    Ho = (Hp - kh) // stride + 1
    Wo = (Wp - kw) // stride + 1

    xp = jnp.pad(x_nhwc, ((0, 0), (pad, pad), (pad, pad), (0, 0)))

    if stride == 2:
        assert Hp % 2 == 0 and Wp % 2 == 0
        Hh, Wh = Hp // 2, Wp // 2
        # channel-concatenated phase layout (pure transpose/reshape, ~1x bytes):
        #   xcat[n, h*Wh + w, (p*2+q)*Cin + c] = x_pad[n, 2h+p, 2w+q, c]
        xcat = xp.reshape(N, Hh, 2, Wh, 2, Cin).transpose(0, 1, 3, 2, 4, 5)
        xcat = xcat.reshape(N, Hh * Wh, 4 * Cin)
        Ck = 4 * Cin
        # tap group (a, b): W_ab[(p*2+q)*Cin + c, co] = w[2a+p, 2b+q, c, co]
        w_taps = w_hwio.reshape(2, 2, 2, 2, Cin, Cout)          # (a,p,b,q,c,co)
        w_taps = w_taps.transpose(0, 2, 1, 3, 4, 5).reshape(4, 4 * Cin, Cout)
        T = 4
        tap_offsets = (0, 1, Wh, Wh + 1)                        # a*Wh + b
    elif stride == 1:
        Hh, Wh = Hp, Wp
        xcat = xp.reshape(N, Hh * Wh, Cin)
        Ck = Cin
        w_taps = w_hwio.reshape(kh * kw, Cin, Cout)
        T = kh * kw
        tap_offsets = tuple(i * Wh + j for i in range(kh) for j in range(kw))
    else:
        raise NotImplementedError(stride)

    # Flat output rows live on the (Ho, Wh) grid; rows_acc keeps every tap slice
    # exactly in bounds (last valid pixel's last tap is the last input element).
    rows_acc = (Ho - 1) * Wh + Wo
    Mflat = Hh * Wh

    # Lane-dense output stores for the Cout=1 head: pad channels to 128.
    Cout_p = 128 if Cout < 64 else Cout
    if Cout_p != Cout:
        w_taps = jnp.pad(w_taps, ((0, 0), (0, 0), (0, Cout_p - Cout)))
        b = jnp.pad(b, (0, Cout_p - Cout))

    x_in = xcat.astype(jnp.bfloat16)
    w_in = w_taps.astype(jnp.bfloat16)
    b_in = b.reshape(1, Cout_p).astype(jnp.float32)
    out_dtype = jnp.float32 if act == "sigmoid" else jnp.bfloat16
    out_isize = jnp.dtype(out_dtype).itemsize

    # VMEM budget: double-buffered blocks + f32 accumulator + slack.
    blk_bytes = (Mflat * Ck * 2 + T * Ck * Cout_p * 2 + Cout_p * 4
                 + rows_acc * Cout_p * out_isize)
    vmem_limit = int(min(max(2 * blk_bytes + rows_acc * Cout_p * 4 + (2 << 20),
                             4 << 20), 64 << 20))

    cost = pl.CostEstimate(
        flops=2 * N * T * rows_acc * Ck * Cout_p,
        transcendentals=(N * rows_acc * Cout_p) if act == "sigmoid" else 0,
        bytes_accessed=(x_in.size * 2 + w_in.size * 2 + b_in.size * 4
                        + N * rows_acc * Cout_p * out_isize))

    out_flat = pl.pallas_call(
        functools.partial(_conv_fused_kernel, tap_offsets=tap_offsets,
                          rows_acc=rows_acc, wh=Wh, wo=Wo,
                          inv_valid=1.0 / float(Ho * Wo), act=act),
        out_shape=jax.ShapeDtypeStruct((N, rows_acc, Cout_p), out_dtype),
        grid_spec=pltpu.PrefetchScalarGridSpec(
            num_scalar_prefetch=0,
            grid=(N,),
            in_specs=[
                pl.BlockSpec((1, Mflat, Ck), lambda n: (n, 0, 0)),
                pl.BlockSpec((T, Ck, Cout_p), lambda n: (0, 0, 0)),    # resident
                pl.BlockSpec((1, Cout_p), lambda n: (0, 0)),           # resident
            ],
            out_specs=pl.BlockSpec((1, rows_acc, Cout_p), lambda n: (n, 0, 0)),
        ),
        compiler_params=pltpu.CompilerParams(
            dimension_semantics=("parallel",),
            vmem_limit_bytes=vmem_limit),
        cost_estimate=cost,
    )(x_in, w_in, b_in)

    # (N, rows_acc, Cout_p) -> (N, Ho, Wo, Cout): pad overhang rows, reshape, trim.
    out = jnp.pad(out_flat, ((0, 0), (0, Ho * Wh - rows_acc), (0, 0)))
    out = out.reshape(N, Ho, Wh, Cout_p)[:, :, :Wo, :Cout]
    return out


def init_params(key, in_channel=2, conv_dim=64):
    """Deterministic PyTorch-shaped conv params, stored as (kh, kw, Cin, Cout)."""
    layer_dims = [
        (in_channel, conv_dim),
        (conv_dim, conv_dim * 2),
        (conv_dim * 2, conv_dim * 4),
        (conv_dim * 4, 1),
    ]
    params = []
    for cin, cout in layer_dims:
        key, k_w, k_b = jax.random.split(key, 3)
        fan_in = cin * 4 * 4
        bound = float(1.0 / (fan_in ** 0.5))
        w = jax.random.uniform(k_w, (4, 4, cin, cout), jnp.float32, -bound, bound)
        b = jax.random.uniform(k_b, (cout,), jnp.float32, -bound, bound)
        params.append((w, b))
    return params


def discriminator_forward(x_nchw, y_nchw, params):
    """Matches Discriminator.forward: cat -> 4 convs (+IN/LeakyReLU) -> sigmoid."""
    x = jnp.concatenate([x_nchw, y_nchw], axis=1)       # (N, 2, H, W)
    h = jnp.transpose(x, (0, 2, 3, 1))                  # NCHW -> NHWC
    (w1, b1), (w2, b2), (w3, b3), (w4, b4) = params

    h = conv2d_pallas(h, w1, b1, stride=2, pad=1, act="lrelu")
    h = conv2d_pallas(h, w2, b2, stride=2, pad=1, act="in_lrelu")
    h = conv2d_pallas(h, w3, b3, stride=2, pad=1, act="in_lrelu")
    h = conv2d_pallas(h, w4, b4, stride=1, pad=1, act="sigmoid")

    return jnp.transpose(h, (0, 3, 1, 2)).astype(jnp.float32)   # NHWC -> NCHW


# ------------------------ pure-JAX reference (check) ------------------------ #

def _ref_forward(x_nchw, y_nchw, params):
    x = jnp.concatenate([x_nchw, y_nchw], axis=1)
    h = jnp.transpose(x, (0, 2, 3, 1))

    def conv(h, w, b, s, p):
        o = jax.lax.conv_general_dilated(
            h, w, (s, s), [(p, p), (p, p)],
            dimension_numbers=("NHWC", "HWIO", "NHWC"))
        return o + b

    def inorm_lrelu(h):
        mean = jnp.mean(h, axis=(1, 2), keepdims=True)
        var = jnp.mean(jnp.square(h - mean), axis=(1, 2), keepdims=True)
        y = (h - mean) / jnp.sqrt(var + 1e-5)
        return jnp.where(y >= 0, y, 0.2 * y)

    (w1, b1), (w2, b2), (w3, b3), (w4, b4) = params
    h = conv(h, w1, b1, 2, 1); h = jnp.where(h >= 0, h, 0.2 * h)
    h = conv(h, w2, b2, 2, 1); h = inorm_lrelu(h)
    h = conv(h, w3, b3, 2, 1); h = inorm_lrelu(h)
    h = conv(h, w4, b4, 1, 1); h = jax.nn.sigmoid(h)
    return jnp.transpose(h, (0, 3, 1, 2))


if __name__ == "__main__":
    key = jax.random.PRNGKey(0)
    kx, ky, kp = jax.random.split(key, 3)
    # in_channel=2 => x and y each have 1 channel; small spatial = 16
    x = jax.random.normal(kx, (2, 1, 16, 16), jnp.float32)
    y = jax.random.normal(ky, (2, 1, 16, 16), jnp.float32)
    params = init_params(kp)

    out = jax.jit(discriminator_forward)(x, y, params)
    out = jax.block_until_ready(out)

    ref = _ref_forward(x, y, params)
    assert out.shape == (2, 1, 1, 1), out.shape
    # bf16 matmul path vs f32 reference -> slightly relaxed tolerance
    assert jnp.allclose(out, ref, atol=2e-2), (out, ref)
    print("KERNEL_OK")
</pallas_src>

<mosaic_0001>
module attributes {stable_mosaic.version = 11 : i64} {
  func.func @_conv_fused_kernel(%arg0: i32, %arg1: memref<1x81x8xbf16, #tpu.memory_space<vmem>>, %arg2: memref<4x8x64xbf16, #tpu.memory_space<vmem>>, %arg3: memref<1x64xf32, #tpu.memory_space<vmem>>, %arg4: memref<1x71x64xbf16, #tpu.memory_space<vmem>>) attributes {dimension_semantics = [#tpu.dimension_semantics<parallel>], iteration_bounds = array<i64: 2>, scalar_prefetch = 0 : i64, scratch_operands = 0 : i64, tpu.core_type = #tpu.core_type<tc>, window_params = [{transform_indices = @transform_0, window_bounds = array<i64: 1, 81, 8>}, {pipeline_mode = #tpu.pipeline_mode<synchronous>, transform_indices = @transform_1, window_bounds = array<i64: 4, 8, 64>}, {pipeline_mode = #tpu.pipeline_mode<synchronous>, transform_indices = @transform_2, window_bounds = array<i64: 1, 64>}, {transform_indices = @transform_3, window_bounds = array<i64: 1, 71, 64>}]} {
    %c0 = arith.constant 0 : index
    %c0_0 = arith.constant 0 : index
    %c0_1 = arith.constant 0 : index
    %0 = vector.load %arg1[%c0, %c0_0, %c0_1] : memref<1x81x8xbf16, #tpu.memory_space<vmem>>, vector<1x71x8xbf16>
    %1 = vector.shape_cast %0 : vector<1x71x8xbf16> to vector<71x8xbf16>
    %c0_2 = arith.constant 0 : index
    %c0_3 = arith.constant 0 : index
    %c0_4 = arith.constant 0 : index
    %2 = vector.load %arg2[%c0_2, %c0_3, %c0_4] : memref<4x8x64xbf16, #tpu.memory_space<vmem>>, vector<1x8x64xbf16>
    %3 = vector.shape_cast %2 : vector<1x8x64xbf16> to vector<8x64xbf16>
    %cst = arith.constant dense<0.000000e+00> : vector<71x64xf32>
    %4 = tpu.matmul %1, %3, %cst {dimension_numbers = #tpu.dot_dimension_numbers<[1], [0], [0], [1], [0, 0, 1, 1], [], []>} : vector<71x8xbf16>, vector<8x64xbf16>, vector<71x64xf32> -> vector<71x64xf32>
    %c0_5 = arith.constant 0 : index
    %c1 = arith.constant 1 : index
    %c0_6 = arith.constant 0 : index
    %5 = vector.load %arg1[%c0_5, %c1, %c0_6] : memref<1x81x8xbf16, #tpu.memory_space<vmem>>, vector<1x71x8xbf16>
    %6 = vector.shape_cast %5 : vector<1x71x8xbf16> to vector<71x8xbf16>
    %c1_7 = arith.constant 1 : index
    %c0_8 = arith.constant 0 : index
    %c0_9 = arith.constant 0 : index
    %7 = vector.load %arg2[%c1_7, %c0_8, %c0_9] : memref<4x8x64xbf16, #tpu.memory_space<vmem>>, vector<1x8x64xbf16>
    %8 = vector.shape_cast %7 : vector<1x8x64xbf16> to vector<8x64xbf16>
    %cst_10 = arith.constant dense<0.000000e+00> : vector<71x64xf32>
    %9 = tpu.matmul %6, %8, %cst_10 {dimension_numbers = #tpu.dot_dimension_numbers<[1], [0], [0], [1], [0, 0, 1, 1], [], []>} : vector<71x8xbf16>, vector<8x64xbf16>, vector<71x64xf32> -> vector<71x64xf32>
    %10 = arith.addf %4, %9 : vector<71x64xf32>
    %c0_11 = arith.constant 0 : index
    %c9 = arith.constant 9 : index
    %c0_12 = arith.constant 0 : index
    %11 = vector.load %arg1[%c0_11, %c9, %c0_12] : memref<1x81x8xbf16, #tpu.memory_space<vmem>>, vector<1x71x8xbf16>
    %12 = vector.shape_cast %11 : vector<1x71x8xbf16> to vector<71x8xbf16>
    %c2 = arith.constant 2 : index
    %c0_13 = arith.constant 0 : index
    %c0_14 = arith.constant 0 : index
    %13 = vector.load %arg2[%c2, %c0_13, %c0_14] : memref<4x8x64xbf16, #tpu.memory_space<vmem>>, vector<1x8x64xbf16>
    %14 = vector.shape_cast %13 : vector<1x8x64xbf16> to vector<8x64xbf16>
    %cst_15 = arith.constant dense<0.000000e+00> : vector<71x64xf32>
    %15 = tpu.matmul %12, %14, %cst_15 {dimension_numbers = #tpu.dot_dimension_numbers<[1], [0], [0], [1], [0, 0, 1, 1], [], []>} : vector<71x8xbf16>, vector<8x64xbf16>, vector<71x64xf32> -> vector<71x64xf32>
    %16 = arith.addf %10, %15 : vector<71x64xf32>
    %c0_16 = arith.constant 0 : index
    %c10 = arith.constant 10 : index
    %c0_17 = arith.constant 0 : index
    %17 = vector.load %arg1[%c0_16, %c10, %c0_17] : memref<1x81x8xbf16, #tpu.memory_space<vmem>>, vector<1x71x8xbf16>
    %18 = vector.shape_cast %17 : vector<1x71x8xbf16> to vector<71x8xbf16>
    %c3 = arith.constant 3 : index
    %c0_18 = arith.constant 0 : index
    %c0_19 = arith.constant 0 : index
    %19 = vector.load %arg2[%c3, %c0_18, %c0_19] : memref<4x8x64xbf16, #tpu.memory_space<vmem>>, vector<1x8x64xbf16>
    %20 = vector.shape_cast %19 : vector<1x8x64xbf16> to vector<8x64xbf16>
    %cst_20 = arith.constant dense<0.000000e+00> : vector<71x64xf32>
    %21 = tpu.matmul %18, %20, %cst_20 {dimension_numbers = #tpu.dot_dimension_numbers<[1], [0], [0], [1], [0, 0, 1, 1], [], []>} : vector<71x8xbf16>, vector<8x64xbf16>, vector<71x64xf32> -> vector<71x64xf32>
    %22 = arith.addf %16, %21 : vector<71x64xf32>
    %c0_21 = arith.constant 0 : index
    %c0_22 = arith.constant 0 : index
    %23 = vector.load %arg3[%c0_21, %c0_22] : memref<1x64xf32, #tpu.memory_space<vmem>>, vector<1x64xf32>
    %24 = vector.broadcast %23 : vector<1x64xf32> to vector<71x64xf32>
    %25 = arith.addf %22, %24 : vector<71x64xf32>
    %cst_23 = arith.constant 0.000000e+00 : f32
    %26 = vector.broadcast %cst_23 : f32 to vector<71x64xf32>
    %27 = arith.cmpf oge, %25, %26 : vector<71x64xf32>
    %cst_24 = arith.constant 2.000000e-01 : f32
    %28 = vector.broadcast %cst_24 : f32 to vector<71x64xf32>
    %29 = arith.mulf %28, %25 : vector<71x64xf32>
    %30 = arith.select %27, %25, %29 : vector<71x64xi1>, vector<71x64xf32>
    %31 = arith.truncf %30 : vector<71x64xf32> to vector<71x64xbf16>
    %c0_25 = arith.constant 0 : index
    %c0_26 = arith.constant 0 : index
    %c0_27 = arith.constant 0 : index
    %32 = vector.load %arg4[%c0_25, %c0_26, %c0_27] : memref<1x71x64xbf16, #tpu.memory_space<vmem>>, vector<1x71x64xbf16>
    %33 = vector.shape_cast %32 : vector<1x71x64xbf16> to vector<71x64xbf16>
    %34 = vector.shape_cast %31 : vector<71x64xbf16> to vector<1x71x64xbf16>
    tpu.vector_store %arg4[%c0_25, %c0_26, %c0_27], %34 {strides = array<i32>} : memref<1x71x64xbf16, #tpu.memory_space<vmem>>, vector<1x71x64xbf16>,
    return
  }
  func.func @transform_0(%arg0: i32) -> (i32, i32, i32) {
    %c0_i32 = arith.constant 0 : i32
    %c0_i32_0 = arith.constant 0 : i32
    %c0_i32_1 = arith.constant 0 : i32
    return %arg0, %c0_i32, %c0_i32_0 : i32, i32, i32
  }
  func.func @transform_1(%arg0: i32) -> (i32, i32, i32) {
    %c0_i32 = arith.constant 0 : i32
    %c0_i32_0 = arith.constant 0 : i32
    %c0_i32_1 = arith.constant 0 : i32
    %c0_i32_2 = arith.constant 0 : i32
    return %c0_i32, %c0_i32_0, %c0_i32_1 : i32, i32, i32
  }
  func.func @transform_2(%arg0: i32) -> (i32, i32) {
    %c0_i32 = arith.constant 0 : i32
    %c0_i32_0 = arith.constant 0 : i32
    %c0_i32_1 = arith.constant 0 : i32
    return %c0_i32, %c0_i32_0 : i32, i32
  }
  func.func @transform_3(%arg0: i32) -> (i32, i32, i32) {
    %c0_i32 = arith.constant 0 : i32
    %c0_i32_0 = arith.constant 0 : i32
    %c0_i32_1 = arith.constant 0 : i32
    return %arg0, %c0_i32, %c0_i32_0 : i32, i32, i32
  }
}

module attributes {stable_mosaic.version = 11 : i64} {
  func.func @_conv_fused_kernel(%arg0: i32, %arg1: memref<1x25x256xbf16, #tpu.memory_space<vmem>>, %arg2: memref<4x256x128xbf16, #tpu.memory_space<vmem>>, %arg3: memref<1x128xf32, #tpu.memory_space<vmem>>, %arg4: memref<1x19x128xbf16, #tpu.memory_space<vmem>>) attributes {dimension_semantics = [#tpu.dimension_semantics<parallel>], iteration_bounds = array<i64: 2>, scalar_prefetch = 0 : i64, scratch_operands = 0 : i64, tpu.core_type = #tpu.core_type<tc>, window_params = [{transform_indices = @transform_0, window_bounds = array<i64: 1, 25, 256>}, {pipeline_mode = #tpu.pipeline_mode<synchronous>, transform_indices = @transform_1, window_bounds = array<i64: 4, 256, 128>}, {pipeline_mode = #tpu.pipeline_mode<synchronous>, transform_indices = @transform_2, window_bounds = array<i64: 1, 128>}, {transform_indices = @transform_3, window_bounds = array<i64: 1, 19, 128>}]} {
    %c0 = arith.constant 0 : index
    %c0_0 = arith.constant 0 : index
    %c0_1 = arith.constant 0 : index
    %0 = vector.load %arg1[%c0, %c0_0, %c0_1] : memref<1x25x256xbf16, #tpu.memory_space<vmem>>, vector<1x19x256xbf16>
    %1 = vector.shape_cast %0 : vector<1x19x256xbf16> to vector<19x256xbf16>
    %c0_2 = arith.constant 0 : index
    %c0_3 = arith.constant 0 : index
    %c0_4 = arith.constant 0 : index
    %2 = vector.load %arg2[%c0_2, %c0_3, %c0_4] : memref<4x256x128xbf16, #tpu.memory_space<vmem>>, vector<1x256x128xbf16>
    %3 = vector.shape_cast %2 : vector<1x256x128xbf16> to vector<256x128xbf16>
    %cst = arith.constant dense<0.000000e+00> : vector<19x128xf32>
    %4 = tpu.matmul %1, %3, %cst {dimension_numbers = #tpu.dot_dimension_numbers<[1], [0], [0], [1], [0, 0, 1, 1], [], []>} : vector<19x256xbf16>, vector<256x128xbf16>, vector<19x128xf32> -> vector<19x128xf32>
    %c0_5 = arith.constant 0 : index
    %c1 = arith.constant 1 : index
    %c0_6 = arith.constant 0 : index
    %5 = vector.load %arg1[%c0_5, %c1, %c0_6] : memref<1x25x256xbf16, #tpu.memory_space<vmem>>, vector<1x19x256xbf16>
    %6 = vector.shape_cast %5 : vector<1x19x256xbf16> to vector<19x256xbf16>
    %c1_7 = arith.constant 1 : index
    %c0_8 = arith.constant 0 : index
    %c0_9 = arith.constant 0 : index
    %7 = vector.load %arg2[%c1_7, %c0_8, %c0_9] : memref<4x256x128xbf16, #tpu.memory_space<vmem>>, vector<1x256x128xbf16>
    %8 = vector.shape_cast %7 : vector<1x256x128xbf16> to vector<256x128xbf16>
    %cst_10 = arith.constant dense<0.000000e+00> : vector<19x128xf32>
    %9 = tpu.matmul %6, %8, %cst_10 {dimension_numbers = #tpu.dot_dimension_numbers<[1], [0], [0], [1], [0, 0, 1, 1], [], []>} : vector<19x256xbf16>, vector<256x128xbf16>, vector<19x128xf32> -> vector<19x128xf32>
    %10 = arith.addf %4, %9 : vector<19x128xf32>
    %c0_11 = arith.constant 0 : index
    %c5 = arith.constant 5 : index
    %c0_12 = arith.constant 0 : index
    %11 = vector.load %arg1[%c0_11, %c5, %c0_12] : memref<1x25x256xbf16, #tpu.memory_space<vmem>>, vector<1x19x256xbf16>
    %12 = vector.shape_cast %11 : vector<1x19x256xbf16> to vector<19x256xbf16>
    %c2 = arith.constant 2 : index
    %c0_13 = arith.constant 0 : index
    %c0_14 = arith.constant 0 : index
    %13 = vector.load %arg2[%c2, %c0_13, %c0_14] : memref<4x256x128xbf16, #tpu.memory_space<vmem>>, vector<1x256x128xbf16>
    %14 = vector.shape_cast %13 : vector<1x256x128xbf16> to vector<256x128xbf16>
    %cst_15 = arith.constant dense<0.000000e+00> : vector<19x128xf32>
    %15 = tpu.matmul %12, %14, %cst_15 {dimension_numbers = #tpu.dot_dimension_numbers<[1], [0], [0], [1], [0, 0, 1, 1], [], []>} : vector<19x256xbf16>, vector<256x128xbf16>, vector<19x128xf32> -> vector<19x128xf32>
    %16 = arith.addf %10, %15 : vector<19x128xf32>
    %c0_16 = arith.constant 0 : index
    %c6 = arith.constant 6 : index
    %c0_17 = arith.constant 0 : index
    %17 = vector.load %arg1[%c0_16, %c6, %c0_17] : memref<1x25x256xbf16, #tpu.memory_space<vmem>>, vector<1x19x256xbf16>
    %18 = vector.shape_cast %17 : vector<1x19x256xbf16> to vector<19x256xbf16>
    %c3 = arith.constant 3 : index
    %c0_18 = arith.constant 0 : index
    %c0_19 = arith.constant 0 : index
    %19 = vector.load %arg2[%c3, %c0_18, %c0_19] : memref<4x256x128xbf16, #tpu.memory_space<vmem>>, vector<1x256x128xbf16>
    %20 = vector.shape_cast %19 : vector<1x256x128xbf16> to vector<256x128xbf16>
    %cst_20 = arith.constant dense<0.000000e+00> : vector<19x128xf32>
    %21 = tpu.matmul %18, %20, %cst_20 {dimension_numbers = #tpu.dot_dimension_numbers<[1], [0], [0], [1], [0, 0, 1, 1], [], []>} : vector<19x256xbf16>, vector<256x128xbf16>, vector<19x128xf32> -> vector<19x128xf32>
    %22 = arith.addf %16, %21 : vector<19x128xf32>
    %23 = tpu.iota {dimensions = array<i32: 0>} : vector<19x1xi32>
    %c5_i32 = arith.constant 5 : i32
    %c0_i32 = arith.constant 0 : i32
    %24 = arith.cmpi eq, %c5_i32, %c0_i32 : i32
    %c1_i32 = arith.constant 1 : i32
    %25 = arith.select %24, %c1_i32, %c5_i32 : i32
    %26 = vector.broadcast %25 : i32 to vector<19x1xi32>
    %27 = arith.remsi %23, %26 : vector<19x1xi32>
    %c0_i32_21 = arith.constant 0 : i32
    %28 = vector.broadcast %c0_i32_21 : i32 to vector<19x1xi32>
    %29 = arith.cmpi ne, %27, %28 : vector<19x1xi32>
    %c0_i32_22 = arith.constant 0 : i32
    %30 = vector.broadcast %c0_i32_22 : i32 to vector<19x1xi32>
    %31 = arith.cmpi slt, %27, %30 : vector<19x1xi32>
    %c0_i32_23 = arith.constant 0 : i32
    %32 = arith.cmpi slt, %25, %c0_i32_23 : i32
    %33 = vector.broadcast %32 : i1 to vector<19x1xi1>
    %34 = vector.broadcast %33 : vector<19x1xi1> to vector<19x1xi1>
    %35 = arith.xori %31, %34 : vector<19x1xi1>
    %36 = arith.andi %35, %29 : vector<19x1xi1>
    %37 = vector.broadcast %25 : i32 to vector<19x1xi32>
    %38 = arith.addi %27, %37 : vector<19x1xi32>
    %39 = arith.select %36, %38, %27 : vector<19x1xi1>, vector<19x1xi32>
    %c4_i32 = arith.constant 4 : i32
    %40 = vector.broadcast %c4_i32 : i32 to vector<19x1xi32>
    %41 = arith.cmpi slt, %39, %40 : vector<19x1xi32>
    %cst_24 = arith.constant 0.000000e+00 : f32
    %42 = vector.shape_cast %41 : vector<19x1xi1> to vector<19x1xi1>
    %43 = vector.broadcast %42 : vector<19x1xi1> to vector<19x128xi1>
    %44 = vector.broadcast %cst_24 : f32 to vector<19x128xf32>
    %45 = arith.select %43, %22, %44 : vector<19x128xi1>, vector<19x128xf32>
    %cst_25 = arith.constant dense<0.000000e+00> : vector<128xf32>
    %46 = vector.multi_reduction <add>, %45, %cst_25 [0] : vector<19x128xf32> to vector<128xf32>
    %47 = vector.shape_cast %46 : vector<128xf32> to vector<1x128xf32>
    %cst_26 = arith.constant 6.250000e-02 : f32
    %48 = vector.broadcast %cst_26 : f32 to vector<1x128xf32>
    %49 = arith.mulf %47, %48 : vector<1x128xf32>
    %50 = arith.mulf %22, %22 : vector<19x128xf32>
    %cst_27 = arith.constant 0.000000e+00 : f32
    %51 = vector.shape_cast %41 : vector<19x1xi1> to vector<19x1xi1>
    %52 = vector.broadcast %51 : vector<19x1xi1> to vector<19x128xi1>
    %53 = vector.broadcast %cst_27 : f32 to vector<19x128xf32>
    %54 = arith.select %52, %50, %53 : vector<19x128xi1>, vector<19x128xf32>
    %cst_28 = arith.constant dense<0.000000e+00> : vector<128xf32>
    %55 = vector.multi_reduction <add>, %54, %cst_28 [0] : vector<19x128xf32> to vector<128xf32>
    %56 = vector.shape_cast %55 : vector<128xf32> to vector<1x128xf32>
    %cst_29 = arith.constant 6.250000e-02 : f32
    %57 = vector.broadcast %cst_29 : f32 to vector<1x128xf32>
    %58 = arith.mulf %56, %57 : vector<1x128xf32>
    %59 = arith.mulf %49, %49 : vector<1x128xf32>
    %60 = arith.subf %58, %59 : vector<1x128xf32>
    %61 = vector.broadcast %49 : vector<1x128xf32> to vector<19x128xf32>
    %62 = arith.subf %22, %61 : vector<19x128xf32>
    %cst_30 = arith.constant 9.99999974E-6 : f32
    %63 = vector.broadcast %cst_30 : f32 to vector<1x128xf32>
    %64 = arith.addf %60, %63 : vector<1x128xf32>
    %65 = math.rsqrt %64 : vector<1x128xf32>
    %66 = vector.broadcast %65 : vector<1x128xf32> to vector<19x128xf32>
    %67 = arith.mulf %62, %66 : vector<19x128xf32>
    %cst_31 = arith.constant 0.000000e+00 : f32
    %68 = vector.broadcast %cst_31 : f32 to vector<19x128xf32>
    %69 = arith.cmpf oge, %67, %68 : vector<19x128xf32>
    %cst_32 = arith.constant 2.000000e-01 : f32
    %70 = vector.broadcast %cst_32 : f32 to vector<19x128xf32>
    %71 = arith.mulf %70, %67 : vector<19x128xf32>
    %72 = arith.select %69, %67, %71 : vector<19x128xi1>, vector<19x128xf32>
    %73 = arith.truncf %72 : vector<19x128xf32> to vector<19x128xbf16>
    %c0_33 = arith.constant 0 : index
    %c0_34 = arith.constant 0 : index
    %c0_35 = arith.constant 0 : index
    %74 = vector.load %arg4[%c0_33, %c0_34, %c0_35] : memref<1x19x128xbf16, #tpu.memory_space<vmem>>, vector<1x19x128xbf16>
    %75 = vector.shape_cast %74 : vector<1x19x128xbf16> to vector<19x128xbf16>
    %76 = vector.shape_cast %73 : vector<19x128xbf16> to vector<1x19x128xbf16>
    tpu.vector_store %arg4[%c0_33, %c0_34, %c0_35], %76 {strides = array<i32>} : memref<1x19x128xbf16, #tpu.memory_space<vmem>>, vector<1x19x128xbf16>,
    return
  }
  func.func @transform_0(%arg0: i32) -> (i32, i32, i32) {
    %c0_i32 = arith.constant 0 : i32
    %c0_i32_0 = arith.constant 0 : i32
    %c0_i32_1 = arith.constant 0 : i32
    return %arg0, %c0_i32, %c0_i32_0 : i32, i32, i32
  }
  func.func @transform_1(%arg0: i32) -> (i32, i32, i32) {
    %c0_i32 = arith.constant 0 : i32
    %c0_i32_0 = arith.constant 0 : i32
    %c0_i32_1 = arith.constant 0 : i32
    %c0_i32_2 = arith.constant 0 : i32
    return %c0_i32, %c0_i32_0, %c0_i32_1 : i32, i32, i32
  }
  func.func @transform_2(%arg0: i32) -> (i32, i32) {
    %c0_i32 = arith.constant 0 : i32
    %c0_i32_0 = arith.constant 0 : i32
    %c0_i32_1 = arith.constant 0 : i32
    return %c0_i32, %c0_i32_0 : i32, i32
  }
  func.func @transform_3(%arg0: i32) -> (i32, i32, i32) {
    %c0_i32 = arith.constant 0 : i32
    %c0_i32_0 = arith.constant 0 : i32
    %c0_i32_1 = arith.constant 0 : i32
    return %arg0, %c0_i32, %c0_i32_0 : i32, i32, i32
  }
}

module attributes {stable_mosaic.version = 11 : i64} {
  func.func @_conv_fused_kernel(%arg0: i32, %arg1: memref<1x9x512xbf16, #tpu.memory_space<vmem>>, %arg2: memref<4x512x256xbf16, #tpu.memory_space<vmem>>, %arg3: memref<1x256xf32, #tpu.memory_space<vmem>>, %arg4: memref<1x5x256xbf16, #tpu.memory_space<vmem>>) attributes {dimension_semantics = [#tpu.dimension_semantics<parallel>], iteration_bounds = array<i64: 2>, scalar_prefetch = 0 : i64, scratch_operands = 0 : i64, tpu.core_type = #tpu.core_type<tc>, window_params = [{transform_indices = @transform_0, window_bounds = array<i64: 1, 9, 512>}, {pipeline_mode = #tpu.pipeline_mode<synchronous>, transform_indices = @transform_1, window_bounds = array<i64: 4, 512, 256>}, {pipeline_mode = #tpu.pipeline_mode<synchronous>, transform_indices = @transform_2, window_bounds = array<i64: 1, 256>}, {transform_indices = @transform_3, window_bounds = array<i64: 1, 5, 256>}]} {
    %c0 = arith.constant 0 : index
    %c0_0 = arith.constant 0 : index
    %c0_1 = arith.constant 0 : index
    %0 = vector.load %arg1[%c0, %c0_0, %c0_1] : memref<1x9x512xbf16, #tpu.memory_space<vmem>>, vector<1x5x512xbf16>
    %1 = vector.shape_cast %0 : vector<1x5x512xbf16> to vector<5x512xbf16>
    %c0_2 = arith.constant 0 : index
    %c0_3 = arith.constant 0 : index
    %c0_4 = arith.constant 0 : index
    %2 = vector.load %arg2[%c0_2, %c0_3, %c0_4] : memref<4x512x256xbf16, #tpu.memory_space<vmem>>, vector<1x512x256xbf16>
    %3 = vector.shape_cast %2 : vector<1x512x256xbf16> to vector<512x256xbf16>
    %cst = arith.constant dense<0.000000e+00> : vector<5x256xf32>
    %4 = tpu.matmul %1, %3, %cst {dimension_numbers = #tpu.dot_dimension_numbers<[1], [0], [0], [1], [0, 0, 1, 1], [], []>} : vector<5x512xbf16>, vector<512x256xbf16>, vector<5x256xf32> -> vector<5x256xf32>
    %c0_5 = arith.constant 0 : index
    %c1 = arith.constant 1 : index
    %c0_6 = arith.constant 0 : index
    %5 = vector.load %arg1[%c0_5, %c1, %c0_6] : memref<1x9x512xbf16, #tpu.memory_space<vmem>>, vector<1x5x512xbf16>
    %6 = vector.shape_cast %5 : vector<1x5x512xbf16> to vector<5x512xbf16>
    %c1_7 = arith.constant 1 : index
    %c0_8 = arith.constant 0 : index
    %c0_9 = arith.constant 0 : index
    %7 = vector.load %arg2[%c1_7, %c0_8, %c0_9] : memref<4x512x256xbf16, #tpu.memory_space<vmem>>, vector<1x512x256xbf16>
    %8 = vector.shape_cast %7 : vector<1x512x256xbf16> to vector<512x256xbf16>
    %cst_10 = arith.constant dense<0.000000e+00> : vector<5x256xf32>
    %9 = tpu.matmul %6, %8, %cst_10 {dimension_numbers = #tpu.dot_dimension_numbers<[1], [0], [0], [1], [0, 0, 1, 1], [], []>} : vector<5x512xbf16>, vector<512x256xbf16>, vector<5x256xf32> -> vector<5x256xf32>
    %10 = arith.addf %4, %9 : vector<5x256xf32>
    %c0_11 = arith.constant 0 : index
    %c3 = arith.constant 3 : index
    %c0_12 = arith.constant 0 : index
    %11 = vector.load %arg1[%c0_11, %c3, %c0_12] : memref<1x9x512xbf16, #tpu.memory_space<vmem>>, vector<1x5x512xbf16>
    %12 = vector.shape_cast %11 : vector<1x5x512xbf16> to vector<5x512xbf16>
    %c2 = arith.constant 2 : index
    %c0_13 = arith.constant 0 : index
    %c0_14 = arith.constant 0 : index
    %13 = vector.load %arg2[%c2, %c0_13, %c0_14] : memref<4x512x256xbf16, #tpu.memory_space<vmem>>, vector<1x512x256xbf16>
    %14 = vector.shape_cast %13 : vector<1x512x256xbf16> to vector<512x256xbf16>
    %cst_15 = arith.constant dense<0.000000e+00> : vector<5x256xf32>
    %15 = tpu.matmul %12, %14, %cst_15 {dimension_numbers = #tpu.dot_dimension_numbers<[1], [0], [0], [1], [0, 0, 1, 1], [], []>} : vector<5x512xbf16>, vector<512x256xbf16>, vector<5x256xf32> -> vector<5x256xf32>
    %16 = arith.addf %10, %15 : vector<5x256xf32>
    %c0_16 = arith.constant 0 : index
    %c4 = arith.constant 4 : index
    %c0_17 = arith.constant 0 : index
    %17 = vector.load %arg1[%c0_16, %c4, %c0_17] : memref<1x9x512xbf16, #tpu.memory_space<vmem>>, vector<1x5x512xbf16>
    %18 = vector.shape_cast %17 : vector<1x5x512xbf16> to vector<5x512xbf16>
    %c3_18 = arith.constant 3 : index
    %c0_19 = arith.constant 0 : index
    %c0_20 = arith.constant 0 : index
    %19 = vector.load %arg2[%c3_18, %c0_19, %c0_20] : memref<4x512x256xbf16, #tpu.memory_space<vmem>>, vector<1x512x256xbf16>
    %20 = vector.shape_cast %19 : vector<1x512x256xbf16> to vector<512x256xbf16>
    %cst_21 = arith.constant dense<0.000000e+00> : vector<5x256xf32>
    %21 = tpu.matmul %18, %20, %cst_21 {dimension_numbers = #tpu.dot_dimension_numbers<[1], [0], [0], [1], [0, 0, 1, 1], [], []>} : vector<5x512xbf16>, vector<512x256xbf16>, vector<5x256xf32> -> vector<5x256xf32>
    %22 = arith.addf %16, %21 : vector<5x256xf32>
    %23 = tpu.iota {dimensions = array<i32: 0>} : vector<5x1xi32>
    %c3_i32 = arith.constant 3 : i32
    %c0_i32 = arith.constant 0 : i32
    %24 = arith.cmpi eq, %c3_i32, %c0_i32 : i32
    %c1_i32 = arith.constant 1 : i32
    %25 = arith.select %24, %c1_i32, %c3_i32 : i32
    %26 = vector.broadcast %25 : i32 to vector<5x1xi32>
    %27 = arith.remsi %23, %26 : vector<5x1xi32>
    %c0_i32_22 = arith.constant 0 : i32
    %28 = vector.broadcast %c0_i32_22 : i32 to vector<5x1xi32>
    %29 = arith.cmpi ne, %27, %28 : vector<5x1xi32>
    %c0_i32_23 = arith.constant 0 : i32
    %30 = vector.broadcast %c0_i32_23 : i32 to vector<5x1xi32>
    %31 = arith.cmpi slt, %27, %30 : vector<5x1xi32>
    %c0_i32_24 = arith.constant 0 : i32
    %32 = arith.cmpi slt, %25, %c0_i32_24 : i32
    %33 = vector.broadcast %32 : i1 to vector<5x1xi1>
    %34 = vector.broadcast %33 : vector<5x1xi1> to vector<5x1xi1>
    %35 = arith.xori %31, %34 : vector<5x1xi1>
    %36 = arith.andi %35, %29 : vector<5x1xi1>
    %37 = vector.broadcast %25 : i32 to vector<5x1xi32>
    %38 = arith.addi %27, %37 : vector<5x1xi32>
    %39 = arith.select %36, %38, %27 : vector<5x1xi1>, vector<5x1xi32>
    %c2_i32 = arith.constant 2 : i32
    %40 = vector.broadcast %c2_i32 : i32 to vector<5x1xi32>
    %41 = arith.cmpi slt, %39, %40 : vector<5x1xi32>
    %cst_25 = arith.constant 0.000000e+00 : f32
    %42 = vector.shape_cast %41 : vector<5x1xi1> to vector<5x1xi1>
    %43 = vector.broadcast %42 : vector<5x1xi1> to vector<5x256xi1>
    %44 = vector.broadcast %cst_25 : f32 to vector<5x256xf32>
    %45 = arith.select %43, %22, %44 : vector<5x256xi1>, vector<5x256xf32>
    %cst_26 = arith.constant dense<0.000000e+00> : vector<256xf32>
    %46 = vector.multi_reduction <add>, %45, %cst_26 [0] : vector<5x256xf32> to vector<256xf32>
    %47 = vector.shape_cast %46 : vector<256xf32> to vector<1x256xf32>
    %cst_27 = arith.constant 2.500000e-01 : f32
    %48 = vector.broadcast %cst_27 : f32 to vector<1x256xf32>
    %49 = arith.mulf %47, %48 : vector<1x256xf32>
    %50 = arith.mulf %22, %22 : vector<5x256xf32>
    %cst_28 = arith.constant 0.000000e+00 : f32
    %51 = vector.shape_cast %41 : vector<5x1xi1> to vector<5x1xi1>
    %52 = vector.broadcast %51 : vector<5x1xi1> to vector<5x256xi1>
    %53 = vector.broadcast %cst_28 : f32 to vector<5x256xf32>
    %54 = arith.select %52, %50, %53 : vector<5x256xi1>, vector<5x256xf32>
    %cst_29 = arith.constant dense<0.000000e+00> : vector<256xf32>
    %55 = vector.multi_reduction <add>, %54, %cst_29 [0] : vector<5x256xf32> to vector<256xf32>
    %56 = vector.shape_cast %55 : vector<256xf32> to vector<1x256xf32>
    %cst_30 = arith.constant 2.500000e-01 : f32
    %57 = vector.broadcast %cst_30 : f32 to vector<1x256xf32>
    %58 = arith.mulf %56, %57 : vector<1x256xf32>
    %59 = arith.mulf %49, %49 : vector<1x256xf32>
    %60 = arith.subf %58, %59 : vector<1x256xf32>
    %61 = vector.broadcast %49 : vector<1x256xf32> to vector<5x256xf32>
    %62 = arith.subf %22, %61 : vector<5x256xf32>
    %cst_31 = arith.constant 9.99999974E-6 : f32
    %63 = vector.broadcast %cst_31 : f32 to vector<1x256xf32>
    %64 = arith.addf %60, %63 : vector<1x256xf32>
    %65 = math.rsqrt %64 : vector<1x256xf32>
    %66 = vector.broadcast %65 : vector<1x256xf32> to vector<5x256xf32>
    %67 = arith.mulf %62, %66 : vector<5x256xf32>
    %cst_32 = arith.constant 0.000000e+00 : f32
    %68 = vector.broadcast %cst_32 : f32 to vector<5x256xf32>
    %69 = arith.cmpf oge, %67, %68 : vector<5x256xf32>
    %cst_33 = arith.constant 2.000000e-01 : f32
    %70 = vector.broadcast %cst_33 : f32 to vector<5x256xf32>
    %71 = arith.mulf %70, %67 : vector<5x256xf32>
    %72 = arith.select %69, %67, %71 : vector<5x256xi1>, vector<5x256xf32>
    %73 = arith.truncf %72 : vector<5x256xf32> to vector<5x256xbf16>
    %c0_34 = arith.constant 0 : index
    %c0_35 = arith.constant 0 : index
    %c0_36 = arith.constant 0 : index
    %74 = vector.load %arg4[%c0_34, %c0_35, %c0_36] : memref<1x5x256xbf16, #tpu.memory_space<vmem>>, vector<1x5x256xbf16>
    %75 = vector.shape_cast %74 : vector<1x5x256xbf16> to vector<5x256xbf16>
    %76 = vector.shape_cast %73 : vector<5x256xbf16> to vector<1x5x256xbf16>
    tpu.vector_store %arg4[%c0_34, %c0_35, %c0_36], %76 {strides = array<i32>} : memref<1x5x256xbf16, #tpu.memory_space<vmem>>, vector<1x5x256xbf16>,
    return
  }
  func.func @transform_0(%arg0: i32) -> (i32, i32, i32) {
    %c0_i32 = arith.constant 0 : i32
    %c0_i32_0 = arith.constant 0 : i32
    %c0_i32_1 = arith.constant 0 : i32
    return %arg0, %c0_i32, %c0_i32_0 : i32, i32, i32
  }
  func.func @transform_1(%arg0: i32) -> (i32, i32, i32) {
    %c0_i32 = arith.constant 0 : i32
    %c0_i32_0 = arith.constant 0 : i32
    %c0_i32_1 = arith.constant 0 : i32
    %c0_i32_2 = arith.constant 0 : i32
    return %c0_i32, %c0_i32_0, %c0_i32_1 : i32, i32, i32
  }
  func.func @transform_2(%arg0: i32) -> (i32, i32) {
    %c0_i32 = arith.constant 0 : i32
    %c0_i32_0 = arith.constant 0 : i32
    %c0_i32_1 = arith.constant 0 : i32
    return %c0_i32, %c0_i32_0 : i32, i32
  }
  func.func @transform_3(%arg0: i32) -> (i32, i32, i32) {
    %c0_i32 = arith.constant 0 : i32
    %c0_i32_0 = arith.constant 0 : i32
    %c0_i32_1 = arith.constant 0 : i32
    return %arg0, %c0_i32, %c0_i32_0 : i32, i32, i32
  }
}

module attributes {stable_mosaic.version = 11 : i64} {
  func.func @_conv_fused_kernel(%arg0: i32, %arg1: memref<1x16x256xbf16, #tpu.memory_space<vmem>>, %arg2: memref<16x256x128xbf16, #tpu.memory_space<vmem>>, %arg3: memref<1x128xf32, #tpu.memory_space<vmem>>, %arg4: memref<1x1x128xf32, #tpu.memory_space<vmem>>) attributes {dimension_semantics = [#tpu.dimension_semantics<parallel>], iteration_bounds = array<i64: 2>, scalar_prefetch = 0 : i64, scratch_operands = 0 : i64, tpu.core_type = #tpu.core_type<tc>, window_params = [{transform_indices = @transform_0, window_bounds = array<i64: 1, 16, 256>}, {pipeline_mode = #tpu.pipeline_mode<synchronous>, transform_indices = @transform_1, window_bounds = array<i64: 16, 256, 128>}, {pipeline_mode = #tpu.pipeline_mode<synchronous>, transform_indices = @transform_2, window_bounds = array<i64: 1, 128>}, {transform_indices = @transform_3, window_bounds = array<i64: 1, 1, 128>}]} {
    %c0 = arith.constant 0 : index
    %c0_0 = arith.constant 0 : index
    %c0_1 = arith.constant 0 : index
    %0 = vector.load %arg1[%c0, %c0_0, %c0_1] : memref<1x16x256xbf16, #tpu.memory_space<vmem>>, vector<1x1x256xbf16>
    %1 = vector.shape_cast %0 : vector<1x1x256xbf16> to vector<1x256xbf16>
    %c0_2 = arith.constant 0 : index
    %c0_3 = arith.constant 0 : index
    %c0_4 = arith.constant 0 : index
    %2 = vector.load %arg2[%c0_2, %c0_3, %c0_4] : memref<16x256x128xbf16, #tpu.memory_space<vmem>>, vector<1x256x128xbf16>
    %3 = vector.shape_cast %2 : vector<1x256x128xbf16> to vector<256x128xbf16>
    %cst = arith.constant dense<0.000000e+00> : vector<1x128xf32>
    %4 = tpu.matmul %1, %3, %cst {dimension_numbers = #tpu.dot_dimension_numbers<[1], [0], [0], [1], [0, 0, 1, 1], [], []>} : vector<1x256xbf16>, vector<256x128xbf16>, vector<1x128xf32> -> vector<1x128xf32>
    %c0_5 = arith.constant 0 : index
    %c1 = arith.constant 1 : index
    %c0_6 = arith.constant 0 : index
    %5 = vector.load %arg1[%c0_5, %c1, %c0_6] : memref<1x16x256xbf16, #tpu.memory_space<vmem>>, vector<1x1x256xbf16>
    %6 = vector.shape_cast %5 : vector<1x1x256xbf16> to vector<1x256xbf16>
    %c1_7 = arith.constant 1 : index
    %c0_8 = arith.constant 0 : index
    %c0_9 = arith.constant 0 : index
    %7 = vector.load %arg2[%c1_7, %c0_8, %c0_9] : memref<16x256x128xbf16, #tpu.memory_space<vmem>>, vector<1x256x128xbf16>
    %8 = vector.shape_cast %7 : vector<1x256x128xbf16> to vector<256x128xbf16>
    %cst_10 = arith.constant dense<0.000000e+00> : vector<1x128xf32>
    %9 = tpu.matmul %6, %8, %cst_10 {dimension_numbers = #tpu.dot_dimension_numbers<[1], [0], [0], [1], [0, 0, 1, 1], [], []>} : vector<1x256xbf16>, vector<256x128xbf16>, vector<1x128xf32> -> vector<1x128xf32>
    %10 = arith.addf %4, %9 : vector<1x128xf32>
    %c0_11 = arith.constant 0 : index
    %c2 = arith.constant 2 : index
    %c0_12 = arith.constant 0 : index
    %11 = vector.load %arg1[%c0_11, %c2, %c0_12] : memref<1x16x256xbf16, #tpu.memory_space<vmem>>, vector<1x1x256xbf16>
    %12 = vector.shape_cast %11 : vector<1x1x256xbf16> to vector<1x256xbf16>
    %c2_13 = arith.constant 2 : index
    %c0_14 = arith.constant 0 : index
    %c0_15 = arith.constant 0 : index
    %13 = vector.load %arg2[%c2_13, %c0_14, %c0_15] : memref<16x256x128xbf16, #tpu.memory_space<vmem>>, vector<1x256x128xbf16>
    %14 = vector.shape_cast %13 : vector<1x256x128xbf16> to vector<256x128xbf16>
    %cst_16 = arith.constant dense<0.000000e+00> : vector<1x128xf32>
    %15 = tpu.matmul %12, %14, %cst_16 {dimension_numbers = #tpu.dot_dimension_numbers<[1], [0], [0], [1], [0, 0, 1, 1], [], []>} : vector<1x256xbf16>, vector<256x128xbf16>, vector<1x128xf32> -> vector<1x128xf32>
    %16 = arith.addf %10, %15 : vector<1x128xf32>
    %c0_17 = arith.constant 0 : index
    %c3 = arith.constant 3 : index
    %c0_18 = arith.constant 0 : index
    %17 = vector.load %arg1[%c0_17, %c3, %c0_18] : memref<1x16x256xbf16, #tpu.memory_space<vmem>>, vector<1x1x256xbf16>
    %18 = vector.shape_cast %17 : vector<1x1x256xbf16> to vector<1x256xbf16>
    %c3_19 = arith.constant 3 : index
    %c0_20 = arith.constant 0 : index
    %c0_21 = arith.constant 0 : index
    %19 = vector.load %arg2[%c3_19, %c0_20, %c0_21] : memref<16x256x128xbf16, #tpu.memory_space<vmem>>, vector<1x256x128xbf16>
    %20 = vector.shape_cast %19 : vector<1x256x128xbf16> to vector<256x128xbf16>
    %cst_22 = arith.constant dense<0.000000e+00> : vector<1x128xf32>
    %21 = tpu.matmul %18, %20, %cst_22 {dimension_numbers = #tpu.dot_dimension_numbers<[1], [0], [0], [1], [0, 0, 1, 1], [], []>} : vector<1x256xbf16>, vector<256x128xbf16>, vector<1x128xf32> -> vector<1x128xf32>
    %22 = arith.addf %16, %21 : vector<1x128xf32>
    %c0_23 = arith.constant 0 : index
    %c4 = arith.constant 4 : index
    %c0_24 = arith.constant 0 : index
    %23 = vector.load %arg1[%c0_23, %c4, %c0_24] : memref<1x16x256xbf16, #tpu.memory_space<vmem>>, vector<1x1x256xbf16>
    %24 = vector.shape_cast %23 : vector<1x1x256xbf16> to vector<1x256xbf16>
    %c4_25 = arith.constant 4 : index
    %c0_26 = arith.constant 0 : index
    %c0_27 = arith.constant 0 : index
    %25 = vector.load %arg2[%c4_25, %c0_26, %c0_27] : memref<16x256x128xbf16, #tpu.memory_space<vmem>>, vector<1x256x128xbf16>
    %26 = vector.shape_cast %25 : vector<1x256x128xbf16> to vector<256x128xbf16>
    %cst_28 = arith.constant dense<0.000000e+00> : vector<1x128xf32>
    %27 = tpu.matmul %24, %26, %cst_28 {dimension_numbers = #tpu.dot_dimension_numbers<[1], [0], [0], [1], [0, 0, 1, 1], [], []>} : vector<1x256xbf16>, vector<256x128xbf16>, vector<1x128xf32> -> vector<1x128xf32>
    %28 = arith.addf %22, %27 : vector<1x128xf32>
    %c0_29 = arith.constant 0 : index
    %c5 = arith.constant 5 : index
    %c0_30 = arith.constant 0 : index
    %29 = vector.load %arg1[%c0_29, %c5, %c0_30] : memref<1x16x256xbf16, #tpu.memory_space<vmem>>, vector<1x1x256xbf16>
    %30 = vector.shape_cast %29 : vector<1x1x256xbf16> to vector<1x256xbf16>
    %c5_31 = arith.constant 5 : index
    %c0_32 = arith.constant 0 : index
    %c0_33 = arith.constant 0 : index
    %31 = vector.load %arg2[%c5_31, %c0_32, %c0_33] : memref<16x256x128xbf16, #tpu.memory_space<vmem>>, vector<1x256x128xbf16>
    %32 = vector.shape_cast %31 : vector<1x256x128xbf16> to vector<256x128xbf16>
    %cst_34 = arith.constant dense<0.000000e+00> : vector<1x128xf32>
    %33 = tpu.matmul %30, %32, %cst_34 {dimension_numbers = #tpu.dot_dimension_numbers<[1], [0], [0], [1], [0, 0, 1, 1], [], []>} : vector<1x256xbf16>, vector<256x128xbf16>, vector<1x128xf32> -> vector<1x128xf32>
    %34 = arith.addf %28, %33 : vector<1x128xf32>
    %c0_35 = arith.constant 0 : index
    %c6 = arith.constant 6 : index
    %c0_36 = arith.constant 0 : index
    %35 = vector.load %arg1[%c0_35, %c6, %c0_36] : memref<1x16x256xbf16, #tpu.memory_space<vmem>>, vector<1x1x256xbf16>
    %36 = vector.shape_cast %35 : vector<1x1x256xbf16> to vector<1x256xbf16>
    %c6_37 = arith.constant 6 : index
    %c0_38 = arith.constant 0 : index
    %c0_39 = arith.constant 0 : index
    %37 = vector.load %arg2[%c6_37, %c0_38, %c0_39] : memref<16x256x128xbf16, #tpu.memory_space<vmem>>, vector<1x256x128xbf16>
    %38 = vector.shape_cast %37 : vector<1x256x128xbf16> to vector<256x128xbf16>
    %cst_40 = arith.constant dense<0.000000e+00> : vector<1x128xf32>
    %39 = tpu.matmul %36, %38, %cst_40 {dimension_numbers = #tpu.dot_dimension_numbers<[1], [0], [0], [1], [0, 0, 1, 1], [], []>} : vector<1x256xbf16>, vector<256x128xbf16>, vector<1x128xf32> -> vector<1x128xf32>
    %40 = arith.addf %34, %39 : vector<1x128xf32>
    %c0_41 = arith.constant 0 : index
    %c7 = arith.constant 7 : index
    %c0_42 = arith.constant 0 : index
    %41 = vector.load %arg1[%c0_41, %c7, %c0_42] : memref<1x16x256xbf16, #tpu.memory_space<vmem>>, vector<1x1x256xbf16>
    %42 = vector.shape_cast %41 : vector<1x1x256xbf16> to vector<1x256xbf16>
    %c7_43 = arith.constant 7 : index
    %c0_44 = arith.constant 0 : index
    %c0_45 = arith.constant 0 : index
    %43 = vector.load %arg2[%c7_43, %c0_44, %c0_45] : memref<16x256x128xbf16, #tpu.memory_space<vmem>>, vector<1x256x128xbf16>
    %44 = vector.shape_cast %43 : vector<1x256x128xbf16> to vector<256x128xbf16>
    %cst_46 = arith.constant dense<0.000000e+00> : vector<1x128xf32>
    %45 = tpu.matmul %42, %44, %cst_46 {dimension_numbers = #tpu.dot_dimension_numbers<[1], [0], [0], [1], [0, 0, 1, 1], [], []>} : vector<1x256xbf16>, vector<256x128xbf16>, vector<1x128xf32> -> vector<1x128xf32>
    %46 = arith.addf %40, %45 : vector<1x128xf32>
    %c0_47 = arith.constant 0 : index
    %c8 = arith.constant 8 : index
    %c0_48 = arith.constant 0 : index
    %47 = vector.load %arg1[%c0_47, %c8, %c0_48] : memref<1x16x256xbf16, #tpu.memory_space<vmem>>, vector<1x1x256xbf16>
    %48 = vector.shape_cast %47 : vector<1x1x256xbf16> to vector<1x256xbf16>
    %c8_49 = arith.constant 8 : index
    %c0_50 = arith.constant 0 : index
    %c0_51 = arith.constant 0 : index
    %49 = vector.load %arg2[%c8_49, %c0_50, %c0_51] : memref<16x256x128xbf16, #tpu.memory_space<vmem>>, vector<1x256x128xbf16>
    %50 = vector.shape_cast %49 : vector<1x256x128xbf16> to vector<256x128xbf16>
    %cst_52 = arith.constant dense<0.000000e+00> : vector<1x128xf32>
    %51 = tpu.matmul %48, %50, %cst_52 {dimension_numbers = #tpu.dot_dimension_numbers<[1], [0], [0], [1], [0, 0, 1, 1], [], []>} : vector<1x256xbf16>, vector<256x128xbf16>, vector<1x128xf32> -> vector<1x128xf32>
    %52 = arith.addf %46, %51 : vector<1x128xf32>
    %c0_53 = arith.constant 0 : index
    %c9 = arith.constant 9 : index
    %c0_54 = arith.constant 0 : index
    %53 = vector.load %arg1[%c0_53, %c9, %c0_54] : memref<1x16x256xbf16, #tpu.memory_space<vmem>>, vector<1x1x256xbf16>
    %54 = vector.shape_cast %53 : vector<1x1x256xbf16> to vector<1x256xbf16>
    %c9_55 = arith.constant 9 : index
    %c0_56 = arith.constant 0 : index
    %c0_57 = arith.constant 0 : index
    %55 = vector.load %arg2[%c9_55, %c0_56, %c0_57] : memref<16x256x128xbf16, #tpu.memory_space<vmem>>, vector<1x256x128xbf16>
    %56 = vector.shape_cast %55 : vector<1x256x128xbf16> to vector<256x128xbf16>
    %cst_58 = arith.constant dense<0.000000e+00> : vector<1x128xf32>
    %57 = tpu.matmul %54, %56, %cst_58 {dimension_numbers = #tpu.dot_dimension_numbers<[1], [0], [0], [1], [0, 0, 1, 1], [], []>} : vector<1x256xbf16>, vector<256x128xbf16>, vector<1x128xf32> -> vector<1x128xf32>
    %58 = arith.addf %52, %57 : vector<1x128xf32>
    %c0_59 = arith.constant 0 : index
    %c10 = arith.constant 10 : index
    %c0_60 = arith.constant 0 : index
    %59 = vector.load %arg1[%c0_59, %c10, %c0_60] : memref<1x16x256xbf16, #tpu.memory_space<vmem>>, vector<1x1x256xbf16>
    %60 = vector.shape_cast %59 : vector<1x1x256xbf16> to vector<1x256xbf16>
    %c10_61 = arith.constant 10 : index
    %c0_62 = arith.constant 0 : index
    %c0_63 = arith.constant 0 : index
    %61 = vector.load %arg2[%c10_61, %c0_62, %c0_63] : memref<16x256x128xbf16, #tpu.memory_space<vmem>>, vector<1x256x128xbf16>
    %62 = vector.shape_cast %61 : vector<1x256x128xbf16> to vector<256x128xbf16>
    %cst_64 = arith.constant dense<0.000000e+00> : vector<1x128xf32>
    %63 = tpu.matmul %60, %62, %cst_64 {dimension_numbers = #tpu.dot_dimension_numbers<[1], [0], [0], [1], [0, 0, 1, 1], [], []>} : vector<1x256xbf16>, vector<256x128xbf16>, vector<1x128xf32> -> vector<1x128xf32>
    %64 = arith.addf %58, %63 : vector<1x128xf32>
    %c0_65 = arith.constant 0 : index
    %c11 = arith.constant 11 : index
    %c0_66 = arith.constant 0 : index
    %65 = vector.load %arg1[%c0_65, %c11, %c0_66] : memref<1x16x256xbf16, #tpu.memory_space<vmem>>, vector<1x1x256xbf16>
    %66 = vector.shape_cast %65 : vector<1x1x256xbf16> to vector<1x256xbf16>
    %c11_67 = arith.constant 11 : index
    %c0_68 = arith.constant 0 : index
    %c0_69 = arith.constant 0 : index
    %67 = vector.load %arg2[%c11_67, %c0_68, %c0_69] : memref<16x256x128xbf16, #tpu.memory_space<vmem>>, vector<1x256x128xbf16>
    %68 = vector.shape_cast %67 : vector<1x256x128xbf16> to vector<256x128xbf16>
    %cst_70 = arith.constant dense<0.000000e+00> : vector<1x128xf32>
    %69 = tpu.matmul %66, %68, %cst_70 {dimension_numbers = #tpu.dot_dimension_numbers<[1], [0], [0], [1], [0, 0, 1, 1], [], []>} : vector<1x256xbf16>, vector<256x128xbf16>, vector<1x128xf32> -> vector<1x128xf32>
    %70 = arith.addf %64, %69 : vector<1x128xf32>
    %c0_71 = arith.constant 0 : index
    %c12 = arith.constant 12 : index
    %c0_72 = arith.constant 0 : index
    %71 = vector.load %arg1[%c0_71, %c12, %c0_72] : memref<1x16x256xbf16, #tpu.memory_space<vmem>>, vector<1x1x256xbf16>
    %72 = vector.shape_cast %71 : vector<1x1x256xbf16> to vector<1x256xbf16>
    %c12_73 = arith.constant 12 : index
    %c0_74 = arith.constant 0 : index
    %c0_75 = arith.constant 0 : index
    %73 = vector.load %arg2[%c12_73, %c0_74, %c0_75] : memref<16x256x128xbf16, #tpu.memory_space<vmem>>, vector<1x256x128xbf16>
    %74 = vector.shape_cast %73 : vector<1x256x128xbf16> to vector<256x128xbf16>
    %cst_76 = arith.constant dense<0.000000e+00> : vector<1x128xf32>
    %75 = tpu.matmul %72, %74, %cst_76 {dimension_numbers = #tpu.dot_dimension_numbers<[1], [0], [0], [1], [0, 0, 1, 1], [], []>} : vector<1x256xbf16>, vector<256x128xbf16>, vector<1x128xf32> -> vector<1x128xf32>
    %76 = arith.addf %70, %75 : vector<1x128xf32>
    %c0_77 = arith.constant 0 : index
    %c13 = arith.constant 13 : index
    %c0_78 = arith.constant 0 : index
    %77 = vector.load %arg1[%c0_77, %c13, %c0_78] : memref<1x16x256xbf16, #tpu.memory_space<vmem>>, vector<1x1x256xbf16>
    %78 = vector.shape_cast %77 : vector<1x1x256xbf16> to vector<1x256xbf16>
    %c13_79 = arith.constant 13 : index
    %c0_80 = arith.constant 0 : index
    %c0_81 = arith.constant 0 : index
    %79 = vector.load %arg2[%c13_79, %c0_80, %c0_81] : memref<16x256x128xbf16, #tpu.memory_space<vmem>>, vector<1x256x128xbf16>
    %80 = vector.shape_cast %79 : vector<1x256x128xbf16> to vector<256x128xbf16>
    %cst_82 = arith.constant dense<0.000000e+00> : vector<1x128xf32>
    %81 = tpu.matmul %78, %80, %cst_82 {dimension_numbers = #tpu.dot_dimension_numbers<[1], [0], [0], [1], [0, 0, 1, 1], [], []>} : vector<1x256xbf16>, vector<256x128xbf16>, vector<1x128xf32> -> vector<1x128xf32>
    %82 = arith.addf %76, %81 : vector<1x128xf32>
    %c0_83 = arith.constant 0 : index
    %c14 = arith.constant 14 : index
    %c0_84 = arith.constant 0 : index
    %83 = vector.load %arg1[%c0_83, %c14, %c0_84] : memref<1x16x256xbf16, #tpu.memory_space<vmem>>, vector<1x1x256xbf16>
    %84 = vector.shape_cast %83 : vector<1x1x256xbf16> to vector<1x256xbf16>
    %c14_85 = arith.constant 14 : index
    %c0_86 = arith.constant 0 : index
    %c0_87 = arith.constant 0 : index
    %85 = vector.load %arg2[%c14_85, %c0_86, %c0_87] : memref<16x256x128xbf16, #tpu.memory_space<vmem>>, vector<1x256x128xbf16>
    %86 = vector.shape_cast %85 : vector<1x256x128xbf16> to vector<256x128xbf16>
    %cst_88 = arith.constant dense<0.000000e+00> : vector<1x128xf32>
    %87 = tpu.matmul %84, %86, %cst_88 {dimension_numbers = #tpu.dot_dimension_numbers<[1], [0], [0], [1], [0, 0, 1, 1], [], []>} : vector<1x256xbf16>, vector<256x128xbf16>, vector<1x128xf32> -> vector<1x128xf32>
    %88 = arith.addf %82, %87 : vector<1x128xf32>
    %c0_89 = arith.constant 0 : index
    %c15 = arith.constant 15 : index
    %c0_90 = arith.constant 0 : index
    %89 = vector.load %arg1[%c0_89, %c15, %c0_90] : memref<1x16x256xbf16, #tpu.memory_space<vmem>>, vector<1x1x256xbf16>
    %90 = vector.shape_cast %89 : vector<1x1x256xbf16> to vector<1x256xbf16>
    %c15_91 = arith.constant 15 : index
    %c0_92 = arith.constant 0 : index
    %c0_93 = arith.constant 0 : index
    %91 = vector.load %arg2[%c15_91, %c0_92, %c0_93] : memref<16x256x128xbf16, #tpu.memory_space<vmem>>, vector<1x256x128xbf16>
    %92 = vector.shape_cast %91 : vector<1x256x128xbf16> to vector<256x128xbf16>
    %cst_94 = arith.constant dense<0.000000e+00> : vector<1x128xf32>
    %93 = tpu.matmul %90, %92, %cst_94 {dimension_numbers = #tpu.dot_dimension_numbers<[1], [0], [0], [1], [0, 0, 1, 1], [], []>} : vector<1x256xbf16>, vector<256x128xbf16>, vector<1x128xf32> -> vector<1x128xf32>
    %94 = arith.addf %88, %93 : vector<1x128xf32>
    %c0_95 = arith.constant 0 : index
    %c0_96 = arith.constant 0 : index
    %95 = vector.load %arg3[%c0_95, %c0_96] : memref<1x128xf32, #tpu.memory_space<vmem>>, vector<1x128xf32>
    %96 = arith.addf %94, %95 : vector<1x128xf32>
    %cst_97 = arith.constant 0.000000e+00 : f32
    %97 = vector.broadcast %cst_97 : f32 to vector<1x128xf32>
    %98 = arith.subf %97, %96 : vector<1x128xf32>
    %99 = math.exp %98 : vector<1x128xf32>
    %cst_98 = arith.constant 1.000000e+00 : f32
    %100 = vector.broadcast %cst_98 : f32 to vector<1x128xf32>
    %101 = arith.addf %100, %99 : vector<1x128xf32>
    %102 = tpu.reciprocal %101 {approx = true} : vector<1x128xf32> -> vector<1x128xf32>
    %c0_99 = arith.constant 0 : index
    %c0_100 = arith.constant 0 : index
    %c0_101 = arith.constant 0 : index
    %103 = vector.load %arg4[%c0_99, %c0_100, %c0_101] : memref<1x1x128xf32, #tpu.memory_space<vmem>>, vector<1x1x128xf32>
    %104 = vector.shape_cast %103 : vector<1x1x128xf32> to vector<1x128xf32>
    %105 = vector.shape_cast %102 : vector<1x128xf32> to vector<1x1x128xf32>
    tpu.vector_store %arg4[%c0_99, %c0_100, %c0_101], %105 {strides = array<i32>} : memref<1x1x128xf32, #tpu.memory_space<vmem>>, vector<1x1x128xf32>,
    return
  }
  func.func @transform_0(%arg0: i32) -> (i32, i32, i32) {
    %c0_i32 = arith.constant 0 : i32
    %c0_i32_0 = arith.constant 0 : i32
    %c0_i32_1 = arith.constant 0 : i32
    return %arg0, %c0_i32, %c0_i32_0 : i32, i32, i32
  }
  func.func @transform_1(%arg0: i32) -> (i32, i32, i32) {
    %c0_i32 = arith.constant 0 : i32
    %c0_i32_0 = arith.constant 0 : i32
    %c0_i32_1 = arith.constant 0 : i32
    %c0_i32_2 = arith.constant 0 : i32
    return %c0_i32, %c0_i32_0, %c0_i32_1 : i32, i32, i32
  }
  func.func @transform_2(%arg0: i32) -> (i32, i32) {
    %c0_i32 = arith.constant 0 : i32
    %c0_i32_0 = arith.constant 0 : i32
    %c0_i32_1 = arith.constant 0 : i32
    return %c0_i32, %c0_i32_0 : i32, i32
  }
  func.func @transform_3(%arg0: i32) -> (i32, i32, i32) {
    %c0_i32 = arith.constant 0 : i32
    %c0_i32_0 = arith.constant 0 : i32
    %c0_i32_1 = arith.constant 0 : i32
    return %arg0, %c0_i32, %c0_i32_0 : i32, i32, i32
  }
}

</mosaic_0001>

<llo_original>
// kernel: discriminator_forward.4
$region0: #{discriminator_forward.4}
  #allocation0 [shape = 'u32[]', space=smem, size = 0x4, offset = 0x4, fixed_abs, tag = 'smem constant byte address 0x4 - core index']
  #allocation1 [shape = 'u32[144,128]{1,0:T(1,128)}', space=vmem, size = 0x12000, scoped, tag = 'internal scratch']
  %s0 = inlined_call_operand.vmem [shape: bf16[2,81,8], index: 0, kind: input, shape index: {}]
  %s1 = inlined_call_operand.vmem [shape: bf16[4,8,64], index: 1, kind: input, shape index: {}]
  %s2 = inlined_call_operand.vmem [shape: f32[1,64], index: 2, kind: input, shape index: {}]
  %s3 = inlined_call_operand.vmem [shape: bf16[2,71,64], index: 3, kind: output, shape index: {}]
  %s4 = sld [smem:[#allocation0]]
  $region45: #{discriminator_forward.4} parent=0
    _
  %s6 = ssub.s32 1, %s4
  %s7 = scalar_select 0, %s6, %s4
  loop: start=0, step=1, limit=4
  $region2: #{discriminator_forward.4} parent=0 // loop_pre_header
    _
  $region3: #{discriminator_forward.4} parent=0 // loop_header
    %s9 = sphi 0, %s13
    %p10 = scmp.ge.s32.totalorder %s9, 4
    %s19 = sphi 0, %s21
    %s22 = sphi 0, %s19
    %s23 = sphi 0, %s22
    %s39 = sphi 0, %s23
    %s43 = sphi 0, %s43
    %s45 = sphi 0, %s43
    %s46 = sphi 0, %s45
    %s60 = sphi 0, %s46
    %s64 = sphi 0, %s64
    %s66 = sphi 0, %s64
    %s67 = sphi 0, %s66
    %s81 = sphi 0, %s67
    %s87 = sphi 0, %s89
    %s90 = sphi 0, %s87
    %s91 = sphi 0, %s90
    %s107 = sphi 0, %s91
  $region4: #{discriminator_forward.4} parent=0 // loop_header_branch
    %12 = sbr.rel (%p10) target = $region8
  $region5: #{discriminator_forward.4} parent=0 // loop_body
    %s14 = ssub.s32 %s9, 1
    %s15 = ssub.s32 %s9, 2
    %s16 = sadd.s32 %s9, 1
    %s17 = ssub.s32 %s9, %s16
    %p18 = scmp.eq.s32.totalorder %s17, 0
    %s20 = sadd.s32 %s19, 1
    %s21 = scalar_select %p18, %s19, %s20
    %p24 = pneg %p18
    %p25 = scmp.eq.s32.totalorder %s9, 1
    %p26 = por %p24, %p25
    %p27 = scmp.ne.s32.totalorder %s19, %s22
    %p28 = scmp.eq.s32.totalorder %s9, 0
    %p29 = por %p27, %p28
    %p30 = scmp.ne.s32.totalorder %s19, %s22
    %p31 = scmp.eq.s32.totalorder %s14, 1
    %p32 = por %p30, %p31
    %p33 = scmp.ne.s32.totalorder %s22, %s23
    %p34 = scmp.eq.s32.totalorder %s14, 0
    %p35 = por %p33, %p34
    %p36 = scmp.ne.s32.totalorder %s22, %s23
    %p37 = scmp.eq.s32.totalorder %s15, 1
    %p38 = por %p36, %p37
    %p40 = scmp.ne.s32.totalorder %s23, %s39
    %p41 = scmp.eq.s32.totalorder %s15, 0
    %p42 = por %p40, %p41
    %s44 = sadd.s32 %s43, 1
    %p47 = scmp.eq.s32.totalorder %s9, 1
    %p48 = scmp.ne.s32.totalorder %s43, %s45
    %p49 = scmp.eq.s32.totalorder %s9, 0
    %p50 = por %p48, %p49
    %p51 = scmp.ne.s32.totalorder %s43, %s45
    %p52 = scmp.eq.s32.totalorder %s14, 1
    %p53 = por %p51, %p52
    %p54 = scmp.ne.s32.totalorder %s45, %s46
    %p55 = scmp.eq.s32.totalorder %s14, 0
    %p56 = por %p54, %p55
    %p57 = scmp.ne.s32.totalorder %s45, %s46
    %p58 = scmp.eq.s32.totalorder %s15, 1
    %p59 = por %p57, %p58
    %p61 = scmp.ne.s32.totalorder %s46, %s60
    %p62 = scmp.eq.s32.totalorder %s15, 0
    %p63 = por %p61, %p62
    %s65 = sadd.s32 %s64, 1
    %p68 = scmp.eq.s32.totalorder %s9, 1
    %p69 = scmp.ne.s32.totalorder %s64, %s66
    %p70 = scmp.eq.s32.totalorder %s9, 0
    %p71 = por %p69, %p70
    %p72 = scmp.ne.s32.totalorder %s64, %s66
    %p73 = scmp.eq.s32.totalorder %s14, 1
    %p74 = por %p72, %p73
    %p75 = scmp.ne.s32.totalorder %s66, %s67
    %p76 = scmp.eq.s32.totalorder %s14, 0
    %p77 = por %p75, %p76
    %p78 = scmp.ne.s32.totalorder %s66, %s67
    %p79 = scmp.eq.s32.totalorder %s15, 1
    %p80 = por %p78, %p79
    %p82 = scmp.ne.s32.totalorder %s67, %s81
    %p83 = scmp.eq.s32.totalorder %s15, 0
    %p84 = por %p82, %p83
    %s85 = ssub.s32 %s9, %s16
    %p86 = scmp.eq.s32.totalorder %s85, 0
    %s88 = sadd.s32 %s87, 1
    %s89 = scalar_select %p86, %s87, %s88
    %p92 = pneg %p86
    %p93 = scmp.eq.s32.totalorder %s9, 1
    %p94 = por %p92, %p93
    %p95 = scmp.ne.s32.totalorder %s87, %s90
    %p96 = scmp.eq.s32.totalorder %s9, 0
    %p97 = por %p95, %p96
    %p98 = scmp.ne.s32.totalorder %s87, %s90
    %p99 = scmp.eq.s32.totalorder %s14, 1
    %p100 = por %p98, %p99
    %p101 = scmp.ne.s32.totalorder %s90, %s91
    %p102 = scmp.eq.s32.totalorder %s14, 0
    %p103 = por %p101, %p102
    %p104 = scmp.ne.s32.totalorder %s90, %s91
    %p105 = scmp.eq.s32.totalorder %s15, 1
    %p106 = por %p104, %p105
    %p108 = scmp.ne.s32.totalorder %s91, %s107
    %p109 = scmp.eq.s32.totalorder %s15, 0
    %p110 = por %p108, %p109
    %p111 = scmp.le.s32.totalorder 1, %s9
    %p112 = scmp.lt.s32.totalorder %s9, 3
    %p113 = pnand %p111, %p112
    %p114 = pneg %p113
    // Predicated region
    $region9: #{discriminator_forward.4} parent=5 // pred_check
      _
    $region10: #{discriminator_forward.4} parent=5 // pred_check_branch
      %116 = sbr.rel (%p113) target = $region12
    $region11: #{discriminator_forward.4} parent=5 // pred_region
      %s117 = ssub.s32 %s9, 1
      // Predicated region
      $region13: #{discriminator_forward.4} parent=11 // pred_check
        %p118 = pneg %p56
      $region14: #{discriminator_forward.4} parent=11 // pred_check_branch
        %120 = sbr.rel (%p118) target = $region16
      $region15: #{discriminator_forward.4} parent=11 // pred_region
        _
      $region16: #{discriminator_forward.4} parent=11 // pred_fallthru
        _
      // Predicated region
      $region17: #{discriminator_forward.4} parent=11 // pred_check
        %p121 = pneg %p77
      $region18: #{discriminator_forward.4} parent=11 // pred_check_branch
        %123 = sbr.rel (%p121) target = $region20
      $region19: #{discriminator_forward.4} parent=11 // pred_region
        _
      $region20: #{discriminator_forward.4} parent=11 // pred_fallthru
        _
    $region12: #{discriminator_forward.4} parent=5 // pred_fallthru
      _
    %p124 = scmp.lt.s32.totalorder %s9, 2
    // Predicated region
    $region21: #{discriminator_forward.4} parent=5 // pred_check
      %p125 = pneg %p124
    $region22: #{discriminator_forward.4} parent=5 // pred_check_branch
      %127 = sbr.rel (%p125) target = $region24
    $region23: #{discriminator_forward.4} parent=5 // pred_region
      // Predicated region
      $region25: #{discriminator_forward.4} parent=23 // pred_check
        %p128 = pneg %p29
      $region26: #{discriminator_forward.4} parent=23 // pred_check_branch
        %130 = sbr.rel (%p128) target = $region28
      $region27: #{discriminator_forward.4} parent=23 // pred_region
        %p131 = scmp.lt.s32.totalorder %s9, 1
        %s132 = scalar_select %p131, %s9, 1
        %s133 = smul.addr %s132, 11
        %s134 = smul.addr %s133, 4
        %s135 = scalar_lea.vmem %s0, %s134
      $region28: #{discriminator_forward.4} parent=23 // pred_fallthru
        _
    $region24: #{discriminator_forward.4} parent=5 // pred_fallthru
      _
    %p136 = scmp.le.s32.totalorder 1, %s9
    %p137 = scmp.lt.s32.totalorder %s9, 3
    %p138 = pnand %p136, %p137
    %p139 = pneg %p138
    // Predicated region
    $region29: #{discriminator_forward.4} parent=5 // pred_check
      _
    $region30: #{discriminator_forward.4} parent=5 // pred_check_branch
      %141 = sbr.rel (%p138) target = $region32
    $region31: #{discriminator_forward.4} parent=5 // pred_region
      %s142 = ssub.s32 %s9, 1
      %p143 = scmp.lt.s32.totalorder %s14, 1
      %s144 = scalar_select %p143, %s14, 1
      %s145 = smul.addr %s144, 11
      %s146 = smul.addr %s145, 4
      %s147 = scalar_lea.vmem %s0, %s146
      %p148 = pneg %p35
      %p149 = pneg %p32
      %p150 = pneg %p56
      %p151 = pneg %p53
      %p152 = pneg %p77
      %p153 = pneg %p74
      %p154 = pneg %p103
      %p155 = pneg %p100
      %p156 = scmp.lt.s32.totalorder %s14, 1
      %s157 = scalar_select %p156, %s14, 1
      %s158 = smul.addr %s157, 9
      %s159 = smul.addr %s158, 4
      %s160 = scalar_lea.vmem %s3, %s159
      %p161 = scmp.lt.s32.totalorder %s14, 1
      %s162 = scalar_select %p161, %s14, 1
      %s163 = smul.addr %s162, 11
      %s164 = smul.addr %s163, 4
      %s165 = scalar_lea.vmem %s0, %s164
      %p166 = scmp.lt.s32.totalorder %s14, 1
      %s167 = scalar_select %p166, %s14, 1
      %s168 = smul.addr %s167, 9
      %s169 = smul.addr %s168, 4
      %s170 = scalar_lea.vmem %s3, %s169
      %v172 = vld [vmem:[%s165] sm:$0xf]
      %v173 = vld [vmem:[%s165 + $0x4] sm:$0xf]
      %v174 = vld [vmem:[%s165 + $0x8] sm:$0xf]
      %v175 = vld [vmem:[%s165 + $0xc] sm:$0xf]
      %v176 = vld [vmem:[%s165 + $0x10] sm:$0xf]
      %v177 = vld [vmem:[%s165 + $0x14] sm:$0xf]
      %v178 = vld [vmem:[%s165 + $0x18] sm:$0xf]
      %v179 = vld [vmem:[%s165 + $0x1c] sm:$0xf]
      %v180 = vld [vmem:[%s165 + $0x20] sm:$0xf]
      %v181 = vld [vmem:[%s1] sm:$0xf]
      %s182 = scalar_lea.vmem %s1, 4
      %v183 = vld [vmem:[%s182] sm:$0xf]
      %v193 = vunpack.c.l.b16 %v172
      %v194 = vunpack.c.l.b16 %v173
      %v195 = vunpack.c.l.b16 %v174
      %v196 = vunpack.c.l.b16 %v175
      %v197 = vunpack.c.l.b16 %v176
      %v198 = vunpack.c.l.b16 %v177
      %v199 = vunpack.c.l.b16 %v178
      %v200 = vunpack.c.l.b16 %v179
      %v201 = vunpack.c.l.b16 %v180
      %v202 = vpack.c.b16 %v194, %v193
      %v203 = vpack.c.b16 %v196, %v195
      %v204 = vpack.c.b16 %v198, %v197
      %v205 = vpack.c.b16 %v200, %v199
      %v206 = vpack.c.b16 %v201, %v201
      %vm207 = vsmask.f32 7424
      %v209 = vshrl.u32 %v202, 16
      %v211 = vshll.u32 %v202, 16
      %v213 = vrot.slane %v211, 1
      %v214 = vor.u32 %v209, %v213
      %v216 = vshll.u32 %v203, 16
      %v218 = vrot.slane %v216, 1
      %v219 = vsel %vm207, %v214, %v218
      %v220 = vshrl.u32 %v203, 16
      %v222 = vor.u32 %v220, %v218
      %v224 = vshll.u32 %v204, 16
      %v226 = vrot.slane %v224, 1
      %v227 = vsel %vm207, %v222, %v226
      %v228 = vshrl.u32 %v204, 16
      %v230 = vor.u32 %v228, %v226
      %v232 = vshll.u32 %v205, 16
      %v234 = vrot.slane %v232, 1
      %v235 = vsel %vm207, %v230, %v234
      %v236 = vshrl.u32 %v205, 16
      %v238 = vor.u32 %v236, %v234
      %v240 = vshll.u32 %v206, 16
      %v242 = vrot.slane %v240, 1
      %v243 = vsel %vm207, %v238, %v242
      %v244 = vshrl.u32 %v206, 16
      %v246 = vor.u32 %v244, %v242
      %vm247 = vcmask 64512
      %v249 = vsel %vm247, %v219, 0
      %v252 = vsel %vm247, %v227, 0
      %v255 = vsel %vm247, %v235, 0
      %v258 = vsel %vm247, %v243, 0
      %v261 = vsel %vm247, %v246, 0
      %vm263 = vcmask 1043456
      %v265 = vsel %vm263, %v183, 0
      %267 = vmatprep.subr.bf16.mxu0 0
      %268 = vmatpush1.bf16.msra.mxu0 %v265
      %269 = vmatprep.subr.bf16.mxu0 0
      %270 = vmatpush1.bf16.msra.mxu0 0
      %271 = vmatprep.subr.bf16.mxu0 0
      %272 = vmatpush1.bf16.msra.mxu0 0
      %273 = vmatprep.subr.bf16.mxu0 0
      %274 = vmatpush1.bf16.msra.mxu0 0
      %275 = vmatprep.subr.bf16.mxu0 0
      %276 = vmatpush1.bf16.msra.mxu0 0
      %277 = vmatprep.subr.bf16.mxu0 0
      %278 = vmatpush1.bf16.msra.mxu0 0
      %279 = vmatprep.subr.bf16.mxu0 0
      %280 = vmatpush1.bf16.msra.mxu0 0
      %281 = vmatprep.subr.bf16.mxu0 0
      %282 = vmatpush1.bf16.msra.mxu0 0
      %283 = vmatprep.subr.bf16.mxu0 0
      %284 = vmatpush1.bf16.msra.mxu0 0
      %285 = vmatprep.subr.bf16.mxu0 0
      %286 = vmatpush1.bf16.msra.mxu0 0
      %287 = vmatprep.subr.bf16.mxu0 0
      %288 = vmatpush1.bf16.msra.mxu0 0
      %289 = vmatprep.subr.bf16.mxu0 0
      %290 = vmatpush1.bf16.msra.mxu0 0
      %291 = vmatprep.subr.bf16.mxu0 0
      %292 = vmatpush1.bf16.msra.mxu0 0
      %293 = vmatprep.subr.bf16.mxu0 0
      %294 = vmatpush1.bf16.msra.mxu0 0
      %295 = vmatprep.subr.bf16.mxu0 0
      %296 = vmatpush1.bf16.msra.mxu0 0
      %297 = vmatprep.subr.bf16.mxu0 0
      %298 = vmatpush1.bf16.msra.mxu0 0
      %299 = vmatprep.mubr.bf16.mxu0 0
      %300 = vmatmul.mubr.bf16.gmra.mrb[0].mxu0 %v249
      %v301 = vpop.f32.mrb[0].mxu0
      %v302 = vadd.f32 0.0, %v301
      %v303 = vpop.f32.mrb[0].mxu0
      %v304 = vpop.f32.mrb[0].mxu0
      %v305 = vadd.f32 0.0, %v304
      %v306 = vpop.f32.mrb[0].mxu0
      %307 = vmatprep.mubr.bf16.mxu0 0
      %308 = vmatmul.mubr.bf16.gmra.mrb[0].mxu0 %v252
      %v309 = vpop.f32.mrb[0].mxu0
      %v310 = vadd.f32 0.0, %v309
      %v311 = vpop.f32.mrb[0].mxu0
      %v312 = vpop.f32.mrb[0].mxu0
      %v313 = vadd.f32 0.0, %v312
      %v314 = vpop.f32.mrb[0].mxu0
      %315 = vmatprep.mubr.bf16.mxu0 0
      %316 = vmatmul.mubr.bf16.gmra.mrb[0].mxu0 %v255
      %v317 = vpop.f32.mrb[0].mxu0
      %v318 = vadd.f32 0.0, %v317
      %v319 = vpop.f32.mrb[0].mxu0
      %v320 = vpop.f32.mrb[0].mxu0
      %v321 = vadd.f32 0.0, %v320
      %v322 = vpop.f32.mrb[0].mxu0
      %323 = vmatprep.mubr.bf16.mxu0 0
      %324 = vmatmul.mubr.bf16.gmra.mrb[0].mxu0 %v258
      %v325 = vpop.f32.mrb[0].mxu0
      %v326 = vadd.f32 0.0, %v325
      %v327 = vpop.f32.mrb[0].mxu0
      %v328 = vpop.f32.mrb[0].mxu0
      %v329 = vadd.f32 0.0, %v328
      %v330 = vpop.f32.mrb[0].mxu0
      %331 = vmatprep.mubr.bf16.mxu0 0
      %332 = vmatmul.mubr.bf16.gmra.mrb[0].mxu0 %v261
      %v333 = vpop.f32.mrb[0].mxu0
      %v334 = vadd.f32 0.0, %v333
      %v335 = vpop.f32.mrb[0].mxu0
      %v336 = vpop.f32.mrb[0].mxu0
      %v337 = vpop.f32.mrb[0].mxu0
      %338 = vdwg.mxu0
      %v339 = vsel %vm247, %v202, 0
      %v341 = vsel %vm247, %v203, 0
      %v343 = vsel %vm247, %v204, 0
      %v345 = vsel %vm247, %v205, 0
      %v347 = vsel %vm247, %v206, 0
      %v350 = vsel %vm263, %v181, 0
      %352 = vmatprep.subr.bf16.mxu0 0
      %353 = vmatpush1.bf16.msra.mxu0 %v350
      %354 = vmatprep.subr.bf16.mxu0 0
      %355 = vmatpush1.bf16.msra.mxu0 0
      %356 = vmatprep.subr.bf16.mxu0 0
      %357 = vmatpush1.bf16.msra.mxu0 0
      %358 = vmatprep.subr.bf16.mxu0 0
      %359 = vmatpush1.bf16.msra.mxu0 0
      %360 = vmatprep.subr.bf16.mxu0 0
      %361 = vmatpush1.bf16.msra.mxu0 0
      %362 = vmatprep.subr.bf16.mxu0 0
      %363 = vmatpush1.bf16.msra.mxu0 0
      %364 = vmatprep.subr.bf16.mxu0 0
      %365 = vmatpush1.bf16.msra.mxu0 0
      %366 = vmatprep.subr.bf16.mxu0 0
      %367 = vmatpush1.bf16.msra.mxu0 0
      %368 = vmatprep.subr.bf16.mxu0 0
      %369 = vmatpush1.bf16.msra.mxu0 0
      %370 = vmatprep.subr.bf16.mxu0 0
      %371 = vmatpush1.bf16.msra.mxu0 0
      %372 = vmatprep.subr.bf16.mxu0 0
      %373 = vmatpush1.bf16.msra.mxu0 0
      %374 = vmatprep.subr.bf16.mxu0 0
      %375 = vmatpush1.bf16.msra.mxu0 0
      %376 = vmatprep.subr.bf16.mxu0 0
      %377 = vmatpush1.bf16.msra.mxu0 0
      %378 = vmatprep.subr.bf16.mxu0 0
      %379 = vmatpush1.bf16.msra.mxu0 0
      %380 = vmatprep.subr.bf16.mxu0 0
      %381 = vmatpush1.bf16.msra.mxu0 0
      %382 = vmatprep.subr.bf16.mxu0 0
      %383 = vmatpush1.bf16.msra.mxu0 0
      %384 = vmatprep.mubr.bf16.mxu0 0
      %385 = vmatmul.mubr.bf16.gmra.mrb[0].mxu0 %v339
      %v386 = vpop.f32.mrb[0].mxu0
      %v387 = vadd.f32 %v302, %v386
      %v388 = vpop.f32.mrb[0].mxu0
      %v389 = vpop.f32.mrb[0].mxu0
      %v390 = vadd.f32 %v305, %v389
      %v391 = vpop.f32.mrb[0].mxu0
      %392 = vmatprep.mubr.bf16.mxu0 0
      %393 = vmatmul.mubr.bf16.gmra.mrb[0].mxu0 %v341
      %v394 = vpop.f32.mrb[0].mxu0
      %v395 = vadd.f32 %v310, %v394
      %v396 = vpop.f32.mrb[0].mxu0
      %v397 = vpop.f32.mrb[0].mxu0
      %v398 = vadd.f32 %v313, %v397
      %v399 = vpop.f32.mrb[0].mxu0
      %400 = vmatprep.mubr.bf16.mxu0 0
      %401 = vmatmul.mubr.bf16.gmra.mrb[0].mxu0 %v343
      %v402 = vpop.f32.mrb[0].mxu0
      %v403 = vadd.f32 %v318, %v402
      %v404 = vpop.f32.mrb[0].mxu0
      %v405 = vpop.f32.mrb[0].mxu0
      %v406 = vadd.f32 %v321, %v405
      %v407 = vpop.f32.mrb[0].mxu0
      %408 = vmatprep.mubr.bf16.mxu0 0
      %409 = vmatmul.mubr.bf16.gmra.mrb[0].mxu0 %v345
      %v410 = vpop.f32.mrb[0].mxu0
      %v411 = vadd.f32 %v326, %v410
      %v412 = vpop.f32.mrb[0].mxu0
      %v413 = vpop.f32.mrb[0].mxu0
      %v414 = vadd.f32 %v329, %v413
      %v415 = vpop.f32.mrb[0].mxu0
      %416 = vmatprep.mubr.bf16.mxu0 0
      %417 = vmatmul.mubr.bf16.gmra.mrb[0].mxu0 %v347
      %v418 = vpop.f32.mrb[0].mxu0
      %v419 = vadd.f32 %v334, %v418
      %v420 = vpop.f32.mrb[0].mxu0
      %v421 = vpop.f32.mrb[0].mxu0
      %v422 = vpop.f32.mrb[0].mxu0
      %423 = vdwg.mxu0
      %v424 = vld [vmem:[%s165 + $0x4] sm:$0xf]
      %v425 = vld [vmem:[%s165 + $0x8] sm:$0xf]
      %v426 = vld [vmem:[%s165 + $0xc] sm:$0xf]
      %v427 = vld [vmem:[%s165 + $0x10] sm:$0xf]
      %v428 = vld [vmem:[%s165 + $0x14] sm:$0xf]
      %v429 = vld [vmem:[%s165 + $0x18] sm:$0xf]
      %v430 = vld [vmem:[%s165 + $0x1c] sm:$0xf]
      %v431 = vld [vmem:[%s165 + $0x20] sm:$0xf]
      %v432 = vld [vmem:[%s165 + $0x24] sm:$0xf]
      %s433 = scalar_lea.vmem %s1, 8
      %v434 = vld [vmem:[%s433] sm:$0xf]
      %v444 = vunpack.c.l.b16 %v424
      %v445 = vunpack.c.l.b16 %v425
      %v446 = vunpack.c.l.b16 %v426
      %v447 = vunpack.c.l.b16 %v427
      %v448 = vunpack.c.l.b16 %v428
      %v449 = vunpack.c.l.b16 %v429
      %v450 = vunpack.c.l.b16 %v430
      %v451 = vunpack.c.l.b16 %v431
      %v452 = vunpack.c.l.b16 %v432
      %v453 = vpack.c.b16 %v445, %v444
      %v454 = vpack.c.b16 %v447, %v446
      %v455 = vpack.c.b16 %v449, %v448
      %v456 = vpack.c.b16 %v451, %v450
      %v457 = vpack.c.b16 %v452, %v452
      %v459 = vshrl.u32 %v453, 16
      %v461 = vshll.u32 %v453, 16
      %v463 = vrot.slane %v461, 1
      %v464 = vor.u32 %v459, %v463
      %v466 = vshll.u32 %v454, 16
      %v468 = vrot.slane %v466, 1
      %v469 = vsel %vm207, %v464, %v468
      %v470 = vshrl.u32 %v454, 16
      %v472 = vor.u32 %v470, %v468
      %v474 = vshll.u32 %v455, 16
      %v476 = vrot.slane %v474, 1
      %v477 = vsel %vm207, %v472, %v476
      %v478 = vshrl.u32 %v455, 16
      %v480 = vor.u32 %v478, %v476
      %v482 = vshll.u32 %v456, 16
      %v484 = vrot.slane %v482, 1
      %v485 = vsel %vm207, %v480, %v484
      %v486 = vshrl.u32 %v456, 16
      %v488 = vor.u32 %v486, %v484
      %v490 = vshll.u32 %v457, 16
      %v492 = vrot.slane %v490, 1
      %v493 = vsel %vm207, %v488, %v492
      %v494 = vshrl.u32 %v457, 16
      %v496 = vor.u32 %v494, %v492
      %v498 = vsel %vm247, %v469, 0
      %v501 = vsel %vm247, %v477, 0
      %v504 = vsel %vm247, %v485, 0
      %v507 = vsel %vm247, %v493, 0
      %v510 = vsel %vm247, %v496, 0
      %v513 = vsel %vm263, %v434, 0
      %515 = vmatprep.subr.bf16.mxu0 0
      %516 = vmatpush1.bf16.msra.mxu0 %v513
      %517 = vmatprep.subr.bf16.mxu0 0
      %518 = vmatpush1.bf16.msra.mxu0 0
      %519 = vmatprep.subr.bf16.mxu0 0
      %520 = vmatpush1.bf16.msra.mxu0 0
      %521 = vmatprep.subr.bf16.mxu0 0
      %522 = vmatpush1.bf16.msra.mxu0 0
      %523 = vmatprep.subr.bf16.mxu0 0
      %524 = vmatpush1.bf16.msra.mxu0 0
      %525 = vmatprep.subr.bf16.mxu0 0
      %526 = vmatpush1.bf16.msra.mxu0 0
      %527 = vmatprep.subr.bf16.mxu0 0
      %528 = vmatpush1.bf16.msra.mxu0 0
      %529 = vmatprep.subr.bf16.mxu0 0
      %530 = vmatpush1.bf16.msra.mxu0 0
      %531 = vmatprep.subr.bf16.mxu0 0
      %532 = vmatpush1.bf16.msra.mxu0 0
      %533 = vmatprep.subr.bf16.mxu0 0
      %534 = vmatpush1.bf16.msra.mxu0 0
      %535 = vmatprep.subr.bf16.mxu0 0
      %536 = vmatpush1.bf16.msra.mxu0 0
      %537 = vmatprep.subr.bf16.mxu0 0
      %538 = vmatpush1.bf16.msra.mxu0 0
      %539 = vmatprep.subr.bf16.mxu0 0
      %540 = vmatpush1.bf16.msra.mxu0 0
      %541 = vmatprep.subr.bf16.mxu0 0
      %542 = vmatpush1.bf16.msra.mxu0 0
      %543 = vmatprep.subr.bf16.mxu0 0
      %544 = vmatpush1.bf16.msra.mxu0 0
      %545 = vmatprep.subr.bf16.mxu0 0
      %546 = vmatpush1.bf16.msra.mxu0 0
      %547 = vmatprep.mubr.bf16.mxu0 0
      %548 = vmatmul.mubr.bf16.gmra.mrb[0].mxu0 %v498
      %v549 = vpop.f32.mrb[0].mxu0
      %v550 = vadd.f32 0.0, %v549
      %v551 = vpop.f32.mrb[0].mxu0
      %v552 = vpop.f32.mrb[0].mxu0
      %v553 = vadd.f32 0.0, %v552
      %v554 = vpop.f32.mrb[0].mxu0
      %555 = vmatprep.mubr.bf16.mxu0 0
      %556 = vmatmul.mubr.bf16.gmra.mrb[0].mxu0 %v501
      %v557 = vpop.f32.mrb[0].mxu0
      %v558 = vadd.f32 0.0, %v557
      %v559 = vpop.f32.mrb[0].mxu0
      %v560 = vpop.f32.mrb[0].mxu0
      %v561 = vadd.f32 0.0, %v560
      %v562 = vpop.f32.mrb[0].mxu0
      %563 = vmatprep.mubr.bf16.mxu0 0
      %564 = vmatmul.mubr.bf16.gmra.mrb[0].mxu0 %v504
      %v565 = vpop.f32.mrb[0].mxu0
      %v566 = vadd.f32 0.0, %v565
      %v567 = vpop.f32.mrb[0].mxu0
      %v568 = vpop.f32.mrb[0].mxu0
      %v569 = vadd.f32 0.0, %v568
      %v570 = vpop.f32.mrb[0].mxu0
      %571 = vmatprep.mubr.bf16.mxu0 0
      %572 = vmatmul.mubr.bf16.gmra.mrb[0].mxu0 %v507
      %v573 = vpop.f32.mrb[0].mxu0
      %v574 = vadd.f32 0.0, %v573
      %v575 = vpop.f32.mrb[0].mxu0
      %v576 = vpop.f32.mrb[0].mxu0
      %v577 = vadd.f32 0.0, %v576
      %v578 = vpop.f32.mrb[0].mxu0
      %579 = vmatprep.mubr.bf16.mxu0 0
      %580 = vmatmul.mubr.bf16.gmra.mrb[0].mxu0 %v510
      %v581 = vpop.f32.mrb[0].mxu0
      %v582 = vadd.f32 0.0, %v581
      %v583 = vpop.f32.mrb[0].mxu0
      %v584 = vpop.f32.mrb[0].mxu0
      %v585 = vpop.f32.mrb[0].mxu0
      %586 = vdwg.mxu0
      %v587 = vadd.f32 %v387, %v550
      %v588 = vadd.f32 %v390, %v553
      %v589 = vadd.f32 %v395, %v558
      %v590 = vadd.f32 %v398, %v561
      %v591 = vadd.f32 %v403, %v566
      %v592 = vadd.f32 %v406, %v569
      %v593 = vadd.f32 %v411, %v574
      %v594 = vadd.f32 %v414, %v577
      %v595 = vadd.f32 %v419, %v582
      %v596 = vld [vmem:[%s165 + $0x4] sm:$0xe]
      %v597 = vld [vmem:[%s165 + $0x8] sm:$0xf]
      %v598 = vld [vmem:[%s165 + $0xc] sm:$0xf]
      %v599 = vld [vmem:[%s165 + $0x10] sm:$0xf]
      %v600 = vld [vmem:[%s165 + $0x14] sm:$0xf]
      %v601 = vld [vmem:[%s165 + $0x18] sm:$0xf]
      %v602 = vld [vmem:[%s165 + $0x1c] sm:$0xf]
      %v603 = vld [vmem:[%s165 + $0x20] sm:$0xf]
      %v604 = vld [vmem:[%s165 + $0x24] sm:$0xf]
      %v605 = vld [vmem:[%s165 + $0x28] sm:$0x1]
      %s606 = scalar_lea.vmem %s1, 12
      %v607 = vld [vmem:[%s606] sm:$0xf]
      %v618 = vunpack.c.l.b16 %v596
      %v619 = vunpack.c.l.b16 %v597
      %v620 = vunpack.c.l.b16 %v598
      %v621 = vunpack.c.l.b16 %v599
      %v622 = vunpack.c.l.b16 %v600
      %v623 = vunpack.c.l.b16 %v601
      %v624 = vunpack.c.l.b16 %v602
      %v625 = vunpack.c.l.b16 %v603
      %v626 = vunpack.c.l.b16 %v604
      %v627 = vunpack.c.l.b16 %v605
      %v628 = vpack.c.b16 %v619, %v618
      %v629 = vpack.c.b16 %v621, %v620
      %v630 = vpack.c.b16 %v623, %v622
      %v631 = vpack.c.b16 %v625, %v624
      %v632 = vpack.c.b16 %v627, %v626
      %vm633 = vcmask 1046528
      %v634 = vrot.slane %v628, 1
      %v635 = vrot.slane %v629, 1
      %v636 = vsel %vm633, %v634, %v635
      %v637 = vrot.slane %v630, 1
      %v638 = vsel %vm633, %v635, %v637
      %v639 = vrot.slane %v631, 1
      %v640 = vsel %vm633, %v637, %v639
      %v641 = vrot.slane %v632, 1
      %v642 = vsel %vm633, %v639, %v641
      %v644 = vsel %vm247, %v636, 0
      %v647 = vsel %vm247, %v638, 0
      %v650 = vsel %vm247, %v640, 0
      %v653 = vsel %vm247, %v642, 0
      %v656 = vsel %vm247, %v641, 0
      %v659 = vsel %vm263, %v607, 0
      %661 = vmatprep.subr.bf16.mxu0 0
      %662 = vmatpush1.bf16.msra.mxu0 %v659
      %663 = vmatprep.subr.bf16.mxu0 0
      %664 = vmatpush1.bf16.msra.mxu0 0
      %665 = vmatprep.subr.bf16.mxu0 0
      %666 = vmatpush1.bf16.msra.mxu0 0
      %667 = vmatprep.subr.bf16.mxu0 0
      %668 = vmatpush1.bf16.msra.mxu0 0
      %669 = vmatprep.subr.bf16.mxu0 0
      %670 = vmatpush1.bf16.msra.mxu0 0
      %671 = vmatprep.subr.bf16.mxu0 0
      %672 = vmatpush1.bf16.msra.mxu0 0
      %673 = vmatprep.subr.bf16.mxu0 0
      %674 = vmatpush1.bf16.msra.mxu0 0
      %675 = vmatprep.subr.bf16.mxu0 0
      %676 = vmatpush1.bf16.msra.mxu0 0
      %677 = vmatprep.subr.bf16.mxu0 0
      %678 = vmatpush1.bf16.msra.mxu0 0
      %679 = vmatprep.subr.bf16.mxu0 0
      %680 = vmatpush1.bf16.msra.mxu0 0
      %681 = vmatprep.subr.bf16.mxu0 0
      %682 = vmatpush1.bf16.msra.mxu0 0
      %683 = vmatprep.subr.bf16.mxu0 0
      %684 = vmatpush1.bf16.msra.mxu0 0
      %685 = vmatprep.subr.bf16.mxu0 0
      %686 = vmatpush1.bf16.msra.mxu0 0
      %687 = vmatprep.subr.bf16.mxu0 0
      %688 = vmatpush1.bf16.msra.mxu0 0
      %689 = vmatprep.subr.bf16.mxu0 0
      %690 = vmatpush1.bf16.msra.mxu0 0
      %691 = vmatprep.subr.bf16.mxu0 0
      %692 = vmatpush1.bf16.msra.mxu0 0
      %693 = vmatprep.mubr.bf16.mxu0 0
      %694 = vmatmul.mubr.bf16.gmra.mrb[0].mxu0 %v644
      %v695 = vpop.f32.mrb[0].mxu0
      %v696 = vadd.f32 0.0, %v695
      %v697 = vpop.f32.mrb[0].mxu0
      %v698 = vpop.f32.mrb[0].mxu0
      %v699 = vadd.f32 0.0, %v698
      %v700 = vpop.f32.mrb[0].mxu0
      %701 = vmatprep.mubr.bf16.mxu0 0
      %702 = vmatmul.mubr.bf16.gmra.mrb[0].mxu0 %v647
      %v703 = vpop.f32.mrb[0].mxu0
      %v704 = vadd.f32 0.0, %v703
      %v705 = vpop.f32.mrb[0].mxu0
      %v706 = vpop.f32.mrb[0].mxu0
      %v707 = vadd.f32 0.0, %v706
      %v708 = vpop.f32.mrb[0].mxu0
      %709 = vmatprep.mubr.bf16.mxu0 0
      %710 = vmatmul.mubr.bf16.gmra.mrb[0].mxu0 %v650
      %v711 = vpop.f32.mrb[0].mxu0
      %v712 = vadd.f32 0.0, %v711
      %v713 = vpop.f32.mrb[0].mxu0
      %v714 = vpop.f32.mrb[0].mxu0
      %v715 = vadd.f32 0.0, %v714
      %v716 = vpop.f32.mrb[0].mxu0
      %717 = vmatprep.mubr.bf16.mxu0 0
      %718 = vmatmul.mubr.bf16.gmra.mrb[0].mxu0 %v653
      %v719 = vpop.f32.mrb[0].mxu0
      %v720 = vadd.f32 0.0, %v719
      %v721 = vpop.f32.mrb[0].mxu0
      %v722 = vpop.f32.mrb[0].mxu0
      %v723 = vadd.f32 0.0, %v722
      %v724 = vpop.f32.mrb[0].mxu0
      %725 = vmatprep.mubr.bf16.mxu0 0
      %726 = vmatmul.mubr.bf16.gmra.mrb[0].mxu0 %v656
      %v727 = vpop.f32.mrb[0].mxu0
      %v728 = vadd.f32 0.0, %v727
      %v729 = vpop.f32.mrb[0].mxu0
      %v730 = vpop.f32.mrb[0].mxu0
      %v731 = vpop.f32.mrb[0].mxu0
      %732 = vdwg.mxu0
      %v733 = vadd.f32 %v587, %v696
      %v734 = vadd.f32 %v588, %v699
      %v735 = vadd.f32 %v589, %v704
      %v736 = vadd.f32 %v590, %v707
      %v737 = vadd.f32 %v591, %v712
      %v738 = vadd.f32 %v592, %v715
      %v739 = vadd.f32 %v593, %v720
      %v740 = vadd.f32 %v594, %v723
      %v741 = vadd.f32 %v595, %v728
      %v742 = vld [vmem:[%s2] sm:$0x1]
      %v744 = vlaneseq
      %v745 = vshrl.u32 %v744, 7
      %v746 = vsub.s32 0, %v745
      %v747 = vrot.slane %v742, %v746
      %v749 = vadd.f32 %v733, %v747
      %v750 = vadd.f32 %v734, %v747
      %v751 = vadd.f32 %v735, %v747
      %v752 = vadd.f32 %v736, %v747
      %v753 = vadd.f32 %v737, %v747
      %v754 = vadd.f32 %v738, %v747
      %v755 = vadd.f32 %v739, %v747
      %v756 = vadd.f32 %v740, %v747
      %v757 = vadd.f32 %v741, %v747
      %vm758 = vcmp.ge.f32.partialorder %v749, 0.0
      %vm759 = vcmp.ge.f32.partialorder %v750, 0.0
      %vm760 = vcmp.ge.f32.partialorder %v751, 0.0
      %vm761 = vcmp.ge.f32.partialorder %v752, 0.0
      %vm762 = vcmp.ge.f32.partialorder %v753, 0.0
      %vm763 = vcmp.ge.f32.partialorder %v754, 0.0
      %vm764 = vcmp.ge.f32.partialorder %v755, 0.0
      %vm765 = vcmp.ge.f32.partialorder %v756, 0.0
      %vm766 = vcmp.ge.f32.partialorder %v757, 0.0
      %v767 = vmul.f32 %v749, 0.2
      %v768 = vmul.f32 %v750, 0.2
      %v769 = vmul.f32 %v751, 0.2
      %v770 = vmul.f32 %v752, 0.2
      %v771 = vmul.f32 %v753, 0.2
      %v772 = vmul.f32 %v754, 0.2
      %v773 = vmul.f32 %v755, 0.2
      %v774 = vmul.f32 %v756, 0.2
      %v775 = vmul.f32 %v757, 0.2
      %v776 = vsel %vm758, %v749, %v767
      %v777 = vsel %vm759, %v750, %v768
      %v778 = vsel %vm760, %v751, %v769
      %v779 = vsel %vm761, %v752, %v770
      %v780 = vsel %vm762, %v753, %v771
      %v781 = vsel %vm763, %v754, %v772
      %v782 = vsel %vm764, %v755, %v773
      %v783 = vsel %vm765, %v756, %v774
      %v784 = vsel %vm766, %v757, %v775
      %v785 = vpack.c.bf16 %v777, %v776
      %v786 = vpack.c.bf16 %v779, %v778
      %v787 = vpack.c.bf16 %v781, %v780
      %v788 = vpack.c.bf16 %v783, %v782
      %v789 = vpack.c.bf16 %v784, %v784
      %v795 = vunpack.c.l.b16 %v785
      %v796 = vunpack.c.h.b16 %v785
      %v797 = vunpack.c.l.b16 %v786
      %v798 = vunpack.c.h.b16 %v786
      %v799 = vunpack.c.l.b16 %v787
      %v800 = vunpack.c.h.b16 %v787
      %v801 = vunpack.c.l.b16 %v788
      %v802 = vunpack.c.h.b16 %v788
      %v803 = vunpack.c.l.b16 %v789
      %v804 = vpack.c.b16 %v795, %v795
      %v805 = vpack.c.b16 %v796, %v796
      %v806 = vpack.c.b16 %v797, %v797
      %v807 = vpack.c.b16 %v798, %v798
      %v808 = vpack.c.b16 %v799, %v799
      %v809 = vpack.c.b16 %v800, %v800
      %v810 = vpack.c.b16 %v801, %v801
      %v811 = vpack.c.b16 %v802, %v802
      %v812 = vpack.c.b16 %v803, %v803
      %vm822 = vcmask 519168
      %823 = vst.msk [vmem:[%s170] sm:$0xf] %vm822, %v804
      %824 = vst.msk [vmem:[%s170 + $0x4] sm:$0xf] %vm822, %v805
      %825 = vst.msk [vmem:[%s170 + $0x8] sm:$0xf] %vm822, %v806
      %826 = vst.msk [vmem:[%s170 + $0xc] sm:$0xf] %vm822, %v807
      %827 = vst.msk [vmem:[%s170 + $0x10] sm:$0xf] %vm822, %v808
      %828 = vst.msk [vmem:[%s170 + $0x14] sm:$0xf] %vm822, %v809
      %829 = vst.msk [vmem:[%s170 + $0x18] sm:$0xf] %vm822, %v810
      %830 = vst.msk [vmem:[%s170 + $0x1c] sm:$0xf] %vm822, %v811
      %vm831 = vcmask 519168
      %vm832 = vsmask.f32 3328
      %vm833 = vmand %vm831, %vm832
      %v834 = vld [vmem:[%s170 + $0x20] sm:$0xf]
      %v835 = vsel %vm833, %v812, %v834
      %836 = vst [vmem:[%s170 + $0x20] sm:$0xf] %v835
      %p837 = scmp.lt.s32.totalorder %s14, 1
      %s838 = scalar_select %p837, %s14, 1
      %s839 = smul.addr %s838, 9
      %s840 = smul.addr %s839, 4
      %s841 = scalar_lea.vmem %s3, %s840
      // Predicated region
      $region33: #{discriminator_forward.4} parent=31 // pred_check
        %p842 = pneg %p100
      $region34: #{discriminator_forward.4} parent=31 // pred_check_branch
        %844 = sbr.rel (%p842) target = $region36
      $region35: #{discriminator_forward.4} parent=31 // pred_region
        _
      $region36: #{discriminator_forward.4} parent=31 // pred_fallthru
        _
    $region32: #{discriminator_forward.4} parent=5 // pred_fallthru
      _
    %p845 = scmp.le.s32.totalorder 2, %s9
    // Predicated region
    $region37: #{discriminator_forward.4} parent=5 // pred_check
      %p846 = pneg %p845
    $region38: #{discriminator_forward.4} parent=5 // pred_check_branch
      %848 = sbr.rel (%p846) target = $region40
    $region39: #{discriminator_forward.4} parent=5 // pred_region
      %s849 = ssub.s32 %s9, 2
      // Predicated region
      $region41: #{discriminator_forward.4} parent=39 // pred_check
        %p850 = pneg %p106
      $region42: #{discriminator_forward.4} parent=39 // pred_check_branch
        %852 = sbr.rel (%p850) target = $region44
      $region43: #{discriminator_forward.4} parent=39 // pred_region
        %p853 = scmp.lt.s32.totalorder %s15, 1
        %s854 = scalar_select %p853, %s15, 1
        %s855 = smul.addr %s854, 9
        %s856 = smul.addr %s855, 4
        %s857 = scalar_lea.vmem %s3, %s856
      $region44: #{discriminator_forward.4} parent=39 // pred_fallthru
        _
    $region40: #{discriminator_forward.4} parent=5 // pred_fallthru
      _
  $region6: #{discriminator_forward.4} parent=0 // loop_footer
    %s13 = sadd.s32 1, %s9
  $region7: #{discriminator_forward.4} parent=0 // loop_footer_branch
    %8 = sbr.rel target = $region3
  $region8: #{discriminator_forward.4} parent=0 // loop_exit
    _

// kernel: discriminator_forward.5
$region0: #{discriminator_forward.5}
  #allocation0 [shape = 'u32[]', space=smem, size = 0x4, offset = 0x4, fixed_abs, tag = 'smem constant byte address 0x4 - core index']
  #allocation1 [shape = 'u32[144,128]{1,0:T(1,128)}', space=vmem, size = 0x12000, scoped, tag = 'internal scratch']
  %s0 = inlined_call_operand.vmem [shape: bf16[2,25,256], index: 0, kind: input, shape index: {}]
  %s1 = inlined_call_operand.vmem [shape: bf16[4,256,128], index: 1, kind: input, shape index: {}]
  %s2 = inlined_call_operand.vmem [shape: f32[1,128], index: 2, kind: input, shape index: {}]
  %s3 = inlined_call_operand.vmem [shape: bf16[2,19,128], index: 3, kind: output, shape index: {}]
  %s4 = sld [smem:[#allocation0]]
  $region45: #{discriminator_forward.5} parent=0
    _
  %s6 = ssub.s32 1, %s4
  %s7 = scalar_select 0, %s6, %s4
  loop: start=0, step=1, limit=4
  $region2: #{discriminator_forward.5} parent=0 // loop_pre_header
    _
  $region3: #{discriminator_forward.5} parent=0 // loop_header
    %s9 = sphi 0, %s13
    %p10 = scmp.ge.s32.totalorder %s9, 4
    %s19 = sphi 0, %s21
    %s22 = sphi 0, %s19
    %s23 = sphi 0, %s22
    %s39 = sphi 0, %s23
    %s43 = sphi 0, %s43
    %s45 = sphi 0, %s43
    %s46 = sphi 0, %s45
    %s60 = sphi 0, %s46
    %s64 = sphi 0, %s64
    %s66 = sphi 0, %s64
    %s67 = sphi 0, %s66
    %s81 = sphi 0, %s67
    %s87 = sphi 0, %s89
    %s90 = sphi 0, %s87
    %s91 = sphi 0, %s90
    %s107 = sphi 0, %s91
  $region4: #{discriminator_forward.5} parent=0 // loop_header_branch
    %12 = sbr.rel (%p10) target = $region8
  $region5: #{discriminator_forward.5} parent=0 // loop_body
    %s14 = ssub.s32 %s9, 1
    %s15 = ssub.s32 %s9, 2
    %s16 = sadd.s32 %s9, 1
    %s17 = ssub.s32 %s9, %s16
    %p18 = scmp.eq.s32.totalorder %s17, 0
    %s20 = sadd.s32 %s19, 1
    %s21 = scalar_select %p18, %s19, %s20
    %p24 = pneg %p18
    %p25 = scmp.eq.s32.totalorder %s9, 1
    %p26 = por %p24, %p25
    %p27 = scmp.ne.s32.totalorder %s19, %s22
    %p28 = scmp.eq.s32.totalorder %s9, 0
    %p29 = por %p27, %p28
    %p30 = scmp.ne.s32.totalorder %s19, %s22
    %p31 = scmp.eq.s32.totalorder %s14, 1
    %p32 = por %p30, %p31
    %p33 = scmp.ne.s32.totalorder %s22, %s23
    %p34 = scmp.eq.s32.totalorder %s14, 0
    %p35 = por %p33, %p34
    %p36 = scmp.ne.s32.totalorder %s22, %s23
    %p37 = scmp.eq.s32.totalorder %s15, 1
    %p38 = por %p36, %p37
    %p40 = scmp.ne.s32.totalorder %s23, %s39
    %p41 = scmp.eq.s32.totalorder %s15, 0
    %p42 = por %p40, %p41
    %s44 = sadd.s32 %s43, 1
    %p47 = scmp.eq.s32.totalorder %s9, 1
    %p48 = scmp.ne.s32.totalorder %s43, %s45
    %p49 = scmp.eq.s32.totalorder %s9, 0
    %p50 = por %p48, %p49
    %p51 = scmp.ne.s32.totalorder %s43, %s45
    %p52 = scmp.eq.s32.totalorder %s14, 1
    %p53 = por %p51, %p52
    %p54 = scmp.ne.s32.totalorder %s45, %s46
    %p55 = scmp.eq.s32.totalorder %s14, 0
    %p56 = por %p54, %p55
    %p57 = scmp.ne.s32.totalorder %s45, %s46
    %p58 = scmp.eq.s32.totalorder %s15, 1
    %p59 = por %p57, %p58
    %p61 = scmp.ne.s32.totalorder %s46, %s60
    %p62 = scmp.eq.s32.totalorder %s15, 0
    %p63 = por %p61, %p62
    %s65 = sadd.s32 %s64, 1
    %p68 = scmp.eq.s32.totalorder %s9, 1
    %p69 = scmp.ne.s32.totalorder %s64, %s66
    %p70 = scmp.eq.s32.totalorder %s9, 0
    %p71 = por %p69, %p70
    %p72 = scmp.ne.s32.totalorder %s64, %s66
    %p73 = scmp.eq.s32.totalorder %s14, 1
    %p74 = por %p72, %p73
    %p75 = scmp.ne.s32.totalorder %s66, %s67
    %p76 = scmp.eq.s32.totalorder %s14, 0
    %p77 = por %p75, %p76
    %p78 = scmp.ne.s32.totalorder %s66, %s67
    %p79 = scmp.eq.s32.totalorder %s15, 1
    %p80 = por %p78, %p79
    %p82 = scmp.ne.s32.totalorder %s67, %s81
    %p83 = scmp.eq.s32.totalorder %s15, 0
    %p84 = por %p82, %p83
    %s85 = ssub.s32 %s9, %s16
    %p86 = scmp.eq.s32.totalorder %s85, 0
    %s88 = sadd.s32 %s87, 1
    %s89 = scalar_select %p86, %s87, %s88
    %p92 = pneg %p86
    %p93 = scmp.eq.s32.totalorder %s9, 1
    %p94 = por %p92, %p93
    %p95 = scmp.ne.s32.totalorder %s87, %s90
    %p96 = scmp.eq.s32.totalorder %s9, 0
    %p97 = por %p95, %p96
    %p98 = scmp.ne.s32.totalorder %s87, %s90
    %p99 = scmp.eq.s32.totalorder %s14, 1
    %p100 = por %p98, %p99
    %p101 = scmp.ne.s32.totalorder %s90, %s91
    %p102 = scmp.eq.s32.totalorder %s14, 0
    %p103 = por %p101, %p102
    %p104 = scmp.ne.s32.totalorder %s90, %s91
    %p105 = scmp.eq.s32.totalorder %s15, 1
    %p106 = por %p104, %p105
    %p108 = scmp.ne.s32.totalorder %s91, %s107
    %p109 = scmp.eq.s32.totalorder %s15, 0
    %p110 = por %p108, %p109
    %p111 = scmp.le.s32.totalorder 1, %s9
    %p112 = scmp.lt.s32.totalorder %s9, 3
    %p113 = pnand %p111, %p112
    %p114 = pneg %p113
    // Predicated region
    $region9: #{discriminator_forward.5} parent=5 // pred_check
      _
    $region10: #{discriminator_forward.5} parent=5 // pred_check_branch
      %116 = sbr.rel (%p113) target = $region12
    $region11: #{discriminator_forward.5} parent=5 // pred_region
      %s117 = ssub.s32 %s9, 1
      // Predicated region
      $region13: #{discriminator_forward.5} parent=11 // pred_check
        %p118 = pneg %p56
      $region14: #{discriminator_forward.5} parent=11 // pred_check_branch
        %120 = sbr.rel (%p118) target = $region16
      $region15: #{discriminator_forward.5} parent=11 // pred_region
        _
      $region16: #{discriminator_forward.5} parent=11 // pred_fallthru
        _
      // Predicated region
      $region17: #{discriminator_forward.5} parent=11 // pred_check
        %p121 = pneg %p77
      $region18: #{discriminator_forward.5} parent=11 // pred_check_branch
        %123 = sbr.rel (%p121) target = $region20
      $region19: #{discriminator_forward.5} parent=11 // pred_region
        _
      $region20: #{discriminator_forward.5} parent=11 // pred_fallthru
        _
    $region12: #{discriminator_forward.5} parent=5 // pred_fallthru
      _
    %p124 = scmp.lt.s32.totalorder %s9, 2
    // Predicated region
    $region21: #{discriminator_forward.5} parent=5 // pred_check
      %p125 = pneg %p124
    $region22: #{discriminator_forward.5} parent=5 // pred_check_branch
      %127 = sbr.rel (%p125) target = $region24
    $region23: #{discriminator_forward.5} parent=5 // pred_region
      // Predicated region
      $region25: #{discriminator_forward.5} parent=23 // pred_check
        %p128 = pneg %p29
      $region26: #{discriminator_forward.5} parent=23 // pred_check_branch
        %130 = sbr.rel (%p128) target = $region28
      $region27: #{discriminator_forward.5} parent=23 // pred_region
        %p131 = scmp.lt.s32.totalorder %s9, 1
        %s132 = scalar_select %p131, %s9, 1
        %s133 = smul.addr %s132, 8
        %s134 = smul.addr %s133, 4
        %s135 = scalar_lea.vmem %s0, %s134
      $region28: #{discriminator_forward.5} parent=23 // pred_fallthru
        _
    $region24: #{discriminator_forward.5} parent=5 // pred_fallthru
      _
    %p136 = scmp.le.s32.totalorder 1, %s9
    %p137 = scmp.lt.s32.totalorder %s9, 3
    %p138 = pnand %p136, %p137
    %p139 = pneg %p138
    // Predicated region
    $region29: #{discriminator_forward.5} parent=5 // pred_check
      _
    $region30: #{discriminator_forward.5} parent=5 // pred_check_branch
      %141 = sbr.rel (%p138) target = $region32
    $region31: #{discriminator_forward.5} parent=5 // pred_region
      %s142 = ssub.s32 %s9, 1
      %p143 = scmp.lt.s32.totalorder %s14, 1
      %s144 = scalar_select %p143, %s14, 1
      %s145 = smul.addr %s144, 8
      %s146 = smul.addr %s145, 4
      %s147 = scalar_lea.vmem %s0, %s146
      %p148 = pneg %p35
      %p149 = pneg %p32
      %p150 = pneg %p56
      %p151 = pneg %p53
      %p152 = pneg %p77
      %p153 = pneg %p74
      %p154 = pneg %p103
      %p155 = pneg %p100
      %p156 = scmp.lt.s32.totalorder %s14, 1
      %s157 = scalar_select %p156, %s14, 1
      %s158 = smul.addr %s157, 3
      %s159 = smul.addr %s158, 4
      %s160 = scalar_lea.vmem %s3, %s159
      %p161 = scmp.lt.s32.totalorder %s14, 1
      %s162 = scalar_select %p161, %s14, 1
      %s163 = smul.addr %s162, 8
      %s164 = smul.addr %s163, 4
      %s165 = scalar_lea.vmem %s0, %s164
      %p166 = scmp.lt.s32.totalorder %s14, 1
      %s167 = scalar_select %p166, %s14, 1
      %s168 = smul.addr %s167, 3
      %s169 = smul.addr %s168, 4
      %s170 = scalar_lea.vmem %s3, %s169
      %v172 = vld [vmem:[%s165] sm:$0xff]
      %v173 = vld [vmem:[%s165 + $0x8] sm:$0xff]
      %v174 = vld [vmem:[%s165 + $0x10] sm:$0x33]
      %v175 = vld [vmem:[%s1] sm:$0xf]
      %v176 = vld [vmem:[%s1 + $0x4] sm:$0xf]
      %v177 = vld [vmem:[%s1 + $0x8] sm:$0xf]
      %v178 = vld [vmem:[%s1 + $0xc] sm:$0xf]
      %v179 = vld [vmem:[%s1 + $0x10] sm:$0xf]
      %v180 = vld [vmem:[%s1 + $0x14] sm:$0xf]
      %v181 = vld [vmem:[%s1 + $0x18] sm:$0xf]
      %v182 = vld [vmem:[%s1 + $0x1c] sm:$0xf]
      %v183 = vld [vmem:[%s1 + $0x20] sm:$0xf]
      %v184 = vld [vmem:[%s1 + $0x24] sm:$0xf]
      %v185 = vld [vmem:[%s1 + $0x28] sm:$0xf]
      %v186 = vld [vmem:[%s1 + $0x2c] sm:$0xf]
      %v187 = vld [vmem:[%s1 + $0x30] sm:$0xf]
      %v188 = vld [vmem:[%s1 + $0x34] sm:$0xf]
      %v189 = vld [vmem:[%s1 + $0x38] sm:$0xf]
      %v190 = vld [vmem:[%s1 + $0x3c] sm:$0xf]
      %v191 = vld [vmem:[%s1 + $0x40] sm:$0xf]
      %v192 = vld [vmem:[%s1 + $0x44] sm:$0xf]
      %v193 = vld [vmem:[%s1 + $0x48] sm:$0xf]
      %v194 = vld [vmem:[%s1 + $0x4c] sm:$0xf]
      %v195 = vld [vmem:[%s1 + $0x50] sm:$0xf]
      %v196 = vld [vmem:[%s1 + $0x54] sm:$0xf]
      %v197 = vld [vmem:[%s1 + $0x58] sm:$0xf]
      %v198 = vld [vmem:[%s1 + $0x5c] sm:$0xf]
      %v199 = vld [vmem:[%s1 + $0x60] sm:$0xf]
      %v200 = vld [vmem:[%s1 + $0x64] sm:$0xf]
      %v201 = vld [vmem:[%s1 + $0x68] sm:$0xf]
      %v202 = vld [vmem:[%s1 + $0x6c] sm:$0xf]
      %v203 = vld [vmem:[%s1 + $0x70] sm:$0xf]
      %v204 = vld [vmem:[%s1 + $0x74] sm:$0xf]
      %v205 = vld [vmem:[%s1 + $0x78] sm:$0xf]
      %v206 = vld [vmem:[%s1 + $0x7c] sm:$0xf]
      %s207 = scalar_lea.vmem %s1, 128
      %v208 = vld [vmem:[%s207] sm:$0xf]
      %v209 = vld [vmem:[%s207 + $0x4] sm:$0xf]
      %v210 = vld [vmem:[%s207 + $0x8] sm:$0xf]
      %v211 = vld [vmem:[%s207 + $0xc] sm:$0xf]
      %v212 = vld [vmem:[%s207 + $0x10] sm:$0xf]
      %v213 = vld [vmem:[%s207 + $0x14] sm:$0xf]
      %v214 = vld [vmem:[%s207 + $0x18] sm:$0xf]
      %v215 = vld [vmem:[%s207 + $0x1c] sm:$0xf]
      %v216 = vld [vmem:[%s207 + $0x20] sm:$0xf]
      %v217 = vld [vmem:[%s207 + $0x24] sm:$0xf]
      %v218 = vld [vmem:[%s207 + $0x28] sm:$0xf]
      %v219 = vld [vmem:[%s207 + $0x2c] sm:$0xf]
      %v220 = vld [vmem:[%s207 + $0x30] sm:$0xf]
      %v221 = vld [vmem:[%s207 + $0x34] sm:$0xf]
      %v222 = vld [vmem:[%s207 + $0x38] sm:$0xf]
      %v223 = vld [vmem:[%s207 + $0x3c] sm:$0xf]
      %v224 = vld [vmem:[%s207 + $0x40] sm:$0xf]
      %v225 = vld [vmem:[%s207 + $0x44] sm:$0xf]
      %v226 = vld [vmem:[%s207 + $0x48] sm:$0xf]
      %v227 = vld [vmem:[%s207 + $0x4c] sm:$0xf]
      %v228 = vld [vmem:[%s207 + $0x50] sm:$0xf]
      %v229 = vld [vmem:[%s207 + $0x54] sm:$0xf]
      %v230 = vld [vmem:[%s207 + $0x58] sm:$0xf]
      %v231 = vld [vmem:[%s207 + $0x5c] sm:$0xf]
      %v232 = vld [vmem:[%s207 + $0x60] sm:$0xf]
      %v233 = vld [vmem:[%s207 + $0x64] sm:$0xf]
      %v234 = vld [vmem:[%s207 + $0x68] sm:$0xf]
      %v235 = vld [vmem:[%s207 + $0x6c] sm:$0xf]
      %v236 = vld [vmem:[%s207 + $0x70] sm:$0xf]
      %v237 = vld [vmem:[%s207 + $0x74] sm:$0xf]
      %v238 = vld [vmem:[%s207 + $0x78] sm:$0xf]
      %v239 = vld [vmem:[%s207 + $0x7c] sm:$0xf]
      %v243 = vunpack.c.l.b16 %v172
      %v244 = vunpack.c.h.b16 %v172
      %v245 = vunpack.c.l.b16 %v173
      %v246 = vunpack.c.h.b16 %v173
      %v247 = vunpack.c.l.b16 %v174
      %v248 = vunpack.c.h.b16 %v174
      %v249 = vpack.c.b16 %v245, %v243
      %v250 = vpack.c.b16 %v246, %v244
      %v251 = vpack.c.b16 %v247, %v247
      %v252 = vpack.c.b16 %v248, %v248
      %vm253 = vsmask.f32 7424
      %v255 = vshrl.u32 %v249, 16
      %v257 = vshll.u32 %v249, 16
      %v259 = vrot.slane %v257, 1
      %v260 = vor.u32 %v255, %v259
      %v262 = vshll.u32 %v251, 16
      %v264 = vrot.slane %v262, 1
      %v265 = vsel %vm253, %v260, %v264
      %v267 = vshrl.u32 %v250, 16
      %v269 = vshll.u32 %v250, 16
      %v271 = vrot.slane %v269, 1
      %v272 = vor.u32 %v267, %v271
      %v274 = vshll.u32 %v252, 16
      %v276 = vrot.slane %v274, 1
      %v277 = vsel %vm253, %v272, %v276
      %v278 = vshrl.u32 %v251, 16
      %v280 = vor.u32 %v278, %v264
      %v281 = vshrl.u32 %v252, 16
      %v283 = vor.u32 %v281, %v276
      %v320 = vunpack.c.l.b16 %v208
      %v321 = vunpack.c.l.b16 %v209
      %v322 = vunpack.c.l.b16 %v210
      %v323 = vunpack.c.l.b16 %v211
      %v324 = vunpack.c.l.b16 %v212
      %v325 = vunpack.c.l.b16 %v213
      %v326 = vunpack.c.l.b16 %v214
      %v327 = vunpack.c.l.b16 %v215
      %v328 = vunpack.c.l.b16 %v216
      %v329 = vunpack.c.l.b16 %v217
      %v330 = vunpack.c.l.b16 %v218
      %v331 = vunpack.c.l.b16 %v219
      %v332 = vunpack.c.l.b16 %v220
      %v333 = vunpack.c.l.b16 %v221
      %v334 = vunpack.c.l.b16 %v222
      %v335 = vunpack.c.l.b16 %v223
      %v336 = vunpack.c.l.b16 %v224
      %v337 = vunpack.c.l.b16 %v225
      %v338 = vunpack.c.l.b16 %v226
      %v339 = vunpack.c.l.b16 %v227
      %v340 = vunpack.c.l.b16 %v228
      %v341 = vunpack.c.l.b16 %v229
      %v342 = vunpack.c.l.b16 %v230
      %v343 = vunpack.c.l.b16 %v231
      %v344 = vunpack.c.l.b16 %v232
      %v345 = vunpack.c.l.b16 %v233
      %v346 = vunpack.c.l.b16 %v234
      %v347 = vunpack.c.l.b16 %v235
      %v348 = vunpack.c.l.b16 %v236
      %v349 = vunpack.c.l.b16 %v237
      %v350 = vunpack.c.l.b16 %v238
      %v351 = vunpack.c.l.b16 %v239
      %v352 = vpack.c.b16 %v321, %v320
      %v353 = vpack.c.b16 %v323, %v322
      %v354 = vpack.c.b16 %v325, %v324
      %v355 = vpack.c.b16 %v327, %v326
      %v356 = vpack.c.b16 %v329, %v328
      %v357 = vpack.c.b16 %v331, %v330
      %v358 = vpack.c.b16 %v333, %v332
      %v359 = vpack.c.b16 %v335, %v334
      %v360 = vpack.c.b16 %v337, %v336
      %v361 = vpack.c.b16 %v339, %v338
      %v362 = vpack.c.b16 %v341, %v340
      %v363 = vpack.c.b16 %v343, %v342
      %v364 = vpack.c.b16 %v345, %v344
      %v365 = vpack.c.b16 %v347, %v346
      %v366 = vpack.c.b16 %v349, %v348
      %v367 = vpack.c.b16 %v351, %v350
      %384 = vmatprep.subr.bf16.mxu0 0
      %385 = vmatpush1.bf16.msra.mxu0 %v352
      %386 = vmatprep.subr.bf16.mxu0 0
      %387 = vmatpush1.bf16.msra.mxu0 %v353
      %388 = vmatprep.subr.bf16.mxu0 0
      %389 = vmatpush1.bf16.msra.mxu0 %v354
      %390 = vmatprep.subr.bf16.mxu0 0
      %391 = vmatpush1.bf16.msra.mxu0 %v355
      %392 = vmatprep.subr.bf16.mxu0 0
      %393 = vmatpush1.bf16.msra.mxu0 %v356
      %394 = vmatprep.subr.bf16.mxu0 0
      %395 = vmatpush1.bf16.msra.mxu0 %v357
      %396 = vmatprep.subr.bf16.mxu0 0
      %397 = vmatpush1.bf16.msra.mxu0 %v358
      %398 = vmatprep.subr.bf16.mxu0 0
      %399 = vmatpush1.bf16.msra.mxu0 %v359
      %400 = vmatprep.subr.bf16.mxu0 0
      %401 = vmatpush1.bf16.msra.mxu0 %v360
      %402 = vmatprep.subr.bf16.mxu0 0
      %403 = vmatpush1.bf16.msra.mxu0 %v361
      %404 = vmatprep.subr.bf16.mxu0 0
      %405 = vmatpush1.bf16.msra.mxu0 %v362
      %406 = vmatprep.subr.bf16.mxu0 0
      %407 = vmatpush1.bf16.msra.mxu0 %v363
      %408 = vmatprep.subr.bf16.mxu0 0
      %409 = vmatpush1.bf16.msra.mxu0 %v364
      %410 = vmatprep.subr.bf16.mxu0 0
      %411 = vmatpush1.bf16.msra.mxu0 %v365
      %412 = vmatprep.subr.bf16.mxu0 0
      %413 = vmatpush1.bf16.msra.mxu0 %v366
      %414 = vmatprep.subr.bf16.mxu0 0
      %415 = vmatpush1.bf16.msra.mxu0 %v367
      %416 = vmatprep.mubr.bf16.mxu0 %v277
      %417 = vmatmul.mubr.bf16.gmra.mrb[0].mxu0 %v265
      %v418 = vpop.f32.mrb[0].mxu0
      %v419 = vadd.f32 0.0, %v418
      %v420 = vpop.f32.mrb[0].mxu0
      %v421 = vpop.f32.mrb[0].mxu0
      %v422 = vadd.f32 0.0, %v421
      %v423 = vpop.f32.mrb[0].mxu0
      %424 = vmatprep.mubr.bf16.mxu0 %v283
      %425 = vmatmul.mubr.bf16.gmra.mrb[0].mxu0 %v280
      %v426 = vpop.f32.mrb[0].mxu0
      %v427 = vadd.f32 0.0, %v426
      %v428 = vpop.f32.mrb[0].mxu0
      %v429 = vpop.f32.mrb[0].mxu0
      %v430 = vpop.f32.mrb[0].mxu0
      %431 = vdwg.mxu0
      %v468 = vunpack.c.l.b16 %v175
      %v469 = vunpack.c.l.b16 %v176
      %v470 = vunpack.c.l.b16 %v177
      %v471 = vunpack.c.l.b16 %v178
      %v472 = vunpack.c.l.b16 %v179
      %v473 = vunpack.c.l.b16 %v180
      %v474 = vunpack.c.l.b16 %v181
      %v475 = vunpack.c.l.b16 %v182
      %v476 = vunpack.c.l.b16 %v183
      %v477 = vunpack.c.l.b16 %v184
      %v478 = vunpack.c.l.b16 %v185
      %v479 = vunpack.c.l.b16 %v186
      %v480 = vunpack.c.l.b16 %v187
      %v481 = vunpack.c.l.b16 %v188
      %v482 = vunpack.c.l.b16 %v189
      %v483 = vunpack.c.l.b16 %v190
      %v484 = vunpack.c.l.b16 %v191
      %v485 = vunpack.c.l.b16 %v192
      %v486 = vunpack.c.l.b16 %v193
      %v487 = vunpack.c.l.b16 %v194
      %v488 = vunpack.c.l.b16 %v195
      %v489 = vunpack.c.l.b16 %v196
      %v490 = vunpack.c.l.b16 %v197
      %v491 = vunpack.c.l.b16 %v198
      %v492 = vunpack.c.l.b16 %v199
      %v493 = vunpack.c.l.b16 %v200
      %v494 = vunpack.c.l.b16 %v201
      %v495 = vunpack.c.l.b16 %v202
      %v496 = vunpack.c.l.b16 %v203
      %v497 = vunpack.c.l.b16 %v204
      %v498 = vunpack.c.l.b16 %v205
      %v499 = vunpack.c.l.b16 %v206
      %v500 = vpack.c.b16 %v469, %v468
      %v501 = vpack.c.b16 %v471, %v470
      %v502 = vpack.c.b16 %v473, %v472
      %v503 = vpack.c.b16 %v475, %v474
      %v504 = vpack.c.b16 %v477, %v476
      %v505 = vpack.c.b16 %v479, %v478
      %v506 = vpack.c.b16 %v481, %v480
      %v507 = vpack.c.b16 %v483, %v482
      %v508 = vpack.c.b16 %v485, %v484
      %v509 = vpack.c.b16 %v487, %v486
      %v510 = vpack.c.b16 %v489, %v488
      %v511 = vpack.c.b16 %v491, %v490
      %v512 = vpack.c.b16 %v493, %v492
      %v513 = vpack.c.b16 %v495, %v494
      %v514 = vpack.c.b16 %v497, %v496
      %v515 = vpack.c.b16 %v499, %v498
      %532 = vmatprep.subr.bf16.mxu0 0
      %533 = vmatpush1.bf16.msra.mxu0 %v500
      %534 = vmatprep.subr.bf16.mxu0 0
      %535 = vmatpush1.bf16.msra.mxu0 %v501
      %536 = vmatprep.subr.bf16.mxu0 0
      %537 = vmatpush1.bf16.msra.mxu0 %v502
      %538 = vmatprep.subr.bf16.mxu0 0
      %539 = vmatpush1.bf16.msra.mxu0 %v503
      %540 = vmatprep.subr.bf16.mxu0 0
      %541 = vmatpush1.bf16.msra.mxu0 %v504
      %542 = vmatprep.subr.bf16.mxu0 0
      %543 = vmatpush1.bf16.msra.mxu0 %v505
      %544 = vmatprep.subr.bf16.mxu0 0
      %545 = vmatpush1.bf16.msra.mxu0 %v506
      %546 = vmatprep.subr.bf16.mxu0 0
      %547 = vmatpush1.bf16.msra.mxu0 %v507
      %548 = vmatprep.subr.bf16.mxu0 0
      %549 = vmatpush1.bf16.msra.mxu0 %v508
      %550 = vmatprep.subr.bf16.mxu0 0
      %551 = vmatpush1.bf16.msra.mxu0 %v509
      %552 = vmatprep.subr.bf16.mxu0 0
      %553 = vmatpush1.bf16.msra.mxu0 %v510
      %554 = vmatprep.subr.bf16.mxu0 0
      %555 = vmatpush1.bf16.msra.mxu0 %v511
      %556 = vmatprep.subr.bf16.mxu0 0
      %557 = vmatpush1.bf16.msra.mxu0 %v512
      %558 = vmatprep.subr.bf16.mxu0 0
      %559 = vmatpush1.bf16.msra.mxu0 %v513
      %560 = vmatprep.subr.bf16.mxu0 0
      %561 = vmatpush1.bf16.msra.mxu0 %v514
      %562 = vmatprep.subr.bf16.mxu0 0
      %563 = vmatpush1.bf16.msra.mxu0 %v515
      %564 = vmatprep.mubr.bf16.mxu0 %v250
      %565 = vmatmul.mubr.bf16.gmra.mrb[0].mxu0 %v249
      %v566 = vpop.f32.mrb[0].mxu0
      %v567 = vadd.f32 %v419, %v566
      %v568 = vpop.f32.mrb[0].mxu0
      %v569 = vpop.f32.mrb[0].mxu0
      %v570 = vadd.f32 %v422, %v569
      %v571 = vpop.f32.mrb[0].mxu0
      %572 = vmatprep.mubr.bf16.mxu0 %v252
      %573 = vmatmul.mubr.bf16.gmra.mrb[0].mxu0 %v251
      %v574 = vpop.f32.mrb[0].mxu0
      %v575 = vadd.f32 %v427, %v574
      %v576 = vpop.f32.mrb[0].mxu0
      %v577 = vpop.f32.mrb[0].mxu0
      %v578 = vpop.f32.mrb[0].mxu0
      %579 = vdwg.mxu0
      %v580 = vld [vmem:[%s165] sm:$0xcc]
      %v581 = vld [vmem:[%s165 + $0x10] sm:$0xff]
      %s582 = scalar_lea.vmem %s1, 256
      %v583 = vld [vmem:[%s582] sm:$0xf]
      %v584 = vld [vmem:[%s582 + $0x4] sm:$0xf]
      %v585 = vld [vmem:[%s582 + $0x8] sm:$0xf]
      %v586 = vld [vmem:[%s582 + $0xc] sm:$0xf]
      %v587 = vld [vmem:[%s582 + $0x10] sm:$0xf]
      %v588 = vld [vmem:[%s582 + $0x14] sm:$0xf]
      %v589 = vld [vmem:[%s582 + $0x18] sm:$0xf]
      %v590 = vld [vmem:[%s582 + $0x1c] sm:$0xf]
      %v591 = vld [vmem:[%s582 + $0x20] sm:$0xf]
      %v592 = vld [vmem:[%s582 + $0x24] sm:$0xf]
      %v593 = vld [vmem:[%s582 + $0x28] sm:$0xf]
      %v594 = vld [vmem:[%s582 + $0x2c] sm:$0xf]
      %v595 = vld [vmem:[%s582 + $0x30] sm:$0xf]
      %v596 = vld [vmem:[%s582 + $0x34] sm:$0xf]
      %v597 = vld [vmem:[%s582 + $0x38] sm:$0xf]
      %v598 = vld [vmem:[%s582 + $0x3c] sm:$0xf]
      %v599 = vld [vmem:[%s582 + $0x40] sm:$0xf]
      %v600 = vld [vmem:[%s582 + $0x44] sm:$0xf]
      %v601 = vld [vmem:[%s582 + $0x48] sm:$0xf]
      %v602 = vld [vmem:[%s582 + $0x4c] sm:$0xf]
      %v603 = vld [vmem:[%s582 + $0x50] sm:$0xf]
      %v604 = vld [vmem:[%s582 + $0x54] sm:$0xf]
      %v605 = vld [vmem:[%s582 + $0x58] sm:$0xf]
      %v606 = vld [vmem:[%s582 + $0x5c] sm:$0xf]
      %v607 = vld [vmem:[%s582 + $0x60] sm:$0xf]
      %v608 = vld [vmem:[%s582 + $0x64] sm:$0xf]
      %v609 = vld [vmem:[%s582 + $0x68] sm:$0xf]
      %v610 = vld [vmem:[%s582 + $0x6c] sm:$0xf]
      %v611 = vld [vmem:[%s582 + $0x70] sm:$0xf]
      %v612 = vld [vmem:[%s582 + $0x74] sm:$0xf]
      %v613 = vld [vmem:[%s582 + $0x78] sm:$0xf]
      %v614 = vld [vmem:[%s582 + $0x7c] sm:$0xf]
      %v617 = vunpack.c.l.b16 %v580
      %v618 = vunpack.c.h.b16 %v580
      %v619 = vunpack.c.l.b16 %v581
      %v620 = vunpack.c.h.b16 %v581
      %v621 = vpack.c.b16 %v245, %v617
      %v622 = vpack.c.b16 %v246, %v618
      %v623 = vpack.c.b16 %v619, %v619
      %v624 = vpack.c.b16 %v620, %v620
      %vm625 = vsmask.f32 5376
      %v627 = vshrl.u32 %v621, 16
      %v629 = vrot.slane %v627, 2
      %v630 = vshll.u32 %v621, 16
      %v632 = vrot.slane %v630, 3
      %v633 = vor.u32 %v629, %v632
      %v635 = vshrl.u32 %v623, 16
      %v637 = vrot.slane %v635, 2
      %v638 = vshll.u32 %v623, 16
      %v640 = vrot.slane %v638, 3
      %v641 = vor.u32 %v637, %v640
      %v642 = vsel %vm625, %v633, %v641
      %v644 = vshrl.u32 %v622, 16
      %v646 = vrot.slane %v644, 2
      %v647 = vshll.u32 %v622, 16
      %v649 = vrot.slane %v647, 3
      %v650 = vor.u32 %v646, %v649
      %v652 = vshrl.u32 %v624, 16
      %v654 = vrot.slane %v652, 2
      %v655 = vshll.u32 %v624, 16
      %v657 = vrot.slane %v655, 3
      %v658 = vor.u32 %v654, %v657
      %v659 = vsel %vm625, %v650, %v658
      %v696 = vunpack.c.l.b16 %v583
      %v697 = vunpack.c.l.b16 %v584
      %v698 = vunpack.c.l.b16 %v585
      %v699 = vunpack.c.l.b16 %v586
      %v700 = vunpack.c.l.b16 %v587
      %v701 = vunpack.c.l.b16 %v588
      %v702 = vunpack.c.l.b16 %v589
      %v703 = vunpack.c.l.b16 %v590
      %v704 = vunpack.c.l.b16 %v591
      %v705 = vunpack.c.l.b16 %v592
      %v706 = vunpack.c.l.b16 %v593
      %v707 = vunpack.c.l.b16 %v594
      %v708 = vunpack.c.l.b16 %v595
      %v709 = vunpack.c.l.b16 %v596
      %v710 = vunpack.c.l.b16 %v597
      %v711 = vunpack.c.l.b16 %v598
      %v712 = vunpack.c.l.b16 %v599
      %v713 = vunpack.c.l.b16 %v600
      %v714 = vunpack.c.l.b16 %v601
      %v715 = vunpack.c.l.b16 %v602
      %v716 = vunpack.c.l.b16 %v603
      %v717 = vunpack.c.l.b16 %v604
      %v718 = vunpack.c.l.b16 %v605
      %v719 = vunpack.c.l.b16 %v606
      %v720 = vunpack.c.l.b16 %v607
      %v721 = vunpack.c.l.b16 %v608
      %v722 = vunpack.c.l.b16 %v609
      %v723 = vunpack.c.l.b16 %v610
      %v724 = vunpack.c.l.b16 %v611
      %v725 = vunpack.c.l.b16 %v612
      %v726 = vunpack.c.l.b16 %v613
      %v727 = vunpack.c.l.b16 %v614
      %v728 = vpack.c.b16 %v697, %v696
      %v729 = vpack.c.b16 %v699, %v698
      %v730 = vpack.c.b16 %v701, %v700
      %v731 = vpack.c.b16 %v703, %v702
      %v732 = vpack.c.b16 %v705, %v704
      %v733 = vpack.c.b16 %v707, %v706
      %v734 = vpack.c.b16 %v709, %v708
      %v735 = vpack.c.b16 %v711, %v710
      %v736 = vpack.c.b16 %v713, %v712
      %v737 = vpack.c.b16 %v715, %v714
      %v738 = vpack.c.b16 %v717, %v716
      %v739 = vpack.c.b16 %v719, %v718
      %v740 = vpack.c.b16 %v721, %v720
      %v741 = vpack.c.b16 %v723, %v722
      %v742 = vpack.c.b16 %v725, %v724
      %v743 = vpack.c.b16 %v727, %v726
      %760 = vmatprep.subr.bf16.mxu0 0
      %761 = vmatpush1.bf16.msra.mxu0 %v728
      %762 = vmatprep.subr.bf16.mxu0 0
      %763 = vmatpush1.bf16.msra.mxu0 %v729
      %764 = vmatprep.subr.bf16.mxu0 0
      %765 = vmatpush1.bf16.msra.mxu0 %v730
      %766 = vmatprep.subr.bf16.mxu0 0
      %767 = vmatpush1.bf16.msra.mxu0 %v731
      %768 = vmatprep.subr.bf16.mxu0 0
      %769 = vmatpush1.bf16.msra.mxu0 %v732
      %770 = vmatprep.subr.bf16.mxu0 0
      %771 = vmatpush1.bf16.msra.mxu0 %v733
      %772 = vmatprep.subr.bf16.mxu0 0
      %773 = vmatpush1.bf16.msra.mxu0 %v734
      %774 = vmatprep.subr.bf16.mxu0 0
      %775 = vmatpush1.bf16.msra.mxu0 %v735
      %776 = vmatprep.subr.bf16.mxu0 0
      %777 = vmatpush1.bf16.msra.mxu0 %v736
      %778 = vmatprep.subr.bf16.mxu0 0
      %779 = vmatpush1.bf16.msra.mxu0 %v737
      %780 = vmatprep.subr.bf16.mxu0 0
      %781 = vmatpush1.bf16.msra.mxu0 %v738
      %782 = vmatprep.subr.bf16.mxu0 0
      %783 = vmatpush1.bf16.msra.mxu0 %v739
      %784 = vmatprep.subr.bf16.mxu0 0
      %785 = vmatpush1.bf16.msra.mxu0 %v740
      %786 = vmatprep.subr.bf16.mxu0 0
      %787 = vmatpush1.bf16.msra.mxu0 %v741
      %788 = vmatprep.subr.bf16.mxu0 0
      %789 = vmatpush1.bf16.msra.mxu0 %v742
      %790 = vmatprep.subr.bf16.mxu0 0
      %791 = vmatpush1.bf16.msra.mxu0 %v743
      %792 = vmatprep.mubr.bf16.mxu0 %v659
      %793 = vmatmul.mubr.bf16.gmra.mrb[0].mxu0 %v642
      %v794 = vpop.f32.mrb[0].mxu0
      %v795 = vadd.f32 0.0, %v794
      %v796 = vpop.f32.mrb[0].mxu0
      %v797 = vpop.f32.mrb[0].mxu0
      %v798 = vadd.f32 0.0, %v797
      %v799 = vpop.f32.mrb[0].mxu0
      %800 = vmatprep.mubr.bf16.mxu0 %v658
      %801 = vmatmul.mubr.bf16.gmra.mrb[0].mxu0 %v641
      %v802 = vpop.f32.mrb[0].mxu0
      %v803 = vadd.f32 0.0, %v802
      %v804 = vpop.f32.mrb[0].mxu0
      %v805 = vpop.f32.mrb[0].mxu0
      %v806 = vpop.f32.mrb[0].mxu0
      %807 = vdwg.mxu0
      %v808 = vadd.f32 %v567, %v795
      %v809 = vadd.f32 %v570, %v798
      %v810 = vadd.f32 %v575, %v803
      %v811 = vld [vmem:[%s165] sm:$0x88]
      %v812 = vld [vmem:[%s165 + $0x8] sm:$0xff]
      %v813 = vld [vmem:[%s165 + $0x10] sm:$0xff]
      %v814 = vld [vmem:[%s165 + $0x18] sm:$0x11]
      %s815 = scalar_lea.vmem %s1, 384
      %v816 = vld [vmem:[%s815] sm:$0xf]
      %v817 = vld [vmem:[%s815 + $0x4] sm:$0xf]
      %v818 = vld [vmem:[%s815 + $0x8] sm:$0xf]
      %v819 = vld [vmem:[%s815 + $0xc] sm:$0xf]
      %v820 = vld [vmem:[%s815 + $0x10] sm:$0xf]
      %v821 = vld [vmem:[%s815 + $0x14] sm:$0xf]
      %v822 = vld [vmem:[%s815 + $0x18] sm:$0xf]
      %v823 = vld [vmem:[%s815 + $0x1c] sm:$0xf]
      %v824 = vld [vmem:[%s815 + $0x20] sm:$0xf]
      %v825 = vld [vmem:[%s815 + $0x24] sm:$0xf]
      %v826 = vld [vmem:[%s815 + $0x28] sm:$0xf]
      %v827 = vld [vmem:[%s815 + $0x2c] sm:$0xf]
      %v828 = vld [vmem:[%s815 + $0x30] sm:$0xf]
      %v829 = vld [vmem:[%s815 + $0x34] sm:$0xf]
      %v830 = vld [vmem:[%s815 + $0x38] sm:$0xf]
      %v831 = vld [vmem:[%s815 + $0x3c] sm:$0xf]
      %v832 = vld [vmem:[%s815 + $0x40] sm:$0xf]
      %v833 = vld [vmem:[%s815 + $0x44] sm:$0xf]
      %v834 = vld [vmem:[%s815 + $0x48] sm:$0xf]
      %v835 = vld [vmem:[%s815 + $0x4c] sm:$0xf]
      %v836 = vld [vmem:[%s815 + $0x50] sm:$0xf]
      %v837 = vld [vmem:[%s815 + $0x54] sm:$0xf]
      %v838 = vld [vmem:[%s815 + $0x58] sm:$0xf]
      %v839 = vld [vmem:[%s815 + $0x5c] sm:$0xf]
      %v840 = vld [vmem:[%s815 + $0x60] sm:$0xf]
      %v841 = vld [vmem:[%s815 + $0x64] sm:$0xf]
      %v842 = vld [vmem:[%s815 + $0x68] sm:$0xf]
      %v843 = vld [vmem:[%s815 + $0x6c] sm:$0xf]
      %v844 = vld [vmem:[%s815 + $0x70] sm:$0xf]
      %v845 = vld [vmem:[%s815 + $0x74] sm:$0xf]
      %v846 = vld [vmem:[%s815 + $0x78] sm:$0xf]
      %v847 = vld [vmem:[%s815 + $0x7c] sm:$0xf]
      %v852 = vunpack.c.l.b16 %v811
      %v853 = vunpack.c.h.b16 %v811
      %v854 = vunpack.c.l.b16 %v812
      %v855 = vunpack.c.h.b16 %v812
      %v856 = vunpack.c.l.b16 %v813
      %v857 = vunpack.c.h.b16 %v813
      %v858 = vunpack.c.l.b16 %v814
      %v859 = vunpack.c.h.b16 %v814
      %v860 = vpack.c.b16 %v854, %v852
      %v861 = vpack.c.b16 %v855, %v853
      %v862 = vpack.c.b16 %v858, %v856
      %v863 = vpack.c.b16 %v859, %v857
      %vm864 = vcmask 1044480
      %v865 = vrot.slane %v860, 3
      %v866 = vrot.slane %v862, 3
      %v867 = vsel %vm864, %v865, %v866
      %v868 = vrot.slane %v861, 3
      %v869 = vrot.slane %v863, 3
      %v870 = vsel %vm864, %v868, %v869
      %v907 = vunpack.c.l.b16 %v816
      %v908 = vunpack.c.l.b16 %v817
      %v909 = vunpack.c.l.b16 %v818
      %v910 = vunpack.c.l.b16 %v819
      %v911 = vunpack.c.l.b16 %v820
      %v912 = vunpack.c.l.b16 %v821
      %v913 = vunpack.c.l.b16 %v822
      %v914 = vunpack.c.l.b16 %v823
      %v915 = vunpack.c.l.b16 %v824
      %v916 = vunpack.c.l.b16 %v825
      %v917 = vunpack.c.l.b16 %v826
      %v918 = vunpack.c.l.b16 %v827
      %v919 = vunpack.c.l.b16 %v828
      %v920 = vunpack.c.l.b16 %v829
      %v921 = vunpack.c.l.b16 %v830
      %v922 = vunpack.c.l.b16 %v831
      %v923 = vunpack.c.l.b16 %v832
      %v924 = vunpack.c.l.b16 %v833
      %v925 = vunpack.c.l.b16 %v834
      %v926 = vunpack.c.l.b16 %v835
      %v927 = vunpack.c.l.b16 %v836
      %v928 = vunpack.c.l.b16 %v837
      %v929 = vunpack.c.l.b16 %v838
      %v930 = vunpack.c.l.b16 %v839
      %v931 = vunpack.c.l.b16 %v840
      %v932 = vunpack.c.l.b16 %v841
      %v933 = vunpack.c.l.b16 %v842
      %v934 = vunpack.c.l.b16 %v843
      %v935 = vunpack.c.l.b16 %v844
      %v936 = vunpack.c.l.b16 %v845
      %v937 = vunpack.c.l.b16 %v846
      %v938 = vunpack.c.l.b16 %v847
      %v939 = vpack.c.b16 %v908, %v907
      %v940 = vpack.c.b16 %v910, %v909
      %v941 = vpack.c.b16 %v912, %v911
      %v942 = vpack.c.b16 %v914, %v913
      %v943 = vpack.c.b16 %v916, %v915
      %v944 = vpack.c.b16 %v918, %v917
      %v945 = vpack.c.b16 %v920, %v919
      %v946 = vpack.c.b16 %v922, %v921
      %v947 = vpack.c.b16 %v924, %v923
      %v948 = vpack.c.b16 %v926, %v925
      %v949 = vpack.c.b16 %v928, %v927
      %v950 = vpack.c.b16 %v930, %v929
      %v951 = vpack.c.b16 %v932, %v931
      %v952 = vpack.c.b16 %v934, %v933
      %v953 = vpack.c.b16 %v936, %v935
      %v954 = vpack.c.b16 %v938, %v937
      %971 = vmatprep.subr.bf16.mxu0 0
      %972 = vmatpush1.bf16.msra.mxu0 %v939
      %973 = vmatprep.subr.bf16.mxu0 0
      %974 = vmatpush1.bf16.msra.mxu0 %v940
      %975 = vmatprep.subr.bf16.mxu0 0
      %976 = vmatpush1.bf16.msra.mxu0 %v941
      %977 = vmatprep.subr.bf16.mxu0 0
      %978 = vmatpush1.bf16.msra.mxu0 %v942
      %979 = vmatprep.subr.bf16.mxu0 0
      %980 = vmatpush1.bf16.msra.mxu0 %v943
      %981 = vmatprep.subr.bf16.mxu0 0
      %982 = vmatpush1.bf16.msra.mxu0 %v944
      %983 = vmatprep.subr.bf16.mxu0 0
      %984 = vmatpush1.bf16.msra.mxu0 %v945
      %985 = vmatprep.subr.bf16.mxu0 0
      %986 = vmatpush1.bf16.msra.mxu0 %v946
      %987 = vmatprep.subr.bf16.mxu0 0
      %988 = vmatpush1.bf16.msra.mxu0 %v947
      %989 = vmatprep.subr.bf16.mxu0 0
      %990 = vmatpush1.bf16.msra.mxu0 %v948
      %991 = vmatprep.subr.bf16.mxu0 0
      %992 = vmatpush1.bf16.msra.mxu0 %v949
      %993 = vmatprep.subr.bf16.mxu0 0
      %994 = vmatpush1.bf16.msra.mxu0 %v950
      %995 = vmatprep.subr.bf16.mxu0 0
      %996 = vmatpush1.bf16.msra.mxu0 %v951
      %997 = vmatprep.subr.bf16.mxu0 0
      %998 = vmatpush1.bf16.msra.mxu0 %v952
      %999 = vmatprep.subr.bf16.mxu0 0
      %1000 = vmatpush1.bf16.msra.mxu0 %v953
      %1001 = vmatprep.subr.bf16.mxu0 0
      %1002 = vmatpush1.bf16.msra.mxu0 %v954
      %1003 = vmatprep.mubr.bf16.mxu0 %v870
      %1004 = vmatmul.mubr.bf16.gmra.mrb[0].mxu0 %v867
      %v1005 = vpop.f32.mrb[0].mxu0
      %v1006 = vadd.f32 0.0, %v1005
      %v1007 = vpop.f32.mrb[0].mxu0
      %v1008 = vpop.f32.mrb[0].mxu0
      %v1009 = vadd.f32 0.0, %v1008
      %v1010 = vpop.f32.mrb[0].mxu0
      %1011 = vmatprep.mubr.bf16.mxu0 %v869
      %1012 = vmatmul.mubr.bf16.gmra.mrb[0].mxu0 %v866
      %v1013 = vpop.f32.mrb[0].mxu0
      %v1014 = vadd.f32 0.0, %v1013
      %v1015 = vpop.f32.mrb[0].mxu0
      %v1016 = vpop.f32.mrb[0].mxu0
      %v1017 = vpop.f32.mrb[0].mxu0
      %1018 = vdwg.mxu0
      %v1019 = vadd.f32 %v808, %v1006
      %v1020 = vadd.f32 %v809, %v1009
      %v1021 = vadd.f32 %v810, %v1014
      %v1022 = vlaneseq
      %v1023 = vshrl.u32 %v1022, 7
      %v1024 = vadd.s32 %v1023, 8
      %v1025 = vadd.s32 %v1023, 16
      %vm1026 = vcmp.lt.s32.totalorder %v1023, 0
      %v1027 = vsub.s32 0, %v1023
      %v1028 = vsel %vm1026, %v1027, %v1023
      %v1029 = vmul.u32.u64.compose %v1028, 3435973837
      %v1030 = vextract.low.u32 %v1029
      %v1031 = vextract.high.u32 %v1029
      %v1032 = vshrl.u32 %v1031, 2
      %v1033 = vmul.u32 %v1032, 5
      %v1034 = vsub.s32 %v1028, %v1033
      %v1035 = vsub.s32 0, %v1034
      %v1036 = vsel %vm1026, %v1035, %v1034
      %vm1037 = vcmp.lt.s32.totalorder %v1024, 0
      %v1038 = vsub.s32 0, %v1024
      %v1039 = vsel %vm1037, %v1038, %v1024
      %v1040 = vmul.u32.u64.compose %v1039, 3435973837
      %v1041 = vextract.low.u32 %v1040
      %v1042 = vextract.high.u32 %v1040
      %v1043 = vshrl.u32 %v1042, 2
      %v1044 = vmul.u32 %v1043, 5
      %v1045 = vsub.s32 %v1039, %v1044
      %v1046 = vsub.s32 0, %v1045
      %v1047 = vsel %vm1037, %v1046, %v1045
      %vm1048 = vcmp.lt.s32.totalorder %v1025, 0
      %v1049 = vsub.s32 0, %v1025
      %v1050 = vsel %vm1048, %v1049, %v1025
      %v1051 = vmul.u32.u64.compose %v1050, 3435973837
      %v1052 = vextract.low.u32 %v1051
      %v1053 = vextract.high.u32 %v1051
      %v1054 = vshrl.u32 %v1053, 2
      %v1055 = vmul.u32 %v1054, 5
      %v1056 = vsub.s32 %v1050, %v1055
      %v1057 = vsub.s32 0, %v1056
      %v1058 = vsel %vm1048, %v1057, %v1056
      %vm1059 = vcmp.ne.s32.totalorder %v1036, 0
      %vm1060 = vcmp.ne.s32.totalorder %v1047, 0
      %vm1061 = vcmp.ne.s32.totalorder %v1058, 0
      %vm1062 = vcmp.lt.s32.totalorder %v1036, 0
      %vm1063 = vcmp.lt.s32.totalorder %v1047, 0
      %vm1064 = vcmp.lt.s32.totalorder %v1058, 0
      %vm1065 = vmand %vm1062, %vm1059
      %vm1066 = vmand %vm1063, %vm1060
      %vm1067 = vmand %vm1064, %vm1061
      %v1068 = vadd.s32 %v1036, 5
      %v1069 = vadd.s32 %v1047, 5
      %v1070 = vadd.s32 %v1058, 5
      %v1071 = vsel %vm1065, %v1068, %v1036
      %v1072 = vsel %vm1066, %v1069, %v1047
      %v1073 = vsel %vm1067, %v1070, %v1058
      %vm1074 = vcmp.lt.s32.totalorder %v1071, 4
      %vm1075 = vcmp.lt.s32.totalorder %v1072, 4
      %vm1076 = vcmp.lt.s32.totalorder %v1073, 4
      %v1077 = vsel %vm1074, 1, 0
      %v1078 = vsel %vm1075, 1, 0
      %v1079 = vsel %vm1076, 1, 0
      %vm1080 = vcmp.eq.s32.totalorder %v1077, 1
      %vm1081 = vcmp.eq.s32.totalorder %v1078, 1
      %vm1082 = vcmp.eq.s32.totalorder %v1079, 1
      %v1083 = vsel %vm1080, %v1019, 0.0
      %v1084 = vsel %vm1081, %v1020, 0.0
      %v1085 = vsel %vm1082, %v1021, 0.0
      %v1086 = vadd.f32 %v1083, %v1084
      %vm1087 = vcmask 1042432
      %v1088 = vsel %vm1087, %v1085, 0.0
      %v1089 = vadd.f32 %v1086, %v1088
      %v1090 = vrot.slane %v1089, 4
      %v1091 = vadd.f32 %v1089, %v1090
      %v1092 = vrot.slane %v1091, 2
      %v1093 = vadd.f32 %v1091, %v1092
      %v1094 = vrot.slane %v1093, 1
      %v1095 = vadd.f32 %v1093, %v1094
      %v1096 = vmul.f32 %v1095, 0.0625
      %v1097 = vmul.f32 %v1019, %v1019
      %v1098 = vmul.f32 %v1020, %v1020
      %v1099 = vmul.f32 %v1021, %v1021
      %v1100 = vsel %vm1080, %v1097, 0.0
      %v1101 = vsel %vm1081, %v1098, 0.0
      %v1102 = vsel %vm1082, %v1099, 0.0
      %v1103 = vadd.f32 %v1100, %v1101
      %v1104 = vsel %vm1087, %v1102, 0.0
      %v1105 = vadd.f32 %v1103, %v1104
      %v1106 = vrot.slane %v1105, 4
      %v1107 = vadd.f32 %v1105, %v1106
      %v1108 = vrot.slane %v1107, 2
      %v1109 = vadd.f32 %v1107, %v1108
      %v1110 = vrot.slane %v1109, 1
      %v1111 = vadd.f32 %v1109, %v1110
      %v1112 = vmul.f32 %v1111, 0.0625
      %v1113 = vmul.f32 %v1096, %v1096
      %v1114 = vsub.f32 %v1112, %v1113
      %v1115 = vsub.f32 %v1019, %v1096
      %v1116 = vsub.f32 %v1020, %v1096
      %v1117 = vsub.f32 %v1021, %v1096
      %v1118 = vadd.f32 %v1114, 1e-05
      %v1119 = vrsqrt.pop %v1118
      %v1120 = vmul.f32 %v1115, %v1119
      %v1121 = vmul.f32 %v1116, %v1119
      %v1122 = vmul.f32 %v1117, %v1119
      %vm1123 = vcmp.ge.f32.partialorder %v1120, 0.0
      %vm1124 = vcmp.ge.f32.partialorder %v1121, 0.0
      %vm1125 = vcmp.ge.f32.partialorder %v1122, 0.0
      %v1126 = vmul.f32 %v1120, 0.2
      %v1127 = vmul.f32 %v1121, 0.2
      %v1128 = vmul.f32 %v1122, 0.2
      %v1129 = vsel %vm1123, %v1120, %v1126
      %v1130 = vsel %vm1124, %v1121, %v1127
      %v1131 = vsel %vm1125, %v1122, %v1128
      %v1132 = vpack.c.bf16 %v1130, %v1129
      %v1133 = vpack.c.bf16 %v1131, %v1131
      %v1136 = vunpack.c.l.b16 %v1132
      %v1137 = vunpack.c.h.b16 %v1132
      %v1138 = vunpack.c.l.b16 %v1133
      %v1139 = vpack.c.b16 %v1136, %v1136
      %v1140 = vpack.c.b16 %v1137, %v1137
      %v1141 = vpack.c.b16 %v1138, %v1138
      %1145 = vst [vmem:[%s170] sm:$0xf] %v1139
      %1146 = vst [vmem:[%s170 + $0x4] sm:$0xf] %v1140
      %vm1147 = vcmask 1041408
      %vm1148 = vsmask.f32 1280
      %vm1149 = vmand %vm1147, %vm1148
      %v1150 = vld [vmem:[%s170 + $0x8] sm:$0x3]
      %v1151 = vsel %vm1149, %v1141, %v1150
      %1152 = vst [vmem:[%s170 + $0x8] sm:$0x3] %v1151
      %p1153 = scmp.lt.s32.totalorder %s14, 1
      %s1154 = scalar_select %p1153, %s14, 1
      %s1155 = smul.addr %s1154, 3
      %s1156 = smul.addr %s1155, 4
      %s1157 = scalar_lea.vmem %s3, %s1156
      // Predicated region
      $region33: #{discriminator_forward.5} parent=31 // pred_check
        %p1158 = pneg %p100
      $region34: #{discriminator_forward.5} parent=31 // pred_check_branch
        %1160 = sbr.rel (%p1158) target = $region36
      $region35: #{discriminator_forward.5} parent=31 // pred_region
        _
      $region36: #{discriminator_forward.5} parent=31 // pred_fallthru
        _
    $region32: #{discriminator_forward.5} parent=5 // pred_fallthru
      _
    %p1161 = scmp.le.s32.totalorder 2, %s9
    // Predicated region
    $region37: #{discriminator_forward.5} parent=5 // pred_check
      %p1162 = pneg %p1161
    $region38: #{discriminator_forward.5} parent=5 // pred_check_branch
      %1164 = sbr.rel (%p1162) target = $region40
    $region39: #{discriminator_forward.5} parent=5 // pred_region
      %s1165 = ssub.s32 %s9, 2
      // Predicated region
      $region41: #{discriminator_forward.5} parent=39 // pred_check
        %p1166 = pneg %p106
      $region42: #{discriminator_forward.5} parent=39 // pred_check_branch
        %1168 = sbr.rel (%p1166) target = $region44
      $region43: #{discriminator_forward.5} parent=39 // pred_region
        %p1169 = scmp.lt.s32.totalorder %s15, 1
        %s1170 = scalar_select %p1169, %s15, 1
        %s1171 = smul.addr %s1170, 3
        %s1172 = smul.addr %s1171, 4
        %s1173 = scalar_lea.vmem %s3, %s1172
      $region44: #{discriminator_forward.5} parent=39 // pred_fallthru
        _
    $region40: #{discriminator_forward.5} parent=5 // pred_fallthru
      _
  $region6: #{discriminator_forward.5} parent=0 // loop_footer
    %s13 = sadd.s32 1, %s9
  $region7: #{discriminator_forward.5} parent=0 // loop_footer_branch
    %8 = sbr.rel target = $region3
  $region8: #{discriminator_forward.5} parent=0 // loop_exit
    _

// kernel: discriminator_forward.6
$region0: #{discriminator_forward.6}
  #allocation0 [shape = 'u32[]', space=smem, size = 0x4, offset = 0x4, fixed_abs, tag = 'smem constant byte address 0x4 - core index']
  #allocation1 [shape = 'u32[144,128]{1,0:T(1,128)}', space=vmem, size = 0x12000, scoped, tag = 'internal scratch']
  %s0 = inlined_call_operand.vmem [shape: bf16[2,9,512], index: 0, kind: input, shape index: {}]
  %s1 = inlined_call_operand.vmem [shape: bf16[4,512,256], index: 1, kind: input, shape index: {}]
  %s2 = inlined_call_operand.vmem [shape: f32[1,256], index: 2, kind: input, shape index: {}]
  %s3 = inlined_call_operand.vmem [shape: bf16[2,5,256], index: 3, kind: output, shape index: {}]
  %s4 = sld [smem:[#allocation0]]
  $region45: #{discriminator_forward.6} parent=0
    _
  %s6 = ssub.s32 1, %s4
  %s7 = scalar_select 0, %s6, %s4
  loop: start=0, step=1, limit=4
  $region2: #{discriminator_forward.6} parent=0 // loop_pre_header
    _
  $region3: #{discriminator_forward.6} parent=0 // loop_header
    %s9 = sphi 0, %s13
    %p10 = scmp.ge.s32.totalorder %s9, 4
    %s19 = sphi 0, %s21
    %s22 = sphi 0, %s19
    %s23 = sphi 0, %s22
    %s39 = sphi 0, %s23
    %s43 = sphi 0, %s43
    %s45 = sphi 0, %s43
    %s46 = sphi 0, %s45
    %s60 = sphi 0, %s46
    %s64 = sphi 0, %s64
    %s66 = sphi 0, %s64
    %s67 = sphi 0, %s66
    %s81 = sphi 0, %s67
    %s87 = sphi 0, %s89
    %s90 = sphi 0, %s87
    %s91 = sphi 0, %s90
    %s107 = sphi 0, %s91
  $region4: #{discriminator_forward.6} parent=0 // loop_header_branch
    %12 = sbr.rel (%p10) target = $region8
  $region5: #{discriminator_forward.6} parent=0 // loop_body
    %s14 = ssub.s32 %s9, 1
    %s15 = ssub.s32 %s9, 2
    %s16 = sadd.s32 %s9, 1
    %s17 = ssub.s32 %s9, %s16
    %p18 = scmp.eq.s32.totalorder %s17, 0
    %s20 = sadd.s32 %s19, 1
    %s21 = scalar_select %p18, %s19, %s20
    %p24 = pneg %p18
    %p25 = scmp.eq.s32.totalorder %s9, 1
    %p26 = por %p24, %p25
    %p27 = scmp.ne.s32.totalorder %s19, %s22
    %p28 = scmp.eq.s32.totalorder %s9, 0
    %p29 = por %p27, %p28
    %p30 = scmp.ne.s32.totalorder %s19, %s22
    %p31 = scmp.eq.s32.totalorder %s14, 1
    %p32 = por %p30, %p31
    %p33 = scmp.ne.s32.totalorder %s22, %s23
    %p34 = scmp.eq.s32.totalorder %s14, 0
    %p35 = por %p33, %p34
    %p36 = scmp.ne.s32.totalorder %s22, %s23
    %p37 = scmp.eq.s32.totalorder %s15, 1
    %p38 = por %p36, %p37
    %p40 = scmp.ne.s32.totalorder %s23, %s39
    %p41 = scmp.eq.s32.totalorder %s15, 0
    %p42 = por %p40, %p41
    %s44 = sadd.s32 %s43, 1
    %p47 = scmp.eq.s32.totalorder %s9, 1
    %p48 = scmp.ne.s32.totalorder %s43, %s45
    %p49 = scmp.eq.s32.totalorder %s9, 0
    %p50 = por %p48, %p49
    %p51 = scmp.ne.s32.totalorder %s43, %s45
    %p52 = scmp.eq.s32.totalorder %s14, 1
    %p53 = por %p51, %p52
    %p54 = scmp.ne.s32.totalorder %s45, %s46
    %p55 = scmp.eq.s32.totalorder %s14, 0
    %p56 = por %p54, %p55
    %p57 = scmp.ne.s32.totalorder %s45, %s46
    %p58 = scmp.eq.s32.totalorder %s15, 1
    %p59 = por %p57, %p58
    %p61 = scmp.ne.s32.totalorder %s46, %s60
    %p62 = scmp.eq.s32.totalorder %s15, 0
    %p63 = por %p61, %p62
    %s65 = sadd.s32 %s64, 1
    %p68 = scmp.eq.s32.totalorder %s9, 1
    %p69 = scmp.ne.s32.totalorder %s64, %s66
    %p70 = scmp.eq.s32.totalorder %s9, 0
    %p71 = por %p69, %p70
    %p72 = scmp.ne.s32.totalorder %s64, %s66
    %p73 = scmp.eq.s32.totalorder %s14, 1
    %p74 = por %p72, %p73
    %p75 = scmp.ne.s32.totalorder %s66, %s67
    %p76 = scmp.eq.s32.totalorder %s14, 0
    %p77 = por %p75, %p76
    %p78 = scmp.ne.s32.totalorder %s66, %s67
    %p79 = scmp.eq.s32.totalorder %s15, 1
    %p80 = por %p78, %p79
    %p82 = scmp.ne.s32.totalorder %s67, %s81
    %p83 = scmp.eq.s32.totalorder %s15, 0
    %p84 = por %p82, %p83
    %s85 = ssub.s32 %s9, %s16
    %p86 = scmp.eq.s32.totalorder %s85, 0
    %s88 = sadd.s32 %s87, 1
    %s89 = scalar_select %p86, %s87, %s88
    %p92 = pneg %p86
    %p93 = scmp.eq.s32.totalorder %s9, 1
    %p94 = por %p92, %p93
    %p95 = scmp.ne.s32.totalorder %s87, %s90
    %p96 = scmp.eq.s32.totalorder %s9, 0
    %p97 = por %p95, %p96
    %p98 = scmp.ne.s32.totalorder %s87, %s90
    %p99 = scmp.eq.s32.totalorder %s14, 1
    %p100 = por %p98, %p99
    %p101 = scmp.ne.s32.totalorder %s90, %s91
    %p102 = scmp.eq.s32.totalorder %s14, 0
    %p103 = por %p101, %p102
    %p104 = scmp.ne.s32.totalorder %s90, %s91
    %p105 = scmp.eq.s32.totalorder %s15, 1
    %p106 = por %p104, %p105
    %p108 = scmp.ne.s32.totalorder %s91, %s107
    %p109 = scmp.eq.s32.totalorder %s15, 0
    %p110 = por %p108, %p109
    %p111 = scmp.le.s32.totalorder 1, %s9
    %p112 = scmp.lt.s32.totalorder %s9, 3
    %p113 = pnand %p111, %p112
    %p114 = pneg %p113
    // Predicated region
    $region9: #{discriminator_forward.6} parent=5 // pred_check
      _
    $region10: #{discriminator_forward.6} parent=5 // pred_check_branch
      %116 = sbr.rel (%p113) target = $region12
    $region11: #{discriminator_forward.6} parent=5 // pred_region
      %s117 = ssub.s32 %s9, 1
      // Predicated region
      $region13: #{discriminator_forward.6} parent=11 // pred_check
        %p118 = pneg %p56
      $region14: #{discriminator_forward.6} parent=11 // pred_check_branch
        %120 = sbr.rel (%p118) target = $region16
      $region15: #{discriminator_forward.6} parent=11 // pred_region
        _
      $region16: #{discriminator_forward.6} parent=11 // pred_fallthru
        _
      // Predicated region
      $region17: #{discriminator_forward.6} parent=11 // pred_check
        %p121 = pneg %p77
      $region18: #{discriminator_forward.6} parent=11 // pred_check_branch
        %123 = sbr.rel (%p121) target = $region20
      $region19: #{discriminator_forward.6} parent=11 // pred_region
        _
      $region20: #{discriminator_forward.6} parent=11 // pred_fallthru
        _
    $region12: #{discriminator_forward.6} parent=5 // pred_fallthru
      _
    %p124 = scmp.lt.s32.totalorder %s9, 2
    // Predicated region
    $region21: #{discriminator_forward.6} parent=5 // pred_check
      %p125 = pneg %p124
    $region22: #{discriminator_forward.6} parent=5 // pred_check_branch
      %127 = sbr.rel (%p125) target = $region24
    $region23: #{discriminator_forward.6} parent=5 // pred_region
      // Predicated region
      $region25: #{discriminator_forward.6} parent=23 // pred_check
        %p128 = pneg %p29
      $region26: #{discriminator_forward.6} parent=23 // pred_check_branch
        %130 = sbr.rel (%p128) target = $region28
      $region27: #{discriminator_forward.6} parent=23 // pred_region
        %p131 = scmp.lt.s32.totalorder %s9, 1
        %s132 = scalar_select %p131, %s9, 1
        %s133 = smul.addr %s132, 8
        %s134 = smul.addr %s133, 4
        %s135 = scalar_lea.vmem %s0, %s134
      $region28: #{discriminator_forward.6} parent=23 // pred_fallthru
        _
    $region24: #{discriminator_forward.6} parent=5 // pred_fallthru
      _
    %p136 = scmp.le.s32.totalorder 1, %s9
    %p137 = scmp.lt.s32.totalorder %s9, 3
    %p138 = pnand %p136, %p137
    %p139 = pneg %p138
    // Predicated region
    $region29: #{discriminator_forward.6} parent=5 // pred_check
      _
    $region30: #{discriminator_forward.6} parent=5 // pred_check_branch
      %141 = sbr.rel (%p138) target = $region32
    $region31: #{discriminator_forward.6} parent=5 // pred_region
      %s142 = ssub.s32 %s9, 1
      %p143 = scmp.lt.s32.totalorder %s14, 1
      %s144 = scalar_select %p143, %s14, 1
      %s145 = smul.addr %s144, 8
      %s146 = smul.addr %s145, 4
      %s147 = scalar_lea.vmem %s0, %s146
      %p148 = pneg %p35
      %p149 = pneg %p32
      %p150 = pneg %p56
      %p151 = pneg %p53
      %p152 = pneg %p77
      %p153 = pneg %p74
      %p154 = pneg %p103
      %p155 = pneg %p100
      %p156 = scmp.lt.s32.totalorder %s14, 1
      %s157 = scalar_select %p156, %s14, 1
      %s158 = smul.addr %s157, 2
      %s159 = smul.addr %s158, 4
      %s160 = scalar_lea.vmem %s3, %s159
      %p161 = scmp.lt.s32.totalorder %s14, 1
      %s162 = scalar_select %p161, %s14, 1
      %s163 = smul.addr %s162, 8
      %s164 = smul.addr %s163, 4
      %s165 = scalar_lea.vmem %s0, %s164
      %p166 = scmp.lt.s32.totalorder %s14, 1
      %s167 = scalar_select %p166, %s14, 1
      %s168 = smul.addr %s167, 2
      %s169 = smul.addr %s168, 4
      %s170 = scalar_lea.vmem %s3, %s169
      %v171 = vld [vmem:[%s165] sm:$0x77]
      %v172 = vld [vmem:[%s165 + $0x8] sm:$0x77]
      %v173 = vld [vmem:[%s1] sm:$0xff]
      %v174 = vld [vmem:[%s1 + $0x8] sm:$0xff]
      %v175 = vld [vmem:[%s1 + $0x10] sm:$0xff]
      %v176 = vld [vmem:[%s1 + $0x18] sm:$0xff]
      %v177 = vld [vmem:[%s1 + $0x20] sm:$0xff]
      %v178 = vld [vmem:[%s1 + $0x28] sm:$0xff]
      %v179 = vld [vmem:[%s1 + $0x30] sm:$0xff]
      %v180 = vld [vmem:[%s1 + $0x38] sm:$0xff]
      %v181 = vld [vmem:[%s1 + $0x40] sm:$0xff]
      %v182 = vld [vmem:[%s1 + $0x48] sm:$0xff]
      %v183 = vld [vmem:[%s1 + $0x50] sm:$0xff]
      %v184 = vld [vmem:[%s1 + $0x58] sm:$0xff]
      %v185 = vld [vmem:[%s1 + $0x60] sm:$0xff]
      %v186 = vld [vmem:[%s1 + $0x68] sm:$0xff]
      %v187 = vld [vmem:[%s1 + $0x70] sm:$0xff]
      %v188 = vld [vmem:[%s1 + $0x78] sm:$0xff]
      %v189 = vld [vmem:[%s1 + $0x80] sm:$0xff]
      %v190 = vld [vmem:[%s1 + $0x88] sm:$0xff]
      %v191 = vld [vmem:[%s1 + $0x90] sm:$0xff]
      %v192 = vld [vmem:[%s1 + $0x98] sm:$0xff]
      %v193 = vld [vmem:[%s1 + $0xa0] sm:$0xff]
      %v194 = vld [vmem:[%s1 + $0xa8] sm:$0xff]
      %v195 = vld [vmem:[%s1 + $0xb0] sm:$0xff]
      %v196 = vld [vmem:[%s1 + $0xb8] sm:$0xff]
      %v197 = vld [vmem:[%s1 + $0xc0] sm:$0xff]
      %v198 = vld [vmem:[%s1 + $0xc8] sm:$0xff]
      %v199 = vld [vmem:[%s1 + $0xd0] sm:$0xff]
      %v200 = vld [vmem:[%s1 + $0xd8] sm:$0xff]
      %v201 = vld [vmem:[%s1 + $0xe0] sm:$0xff]
      %v202 = vld [vmem:[%s1 + $0xe8] sm:$0xff]
      %v203 = vld [vmem:[%s1 + $0xf0] sm:$0xff]
      %v204 = vld [vmem:[%s1 + $0xf8] sm:$0xff]
      %v205 = vld [vmem:[%s1 + $0x100] sm:$0xff]
      %v206 = vld [vmem:[%s1 + $0x108] sm:$0xff]
      %v207 = vld [vmem:[%s1 + $0x110] sm:$0xff]
      %v208 = vld [vmem:[%s1 + $0x118] sm:$0xff]
      %v209 = vld [vmem:[%s1 + $0x120] sm:$0xff]
      %v210 = vld [vmem:[%s1 + $0x128] sm:$0xff]
      %v211 = vld [vmem:[%s1 + $0x130] sm:$0xff]
      %v212 = vld [vmem:[%s1 + $0x138] sm:$0xff]
      %v213 = vld [vmem:[%s1 + $0x140] sm:$0xff]
      %v214 = vld [vmem:[%s1 + $0x148] sm:$0xff]
      %v215 = vld [vmem:[%s1 + $0x150] sm:$0xff]
      %v216 = vld [vmem:[%s1 + $0x158] sm:$0xff]
      %v217 = vld [vmem:[%s1 + $0x160] sm:$0xff]
      %v218 = vld [vmem:[%s1 + $0x168] sm:$0xff]
      %v219 = vld [vmem:[%s1 + $0x170] sm:$0xff]
      %v220 = vld [vmem:[%s1 + $0x178] sm:$0xff]
      %v221 = vld [vmem:[%s1 + $0x180] sm:$0xff]
      %v222 = vld [vmem:[%s1 + $0x188] sm:$0xff]
      %v223 = vld [vmem:[%s1 + $0x190] sm:$0xff]
      %v224 = vld [vmem:[%s1 + $0x198] sm:$0xff]
      %v225 = vld [vmem:[%s1 + $0x1a0] sm:$0xff]
      %v226 = vld [vmem:[%s1 + $0x1a8] sm:$0xff]
      %v227 = vld [vmem:[%s1 + $0x1b0] sm:$0xff]
      %v228 = vld [vmem:[%s1 + $0x1b8] sm:$0xff]
      %v229 = vld [vmem:[%s1 + $0x1c0] sm:$0xff]
      %v230 = vld [vmem:[%s1 + $0x1c8] sm:$0xff]
      %v231 = vld [vmem:[%s1 + $0x1d0] sm:$0xff]
      %v232 = vld [vmem:[%s1 + $0x1d8] sm:$0xff]
      %v233 = vld [vmem:[%s1 + $0x1e0] sm:$0xff]
      %v234 = vld [vmem:[%s1 + $0x1e8] sm:$0xff]
      %v235 = vld [vmem:[%s1 + $0x1f0] sm:$0xff]
      %v236 = vld [vmem:[%s1 + $0x1f8] sm:$0xff]
      %s237 = scalar_lea.vmem %s1, 512
      %v238 = vld [vmem:[%s237] sm:$0xff]
      %v239 = vld [vmem:[%s237 + $0x8] sm:$0xff]
      %v240 = vld [vmem:[%s237 + $0x10] sm:$0xff]
      %v241 = vld [vmem:[%s237 + $0x18] sm:$0xff]
      %v242 = vld [vmem:[%s237 + $0x20] sm:$0xff]
      %v243 = vld [vmem:[%s237 + $0x28] sm:$0xff]
      %v244 = vld [vmem:[%s237 + $0x30] sm:$0xff]
      %v245 = vld [vmem:[%s237 + $0x38] sm:$0xff]
      %v246 = vld [vmem:[%s237 + $0x40] sm:$0xff]
      %v247 = vld [vmem:[%s237 + $0x48] sm:$0xff]
      %v248 = vld [vmem:[%s237 + $0x50] sm:$0xff]
      %v249 = vld [vmem:[%s237 + $0x58] sm:$0xff]
      %v250 = vld [vmem:[%s237 + $0x60] sm:$0xff]
      %v251 = vld [vmem:[%s237 + $0x68] sm:$0xff]
      %v252 = vld [vmem:[%s237 + $0x70] sm:$0xff]
      %v253 = vld [vmem:[%s237 + $0x78] sm:$0xff]
      %v254 = vld [vmem:[%s237 + $0x80] sm:$0xff]
      %v255 = vld [vmem:[%s237 + $0x88] sm:$0xff]
      %v256 = vld [vmem:[%s237 + $0x90] sm:$0xff]
      %v257 = vld [vmem:[%s237 + $0x98] sm:$0xff]
      %v258 = vld [vmem:[%s237 + $0xa0] sm:$0xff]
      %v259 = vld [vmem:[%s237 + $0xa8] sm:$0xff]
      %v260 = vld [vmem:[%s237 + $0xb0] sm:$0xff]
      %v261 = vld [vmem:[%s237 + $0xb8] sm:$0xff]
      %v262 = vld [vmem:[%s237 + $0xc0] sm:$0xff]
      %v263 = vld [vmem:[%s237 + $0xc8] sm:$0xff]
      %v264 = vld [vmem:[%s237 + $0xd0] sm:$0xff]
      %v265 = vld [vmem:[%s237 + $0xd8] sm:$0xff]
      %v266 = vld [vmem:[%s237 + $0xe0] sm:$0xff]
      %v267 = vld [vmem:[%s237 + $0xe8] sm:$0xff]
      %v268 = vld [vmem:[%s237 + $0xf0] sm:$0xff]
      %v269 = vld [vmem:[%s237 + $0xf8] sm:$0xff]
      %v270 = vld [vmem:[%s237 + $0x100] sm:$0xff]
      %v271 = vld [vmem:[%s237 + $0x108] sm:$0xff]
      %v272 = vld [vmem:[%s237 + $0x110] sm:$0xff]
      %v273 = vld [vmem:[%s237 + $0x118] sm:$0xff]
      %v274 = vld [vmem:[%s237 + $0x120] sm:$0xff]
      %v275 = vld [vmem:[%s237 + $0x128] sm:$0xff]
      %v276 = vld [vmem:[%s237 + $0x130] sm:$0xff]
      %v277 = vld [vmem:[%s237 + $0x138] sm:$0xff]
      %v278 = vld [vmem:[%s237 + $0x140] sm:$0xff]
      %v279 = vld [vmem:[%s237 + $0x148] sm:$0xff]
      %v280 = vld [vmem:[%s237 + $0x150] sm:$0xff]
      %v281 = vld [vmem:[%s237 + $0x158] sm:$0xff]
      %v282 = vld [vmem:[%s237 + $0x160] sm:$0xff]
      %v283 = vld [vmem:[%s237 + $0x168] sm:$0xff]
      %v284 = vld [vmem:[%s237 + $0x170] sm:$0xff]
      %v285 = vld [vmem:[%s237 + $0x178] sm:$0xff]
      %v286 = vld [vmem:[%s237 + $0x180] sm:$0xff]
      %v287 = vld [vmem:[%s237 + $0x188] sm:$0xff]
      %v288 = vld [vmem:[%s237 + $0x190] sm:$0xff]
      %v289 = vld [vmem:[%s237 + $0x198] sm:$0xff]
      %v290 = vld [vmem:[%s237 + $0x1a0] sm:$0xff]
      %v291 = vld [vmem:[%s237 + $0x1a8] sm:$0xff]
      %v292 = vld [vmem:[%s237 + $0x1b0] sm:$0xff]
      %v293 = vld [vmem:[%s237 + $0x1b8] sm:$0xff]
      %v294 = vld [vmem:[%s237 + $0x1c0] sm:$0xff]
      %v295 = vld [vmem:[%s237 + $0x1c8] sm:$0xff]
      %v296 = vld [vmem:[%s237 + $0x1d0] sm:$0xff]
      %v297 = vld [vmem:[%s237 + $0x1d8] sm:$0xff]
      %v298 = vld [vmem:[%s237 + $0x1e0] sm:$0xff]
      %v299 = vld [vmem:[%s237 + $0x1e8] sm:$0xff]
      %v300 = vld [vmem:[%s237 + $0x1f0] sm:$0xff]
      %v301 = vld [vmem:[%s237 + $0x1f8] sm:$0xff]
      %v304 = vunpack.c.l.b16 %v171
      %v305 = vunpack.c.h.b16 %v171
      %v306 = vunpack.c.l.b16 %v172
      %v307 = vunpack.c.h.b16 %v172
      %v308 = vpack.c.b16 %v304, %v304
      %v309 = vpack.c.b16 %v305, %v305
      %v310 = vpack.c.b16 %v306, %v306
      %v311 = vpack.c.b16 %v307, %v307
      %v313 = vshrl.u32 %v308, 16
      %v315 = vshll.u32 %v308, 16
      %v317 = vrot.slane %v315, 1
      %v318 = vor.u32 %v313, %v317
      %v320 = vshrl.u32 %v309, 16
      %v322 = vshll.u32 %v309, 16
      %v324 = vrot.slane %v322, 1
      %v325 = vor.u32 %v320, %v324
      %v327 = vshrl.u32 %v310, 16
      %v329 = vshll.u32 %v310, 16
      %v331 = vrot.slane %v329, 1
      %v332 = vor.u32 %v327, %v331
      %v334 = vshrl.u32 %v311, 16
      %v336 = vshll.u32 %v311, 16
      %v338 = vrot.slane %v336, 1
      %v339 = vor.u32 %v334, %v338
      %v408 = vunpack.c.l.b16 %v238
      %v409 = vunpack.c.h.b16 %v238
      %v410 = vunpack.c.l.b16 %v239
      %v411 = vunpack.c.h.b16 %v239
      %v412 = vunpack.c.l.b16 %v240
      %v413 = vunpack.c.h.b16 %v240
      %v414 = vunpack.c.l.b16 %v241
      %v415 = vunpack.c.h.b16 %v241
      %v416 = vunpack.c.l.b16 %v242
      %v417 = vunpack.c.h.b16 %v242
      %v418 = vunpack.c.l.b16 %v243
      %v419 = vunpack.c.h.b16 %v243
      %v420 = vunpack.c.l.b16 %v244
      %v421 = vunpack.c.h.b16 %v244
      %v422 = vunpack.c.l.b16 %v245
      %v423 = vunpack.c.h.b16 %v245
      %v424 = vunpack.c.l.b16 %v246
      %v425 = vunpack.c.h.b16 %v246
      %v426 = vunpack.c.l.b16 %v247
      %v427 = vunpack.c.h.b16 %v247
      %v428 = vunpack.c.l.b16 %v248
      %v429 = vunpack.c.h.b16 %v248
      %v430 = vunpack.c.l.b16 %v249
      %v431 = vunpack.c.h.b16 %v249
      %v432 = vunpack.c.l.b16 %v250
      %v433 = vunpack.c.h.b16 %v250
      %v434 = vunpack.c.l.b16 %v251
      %v435 = vunpack.c.h.b16 %v251
      %v436 = vunpack.c.l.b16 %v252
      %v437 = vunpack.c.h.b16 %v252
      %v438 = vunpack.c.l.b16 %v253
      %v439 = vunpack.c.h.b16 %v253
      %v440 = vunpack.c.l.b16 %v254
      %v441 = vunpack.c.h.b16 %v254
      %v442 = vunpack.c.l.b16 %v255
      %v443 = vunpack.c.h.b16 %v255
      %v444 = vunpack.c.l.b16 %v256
      %v445 = vunpack.c.h.b16 %v256
      %v446 = vunpack.c.l.b16 %v257
      %v447 = vunpack.c.h.b16 %v257
      %v448 = vunpack.c.l.b16 %v258
      %v449 = vunpack.c.h.b16 %v258
      %v450 = vunpack.c.l.b16 %v259
      %v451 = vunpack.c.h.b16 %v259
      %v452 = vunpack.c.l.b16 %v260
      %v453 = vunpack.c.h.b16 %v260
      %v454 = vunpack.c.l.b16 %v261
      %v455 = vunpack.c.h.b16 %v261
      %v456 = vunpack.c.l.b16 %v262
      %v457 = vunpack.c.h.b16 %v262
      %v458 = vunpack.c.l.b16 %v263
      %v459 = vunpack.c.h.b16 %v263
      %v460 = vunpack.c.l.b16 %v264
      %v461 = vunpack.c.h.b16 %v264
      %v462 = vunpack.c.l.b16 %v265
      %v463 = vunpack.c.h.b16 %v265
      %v464 = vunpack.c.l.b16 %v266
      %v465 = vunpack.c.h.b16 %v266
      %v466 = vunpack.c.l.b16 %v267
      %v467 = vunpack.c.h.b16 %v267
      %v468 = vunpack.c.l.b16 %v268
      %v469 = vunpack.c.h.b16 %v268
      %v470 = vunpack.c.l.b16 %v269
      %v471 = vunpack.c.h.b16 %v269
      %v472 = vunpack.c.l.b16 %v270
      %v473 = vunpack.c.h.b16 %v270
      %v474 = vunpack.c.l.b16 %v271
      %v475 = vunpack.c.h.b16 %v271
      %v476 = vunpack.c.l.b16 %v272
      %v477 = vunpack.c.h.b16 %v272
      %v478 = vunpack.c.l.b16 %v273
      %v479 = vunpack.c.h.b16 %v273
      %v480 = vunpack.c.l.b16 %v274
      %v481 = vunpack.c.h.b16 %v274
      %v482 = vunpack.c.l.b16 %v275
      %v483 = vunpack.c.h.b16 %v275
      %v484 = vunpack.c.l.b16 %v276
      %v485 = vunpack.c.h.b16 %v276
      %v486 = vunpack.c.l.b16 %v277
      %v487 = vunpack.c.h.b16 %v277
      %v488 = vunpack.c.l.b16 %v278
      %v489 = vunpack.c.h.b16 %v278
      %v490 = vunpack.c.l.b16 %v279
      %v491 = vunpack.c.h.b16 %v279
      %v492 = vunpack.c.l.b16 %v280
      %v493 = vunpack.c.h.b16 %v280
      %v494 = vunpack.c.l.b16 %v281
      %v495 = vunpack.c.h.b16 %v281
      %v496 = vunpack.c.l.b16 %v282
      %v497 = vunpack.c.h.b16 %v282
      %v498 = vunpack.c.l.b16 %v283
      %v499 = vunpack.c.h.b16 %v283
      %v500 = vunpack.c.l.b16 %v284
      %v501 = vunpack.c.h.b16 %v284
      %v502 = vunpack.c.l.b16 %v285
      %v503 = vunpack.c.h.b16 %v285
      %v504 = vunpack.c.l.b16 %v286
      %v505 = vunpack.c.h.b16 %v286
      %v506 = vunpack.c.l.b16 %v287
      %v507 = vunpack.c.h.b16 %v287
      %v508 = vunpack.c.l.b16 %v288
      %v509 = vunpack.c.h.b16 %v288
      %v510 = vunpack.c.l.b16 %v289
      %v511 = vunpack.c.h.b16 %v289
      %v512 = vunpack.c.l.b16 %v290
      %v513 = vunpack.c.h.b16 %v290
      %v514 = vunpack.c.l.b16 %v291
      %v515 = vunpack.c.h.b16 %v291
      %v516 = vunpack.c.l.b16 %v292
      %v517 = vunpack.c.h.b16 %v292
      %v518 = vunpack.c.l.b16 %v293
      %v519 = vunpack.c.h.b16 %v293
      %v520 = vunpack.c.l.b16 %v294
      %v521 = vunpack.c.h.b16 %v294
      %v522 = vunpack.c.l.b16 %v295
      %v523 = vunpack.c.h.b16 %v295
      %v524 = vunpack.c.l.b16 %v296
      %v525 = vunpack.c.h.b16 %v296
      %v526 = vunpack.c.l.b16 %v297
      %v527 = vunpack.c.h.b16 %v297
      %v528 = vunpack.c.l.b16 %v298
      %v529 = vunpack.c.h.b16 %v298
      %v530 = vunpack.c.l.b16 %v299
      %v531 = vunpack.c.h.b16 %v299
      %v532 = vunpack.c.l.b16 %v300
      %v533 = vunpack.c.h.b16 %v300
      %v534 = vunpack.c.l.b16 %v301
      %v535 = vunpack.c.h.b16 %v301
      %v536 = vpack.c.b16 %v410, %v408
      %v537 = vpack.c.b16 %v411, %v409
      %v538 = vpack.c.b16 %v414, %v412
      %v539 = vpack.c.b16 %v415, %v413
      %v540 = vpack.c.b16 %v418, %v416
      %v541 = vpack.c.b16 %v419, %v417
      %v542 = vpack.c.b16 %v422, %v420
      %v543 = vpack.c.b16 %v423, %v421
      %v544 = vpack.c.b16 %v426, %v424
      %v545 = vpack.c.b16 %v427, %v425
      %v546 = vpack.c.b16 %v430, %v428
      %v547 = vpack.c.b16 %v431, %v429
      %v548 = vpack.c.b16 %v434, %v432
      %v549 = vpack.c.b16 %v435, %v433
      %v550 = vpack.c.b16 %v438, %v436
      %v551 = vpack.c.b16 %v439, %v437
      %v552 = vpack.c.b16 %v442, %v440
      %v553 = vpack.c.b16 %v443, %v441
      %v554 = vpack.c.b16 %v446, %v444
      %v555 = vpack.c.b16 %v447, %v445
      %v556 = vpack.c.b16 %v450, %v448
      %v557 = vpack.c.b16 %v451, %v449
      %v558 = vpack.c.b16 %v454, %v452
      %v559 = vpack.c.b16 %v455, %v453
      %v560 = vpack.c.b16 %v458, %v456
      %v561 = vpack.c.b16 %v459, %v457
      %v562 = vpack.c.b16 %v462, %v460
      %v563 = vpack.c.b16 %v463, %v461
      %v564 = vpack.c.b16 %v466, %v464
      %v565 = vpack.c.b16 %v467, %v465
      %v566 = vpack.c.b16 %v470, %v468
      %v567 = vpack.c.b16 %v471, %v469
      %v568 = vpack.c.b16 %v474, %v472
      %v569 = vpack.c.b16 %v475, %v473
      %v570 = vpack.c.b16 %v478, %v476
      %v571 = vpack.c.b16 %v479, %v477
      %v572 = vpack.c.b16 %v482, %v480
      %v573 = vpack.c.b16 %v483, %v481
      %v574 = vpack.c.b16 %v486, %v484
      %v575 = vpack.c.b16 %v487, %v485
      %v576 = vpack.c.b16 %v490, %v488
      %v577 = vpack.c.b16 %v491, %v489
      %v578 = vpack.c.b16 %v494, %v492
      %v579 = vpack.c.b16 %v495, %v493
      %v580 = vpack.c.b16 %v498, %v496
      %v581 = vpack.c.b16 %v499, %v497
      %v582 = vpack.c.b16 %v502, %v500
      %v583 = vpack.c.b16 %v503, %v501
      %v584 = vpack.c.b16 %v506, %v504
      %v585 = vpack.c.b16 %v507, %v505
      %v586 = vpack.c.b16 %v510, %v508
      %v587 = vpack.c.b16 %v511, %v509
      %v588 = vpack.c.b16 %v514, %v512
      %v589 = vpack.c.b16 %v515, %v513
      %v590 = vpack.c.b16 %v518, %v516
      %v591 = vpack.c.b16 %v519, %v517
      %v592 = vpack.c.b16 %v522, %v520
      %v593 = vpack.c.b16 %v523, %v521
      %v594 = vpack.c.b16 %v526, %v524
      %v595 = vpack.c.b16 %v527, %v525
      %v596 = vpack.c.b16 %v530, %v528
      %v597 = vpack.c.b16 %v531, %v529
      %v598 = vpack.c.b16 %v534, %v532
      %v599 = vpack.c.b16 %v535, %v533
      %664 = vmatprep.subr.bf16.mxu0 %v537
      %665 = vmatpush1.bf16.msra.mxu0 %v536
      %666 = vmatprep.subr.bf16.mxu0 %v539
      %667 = vmatpush1.bf16.msra.mxu0 %v538
      %668 = vmatprep.subr.bf16.mxu0 %v541
      %669 = vmatpush1.bf16.msra.mxu0 %v540
      %670 = vmatprep.subr.bf16.mxu0 %v543
      %671 = vmatpush1.bf16.msra.mxu0 %v542
      %672 = vmatprep.subr.bf16.mxu0 %v545
      %673 = vmatpush1.bf16.msra.mxu0 %v544
      %674 = vmatprep.subr.bf16.mxu0 %v547
      %675 = vmatpush1.bf16.msra.mxu0 %v546
      %676 = vmatprep.subr.bf16.mxu0 %v549
      %677 = vmatpush1.bf16.msra.mxu0 %v548
      %678 = vmatprep.subr.bf16.mxu0 %v551
      %679 = vmatpush1.bf16.msra.mxu0 %v550
      %680 = vmatprep.subr.bf16.mxu0 %v553
      %681 = vmatpush1.bf16.msra.mxu0 %v552
      %682 = vmatprep.subr.bf16.mxu0 %v555
      %683 = vmatpush1.bf16.msra.mxu0 %v554
      %684 = vmatprep.subr.bf16.mxu0 %v557
      %685 = vmatpush1.bf16.msra.mxu0 %v556
      %686 = vmatprep.subr.bf16.mxu0 %v559
      %687 = vmatpush1.bf16.msra.mxu0 %v558
      %688 = vmatprep.subr.bf16.mxu0 %v561
      %689 = vmatpush1.bf16.msra.mxu0 %v560
      %690 = vmatprep.subr.bf16.mxu0 %v563
      %691 = vmatpush1.bf16.msra.mxu0 %v562
      %692 = vmatprep.subr.bf16.mxu0 %v565
      %693 = vmatpush1.bf16.msra.mxu0 %v564
      %694 = vmatprep.subr.bf16.mxu0 %v567
      %695 = vmatpush1.bf16.msra.mxu0 %v566
      %696 = vmatprep.mubr.bf16.mxu0 %v325
      %697 = vmatmul.mubr.bf16.gmra.mrb[0].mxu0 %v318
      %v698 = vpop.f32.mrb[0].mxu0
      %v699 = vadd.f32 0.0, %v698
      %v700 = vpop.f32.mrb[0].mxu0
      %v701 = vadd.f32 0.0, %v700
      %v702 = vpop.f32.mrb[0].mxu0
      %v703 = vpop.f32.mrb[0].mxu0
      %704 = vdwg.mxu0
      %705 = vmatprep.subr.bf16.mxu0 %v569
      %706 = vmatpush1.bf16.msra.mxu0 %v568
      %707 = vmatprep.subr.bf16.mxu0 %v571
      %708 = vmatpush1.bf16.msra.mxu0 %v570
      %709 = vmatprep.subr.bf16.mxu0 %v573
      %710 = vmatpush1.bf16.msra.mxu0 %v572
      %711 = vmatprep.subr.bf16.mxu0 %v575
      %712 = vmatpush1.bf16.msra.mxu0 %v574
      %713 = vmatprep.subr.bf16.mxu0 %v577
      %714 = vmatpush1.bf16.msra.mxu0 %v576
      %715 = vmatprep.subr.bf16.mxu0 %v579
      %716 = vmatpush1.bf16.msra.mxu0 %v578
      %717 = vmatprep.subr.bf16.mxu0 %v581
      %718 = vmatpush1.bf16.msra.mxu0 %v580
      %719 = vmatprep.subr.bf16.mxu0 %v583
      %720 = vmatpush1.bf16.msra.mxu0 %v582
      %721 = vmatprep.subr.bf16.mxu0 %v585
      %722 = vmatpush1.bf16.msra.mxu0 %v584
      %723 = vmatprep.subr.bf16.mxu0 %v587
      %724 = vmatpush1.bf16.msra.mxu0 %v586
      %725 = vmatprep.subr.bf16.mxu0 %v589
      %726 = vmatpush1.bf16.msra.mxu0 %v588
      %727 = vmatprep.subr.bf16.mxu0 %v591
      %728 = vmatpush1.bf16.msra.mxu0 %v590
      %729 = vmatprep.subr.bf16.mxu0 %v593
      %730 = vmatpush1.bf16.msra.mxu0 %v592
      %731 = vmatprep.subr.bf16.mxu0 %v595
      %732 = vmatpush1.bf16.msra.mxu0 %v594
      %733 = vmatprep.subr.bf16.mxu0 %v597
      %734 = vmatpush1.bf16.msra.mxu0 %v596
      %735 = vmatprep.subr.bf16.mxu0 %v599
      %736 = vmatpush1.bf16.msra.mxu0 %v598
      %737 = vmatprep.mubr.bf16.mxu0 %v339
      %738 = vmatmul.mubr.bf16.gmra.mrb[0].mxu0 %v332
      %v739 = vpop.f32.mrb[0].mxu0
      %v740 = vadd.f32 %v699, %v739
      %v741 = vpop.f32.mrb[0].mxu0
      %v742 = vadd.f32 %v701, %v741
      %v743 = vpop.f32.mrb[0].mxu0
      %v744 = vpop.f32.mrb[0].mxu0
      %745 = vdwg.mxu0
      %v814 = vunpack.c.l.b16 %v173
      %v815 = vunpack.c.h.b16 %v173
      %v816 = vunpack.c.l.b16 %v174
      %v817 = vunpack.c.h.b16 %v174
      %v818 = vunpack.c.l.b16 %v175
      %v819 = vunpack.c.h.b16 %v175
      %v820 = vunpack.c.l.b16 %v176
      %v821 = vunpack.c.h.b16 %v176
      %v822 = vunpack.c.l.b16 %v177
      %v823 = vunpack.c.h.b16 %v177
      %v824 = vunpack.c.l.b16 %v178
      %v825 = vunpack.c.h.b16 %v178
      %v826 = vunpack.c.l.b16 %v179
      %v827 = vunpack.c.h.b16 %v179
      %v828 = vunpack.c.l.b16 %v180
      %v829 = vunpack.c.h.b16 %v180
      %v830 = vunpack.c.l.b16 %v181
      %v831 = vunpack.c.h.b16 %v181
      %v832 = vunpack.c.l.b16 %v182
      %v833 = vunpack.c.h.b16 %v182
      %v834 = vunpack.c.l.b16 %v183
      %v835 = vunpack.c.h.b16 %v183
      %v836 = vunpack.c.l.b16 %v184
      %v837 = vunpack.c.h.b16 %v184
      %v838 = vunpack.c.l.b16 %v185
      %v839 = vunpack.c.h.b16 %v185
      %v840 = vunpack.c.l.b16 %v186
      %v841 = vunpack.c.h.b16 %v186
      %v842 = vunpack.c.l.b16 %v187
      %v843 = vunpack.c.h.b16 %v187
      %v844 = vunpack.c.l.b16 %v188
      %v845 = vunpack.c.h.b16 %v188
      %v846 = vunpack.c.l.b16 %v189
      %v847 = vunpack.c.h.b16 %v189
      %v848 = vunpack.c.l.b16 %v190
      %v849 = vunpack.c.h.b16 %v190
      %v850 = vunpack.c.l.b16 %v191
      %v851 = vunpack.c.h.b16 %v191
      %v852 = vunpack.c.l.b16 %v192
      %v853 = vunpack.c.h.b16 %v192
      %v854 = vunpack.c.l.b16 %v193
      %v855 = vunpack.c.h.b16 %v193
      %v856 = vunpack.c.l.b16 %v194
      %v857 = vunpack.c.h.b16 %v194
      %v858 = vunpack.c.l.b16 %v195
      %v859 = vunpack.c.h.b16 %v195
      %v860 = vunpack.c.l.b16 %v196
      %v861 = vunpack.c.h.b16 %v196
      %v862 = vunpack.c.l.b16 %v197
      %v863 = vunpack.c.h.b16 %v197
      %v864 = vunpack.c.l.b16 %v198
      %v865 = vunpack.c.h.b16 %v198
      %v866 = vunpack.c.l.b16 %v199
      %v867 = vunpack.c.h.b16 %v199
      %v868 = vunpack.c.l.b16 %v200
      %v869 = vunpack.c.h.b16 %v200
      %v870 = vunpack.c.l.b16 %v201
      %v871 = vunpack.c.h.b16 %v201
      %v872 = vunpack.c.l.b16 %v202
      %v873 = vunpack.c.h.b16 %v202
      %v874 = vunpack.c.l.b16 %v203
      %v875 = vunpack.c.h.b16 %v203
      %v876 = vunpack.c.l.b16 %v204
      %v877 = vunpack.c.h.b16 %v204
      %v878 = vunpack.c.l.b16 %v205
      %v879 = vunpack.c.h.b16 %v205
      %v880 = vunpack.c.l.b16 %v206
      %v881 = vunpack.c.h.b16 %v206
      %v882 = vunpack.c.l.b16 %v207
      %v883 = vunpack.c.h.b16 %v207
      %v884 = vunpack.c.l.b16 %v208
      %v885 = vunpack.c.h.b16 %v208
      %v886 = vunpack.c.l.b16 %v209
      %v887 = vunpack.c.h.b16 %v209
      %v888 = vunpack.c.l.b16 %v210
      %v889 = vunpack.c.h.b16 %v210
      %v890 = vunpack.c.l.b16 %v211
      %v891 = vunpack.c.h.b16 %v211
      %v892 = vunpack.c.l.b16 %v212
      %v893 = vunpack.c.h.b16 %v212
      %v894 = vunpack.c.l.b16 %v213
      %v895 = vunpack.c.h.b16 %v213
      %v896 = vunpack.c.l.b16 %v214
      %v897 = vunpack.c.h.b16 %v214
      %v898 = vunpack.c.l.b16 %v215
      %v899 = vunpack.c.h.b16 %v215
      %v900 = vunpack.c.l.b16 %v216
      %v901 = vunpack.c.h.b16 %v216
      %v902 = vunpack.c.l.b16 %v217
      %v903 = vunpack.c.h.b16 %v217
      %v904 = vunpack.c.l.b16 %v218
      %v905 = vunpack.c.h.b16 %v218
      %v906 = vunpack.c.l.b16 %v219
      %v907 = vunpack.c.h.b16 %v219
      %v908 = vunpack.c.l.b16 %v220
      %v909 = vunpack.c.h.b16 %v220
      %v910 = vunpack.c.l.b16 %v221
      %v911 = vunpack.c.h.b16 %v221
      %v912 = vunpack.c.l.b16 %v222
      %v913 = vunpack.c.h.b16 %v222
      %v914 = vunpack.c.l.b16 %v223
      %v915 = vunpack.c.h.b16 %v223
      %v916 = vunpack.c.l.b16 %v224
      %v917 = vunpack.c.h.b16 %v224
      %v918 = vunpack.c.l.b16 %v225
      %v919 = vunpack.c.h.b16 %v225
      %v920 = vunpack.c.l.b16 %v226
      %v921 = vunpack.c.h.b16 %v226
      %v922 = vunpack.c.l.b16 %v227
      %v923 = vunpack.c.h.b16 %v227
      %v924 = vunpack.c.l.b16 %v228
      %v925 = vunpack.c.h.b16 %v228
      %v926 = vunpack.c.l.b16 %v229
      %v927 = vunpack.c.h.b16 %v229
      %v928 = vunpack.c.l.b16 %v230
      %v929 = vunpack.c.h.b16 %v230
      %v930 = vunpack.c.l.b16 %v231
      %v931 = vunpack.c.h.b16 %v231
      %v932 = vunpack.c.l.b16 %v232
      %v933 = vunpack.c.h.b16 %v232
      %v934 = vunpack.c.l.b16 %v233
      %v935 = vunpack.c.h.b16 %v233
      %v936 = vunpack.c.l.b16 %v234
      %v937 = vunpack.c.h.b16 %v234
      %v938 = vunpack.c.l.b16 %v235
      %v939 = vunpack.c.h.b16 %v235
      %v940 = vunpack.c.l.b16 %v236
      %v941 = vunpack.c.h.b16 %v236
      %v942 = vpack.c.b16 %v816, %v814
      %v943 = vpack.c.b16 %v817, %v815
      %v944 = vpack.c.b16 %v820, %v818
      %v945 = vpack.c.b16 %v821, %v819
      %v946 = vpack.c.b16 %v824, %v822
      %v947 = vpack.c.b16 %v825, %v823
      %v948 = vpack.c.b16 %v828, %v826
      %v949 = vpack.c.b16 %v829, %v827
      %v950 = vpack.c.b16 %v832, %v830
      %v951 = vpack.c.b16 %v833, %v831
      %v952 = vpack.c.b16 %v836, %v834
      %v953 = vpack.c.b16 %v837, %v835
      %v954 = vpack.c.b16 %v840, %v838
      %v955 = vpack.c.b16 %v841, %v839
      %v956 = vpack.c.b16 %v844, %v842
      %v957 = vpack.c.b16 %v845, %v843
      %v958 = vpack.c.b16 %v848, %v846
      %v959 = vpack.c.b16 %v849, %v847
      %v960 = vpack.c.b16 %v852, %v850
      %v961 = vpack.c.b16 %v853, %v851
      %v962 = vpack.c.b16 %v856, %v854
      %v963 = vpack.c.b16 %v857, %v855
      %v964 = vpack.c.b16 %v860, %v858
      %v965 = vpack.c.b16 %v861, %v859
      %v966 = vpack.c.b16 %v864, %v862
      %v967 = vpack.c.b16 %v865, %v863
      %v968 = vpack.c.b16 %v868, %v866
      %v969 = vpack.c.b16 %v869, %v867
      %v970 = vpack.c.b16 %v872, %v870
      %v971 = vpack.c.b16 %v873, %v871
      %v972 = vpack.c.b16 %v876, %v874
      %v973 = vpack.c.b16 %v877, %v875
      %v974 = vpack.c.b16 %v880, %v878
      %v975 = vpack.c.b16 %v881, %v879
      %v976 = vpack.c.b16 %v884, %v882
      %v977 = vpack.c.b16 %v885, %v883
      %v978 = vpack.c.b16 %v888, %v886
      %v979 = vpack.c.b16 %v889, %v887
      %v980 = vpack.c.b16 %v892, %v890
      %v981 = vpack.c.b16 %v893, %v891
      %v982 = vpack.c.b16 %v896, %v894
      %v983 = vpack.c.b16 %v897, %v895
      %v984 = vpack.c.b16 %v900, %v898
      %v985 = vpack.c.b16 %v901, %v899
      %v986 = vpack.c.b16 %v904, %v902
      %v987 = vpack.c.b16 %v905, %v903
      %v988 = vpack.c.b16 %v908, %v906
      %v989 = vpack.c.b16 %v909, %v907
      %v990 = vpack.c.b16 %v912, %v910
      %v991 = vpack.c.b16 %v913, %v911
      %v992 = vpack.c.b16 %v916, %v914
      %v993 = vpack.c.b16 %v917, %v915
      %v994 = vpack.c.b16 %v920, %v918
      %v995 = vpack.c.b16 %v921, %v919
      %v996 = vpack.c.b16 %v924, %v922
      %v997 = vpack.c.b16 %v925, %v923
      %v998 = vpack.c.b16 %v928, %v926
      %v999 = vpack.c.b16 %v929, %v927
      %v1000 = vpack.c.b16 %v932, %v930
      %v1001 = vpack.c.b16 %v933, %v931
      %v1002 = vpack.c.b16 %v936, %v934
      %v1003 = vpack.c.b16 %v937, %v935
      %v1004 = vpack.c.b16 %v940, %v938
      %v1005 = vpack.c.b16 %v941, %v939
      %1070 = vmatprep.subr.bf16.mxu0 %v943
      %1071 = vmatpush1.bf16.msra.mxu0 %v942
      %1072 = vmatprep.subr.bf16.mxu0 %v945
      %1073 = vmatpush1.bf16.msra.mxu0 %v944
      %1074 = vmatprep.subr.bf16.mxu0 %v947
      %1075 = vmatpush1.bf16.msra.mxu0 %v946
      %1076 = vmatprep.subr.bf16.mxu0 %v949
      %1077 = vmatpush1.bf16.msra.mxu0 %v948
      %1078 = vmatprep.subr.bf16.mxu0 %v951
      %1079 = vmatpush1.bf16.msra.mxu0 %v950
      %1080 = vmatprep.subr.bf16.mxu0 %v953
      %1081 = vmatpush1.bf16.msra.mxu0 %v952
      %1082 = vmatprep.subr.bf16.mxu0 %v955
      %1083 = vmatpush1.bf16.msra.mxu0 %v954
      %1084 = vmatprep.subr.bf16.mxu0 %v957
      %1085 = vmatpush1.bf16.msra.mxu0 %v956
      %1086 = vmatprep.subr.bf16.mxu0 %v959
      %1087 = vmatpush1.bf16.msra.mxu0 %v958
      %1088 = vmatprep.subr.bf16.mxu0 %v961
      %1089 = vmatpush1.bf16.msra.mxu0 %v960
      %1090 = vmatprep.subr.bf16.mxu0 %v963
      %1091 = vmatpush1.bf16.msra.mxu0 %v962
      %1092 = vmatprep.subr.bf16.mxu0 %v965
      %1093 = vmatpush1.bf16.msra.mxu0 %v964
      %1094 = vmatprep.subr.bf16.mxu0 %v967
      %1095 = vmatpush1.bf16.msra.mxu0 %v966
      %1096 = vmatprep.subr.bf16.mxu0 %v969
      %1097 = vmatpush1.bf16.msra.mxu0 %v968
      %1098 = vmatprep.subr.bf16.mxu0 %v971
      %1099 = vmatpush1.bf16.msra.mxu0 %v970
      %1100 = vmatprep.subr.bf16.mxu0 %v973
      %1101 = vmatpush1.bf16.msra.mxu0 %v972
      %1102 = vmatprep.mubr.bf16.mxu0 %v309
      %1103 = vmatmul.mubr.bf16.gmra.mrb[0].mxu0 %v308
      %v1104 = vpop.f32.mrb[0].mxu0
      %v1105 = vadd.f32 %v740, %v1104
      %v1106 = vpop.f32.mrb[0].mxu0
      %v1107 = vadd.f32 %v742, %v1106
      %v1108 = vpop.f32.mrb[0].mxu0
      %v1109 = vpop.f32.mrb[0].mxu0
      %1110 = vdwg.mxu0
      %1111 = vmatprep.subr.bf16.mxu0 %v975
      %1112 = vmatpush1.bf16.msra.mxu0 %v974
      %1113 = vmatprep.subr.bf16.mxu0 %v977
      %1114 = vmatpush1.bf16.msra.mxu0 %v976
      %1115 = vmatprep.subr.bf16.mxu0 %v979
      %1116 = vmatpush1.bf16.msra.mxu0 %v978
      %1117 = vmatprep.subr.bf16.mxu0 %v981
      %1118 = vmatpush1.bf16.msra.mxu0 %v980
      %1119 = vmatprep.subr.bf16.mxu0 %v983
      %1120 = vmatpush1.bf16.msra.mxu0 %v982
      %1121 = vmatprep.subr.bf16.mxu0 %v985
      %1122 = vmatpush1.bf16.msra.mxu0 %v984
      %1123 = vmatprep.subr.bf16.mxu0 %v987
      %1124 = vmatpush1.bf16.msra.mxu0 %v986
      %1125 = vmatprep.subr.bf16.mxu0 %v989
      %1126 = vmatpush1.bf16.msra.mxu0 %v988
      %1127 = vmatprep.subr.bf16.mxu0 %v991
      %1128 = vmatpush1.bf16.msra.mxu0 %v990
      %1129 = vmatprep.subr.bf16.mxu0 %v993
      %1130 = vmatpush1.bf16.msra.mxu0 %v992
      %1131 = vmatprep.subr.bf16.mxu0 %v995
      %1132 = vmatpush1.bf16.msra.mxu0 %v994
      %1133 = vmatprep.subr.bf16.mxu0 %v997
      %1134 = vmatpush1.bf16.msra.mxu0 %v996
      %1135 = vmatprep.subr.bf16.mxu0 %v999
      %1136 = vmatpush1.bf16.msra.mxu0 %v998
      %1137 = vmatprep.subr.bf16.mxu0 %v1001
      %1138 = vmatpush1.bf16.msra.mxu0 %v1000
      %1139 = vmatprep.subr.bf16.mxu0 %v1003
      %1140 = vmatpush1.bf16.msra.mxu0 %v1002
      %1141 = vmatprep.subr.bf16.mxu0 %v1005
      %1142 = vmatpush1.bf16.msra.mxu0 %v1004
      %1143 = vmatprep.mubr.bf16.mxu0 %v311
      %1144 = vmatmul.mubr.bf16.gmra.mrb[0].mxu0 %v310
      %v1145 = vpop.f32.mrb[0].mxu0
      %v1146 = vadd.f32 %v1105, %v1145
      %v1147 = vpop.f32.mrb[0].mxu0
      %v1148 = vadd.f32 %v1107, %v1147
      %v1149 = vpop.f32.mrb[0].mxu0
      %v1150 = vpop.f32.mrb[0].mxu0
      %1151 = vdwg.mxu0
      %v1152 = vld [vmem:[%s165] sm:$0xee]
      %v1153 = vld [vmem:[%s165 + $0x8] sm:$0xee]
      %s1154 = scalar_lea.vmem %s1, 1024
      %v1155 = vld [vmem:[%s1154] sm:$0xff]
      %v1156 = vld [vmem:[%s1154 + $0x8] sm:$0xff]
      %v1157 = vld [vmem:[%s1154 + $0x10] sm:$0xff]
      %v1158 = vld [vmem:[%s1154 + $0x18] sm:$0xff]
      %v1159 = vld [vmem:[%s1154 + $0x20] sm:$0xff]
      %v1160 = vld [vmem:[%s1154 + $0x28] sm:$0xff]
      %v1161 = vld [vmem:[%s1154 + $0x30] sm:$0xff]
      %v1162 = vld [vmem:[%s1154 + $0x38] sm:$0xff]
      %v1163 = vld [vmem:[%s1154 + $0x40] sm:$0xff]
      %v1164 = vld [vmem:[%s1154 + $0x48] sm:$0xff]
      %v1165 = vld [vmem:[%s1154 + $0x50] sm:$0xff]
      %v1166 = vld [vmem:[%s1154 + $0x58] sm:$0xff]
      %v1167 = vld [vmem:[%s1154 + $0x60] sm:$0xff]
      %v1168 = vld [vmem:[%s1154 + $0x68] sm:$0xff]
      %v1169 = vld [vmem:[%s1154 + $0x70] sm:$0xff]
      %v1170 = vld [vmem:[%s1154 + $0x78] sm:$0xff]
      %v1171 = vld [vmem:[%s1154 + $0x80] sm:$0xff]
      %v1172 = vld [vmem:[%s1154 + $0x88] sm:$0xff]
      %v1173 = vld [vmem:[%s1154 + $0x90] sm:$0xff]
      %v1174 = vld [vmem:[%s1154 + $0x98] sm:$0xff]
      %v1175 = vld [vmem:[%s1154 + $0xa0] sm:$0xff]
      %v1176 = vld [vmem:[%s1154 + $0xa8] sm:$0xff]
      %v1177 = vld [vmem:[%s1154 + $0xb0] sm:$0xff]
      %v1178 = vld [vmem:[%s1154 + $0xb8] sm:$0xff]
      %v1179 = vld [vmem:[%s1154 + $0xc0] sm:$0xff]
      %v1180 = vld [vmem:[%s1154 + $0xc8] sm:$0xff]
      %v1181 = vld [vmem:[%s1154 + $0xd0] sm:$0xff]
      %v1182 = vld [vmem:[%s1154 + $0xd8] sm:$0xff]
      %v1183 = vld [vmem:[%s1154 + $0xe0] sm:$0xff]
      %v1184 = vld [vmem:[%s1154 + $0xe8] sm:$0xff]
      %v1185 = vld [vmem:[%s1154 + $0xf0] sm:$0xff]
      %v1186 = vld [vmem:[%s1154 + $0xf8] sm:$0xff]
      %v1187 = vld [vmem:[%s1154 + $0x100] sm:$0xff]
      %v1188 = vld [vmem:[%s1154 + $0x108] sm:$0xff]
      %v1189 = vld [vmem:[%s1154 + $0x110] sm:$0xff]
      %v1190 = vld [vmem:[%s1154 + $0x118] sm:$0xff]
      %v1191 = vld [vmem:[%s1154 + $0x120] sm:$0xff]
      %v1192 = vld [vmem:[%s1154 + $0x128] sm:$0xff]
      %v1193 = vld [vmem:[%s1154 + $0x130] sm:$0xff]
      %v1194 = vld [vmem:[%s1154 + $0x138] sm:$0xff]
      %v1195 = vld [vmem:[%s1154 + $0x140] sm:$0xff]
      %v1196 = vld [vmem:[%s1154 + $0x148] sm:$0xff]
      %v1197 = vld [vmem:[%s1154 + $0x150] sm:$0xff]
      %v1198 = vld [vmem:[%s1154 + $0x158] sm:$0xff]
      %v1199 = vld [vmem:[%s1154 + $0x160] sm:$0xff]
      %v1200 = vld [vmem:[%s1154 + $0x168] sm:$0xff]
      %v1201 = vld [vmem:[%s1154 + $0x170] sm:$0xff]
      %v1202 = vld [vmem:[%s1154 + $0x178] sm:$0xff]
      %v1203 = vld [vmem:[%s1154 + $0x180] sm:$0xff]
      %v1204 = vld [vmem:[%s1154 + $0x188] sm:$0xff]
      %v1205 = vld [vmem:[%s1154 + $0x190] sm:$0xff]
      %v1206 = vld [vmem:[%s1154 + $0x198] sm:$0xff]
      %v1207 = vld [vmem:[%s1154 + $0x1a0] sm:$0xff]
      %v1208 = vld [vmem:[%s1154 + $0x1a8] sm:$0xff]
      %v1209 = vld [vmem:[%s1154 + $0x1b0] sm:$0xff]
      %v1210 = vld [vmem:[%s1154 + $0x1b8] sm:$0xff]
      %v1211 = vld [vmem:[%s1154 + $0x1c0] sm:$0xff]
      %v1212 = vld [vmem:[%s1154 + $0x1c8] sm:$0xff]
      %v1213 = vld [vmem:[%s1154 + $0x1d0] sm:$0xff]
      %v1214 = vld [vmem:[%s1154 + $0x1d8] sm:$0xff]
      %v1215 = vld [vmem:[%s1154 + $0x1e0] sm:$0xff]
      %v1216 = vld [vmem:[%s1154 + $0x1e8] sm:$0xff]
      %v1217 = vld [vmem:[%s1154 + $0x1f0] sm:$0xff]
      %v1218 = vld [vmem:[%s1154 + $0x1f8] sm:$0xff]
      %v1221 = vunpack.c.l.b16 %v1152
      %v1222 = vunpack.c.h.b16 %v1152
      %v1223 = vunpack.c.l.b16 %v1153
      %v1224 = vunpack.c.h.b16 %v1153
      %v1225 = vpack.c.b16 %v1221, %v1221
      %v1226 = vpack.c.b16 %v1222, %v1222
      %v1227 = vpack.c.b16 %v1223, %v1223
      %v1228 = vpack.c.b16 %v1224, %v1224
      %v1230 = vshrl.u32 %v1225, 16
      %v1232 = vrot.slane %v1230, 1
      %v1233 = vshll.u32 %v1225, 16
      %v1235 = vrot.slane %v1233, 2
      %v1236 = vor.u32 %v1232, %v1235
      %v1238 = vshrl.u32 %v1226, 16
      %v1240 = vrot.slane %v1238, 1
      %v1241 = vshll.u32 %v1226, 16
      %v1243 = vrot.slane %v1241, 2
      %v1244 = vor.u32 %v1240, %v1243
      %v1246 = vshrl.u32 %v1227, 16
      %v1248 = vrot.slane %v1246, 1
      %v1249 = vshll.u32 %v1227, 16
      %v1251 = vrot.slane %v1249, 2
      %v1252 = vor.u32 %v1248, %v1251
      %v1254 = vshrl.u32 %v1228, 16
      %v1256 = vrot.slane %v1254, 1
      %v1257 = vshll.u32 %v1228, 16
      %v1259 = vrot.slane %v1257, 2
      %v1260 = vor.u32 %v1256, %v1259
      %v1329 = vunpack.c.l.b16 %v1155
      %v1330 = vunpack.c.h.b16 %v1155
      %v1331 = vunpack.c.l.b16 %v1156
      %v1332 = vunpack.c.h.b16 %v1156
      %v1333 = vunpack.c.l.b16 %v1157
      %v1334 = vunpack.c.h.b16 %v1157
      %v1335 = vunpack.c.l.b16 %v1158
      %v1336 = vunpack.c.h.b16 %v1158
      %v1337 = vunpack.c.l.b16 %v1159
      %v1338 = vunpack.c.h.b16 %v1159
      %v1339 = vunpack.c.l.b16 %v1160
      %v1340 = vunpack.c.h.b16 %v1160
      %v1341 = vunpack.c.l.b16 %v1161
      %v1342 = vunpack.c.h.b16 %v1161
      %v1343 = vunpack.c.l.b16 %v1162
      %v1344 = vunpack.c.h.b16 %v1162
      %v1345 = vunpack.c.l.b16 %v1163
      %v1346 = vunpack.c.h.b16 %v1163
      %v1347 = vunpack.c.l.b16 %v1164
      %v1348 = vunpack.c.h.b16 %v1164
      %v1349 = vunpack.c.l.b16 %v1165
      %v1350 = vunpack.c.h.b16 %v1165
      %v1351 = vunpack.c.l.b16 %v1166
      %v1352 = vunpack.c.h.b16 %v1166
      %v1353 = vunpack.c.l.b16 %v1167
      %v1354 = vunpack.c.h.b16 %v1167
      %v1355 = vunpack.c.l.b16 %v1168
      %v1356 = vunpack.c.h.b16 %v1168
      %v1357 = vunpack.c.l.b16 %v1169
      %v1358 = vunpack.c.h.b16 %v1169
      %v1359 = vunpack.c.l.b16 %v1170
      %v1360 = vunpack.c.h.b16 %v1170
      %v1361 = vunpack.c.l.b16 %v1171
      %v1362 = vunpack.c.h.b16 %v1171
      %v1363 = vunpack.c.l.b16 %v1172
      %v1364 = vunpack.c.h.b16 %v1172
      %v1365 = vunpack.c.l.b16 %v1173
      %v1366 = vunpack.c.h.b16 %v1173
      %v1367 = vunpack.c.l.b16 %v1174
      %v1368 = vunpack.c.h.b16 %v1174
      %v1369 = vunpack.c.l.b16 %v1175
      %v1370 = vunpack.c.h.b16 %v1175
      %v1371 = vunpack.c.l.b16 %v1176
      %v1372 = vunpack.c.h.b16 %v1176
      %v1373 = vunpack.c.l.b16 %v1177
      %v1374 = vunpack.c.h.b16 %v1177
      %v1375 = vunpack.c.l.b16 %v1178
      %v1376 = vunpack.c.h.b16 %v1178
      %v1377 = vunpack.c.l.b16 %v1179
      %v1378 = vunpack.c.h.b16 %v1179
      %v1379 = vunpack.c.l.b16 %v1180
      %v1380 = vunpack.c.h.b16 %v1180
      %v1381 = vunpack.c.l.b16 %v1181
      %v1382 = vunpack.c.h.b16 %v1181
      %v1383 = vunpack.c.l.b16 %v1182
      %v1384 = vunpack.c.h.b16 %v1182
      %v1385 = vunpack.c.l.b16 %v1183
      %v1386 = vunpack.c.h.b16 %v1183
      %v1387 = vunpack.c.l.b16 %v1184
      %v1388 = vunpack.c.h.b16 %v1184
      %v1389 = vunpack.c.l.b16 %v1185
      %v1390 = vunpack.c.h.b16 %v1185
      %v1391 = vunpack.c.l.b16 %v1186
      %v1392 = vunpack.c.h.b16 %v1186
      %v1393 = vunpack.c.l.b16 %v1187
      %v1394 = vunpack.c.h.b16 %v1187
      %v1395 = vunpack.c.l.b16 %v1188
      %v1396 = vunpack.c.h.b16 %v1188
      %v1397 = vunpack.c.l.b16 %v1189
      %v1398 = vunpack.c.h.b16 %v1189
      %v1399 = vunpack.c.l.b16 %v1190
      %v1400 = vunpack.c.h.b16 %v1190
      %v1401 = vunpack.c.l.b16 %v1191
      %v1402 = vunpack.c.h.b16 %v1191
      %v1403 = vunpack.c.l.b16 %v1192
      %v1404 = vunpack.c.h.b16 %v1192
      %v1405 = vunpack.c.l.b16 %v1193
      %v1406 = vunpack.c.h.b16 %v1193
      %v1407 = vunpack.c.l.b16 %v1194
      %v1408 = vunpack.c.h.b16 %v1194
      %v1409 = vunpack.c.l.b16 %v1195
      %v1410 = vunpack.c.h.b16 %v1195
      %v1411 = vunpack.c.l.b16 %v1196
      %v1412 = vunpack.c.h.b16 %v1196
      %v1413 = vunpack.c.l.b16 %v1197
      %v1414 = vunpack.c.h.b16 %v1197
      %v1415 = vunpack.c.l.b16 %v1198
      %v1416 = vunpack.c.h.b16 %v1198
      %v1417 = vunpack.c.l.b16 %v1199
      %v1418 = vunpack.c.h.b16 %v1199
      %v1419 = vunpack.c.l.b16 %v1200
      %v1420 = vunpack.c.h.b16 %v1200
      %v1421 = vunpack.c.l.b16 %v1201
      %v1422 = vunpack.c.h.b16 %v1201
      %v1423 = vunpack.c.l.b16 %v1202
      %v1424 = vunpack.c.h.b16 %v1202
      %v1425 = vunpack.c.l.b16 %v1203
      %v1426 = vunpack.c.h.b16 %v1203
      %v1427 = vunpack.c.l.b16 %v1204
      %v1428 = vunpack.c.h.b16 %v1204
      %v1429 = vunpack.c.l.b16 %v1205
      %v1430 = vunpack.c.h.b16 %v1205
      %v1431 = vunpack.c.l.b16 %v1206
      %v1432 = vunpack.c.h.b16 %v1206
      %v1433 = vunpack.c.l.b16 %v1207
      %v1434 = vunpack.c.h.b16 %v1207
      %v1435 = vunpack.c.l.b16 %v1208
      %v1436 = vunpack.c.h.b16 %v1208
      %v1437 = vunpack.c.l.b16 %v1209
      %v1438 = vunpack.c.h.b16 %v1209
      %v1439 = vunpack.c.l.b16 %v1210
      %v1440 = vunpack.c.h.b16 %v1210
      %v1441 = vunpack.c.l.b16 %v1211
      %v1442 = vunpack.c.h.b16 %v1211
      %v1443 = vunpack.c.l.b16 %v1212
      %v1444 = vunpack.c.h.b16 %v1212
      %v1445 = vunpack.c.l.b16 %v1213
      %v1446 = vunpack.c.h.b16 %v1213
      %v1447 = vunpack.c.l.b16 %v1214
      %v1448 = vunpack.c.h.b16 %v1214
      %v1449 = vunpack.c.l.b16 %v1215
      %v1450 = vunpack.c.h.b16 %v1215
      %v1451 = vunpack.c.l.b16 %v1216
      %v1452 = vunpack.c.h.b16 %v1216
      %v1453 = vunpack.c.l.b16 %v1217
      %v1454 = vunpack.c.h.b16 %v1217
      %v1455 = vunpack.c.l.b16 %v1218
      %v1456 = vunpack.c.h.b16 %v1218
      %v1457 = vpack.c.b16 %v1331, %v1329
      %v1458 = vpack.c.b16 %v1332, %v1330
      %v1459 = vpack.c.b16 %v1335, %v1333
      %v1460 = vpack.c.b16 %v1336, %v1334
      %v1461 = vpack.c.b16 %v1339, %v1337
      %v1462 = vpack.c.b16 %v1340, %v1338
      %v1463 = vpack.c.b16 %v1343, %v1341
      %v1464 = vpack.c.b16 %v1344, %v1342
      %v1465 = vpack.c.b16 %v1347, %v1345
      %v1466 = vpack.c.b16 %v1348, %v1346
      %v1467 = vpack.c.b16 %v1351, %v1349
      %v1468 = vpack.c.b16 %v1352, %v1350
      %v1469 = vpack.c.b16 %v1355, %v1353
      %v1470 = vpack.c.b16 %v1356, %v1354
      %v1471 = vpack.c.b16 %v1359, %v1357
      %v1472 = vpack.c.b16 %v1360, %v1358
      %v1473 = vpack.c.b16 %v1363, %v1361
      %v1474 = vpack.c.b16 %v1364, %v1362
      %v1475 = vpack.c.b16 %v1367, %v1365
      %v1476 = vpack.c.b16 %v1368, %v1366
      %v1477 = vpack.c.b16 %v1371, %v1369
      %v1478 = vpack.c.b16 %v1372, %v1370
      %v1479 = vpack.c.b16 %v1375, %v1373
      %v1480 = vpack.c.b16 %v1376, %v1374
      %v1481 = vpack.c.b16 %v1379, %v1377
      %v1482 = vpack.c.b16 %v1380, %v1378
      %v1483 = vpack.c.b16 %v1383, %v1381
      %v1484 = vpack.c.b16 %v1384, %v1382
      %v1485 = vpack.c.b16 %v1387, %v1385
      %v1486 = vpack.c.b16 %v1388, %v1386
      %v1487 = vpack.c.b16 %v1391, %v1389
      %v1488 = vpack.c.b16 %v1392, %v1390
      %v1489 = vpack.c.b16 %v1395, %v1393
      %v1490 = vpack.c.b16 %v1396, %v1394
      %v1491 = vpack.c.b16 %v1399, %v1397
      %v1492 = vpack.c.b16 %v1400, %v1398
      %v1493 = vpack.c.b16 %v1403, %v1401
      %v1494 = vpack.c.b16 %v1404, %v1402
      %v1495 = vpack.c.b16 %v1407, %v1405
      %v1496 = vpack.c.b16 %v1408, %v1406
      %v1497 = vpack.c.b16 %v1411, %v1409
      %v1498 = vpack.c.b16 %v1412, %v1410
      %v1499 = vpack.c.b16 %v1415, %v1413
      %v1500 = vpack.c.b16 %v1416, %v1414
      %v1501 = vpack.c.b16 %v1419, %v1417
      %v1502 = vpack.c.b16 %v1420, %v1418
      %v1503 = vpack.c.b16 %v1423, %v1421
      %v1504 = vpack.c.b16 %v1424, %v1422
      %v1505 = vpack.c.b16 %v1427, %v1425
      %v1506 = vpack.c.b16 %v1428, %v1426
      %v1507 = vpack.c.b16 %v1431, %v1429
      %v1508 = vpack.c.b16 %v1432, %v1430
      %v1509 = vpack.c.b16 %v1435, %v1433
      %v1510 = vpack.c.b16 %v1436, %v1434
      %v1511 = vpack.c.b16 %v1439, %v1437
      %v1512 = vpack.c.b16 %v1440, %v1438
      %v1513 = vpack.c.b16 %v1443, %v1441
      %v1514 = vpack.c.b16 %v1444, %v1442
      %v1515 = vpack.c.b16 %v1447, %v1445
      %v1516 = vpack.c.b16 %v1448, %v1446
      %v1517 = vpack.c.b16 %v1451, %v1449
      %v1518 = vpack.c.b16 %v1452, %v1450
      %v1519 = vpack.c.b16 %v1455, %v1453
      %v1520 = vpack.c.b16 %v1456, %v1454
      %1585 = vmatprep.subr.bf16.mxu0 %v1458
      %1586 = vmatpush1.bf16.msra.mxu0 %v1457
      %1587 = vmatprep.subr.bf16.mxu0 %v1460
      %1588 = vmatpush1.bf16.msra.mxu0 %v1459
      %1589 = vmatprep.subr.bf16.mxu0 %v1462
      %1590 = vmatpush1.bf16.msra.mxu0 %v1461
      %1591 = vmatprep.subr.bf16.mxu0 %v1464
      %1592 = vmatpush1.bf16.msra.mxu0 %v1463
      %1593 = vmatprep.subr.bf16.mxu0 %v1466
      %1594 = vmatpush1.bf16.msra.mxu0 %v1465
      %1595 = vmatprep.subr.bf16.mxu0 %v1468
      %1596 = vmatpush1.bf16.msra.mxu0 %v1467
      %1597 = vmatprep.subr.bf16.mxu0 %v1470
      %1598 = vmatpush1.bf16.msra.mxu0 %v1469
      %1599 = vmatprep.subr.bf16.mxu0 %v1472
      %1600 = vmatpush1.bf16.msra.mxu0 %v1471
      %1601 = vmatprep.subr.bf16.mxu0 %v1474
      %1602 = vmatpush1.bf16.msra.mxu0 %v1473
      %1603 = vmatprep.subr.bf16.mxu0 %v1476
      %1604 = vmatpush1.bf16.msra.mxu0 %v1475
      %1605 = vmatprep.subr.bf16.mxu0 %v1478
      %1606 = vmatpush1.bf16.msra.mxu0 %v1477
      %1607 = vmatprep.subr.bf16.mxu0 %v1480
      %1608 = vmatpush1.bf16.msra.mxu0 %v1479
      %1609 = vmatprep.subr.bf16.mxu0 %v1482
      %1610 = vmatpush1.bf16.msra.mxu0 %v1481
      %1611 = vmatprep.subr.bf16.mxu0 %v1484
      %1612 = vmatpush1.bf16.msra.mxu0 %v1483
      %1613 = vmatprep.subr.bf16.mxu0 %v1486
      %1614 = vmatpush1.bf16.msra.mxu0 %v1485
      %1615 = vmatprep.subr.bf16.mxu0 %v1488
      %1616 = vmatpush1.bf16.msra.mxu0 %v1487
      %1617 = vmatprep.mubr.bf16.mxu0 %v1244
      %1618 = vmatmul.mubr.bf16.gmra.mrb[0].mxu0 %v1236
      %v1619 = vpop.f32.mrb[0].mxu0
      %v1620 = vadd.f32 0.0, %v1619
      %v1621 = vpop.f32.mrb[0].mxu0
      %v1622 = vadd.f32 0.0, %v1621
      %v1623 = vpop.f32.mrb[0].mxu0
      %v1624 = vpop.f32.mrb[0].mxu0
      %1625 = vdwg.mxu0
      %1626 = vmatprep.subr.bf16.mxu0 %v1490
      %1627 = vmatpush1.bf16.msra.mxu0 %v1489
      %1628 = vmatprep.subr.bf16.mxu0 %v1492
      %1629 = vmatpush1.bf16.msra.mxu0 %v1491
      %1630 = vmatprep.subr.bf16.mxu0 %v1494
      %1631 = vmatpush1.bf16.msra.mxu0 %v1493
      %1632 = vmatprep.subr.bf16.mxu0 %v1496
      %1633 = vmatpush1.bf16.msra.mxu0 %v1495
      %1634 = vmatprep.subr.bf16.mxu0 %v1498
      %1635 = vmatpush1.bf16.msra.mxu0 %v1497
      %1636 = vmatprep.subr.bf16.mxu0 %v1500
      %1637 = vmatpush1.bf16.msra.mxu0 %v1499
      %1638 = vmatprep.subr.bf16.mxu0 %v1502
      %1639 = vmatpush1.bf16.msra.mxu0 %v1501
      %1640 = vmatprep.subr.bf16.mxu0 %v1504
      %1641 = vmatpush1.bf16.msra.mxu0 %v1503
      %1642 = vmatprep.subr.bf16.mxu0 %v1506
      %1643 = vmatpush1.bf16.msra.mxu0 %v1505
      %1644 = vmatprep.subr.bf16.mxu0 %v1508
      %1645 = vmatpush1.bf16.msra.mxu0 %v1507
      %1646 = vmatprep.subr.bf16.mxu0 %v1510
      %1647 = vmatpush1.bf16.msra.mxu0 %v1509
      %1648 = vmatprep.subr.bf16.mxu0 %v1512
      %1649 = vmatpush1.bf16.msra.mxu0 %v1511
      %1650 = vmatprep.subr.bf16.mxu0 %v1514
      %1651 = vmatpush1.bf16.msra.mxu0 %v1513
      %1652 = vmatprep.subr.bf16.mxu0 %v1516
      %1653 = vmatpush1.bf16.msra.mxu0 %v1515
      %1654 = vmatprep.subr.bf16.mxu0 %v1518
      %1655 = vmatpush1.bf16.msra.mxu0 %v1517
      %1656 = vmatprep.subr.bf16.mxu0 %v1520
      %1657 = vmatpush1.bf16.msra.mxu0 %v1519
      %1658 = vmatprep.mubr.bf16.mxu0 %v1260
      %1659 = vmatmul.mubr.bf16.gmra.mrb[0].mxu0 %v1252
      %v1660 = vpop.f32.mrb[0].mxu0
      %v1661 = vadd.f32 %v1620, %v1660
      %v1662 = vpop.f32.mrb[0].mxu0
      %v1663 = vadd.f32 %v1622, %v1662
      %v1664 = vpop.f32.mrb[0].mxu0
      %v1665 = vpop.f32.mrb[0].mxu0
      %1666 = vdwg.mxu0
      %v1667 = vadd.f32 %v1146, %v1661
      %v1668 = vadd.f32 %v1148, %v1663
      %v1669 = vld [vmem:[%s165] sm:$0xcc]
      %v1670 = vld [vmem:[%s165 + $0x8] sm:$0xcc]
      %v1671 = vld [vmem:[%s165 + $0x10] sm:$0x11]
      %v1672 = vld [vmem:[%s165 + $0x18] sm:$0x11]
      %s1673 = scalar_lea.vmem %s1, 1536
      %v1674 = vld [vmem:[%s1673] sm:$0xff]
      %v1675 = vld [vmem:[%s1673 + $0x8] sm:$0xff]
      %v1676 = vld [vmem:[%s1673 + $0x10] sm:$0xff]
      %v1677 = vld [vmem:[%s1673 + $0x18] sm:$0xff]
      %v1678 = vld [vmem:[%s1673 + $0x20] sm:$0xff]
      %v1679 = vld [vmem:[%s1673 + $0x28] sm:$0xff]
      %v1680 = vld [vmem:[%s1673 + $0x30] sm:$0xff]
      %v1681 = vld [vmem:[%s1673 + $0x38] sm:$0xff]
      %v1682 = vld [vmem:[%s1673 + $0x40] sm:$0xff]
      %v1683 = vld [vmem:[%s1673 + $0x48] sm:$0xff]
      %v1684 = vld [vmem:[%s1673 + $0x50] sm:$0xff]
      %v1685 = vld [vmem:[%s1673 + $0x58] sm:$0xff]
      %v1686 = vld [vmem:[%s1673 + $0x60] sm:$0xff]
      %v1687 = vld [vmem:[%s1673 + $0x68] sm:$0xff]
      %v1688 = vld [vmem:[%s1673 + $0x70] sm:$0xff]
      %v1689 = vld [vmem:[%s1673 + $0x78] sm:$0xff]
      %v1690 = vld [vmem:[%s1673 + $0x80] sm:$0xff]
      %v1691 = vld [vmem:[%s1673 + $0x88] sm:$0xff]
      %v1692 = vld [vmem:[%s1673 + $0x90] sm:$0xff]
      %v1693 = vld [vmem:[%s1673 + $0x98] sm:$0xff]
      %v1694 = vld [vmem:[%s1673 + $0xa0] sm:$0xff]
      %v1695 = vld [vmem:[%s1673 + $0xa8] sm:$0xff]
      %v1696 = vld [vmem:[%s1673 + $0xb0] sm:$0xff]
      %v1697 = vld [vmem:[%s1673 + $0xb8] sm:$0xff]
      %v1698 = vld [vmem:[%s1673 + $0xc0] sm:$0xff]
      %v1699 = vld [vmem:[%s1673 + $0xc8] sm:$0xff]
      %v1700 = vld [vmem:[%s1673 + $0xd0] sm:$0xff]
      %v1701 = vld [vmem:[%s1673 + $0xd8] sm:$0xff]
      %v1702 = vld [vmem:[%s1673 + $0xe0] sm:$0xff]
      %v1703 = vld [vmem:[%s1673 + $0xe8] sm:$0xff]
      %v1704 = vld [vmem:[%s1673 + $0xf0] sm:$0xff]
      %v1705 = vld [vmem:[%s1673 + $0xf8] sm:$0xff]
      %v1706 = vld [vmem:[%s1673 + $0x100] sm:$0xff]
      %v1707 = vld [vmem:[%s1673 + $0x108] sm:$0xff]
      %v1708 = vld [vmem:[%s1673 + $0x110] sm:$0xff]
      %v1709 = vld [vmem:[%s1673 + $0x118] sm:$0xff]
      %v1710 = vld [vmem:[%s1673 + $0x120] sm:$0xff]
      %v1711 = vld [vmem:[%s1673 + $0x128] sm:$0xff]
      %v1712 = vld [vmem:[%s1673 + $0x130] sm:$0xff]
      %v1713 = vld [vmem:[%s1673 + $0x138] sm:$0xff]
      %v1714 = vld [vmem:[%s1673 + $0x140] sm:$0xff]
      %v1715 = vld [vmem:[%s1673 + $0x148] sm:$0xff]
      %v1716 = vld [vmem:[%s1673 + $0x150] sm:$0xff]
      %v1717 = vld [vmem:[%s1673 + $0x158] sm:$0xff]
      %v1718 = vld [vmem:[%s1673 + $0x160] sm:$0xff]
      %v1719 = vld [vmem:[%s1673 + $0x168] sm:$0xff]
      %v1720 = vld [vmem:[%s1673 + $0x170] sm:$0xff]
      %v1721 = vld [vmem:[%s1673 + $0x178] sm:$0xff]
      %v1722 = vld [vmem:[%s1673 + $0x180] sm:$0xff]
      %v1723 = vld [vmem:[%s1673 + $0x188] sm:$0xff]
      %v1724 = vld [vmem:[%s1673 + $0x190] sm:$0xff]
      %v1725 = vld [vmem:[%s1673 + $0x198] sm:$0xff]
      %v1726 = vld [vmem:[%s1673 + $0x1a0] sm:$0xff]
      %v1727 = vld [vmem:[%s1673 + $0x1a8] sm:$0xff]
      %v1728 = vld [vmem:[%s1673 + $0x1b0] sm:$0xff]
      %v1729 = vld [vmem:[%s1673 + $0x1b8] sm:$0xff]
      %v1730 = vld [vmem:[%s1673 + $0x1c0] sm:$0xff]
      %v1731 = vld [vmem:[%s1673 + $0x1c8] sm:$0xff]
      %v1732 = vld [vmem:[%s1673 + $0x1d0] sm:$0xff]
      %v1733 = vld [vmem:[%s1673 + $0x1d8] sm:$0xff]
      %v1734 = vld [vmem:[%s1673 + $0x1e0] sm:$0xff]
      %v1735 = vld [vmem:[%s1673 + $0x1e8] sm:$0xff]
      %v1736 = vld [vmem:[%s1673 + $0x1f0] sm:$0xff]
      %v1737 = vld [vmem:[%s1673 + $0x1f8] sm:$0xff]
      %v1742 = vunpack.c.l.b16 %v1669
      %v1743 = vunpack.c.h.b16 %v1669
      %v1744 = vunpack.c.l.b16 %v1670
      %v1745 = vunpack.c.h.b16 %v1670
      %v1746 = vunpack.c.l.b16 %v1671
      %v1747 = vunpack.c.h.b16 %v1671
      %v1748 = vunpack.c.l.b16 %v1672
      %v1749 = vunpack.c.h.b16 %v1672
      %v1750 = vpack.c.b16 %v1746, %v1742
      %v1751 = vpack.c.b16 %v1747, %v1743
      %v1752 = vpack.c.b16 %v1748, %v1744
      %v1753 = vpack.c.b16 %v1749, %v1745
      %v1754 = vrot.slane %v1750, 2
      %v1755 = vrot.slane %v1751, 2
      %v1756 = vrot.slane %v1752, 2
      %v1757 = vrot.slane %v1753, 2
      %v1826 = vunpack.c.l.b16 %v1674
      %v1827 = vunpack.c.h.b16 %v1674
      %v1828 = vunpack.c.l.b16 %v1675
      %v1829 = vunpack.c.h.b16 %v1675
      %v1830 = vunpack.c.l.b16 %v1676
      %v1831 = vunpack.c.h.b16 %v1676
      %v1832 = vunpack.c.l.b16 %v1677
      %v1833 = vunpack.c.h.b16 %v1677
      %v1834 = vunpack.c.l.b16 %v1678
      %v1835 = vunpack.c.h.b16 %v1678
      %v1836 = vunpack.c.l.b16 %v1679
      %v1837 = vunpack.c.h.b16 %v1679
      %v1838 = vunpack.c.l.b16 %v1680
      %v1839 = vunpack.c.h.b16 %v1680
      %v1840 = vunpack.c.l.b16 %v1681
      %v1841 = vunpack.c.h.b16 %v1681
      %v1842 = vunpack.c.l.b16 %v1682
      %v1843 = vunpack.c.h.b16 %v1682
      %v1844 = vunpack.c.l.b16 %v1683
      %v1845 = vunpack.c.h.b16 %v1683
      %v1846 = vunpack.c.l.b16 %v1684
      %v1847 = vunpack.c.h.b16 %v1684
      %v1848 = vunpack.c.l.b16 %v1685
      %v1849 = vunpack.c.h.b16 %v1685
      %v1850 = vunpack.c.l.b16 %v1686
      %v1851 = vunpack.c.h.b16 %v1686
      %v1852 = vunpack.c.l.b16 %v1687
      %v1853 = vunpack.c.h.b16 %v1687
      %v1854 = vunpack.c.l.b16 %v1688
      %v1855 = vunpack.c.h.b16 %v1688
      %v1856 = vunpack.c.l.b16 %v1689
      %v1857 = vunpack.c.h.b16 %v1689
      %v1858 = vunpack.c.l.b16 %v1690
      %v1859 = vunpack.c.h.b16 %v1690
      %v1860 = vunpack.c.l.b16 %v1691
      %v1861 = vunpack.c.h.b16 %v1691
      %v1862 = vunpack.c.l.b16 %v1692
      %v1863 = vunpack.c.h.b16 %v1692
      %v1864 = vunpack.c.l.b16 %v1693
      %v1865 = vunpack.c.h.b16 %v1693
      %v1866 = vunpack.c.l.b16 %v1694
      %v1867 = vunpack.c.h.b16 %v1694
      %v1868 = vunpack.c.l.b16 %v1695
      %v1869 = vunpack.c.h.b16 %v1695
      %v1870 = vunpack.c.l.b16 %v1696
      %v1871 = vunpack.c.h.b16 %v1696
      %v1872 = vunpack.c.l.b16 %v1697
      %v1873 = vunpack.c.h.b16 %v1697
      %v1874 = vunpack.c.l.b16 %v1698
      %v1875 = vunpack.c.h.b16 %v1698
      %v1876 = vunpack.c.l.b16 %v1699
      %v1877 = vunpack.c.h.b16 %v1699
      %v1878 = vunpack.c.l.b16 %v1700
      %v1879 = vunpack.c.h.b16 %v1700
      %v1880 = vunpack.c.l.b16 %v1701
      %v1881 = vunpack.c.h.b16 %v1701
      %v1882 = vunpack.c.l.b16 %v1702
      %v1883 = vunpack.c.h.b16 %v1702
      %v1884 = vunpack.c.l.b16 %v1703
      %v1885 = vunpack.c.h.b16 %v1703
      %v1886 = vunpack.c.l.b16 %v1704
      %v1887 = vunpack.c.h.b16 %v1704
      %v1888 = vunpack.c.l.b16 %v1705
      %v1889 = vunpack.c.h.b16 %v1705
      %v1890 = vunpack.c.l.b16 %v1706
      %v1891 = vunpack.c.h.b16 %v1706
      %v1892 = vunpack.c.l.b16 %v1707
      %v1893 = vunpack.c.h.b16 %v1707
      %v1894 = vunpack.c.l.b16 %v1708
      %v1895 = vunpack.c.h.b16 %v1708
      %v1896 = vunpack.c.l.b16 %v1709
      %v1897 = vunpack.c.h.b16 %v1709
      %v1898 = vunpack.c.l.b16 %v1710
      %v1899 = vunpack.c.h.b16 %v1710
      %v1900 = vunpack.c.l.b16 %v1711
      %v1901 = vunpack.c.h.b16 %v1711
      %v1902 = vunpack.c.l.b16 %v1712
      %v1903 = vunpack.c.h.b16 %v1712
      %v1904 = vunpack.c.l.b16 %v1713
      %v1905 = vunpack.c.h.b16 %v1713
      %v1906 = vunpack.c.l.b16 %v1714
      %v1907 = vunpack.c.h.b16 %v1714
      %v1908 = vunpack.c.l.b16 %v1715
      %v1909 = vunpack.c.h.b16 %v1715
      %v1910 = vunpack.c.l.b16 %v1716
      %v1911 = vunpack.c.h.b16 %v1716
      %v1912 = vunpack.c.l.b16 %v1717
      %v1913 = vunpack.c.h.b16 %v1717
      %v1914 = vunpack.c.l.b16 %v1718
      %v1915 = vunpack.c.h.b16 %v1718
      %v1916 = vunpack.c.l.b16 %v1719
      %v1917 = vunpack.c.h.b16 %v1719
      %v1918 = vunpack.c.l.b16 %v1720
      %v1919 = vunpack.c.h.b16 %v1720
      %v1920 = vunpack.c.l.b16 %v1721
      %v1921 = vunpack.c.h.b16 %v1721
      %v1922 = vunpack.c.l.b16 %v1722
      %v1923 = vunpack.c.h.b16 %v1722
      %v1924 = vunpack.c.l.b16 %v1723
      %v1925 = vunpack.c.h.b16 %v1723
      %v1926 = vunpack.c.l.b16 %v1724
      %v1927 = vunpack.c.h.b16 %v1724
      %v1928 = vunpack.c.l.b16 %v1725
      %v1929 = vunpack.c.h.b16 %v1725
      %v1930 = vunpack.c.l.b16 %v1726
      %v1931 = vunpack.c.h.b16 %v1726
      %v1932 = vunpack.c.l.b16 %v1727
      %v1933 = vunpack.c.h.b16 %v1727
      %v1934 = vunpack.c.l.b16 %v1728
      %v1935 = vunpack.c.h.b16 %v1728
      %v1936 = vunpack.c.l.b16 %v1729
      %v1937 = vunpack.c.h.b16 %v1729
      %v1938 = vunpack.c.l.b16 %v1730
      %v1939 = vunpack.c.h.b16 %v1730
      %v1940 = vunpack.c.l.b16 %v1731
      %v1941 = vunpack.c.h.b16 %v1731
      %v1942 = vunpack.c.l.b16 %v1732
      %v1943 = vunpack.c.h.b16 %v1732
      %v1944 = vunpack.c.l.b16 %v1733
      %v1945 = vunpack.c.h.b16 %v1733
      %v1946 = vunpack.c.l.b16 %v1734
      %v1947 = vunpack.c.h.b16 %v1734
      %v1948 = vunpack.c.l.b16 %v1735
      %v1949 = vunpack.c.h.b16 %v1735
      %v1950 = vunpack.c.l.b16 %v1736
      %v1951 = vunpack.c.h.b16 %v1736
      %v1952 = vunpack.c.l.b16 %v1737
      %v1953 = vunpack.c.h.b16 %v1737
      %v1954 = vpack.c.b16 %v1828, %v1826
      %v1955 = vpack.c.b16 %v1829, %v1827
      %v1956 = vpack.c.b16 %v1832, %v1830
      %v1957 = vpack.c.b16 %v1833, %v1831
      %v1958 = vpack.c.b16 %v1836, %v1834
      %v1959 = vpack.c.b16 %v1837, %v1835
      %v1960 = vpack.c.b16 %v1840, %v1838
      %v1961 = vpack.c.b16 %v1841, %v1839
      %v1962 = vpack.c.b16 %v1844, %v1842
      %v1963 = vpack.c.b16 %v1845, %v1843
      %v1964 = vpack.c.b16 %v1848, %v1846
      %v1965 = vpack.c.b16 %v1849, %v1847
      %v1966 = vpack.c.b16 %v1852, %v1850
      %v1967 = vpack.c.b16 %v1853, %v1851
      %v1968 = vpack.c.b16 %v1856, %v1854
      %v1969 = vpack.c.b16 %v1857, %v1855
      %v1970 = vpack.c.b16 %v1860, %v1858
      %v1971 = vpack.c.b16 %v1861, %v1859
      %v1972 = vpack.c.b16 %v1864, %v1862
      %v1973 = vpack.c.b16 %v1865, %v1863
      %v1974 = vpack.c.b16 %v1868, %v1866
      %v1975 = vpack.c.b16 %v1869, %v1867
      %v1976 = vpack.c.b16 %v1872, %v1870
      %v1977 = vpack.c.b16 %v1873, %v1871
      %v1978 = vpack.c.b16 %v1876, %v1874
      %v1979 = vpack.c.b16 %v1877, %v1875
      %v1980 = vpack.c.b16 %v1880, %v1878
      %v1981 = vpack.c.b16 %v1881, %v1879
      %v1982 = vpack.c.b16 %v1884, %v1882
      %v1983 = vpack.c.b16 %v1885, %v1883
      %v1984 = vpack.c.b16 %v1888, %v1886
      %v1985 = vpack.c.b16 %v1889, %v1887
      %v1986 = vpack.c.b16 %v1892, %v1890
      %v1987 = vpack.c.b16 %v1893, %v1891
      %v1988 = vpack.c.b16 %v1896, %v1894
      %v1989 = vpack.c.b16 %v1897, %v1895
      %v1990 = vpack.c.b16 %v1900, %v1898
      %v1991 = vpack.c.b16 %v1901, %v1899
      %v1992 = vpack.c.b16 %v1904, %v1902
      %v1993 = vpack.c.b16 %v1905, %v1903
      %v1994 = vpack.c.b16 %v1908, %v1906
      %v1995 = vpack.c.b16 %v1909, %v1907
      %v1996 = vpack.c.b16 %v1912, %v1910
      %v1997 = vpack.c.b16 %v1913, %v1911
      %v1998 = vpack.c.b16 %v1916, %v1914
      %v1999 = vpack.c.b16 %v1917, %v1915
      %v2000 = vpack.c.b16 %v1920, %v1918
      %v2001 = vpack.c.b16 %v1921, %v1919
      %v2002 = vpack.c.b16 %v1924, %v1922
      %v2003 = vpack.c.b16 %v1925, %v1923
      %v2004 = vpack.c.b16 %v1928, %v1926
      %v2005 = vpack.c.b16 %v1929, %v1927
      %v2006 = vpack.c.b16 %v1932, %v1930
      %v2007 = vpack.c.b16 %v1933, %v1931
      %v2008 = vpack.c.b16 %v1936, %v1934
      %v2009 = vpack.c.b16 %v1937, %v1935
      %v2010 = vpack.c.b16 %v1940, %v1938
      %v2011 = vpack.c.b16 %v1941, %v1939
      %v2012 = vpack.c.b16 %v1944, %v1942
      %v2013 = vpack.c.b16 %v1945, %v1943
      %v2014 = vpack.c.b16 %v1948, %v1946
      %v2015 = vpack.c.b16 %v1949, %v1947
      %v2016 = vpack.c.b16 %v1952, %v1950
      %v2017 = vpack.c.b16 %v1953, %v1951
      %2082 = vmatprep.subr.bf16.mxu0 %v1955
      %2083 = vmatpush1.bf16.msra.mxu0 %v1954
      %2084 = vmatprep.subr.bf16.mxu0 %v1957
      %2085 = vmatpush1.bf16.msra.mxu0 %v1956
      %2086 = vmatprep.subr.bf16.mxu0 %v1959
      %2087 = vmatpush1.bf16.msra.mxu0 %v1958
      %2088 = vmatprep.subr.bf16.mxu0 %v1961
      %2089 = vmatpush1.bf16.msra.mxu0 %v1960
      %2090 = vmatprep.subr.bf16.mxu0 %v1963
      %2091 = vmatpush1.bf16.msra.mxu0 %v1962
      %2092 = vmatprep.subr.bf16.mxu0 %v1965
      %2093 = vmatpush1.bf16.msra.mxu0 %v1964
      %2094 = vmatprep.subr.bf16.mxu0 %v1967
      %2095 = vmatpush1.bf16.msra.mxu0 %v1966
      %2096 = vmatprep.subr.bf16.mxu0 %v1969
      %2097 = vmatpush1.bf16.msra.mxu0 %v1968
      %2098 = vmatprep.subr.bf16.mxu0 %v1971
      %2099 = vmatpush1.bf16.msra.mxu0 %v1970
      %2100 = vmatprep.subr.bf16.mxu0 %v1973
      %2101 = vmatpush1.bf16.msra.mxu0 %v1972
      %2102 = vmatprep.subr.bf16.mxu0 %v1975
      %2103 = vmatpush1.bf16.msra.mxu0 %v1974
      %2104 = vmatprep.subr.bf16.mxu0 %v1977
      %2105 = vmatpush1.bf16.msra.mxu0 %v1976
      %2106 = vmatprep.subr.bf16.mxu0 %v1979
      %2107 = vmatpush1.bf16.msra.mxu0 %v1978
      %2108 = vmatprep.subr.bf16.mxu0 %v1981
      %2109 = vmatpush1.bf16.msra.mxu0 %v1980
      %2110 = vmatprep.subr.bf16.mxu0 %v1983
      %2111 = vmatpush1.bf16.msra.mxu0 %v1982
      %2112 = vmatprep.subr.bf16.mxu0 %v1985
      %2113 = vmatpush1.bf16.msra.mxu0 %v1984
      %2114 = vmatprep.mubr.bf16.mxu0 %v1755
      %2115 = vmatmul.mubr.bf16.gmra.mrb[0].mxu0 %v1754
      %v2116 = vpop.f32.mrb[0].mxu0
      %v2117 = vadd.f32 0.0, %v2116
      %v2118 = vpop.f32.mrb[0].mxu0
      %v2119 = vadd.f32 0.0, %v2118
      %v2120 = vpop.f32.mrb[0].mxu0
      %v2121 = vpop.f32.mrb[0].mxu0
      %2122 = vdwg.mxu0
      %2123 = vmatprep.subr.bf16.mxu0 %v1987
      %2124 = vmatpush1.bf16.msra.mxu0 %v1986
      %2125 = vmatprep.subr.bf16.mxu0 %v1989
      %2126 = vmatpush1.bf16.msra.mxu0 %v1988
      %2127 = vmatprep.subr.bf16.mxu0 %v1991
      %2128 = vmatpush1.bf16.msra.mxu0 %v1990
      %2129 = vmatprep.subr.bf16.mxu0 %v1993
      %2130 = vmatpush1.bf16.msra.mxu0 %v1992
      %2131 = vmatprep.subr.bf16.mxu0 %v1995
      %2132 = vmatpush1.bf16.msra.mxu0 %v1994
      %2133 = vmatprep.subr.bf16.mxu0 %v1997
      %2134 = vmatpush1.bf16.msra.mxu0 %v1996
      %2135 = vmatprep.subr.bf16.mxu0 %v1999
      %2136 = vmatpush1.bf16.msra.mxu0 %v1998
      %2137 = vmatprep.subr.bf16.mxu0 %v2001
      %2138 = vmatpush1.bf16.msra.mxu0 %v2000
      %2139 = vmatprep.subr.bf16.mxu0 %v2003
      %2140 = vmatpush1.bf16.msra.mxu0 %v2002
      %2141 = vmatprep.subr.bf16.mxu0 %v2005
      %2142 = vmatpush1.bf16.msra.mxu0 %v2004
      %2143 = vmatprep.subr.bf16.mxu0 %v2007
      %2144 = vmatpush1.bf16.msra.mxu0 %v2006
      %2145 = vmatprep.subr.bf16.mxu0 %v2009
      %2146 = vmatpush1.bf16.msra.mxu0 %v2008
      %2147 = vmatprep.subr.bf16.mxu0 %v2011
      %2148 = vmatpush1.bf16.msra.mxu0 %v2010
      %2149 = vmatprep.subr.bf16.mxu0 %v2013
      %2150 = vmatpush1.bf16.msra.mxu0 %v2012
      %2151 = vmatprep.subr.bf16.mxu0 %v2015
      %2152 = vmatpush1.bf16.msra.mxu0 %v2014
      %2153 = vmatprep.subr.bf16.mxu0 %v2017
      %2154 = vmatpush1.bf16.msra.mxu0 %v2016
      %2155 = vmatprep.mubr.bf16.mxu0 %v1757
      %2156 = vmatmul.mubr.bf16.gmra.mrb[0].mxu0 %v1756
      %v2157 = vpop.f32.mrb[0].mxu0
      %v2158 = vadd.f32 %v2117, %v2157
      %v2159 = vpop.f32.mrb[0].mxu0
      %v2160 = vadd.f32 %v2119, %v2159
      %v2161 = vpop.f32.mrb[0].mxu0
      %v2162 = vpop.f32.mrb[0].mxu0
      %2163 = vdwg.mxu0
      %v2164 = vadd.f32 %v1667, %v2158
      %v2165 = vadd.f32 %v1668, %v2160
      %v2166 = vlaneseq
      %v2167 = vshrl.u32 %v2166, 7
      %vm2168 = vcmp.lt.s32.totalorder %v2167, 0
      %v2169 = vsub.s32 0, %v2167
      %v2170 = vsel %vm2168, %v2169, %v2167
      %v2171 = vmul.u32.u64.compose %v2170, 2863311531
      %v2172 = vextract.low.u32 %v2171
      %v2173 = vextract.high.u32 %v2171
      %v2174 = vshrl.u32 %v2173, 1
      %v2175 = vmul.u32 %v2174, 3
      %v2176 = vsub.s32 %v2170, %v2175
      %v2177 = vsub.s32 0, %v2176
      %v2178 = vsel %vm2168, %v2177, %v2176
      %vm2179 = vcmp.ne.s32.totalorder %v2178, 0
      %vm2180 = vcmp.lt.s32.totalorder %v2178, 0
      %vm2181 = vmand %vm2180, %vm2179
      %v2182 = vadd.s32 %v2178, 3
      %v2183 = vsel %vm2181, %v2182, %v2178
      %vm2184 = vcmp.lt.s32.totalorder %v2183, 2
      %v2185 = vsel %vm2184, 1, 0
      %vm2186 = vcmp.eq.s32.totalorder %v2185, 1
      %v2187 = vsel %vm2186, %v2164, 0.0
      %v2188 = vsel %vm2186, %v2165, 0.0
      %vm2189 = vcmask 1044480
      %v2190 = vsel %vm2189, %v2187, 0.0
      %v2191 = vrot.slane %v2190, 4
      %v2192 = vadd.f32 %v2190, %v2191
      %v2193 = vrot.slane %v2192, 2
      %v2194 = vadd.f32 %v2192, %v2193
      %v2195 = vrot.slane %v2194, 1
      %v2196 = vadd.f32 %v2194, %v2195
      %v2197 = vsel %vm2189, %v2188, 0.0
      %v2198 = vrot.slane %v2197, 4
      %v2199 = vadd.f32 %v2197, %v2198
      %v2200 = vrot.slane %v2199, 2
      %v2201 = vadd.f32 %v2199, %v2200
      %v2202 = vrot.slane %v2201, 1
      %v2203 = vadd.f32 %v2201, %v2202
      %v2204 = vmul.f32 %v2196, 0.25
      %v2205 = vmul.f32 %v2203, 0.25
      %v2206 = vmul.f32 %v2164, %v2164
      %v2207 = vmul.f32 %v2165, %v2165
      %v2208 = vsel %vm2186, %v2206, 0.0
      %v2209 = vsel %vm2186, %v2207, 0.0
      %v2210 = vsel %vm2189, %v2208, 0.0
      %v2211 = vrot.slane %v2210, 4
      %v2212 = vadd.f32 %v2210, %v2211
      %v2213 = vrot.slane %v2212, 2
      %v2214 = vadd.f32 %v2212, %v2213
      %v2215 = vrot.slane %v2214, 1
      %v2216 = vadd.f32 %v2214, %v2215
      %v2217 = vsel %vm2189, %v2209, 0.0
      %v2218 = vrot.slane %v2217, 4
      %v2219 = vadd.f32 %v2217, %v2218
      %v2220 = vrot.slane %v2219, 2
      %v2221 = vadd.f32 %v2219, %v2220
      %v2222 = vrot.slane %v2221, 1
      %v2223 = vadd.f32 %v2221, %v2222
      %v2224 = vmul.f32 %v2216, 0.25
      %v2225 = vmul.f32 %v2223, 0.25
      %v2226 = vmul.f32 %v2204, %v2204
      %v2227 = vmul.f32 %v2205, %v2205
      %v2228 = vsub.f32 %v2224, %v2226
      %v2229 = vsub.f32 %v2225, %v2227
      %v2230 = vsub.f32 %v2164, %v2204
      %v2231 = vsub.f32 %v2165, %v2205
      %v2232 = vadd.f32 %v2228, 1e-05
      %v2233 = vadd.f32 %v2229, 1e-05
      %v2234 = vrsqrt.pop %v2232
      %v2235 = vrsqrt.pop %v2233
      %v2236 = vmul.f32 %v2230, %v2234
      %v2237 = vmul.f32 %v2231, %v2235
      %vm2238 = vcmp.ge.f32.partialorder %v2236, 0.0
      %vm2239 = vcmp.ge.f32.partialorder %v2237, 0.0
      %v2240 = vmul.f32 %v2236, 0.2
      %v2241 = vmul.f32 %v2237, 0.2
      %v2242 = vsel %vm2238, %v2236, %v2240
      %v2243 = vsel %vm2239, %v2237, %v2241
      %v2244 = vpack.c.bf16 %v2242, %v2242
      %v2245 = vpack.c.bf16 %v2243, %v2243
      %v2248 = vunpack.c.l.b16 %v2244
      %v2249 = vunpack.c.l.b16 %v2245
      %v2250 = vpack.c.b16 %v2249, %v2248
      %vm2252 = vcmask 1042432
      %vm2253 = vsmask.f32 2304
      %vm2254 = vmand %vm2252, %vm2253
      %vm2255 = vcmask 1046532
      %vm2256 = vsmask.f32 6400
      %vm2257 = vmand %vm2255, %vm2256
      %vm2258 = vmor %vm2257, %vm2254
      %v2259 = vld [vmem:[%s170] sm:$0x77]
      %v2260 = vsel %vm2258, %v2250, %v2259
      %2261 = vst [vmem:[%s170] sm:$0x77] %v2260
      %p2262 = scmp.lt.s32.totalorder %s14, 1
      %s2263 = scalar_select %p2262, %s14, 1
      %s2264 = smul.addr %s2263, 2
      %s2265 = smul.addr %s2264, 4
      %s2266 = scalar_lea.vmem %s3, %s2265
      // Predicated region
      $region33: #{discriminator_forward.6} parent=31 // pred_check
        %p2267 = pneg %p100
      $region34: #{discriminator_forward.6} parent=31 // pred_check_branch
        %2269 = sbr.rel (%p2267) target = $region36
      $region35: #{discriminator_forward.6} parent=31 // pred_region
        _
      $region36: #{discriminator_forward.6} parent=31 // pred_fallthru
        _
    $region32: #{discriminator_forward.6} parent=5 // pred_fallthru
      _
    %p2270 = scmp.le.s32.totalorder 2, %s9
    // Predicated region
    $region37: #{discriminator_forward.6} parent=5 // pred_check
      %p2271 = pneg %p2270
    $region38: #{discriminator_forward.6} parent=5 // pred_check_branch
      %2273 = sbr.rel (%p2271) target = $region40
    $region39: #{discriminator_forward.6} parent=5 // pred_region
      %s2274 = ssub.s32 %s9, 2
      // Predicated region
      $region41: #{discriminator_forward.6} parent=39 // pred_check
        %p2275 = pneg %p106
      $region42: #{discriminator_forward.6} parent=39 // pred_check_branch
        %2277 = sbr.rel (%p2275) target = $region44
      $region43: #{discriminator_forward.6} parent=39 // pred_region
        %p2278 = scmp.lt.s32.totalorder %s15, 1
        %s2279 = scalar_select %p2278, %s15, 1
        %s2280 = smul.addr %s2279, 2
        %s2281 = smul.addr %s2280, 4
        %s2282 = scalar_lea.vmem %s3, %s2281
      $region44: #{discriminator_forward.6} parent=39 // pred_fallthru
        _
    $region40: #{discriminator_forward.6} parent=5 // pred_fallthru
      _
  $region6: #{discriminator_forward.6} parent=0 // loop_footer
    %s13 = sadd.s32 1, %s9
  $region7: #{discriminator_forward.6} parent=0 // loop_footer_branch
    %8 = sbr.rel target = $region3
  $region8: #{discriminator_forward.6} parent=0 // loop_exit
    _

// kernel: discriminator_forward.7
$region0: #{discriminator_forward.7}
  #allocation0 [shape = 'u32[]', space=smem, size = 0x4, offset = 0x4, fixed_abs, tag = 'smem constant byte address 0x4 - core index']
  #allocation1 [shape = 'u32[144,128]{1,0:T(1,128)}', space=vmem, size = 0x12000, scoped, tag = 'internal scratch']
  %s0 = inlined_call_operand.vmem [shape: bf16[2,16,256], index: 0, kind: input, shape index: {}]
  %s1 = inlined_call_operand.vmem [shape: bf16[16,256,128], index: 1, kind: input, shape index: {}]
  %s2 = inlined_call_operand.vmem [shape: f32[1,128], index: 2, kind: input, shape index: {}]
  %s3 = inlined_call_operand.vmem [shape: f32[2,1,128], index: 3, kind: output, shape index: {}]
  %s4 = sld [smem:[#allocation0]]
  $region45: #{discriminator_forward.7} parent=0
    _
  %s6 = ssub.s32 1, %s4
  %s7 = scalar_select 0, %s6, %s4
  loop: start=0, step=1, limit=4
  $region2: #{discriminator_forward.7} parent=0 // loop_pre_header
    _
  $region3: #{discriminator_forward.7} parent=0 // loop_header
    %s9 = sphi 0, %s13
    %p10 = scmp.ge.s32.totalorder %s9, 4
    %s19 = sphi 0, %s21
    %s22 = sphi 0, %s19
    %s23 = sphi 0, %s22
    %s39 = sphi 0, %s23
    %s43 = sphi 0, %s43
    %s45 = sphi 0, %s43
    %s46 = sphi 0, %s45
    %s60 = sphi 0, %s46
    %s64 = sphi 0, %s64
    %s66 = sphi 0, %s64
    %s67 = sphi 0, %s66
    %s81 = sphi 0, %s67
    %s87 = sphi 0, %s89
    %s90 = sphi 0, %s87
    %s91 = sphi 0, %s90
    %s107 = sphi 0, %s91
  $region4: #{discriminator_forward.7} parent=0 // loop_header_branch
    %12 = sbr.rel (%p10) target = $region8
  $region5: #{discriminator_forward.7} parent=0 // loop_body
    %s14 = ssub.s32 %s9, 1
    %s15 = ssub.s32 %s9, 2
    %s16 = sadd.s32 %s9, 1
    %s17 = ssub.s32 %s9, %s16
    %p18 = scmp.eq.s32.totalorder %s17, 0
    %s20 = sadd.s32 %s19, 1
    %s21 = scalar_select %p18, %s19, %s20
    %p24 = pneg %p18
    %p25 = scmp.eq.s32.totalorder %s9, 1
    %p26 = por %p24, %p25
    %p27 = scmp.ne.s32.totalorder %s19, %s22
    %p28 = scmp.eq.s32.totalorder %s9, 0
    %p29 = por %p27, %p28
    %p30 = scmp.ne.s32.totalorder %s19, %s22
    %p31 = scmp.eq.s32.totalorder %s14, 1
    %p32 = por %p30, %p31
    %p33 = scmp.ne.s32.totalorder %s22, %s23
    %p34 = scmp.eq.s32.totalorder %s14, 0
    %p35 = por %p33, %p34
    %p36 = scmp.ne.s32.totalorder %s22, %s23
    %p37 = scmp.eq.s32.totalorder %s15, 1
    %p38 = por %p36, %p37
    %p40 = scmp.ne.s32.totalorder %s23, %s39
    %p41 = scmp.eq.s32.totalorder %s15, 0
    %p42 = por %p40, %p41
    %s44 = sadd.s32 %s43, 1
    %p47 = scmp.eq.s32.totalorder %s9, 1
    %p48 = scmp.ne.s32.totalorder %s43, %s45
    %p49 = scmp.eq.s32.totalorder %s9, 0
    %p50 = por %p48, %p49
    %p51 = scmp.ne.s32.totalorder %s43, %s45
    %p52 = scmp.eq.s32.totalorder %s14, 1
    %p53 = por %p51, %p52
    %p54 = scmp.ne.s32.totalorder %s45, %s46
    %p55 = scmp.eq.s32.totalorder %s14, 0
    %p56 = por %p54, %p55
    %p57 = scmp.ne.s32.totalorder %s45, %s46
    %p58 = scmp.eq.s32.totalorder %s15, 1
    %p59 = por %p57, %p58
    %p61 = scmp.ne.s32.totalorder %s46, %s60
    %p62 = scmp.eq.s32.totalorder %s15, 0
    %p63 = por %p61, %p62
    %s65 = sadd.s32 %s64, 1
    %p68 = scmp.eq.s32.totalorder %s9, 1
    %p69 = scmp.ne.s32.totalorder %s64, %s66
    %p70 = scmp.eq.s32.totalorder %s9, 0
    %p71 = por %p69, %p70
    %p72 = scmp.ne.s32.totalorder %s64, %s66
    %p73 = scmp.eq.s32.totalorder %s14, 1
    %p74 = por %p72, %p73
    %p75 = scmp.ne.s32.totalorder %s66, %s67
    %p76 = scmp.eq.s32.totalorder %s14, 0
    %p77 = por %p75, %p76
    %p78 = scmp.ne.s32.totalorder %s66, %s67
    %p79 = scmp.eq.s32.totalorder %s15, 1
    %p80 = por %p78, %p79
    %p82 = scmp.ne.s32.totalorder %s67, %s81
    %p83 = scmp.eq.s32.totalorder %s15, 0
    %p84 = por %p82, %p83
    %s85 = ssub.s32 %s9, %s16
    %p86 = scmp.eq.s32.totalorder %s85, 0
    %s88 = sadd.s32 %s87, 1
    %s89 = scalar_select %p86, %s87, %s88
    %p92 = pneg %p86
    %p93 = scmp.eq.s32.totalorder %s9, 1
    %p94 = por %p92, %p93
    %p95 = scmp.ne.s32.totalorder %s87, %s90
    %p96 = scmp.eq.s32.totalorder %s9, 0
    %p97 = por %p95, %p96
    %p98 = scmp.ne.s32.totalorder %s87, %s90
    %p99 = scmp.eq.s32.totalorder %s14, 1
    %p100 = por %p98, %p99
    %p101 = scmp.ne.s32.totalorder %s90, %s91
    %p102 = scmp.eq.s32.totalorder %s14, 0
    %p103 = por %p101, %p102
    %p104 = scmp.ne.s32.totalorder %s90, %s91
    %p105 = scmp.eq.s32.totalorder %s15, 1
    %p106 = por %p104, %p105
    %p108 = scmp.ne.s32.totalorder %s91, %s107
    %p109 = scmp.eq.s32.totalorder %s15, 0
    %p110 = por %p108, %p109
    %p111 = scmp.le.s32.totalorder 1, %s9
    %p112 = scmp.lt.s32.totalorder %s9, 3
    %p113 = pnand %p111, %p112
    %p114 = pneg %p113
    // Predicated region
    $region9: #{discriminator_forward.7} parent=5 // pred_check
      _
    $region10: #{discriminator_forward.7} parent=5 // pred_check_branch
      %116 = sbr.rel (%p113) target = $region12
    $region11: #{discriminator_forward.7} parent=5 // pred_region
      %s117 = ssub.s32 %s9, 1
      // Predicated region
      $region13: #{discriminator_forward.7} parent=11 // pred_check
        %p118 = pneg %p56
      $region14: #{discriminator_forward.7} parent=11 // pred_check_branch
        %120 = sbr.rel (%p118) target = $region16
      $region15: #{discriminator_forward.7} parent=11 // pred_region
        _
      $region16: #{discriminator_forward.7} parent=11 // pred_fallthru
        _
      // Predicated region
      $region17: #{discriminator_forward.7} parent=11 // pred_check
        %p121 = pneg %p77
      $region18: #{discriminator_forward.7} parent=11 // pred_check_branch
        %123 = sbr.rel (%p121) target = $region20
      $region19: #{discriminator_forward.7} parent=11 // pred_region
        _
      $region20: #{discriminator_forward.7} parent=11 // pred_fallthru
        _
    $region12: #{discriminator_forward.7} parent=5 // pred_fallthru
      _
    %p124 = scmp.lt.s32.totalorder %s9, 2
    // Predicated region
    $region21: #{discriminator_forward.7} parent=5 // pred_check
      %p125 = pneg %p124
    $region22: #{discriminator_forward.7} parent=5 // pred_check_branch
      %127 = sbr.rel (%p125) target = $region24
    $region23: #{discriminator_forward.7} parent=5 // pred_region
      // Predicated region
      $region25: #{discriminator_forward.7} parent=23 // pred_check
        %p128 = pneg %p29
      $region26: #{discriminator_forward.7} parent=23 // pred_check_branch
        %130 = sbr.rel (%p128) target = $region28
      $region27: #{discriminator_forward.7} parent=23 // pred_region
        %p131 = scmp.lt.s32.totalorder %s9, 1
        %s132 = scalar_select %p131, %s9, 1
        %s133 = smul.addr %s132, 4
        %s134 = smul.addr %s133, 4
        %s135 = scalar_lea.vmem %s0, %s134
      $region28: #{discriminator_forward.7} parent=23 // pred_fallthru
        _
    $region24: #{discriminator_forward.7} parent=5 // pred_fallthru
      _
    %p136 = scmp.le.s32.totalorder 1, %s9
    %p137 = scmp.lt.s32.totalorder %s9, 3
    %p138 = pnand %p136, %p137
    %p139 = pneg %p138
    // Predicated region
    $region29: #{discriminator_forward.7} parent=5 // pred_check
      _
    $region30: #{discriminator_forward.7} parent=5 // pred_check_branch
      %141 = sbr.rel (%p138) target = $region32
    $region31: #{discriminator_forward.7} parent=5 // pred_region
      %s142 = ssub.s32 %s9, 1
      %p143 = scmp.lt.s32.totalorder %s14, 1
      %s144 = scalar_select %p143, %s14, 1
      %s145 = smul.addr %s144, 4
      %s146 = smul.addr %s145, 4
      %s147 = scalar_lea.vmem %s0, %s146
      %p148 = pneg %p35
      %p149 = pneg %p32
      %p150 = pneg %p56
      %p151 = pneg %p53
      %p152 = pneg %p77
      %p153 = pneg %p74
      %p154 = pneg %p103
      %p155 = pneg %p100
      %p156 = scmp.lt.s32.totalorder %s14, 1
      %s157 = scalar_select %p156, %s14, 1
      %s158 = scalar_lea.vmem %s3, %s157
      %p159 = scmp.lt.s32.totalorder %s14, 1
      %s160 = scalar_select %p159, %s14, 1
      %s161 = smul.addr %s160, 4
      %s162 = smul.addr %s161, 4
      %s163 = scalar_lea.vmem %s0, %s162
      %p164 = scmp.lt.s32.totalorder %s14, 1
      %s165 = scalar_select %p164, %s14, 1
      %s166 = scalar_lea.vmem %s3, %s165
      %v168 = vld [vmem:[%s163] sm:$0x11]
      %v169 = vld [vmem:[%s1] sm:$0xf]
      %v170 = vld [vmem:[%s1 + $0x4] sm:$0xf]
      %v171 = vld [vmem:[%s1 + $0x8] sm:$0xf]
      %v172 = vld [vmem:[%s1 + $0xc] sm:$0xf]
      %v173 = vld [vmem:[%s1 + $0x10] sm:$0xf]
      %v174 = vld [vmem:[%s1 + $0x14] sm:$0xf]
      %v175 = vld [vmem:[%s1 + $0x18] sm:$0xf]
      %v176 = vld [vmem:[%s1 + $0x1c] sm:$0xf]
      %v177 = vld [vmem:[%s1 + $0x20] sm:$0xf]
      %v178 = vld [vmem:[%s1 + $0x24] sm:$0xf]
      %v179 = vld [vmem:[%s1 + $0x28] sm:$0xf]
      %v180 = vld [vmem:[%s1 + $0x2c] sm:$0xf]
      %v181 = vld [vmem:[%s1 + $0x30] sm:$0xf]
      %v182 = vld [vmem:[%s1 + $0x34] sm:$0xf]
      %v183 = vld [vmem:[%s1 + $0x38] sm:$0xf]
      %v184 = vld [vmem:[%s1 + $0x3c] sm:$0xf]
      %v185 = vld [vmem:[%s1 + $0x40] sm:$0xf]
      %v186 = vld [vmem:[%s1 + $0x44] sm:$0xf]
      %v187 = vld [vmem:[%s1 + $0x48] sm:$0xf]
      %v188 = vld [vmem:[%s1 + $0x4c] sm:$0xf]
      %v189 = vld [vmem:[%s1 + $0x50] sm:$0xf]
      %v190 = vld [vmem:[%s1 + $0x54] sm:$0xf]
      %v191 = vld [vmem:[%s1 + $0x58] sm:$0xf]
      %v192 = vld [vmem:[%s1 + $0x5c] sm:$0xf]
      %v193 = vld [vmem:[%s1 + $0x60] sm:$0xf]
      %v194 = vld [vmem:[%s1 + $0x64] sm:$0xf]
      %v195 = vld [vmem:[%s1 + $0x68] sm:$0xf]
      %v196 = vld [vmem:[%s1 + $0x6c] sm:$0xf]
      %v197 = vld [vmem:[%s1 + $0x70] sm:$0xf]
      %v198 = vld [vmem:[%s1 + $0x74] sm:$0xf]
      %v199 = vld [vmem:[%s1 + $0x78] sm:$0xf]
      %v200 = vld [vmem:[%s1 + $0x7c] sm:$0xf]
      %s201 = scalar_lea.vmem %s1, 128
      %v202 = vld [vmem:[%s201] sm:$0xf]
      %v203 = vld [vmem:[%s201 + $0x4] sm:$0xf]
      %v204 = vld [vmem:[%s201 + $0x8] sm:$0xf]
      %v205 = vld [vmem:[%s201 + $0xc] sm:$0xf]
      %v206 = vld [vmem:[%s201 + $0x10] sm:$0xf]
      %v207 = vld [vmem:[%s201 + $0x14] sm:$0xf]
      %v208 = vld [vmem:[%s201 + $0x18] sm:$0xf]
      %v209 = vld [vmem:[%s201 + $0x1c] sm:$0xf]
      %v210 = vld [vmem:[%s201 + $0x20] sm:$0xf]
      %v211 = vld [vmem:[%s201 + $0x24] sm:$0xf]
      %v212 = vld [vmem:[%s201 + $0x28] sm:$0xf]
      %v213 = vld [vmem:[%s201 + $0x2c] sm:$0xf]
      %v214 = vld [vmem:[%s201 + $0x30] sm:$0xf]
      %v215 = vld [vmem:[%s201 + $0x34] sm:$0xf]
      %v216 = vld [vmem:[%s201 + $0x38] sm:$0xf]
      %v217 = vld [vmem:[%s201 + $0x3c] sm:$0xf]
      %v218 = vld [vmem:[%s201 + $0x40] sm:$0xf]
      %v219 = vld [vmem:[%s201 + $0x44] sm:$0xf]
      %v220 = vld [vmem:[%s201 + $0x48] sm:$0xf]
      %v221 = vld [vmem:[%s201 + $0x4c] sm:$0xf]
      %v222 = vld [vmem:[%s201 + $0x50] sm:$0xf]
      %v223 = vld [vmem:[%s201 + $0x54] sm:$0xf]
      %v224 = vld [vmem:[%s201 + $0x58] sm:$0xf]
      %v225 = vld [vmem:[%s201 + $0x5c] sm:$0xf]
      %v226 = vld [vmem:[%s201 + $0x60] sm:$0xf]
      %v227 = vld [vmem:[%s201 + $0x64] sm:$0xf]
      %v228 = vld [vmem:[%s201 + $0x68] sm:$0xf]
      %v229 = vld [vmem:[%s201 + $0x6c] sm:$0xf]
      %v230 = vld [vmem:[%s201 + $0x70] sm:$0xf]
      %v231 = vld [vmem:[%s201 + $0x74] sm:$0xf]
      %v232 = vld [vmem:[%s201 + $0x78] sm:$0xf]
      %v233 = vld [vmem:[%s201 + $0x7c] sm:$0xf]
      %v235 = vunpack.c.l.b16 %v168
      %v236 = vunpack.c.h.b16 %v168
      %v237 = vpack.c.b16 %v235, %v235
      %v238 = vpack.c.b16 %v236, %v236
      %v240 = vshrl.u32 %v237, 16
      %v243 = vshrl.u32 %v238, 16
      %v279 = vunpack.c.l.b16 %v202
      %v280 = vunpack.c.l.b16 %v203
      %v281 = vunpack.c.l.b16 %v204
      %v282 = vunpack.c.l.b16 %v205
      %v283 = vunpack.c.l.b16 %v206
      %v284 = vunpack.c.l.b16 %v207
      %v285 = vunpack.c.l.b16 %v208
      %v286 = vunpack.c.l.b16 %v209
      %v287 = vunpack.c.l.b16 %v210
      %v288 = vunpack.c.l.b16 %v211
      %v289 = vunpack.c.l.b16 %v212
      %v290 = vunpack.c.l.b16 %v213
      %v291 = vunpack.c.l.b16 %v214
      %v292 = vunpack.c.l.b16 %v215
      %v293 = vunpack.c.l.b16 %v216
      %v294 = vunpack.c.l.b16 %v217
      %v295 = vunpack.c.l.b16 %v218
      %v296 = vunpack.c.l.b16 %v219
      %v297 = vunpack.c.l.b16 %v220
      %v298 = vunpack.c.l.b16 %v221
      %v299 = vunpack.c.l.b16 %v222
      %v300 = vunpack.c.l.b16 %v223
      %v301 = vunpack.c.l.b16 %v224
      %v302 = vunpack.c.l.b16 %v225
      %v303 = vunpack.c.l.b16 %v226
      %v304 = vunpack.c.l.b16 %v227
      %v305 = vunpack.c.l.b16 %v228
      %v306 = vunpack.c.l.b16 %v229
      %v307 = vunpack.c.l.b16 %v230
      %v308 = vunpack.c.l.b16 %v231
      %v309 = vunpack.c.l.b16 %v232
      %v310 = vunpack.c.l.b16 %v233
      %v311 = vpack.c.b16 %v280, %v279
      %v312 = vpack.c.b16 %v282, %v281
      %v313 = vpack.c.b16 %v284, %v283
      %v314 = vpack.c.b16 %v286, %v285
      %v315 = vpack.c.b16 %v288, %v287
      %v316 = vpack.c.b16 %v290, %v289
      %v317 = vpack.c.b16 %v292, %v291
      %v318 = vpack.c.b16 %v294, %v293
      %v319 = vpack.c.b16 %v296, %v295
      %v320 = vpack.c.b16 %v298, %v297
      %v321 = vpack.c.b16 %v300, %v299
      %v322 = vpack.c.b16 %v302, %v301
      %v323 = vpack.c.b16 %v304, %v303
      %v324 = vpack.c.b16 %v306, %v305
      %v325 = vpack.c.b16 %v308, %v307
      %v326 = vpack.c.b16 %v310, %v309
      %343 = vmatprep.subr.bf16.mxu0 0
      %344 = vmatpush1.bf16.msra.mxu0 %v311
      %345 = vmatprep.subr.bf16.mxu0 0
      %346 = vmatpush1.bf16.msra.mxu0 %v312
      %347 = vmatprep.subr.bf16.mxu0 0
      %348 = vmatpush1.bf16.msra.mxu0 %v313
      %349 = vmatprep.subr.bf16.mxu0 0
      %350 = vmatpush1.bf16.msra.mxu0 %v314
      %351 = vmatprep.subr.bf16.mxu0 0
      %352 = vmatpush1.bf16.msra.mxu0 %v315
      %353 = vmatprep.subr.bf16.mxu0 0
      %354 = vmatpush1.bf16.msra.mxu0 %v316
      %355 = vmatprep.subr.bf16.mxu0 0
      %356 = vmatpush1.bf16.msra.mxu0 %v317
      %357 = vmatprep.subr.bf16.mxu0 0
      %358 = vmatpush1.bf16.msra.mxu0 %v318
      %359 = vmatprep.subr.bf16.mxu0 0
      %360 = vmatpush1.bf16.msra.mxu0 %v319
      %361 = vmatprep.subr.bf16.mxu0 0
      %362 = vmatpush1.bf16.msra.mxu0 %v320
      %363 = vmatprep.subr.bf16.mxu0 0
      %364 = vmatpush1.bf16.msra.mxu0 %v321
      %365 = vmatprep.subr.bf16.mxu0 0
      %366 = vmatpush1.bf16.msra.mxu0 %v322
      %367 = vmatprep.subr.bf16.mxu0 0
      %368 = vmatpush1.bf16.msra.mxu0 %v323
      %369 = vmatprep.subr.bf16.mxu0 0
      %370 = vmatpush1.bf16.msra.mxu0 %v324
      %371 = vmatprep.subr.bf16.mxu0 0
      %372 = vmatpush1.bf16.msra.mxu0 %v325
      %373 = vmatprep.subr.bf16.mxu0 0
      %374 = vmatpush1.bf16.msra.mxu0 %v326
      %375 = vmatprep.mubr.bf16.mxu0 %v243
      %376 = vmatmul.mubr.bf16.gmra.mrb[0].mxu0 %v240
      %v377 = vpop.f32.mrb[0].mxu0
      %v378 = vadd.f32 0.0, %v377
      %v379 = vpop.f32.mrb[0].mxu0
      %v380 = vpop.f32.mrb[0].mxu0
      %v381 = vpop.f32.mrb[0].mxu0
      %382 = vdwg.mxu0
      %v417 = vunpack.c.l.b16 %v169
      %v418 = vunpack.c.l.b16 %v170
      %v419 = vunpack.c.l.b16 %v171
      %v420 = vunpack.c.l.b16 %v172
      %v421 = vunpack.c.l.b16 %v173
      %v422 = vunpack.c.l.b16 %v174
      %v423 = vunpack.c.l.b16 %v175
      %v424 = vunpack.c.l.b16 %v176
      %v425 = vunpack.c.l.b16 %v177
      %v426 = vunpack.c.l.b16 %v178
      %v427 = vunpack.c.l.b16 %v179
      %v428 = vunpack.c.l.b16 %v180
      %v429 = vunpack.c.l.b16 %v181
      %v430 = vunpack.c.l.b16 %v182
      %v431 = vunpack.c.l.b16 %v183
      %v432 = vunpack.c.l.b16 %v184
      %v433 = vunpack.c.l.b16 %v185
      %v434 = vunpack.c.l.b16 %v186
      %v435 = vunpack.c.l.b16 %v187
      %v436 = vunpack.c.l.b16 %v188
      %v437 = vunpack.c.l.b16 %v189
      %v438 = vunpack.c.l.b16 %v190
      %v439 = vunpack.c.l.b16 %v191
      %v440 = vunpack.c.l.b16 %v192
      %v441 = vunpack.c.l.b16 %v193
      %v442 = vunpack.c.l.b16 %v194
      %v443 = vunpack.c.l.b16 %v195
      %v444 = vunpack.c.l.b16 %v196
      %v445 = vunpack.c.l.b16 %v197
      %v446 = vunpack.c.l.b16 %v198
      %v447 = vunpack.c.l.b16 %v199
      %v448 = vunpack.c.l.b16 %v200
      %v449 = vpack.c.b16 %v418, %v417
      %v450 = vpack.c.b16 %v420, %v419
      %v451 = vpack.c.b16 %v422, %v421
      %v452 = vpack.c.b16 %v424, %v423
      %v453 = vpack.c.b16 %v426, %v425
      %v454 = vpack.c.b16 %v428, %v427
      %v455 = vpack.c.b16 %v430, %v429
      %v456 = vpack.c.b16 %v432, %v431
      %v457 = vpack.c.b16 %v434, %v433
      %v458 = vpack.c.b16 %v436, %v435
      %v459 = vpack.c.b16 %v438, %v437
      %v460 = vpack.c.b16 %v440, %v439
      %v461 = vpack.c.b16 %v442, %v441
      %v462 = vpack.c.b16 %v444, %v443
      %v463 = vpack.c.b16 %v446, %v445
      %v464 = vpack.c.b16 %v448, %v447
      %481 = vmatprep.subr.bf16.mxu0 0
      %482 = vmatpush1.bf16.msra.mxu0 %v449
      %483 = vmatprep.subr.bf16.mxu0 0
      %484 = vmatpush1.bf16.msra.mxu0 %v450
      %485 = vmatprep.subr.bf16.mxu0 0
      %486 = vmatpush1.bf16.msra.mxu0 %v451
      %487 = vmatprep.subr.bf16.mxu0 0
      %488 = vmatpush1.bf16.msra.mxu0 %v452
      %489 = vmatprep.subr.bf16.mxu0 0
      %490 = vmatpush1.bf16.msra.mxu0 %v453
      %491 = vmatprep.subr.bf16.mxu0 0
      %492 = vmatpush1.bf16.msra.mxu0 %v454
      %493 = vmatprep.subr.bf16.mxu0 0
      %494 = vmatpush1.bf16.msra.mxu0 %v455
      %495 = vmatprep.subr.bf16.mxu0 0
      %496 = vmatpush1.bf16.msra.mxu0 %v456
      %497 = vmatprep.subr.bf16.mxu0 0
      %498 = vmatpush1.bf16.msra.mxu0 %v457
      %499 = vmatprep.subr.bf16.mxu0 0
      %500 = vmatpush1.bf16.msra.mxu0 %v458
      %501 = vmatprep.subr.bf16.mxu0 0
      %502 = vmatpush1.bf16.msra.mxu0 %v459
      %503 = vmatprep.subr.bf16.mxu0 0
      %504 = vmatpush1.bf16.msra.mxu0 %v460
      %505 = vmatprep.subr.bf16.mxu0 0
      %506 = vmatpush1.bf16.msra.mxu0 %v461
      %507 = vmatprep.subr.bf16.mxu0 0
      %508 = vmatpush1.bf16.msra.mxu0 %v462
      %509 = vmatprep.subr.bf16.mxu0 0
      %510 = vmatpush1.bf16.msra.mxu0 %v463
      %511 = vmatprep.subr.bf16.mxu0 0
      %512 = vmatpush1.bf16.msra.mxu0 %v464
      %513 = vmatprep.mubr.bf16.mxu0 %v238
      %514 = vmatmul.mubr.bf16.gmra.mrb[0].mxu0 %v237
      %v515 = vpop.f32.mrb[0].mxu0
      %v516 = vadd.f32 %v378, %v515
      %v517 = vpop.f32.mrb[0].mxu0
      %v518 = vpop.f32.mrb[0].mxu0
      %v519 = vpop.f32.mrb[0].mxu0
      %520 = vdwg.mxu0
      %v521 = vld [vmem:[%s163] sm:$0x22]
      %s522 = scalar_lea.vmem %s1, 256
      %v523 = vld [vmem:[%s522] sm:$0xf]
      %v524 = vld [vmem:[%s522 + $0x4] sm:$0xf]
      %v525 = vld [vmem:[%s522 + $0x8] sm:$0xf]
      %v526 = vld [vmem:[%s522 + $0xc] sm:$0xf]
      %v527 = vld [vmem:[%s522 + $0x10] sm:$0xf]
      %v528 = vld [vmem:[%s522 + $0x14] sm:$0xf]
      %v529 = vld [vmem:[%s522 + $0x18] sm:$0xf]
      %v530 = vld [vmem:[%s522 + $0x1c] sm:$0xf]
      %v531 = vld [vmem:[%s522 + $0x20] sm:$0xf]
      %v532 = vld [vmem:[%s522 + $0x24] sm:$0xf]
      %v533 = vld [vmem:[%s522 + $0x28] sm:$0xf]
      %v534 = vld [vmem:[%s522 + $0x2c] sm:$0xf]
      %v535 = vld [vmem:[%s522 + $0x30] sm:$0xf]
      %v536 = vld [vmem:[%s522 + $0x34] sm:$0xf]
      %v537 = vld [vmem:[%s522 + $0x38] sm:$0xf]
      %v538 = vld [vmem:[%s522 + $0x3c] sm:$0xf]
      %v539 = vld [vmem:[%s522 + $0x40] sm:$0xf]
      %v540 = vld [vmem:[%s522 + $0x44] sm:$0xf]
      %v541 = vld [vmem:[%s522 + $0x48] sm:$0xf]
      %v542 = vld [vmem:[%s522 + $0x4c] sm:$0xf]
      %v543 = vld [vmem:[%s522 + $0x50] sm:$0xf]
      %v544 = vld [vmem:[%s522 + $0x54] sm:$0xf]
      %v545 = vld [vmem:[%s522 + $0x58] sm:$0xf]
      %v546 = vld [vmem:[%s522 + $0x5c] sm:$0xf]
      %v547 = vld [vmem:[%s522 + $0x60] sm:$0xf]
      %v548 = vld [vmem:[%s522 + $0x64] sm:$0xf]
      %v549 = vld [vmem:[%s522 + $0x68] sm:$0xf]
      %v550 = vld [vmem:[%s522 + $0x6c] sm:$0xf]
      %v551 = vld [vmem:[%s522 + $0x70] sm:$0xf]
      %v552 = vld [vmem:[%s522 + $0x74] sm:$0xf]
      %v553 = vld [vmem:[%s522 + $0x78] sm:$0xf]
      %v554 = vld [vmem:[%s522 + $0x7c] sm:$0xf]
      %v556 = vunpack.c.l.b16 %v521
      %v557 = vunpack.c.h.b16 %v521
      %v558 = vpack.c.b16 %v556, %v556
      %v559 = vpack.c.b16 %v557, %v557
      %v560 = vrot.slane %v558, 1
      %v561 = vrot.slane %v559, 1
      %v596 = vunpack.c.l.b16 %v523
      %v597 = vunpack.c.l.b16 %v524
      %v598 = vunpack.c.l.b16 %v525
      %v599 = vunpack.c.l.b16 %v526
      %v600 = vunpack.c.l.b16 %v527
      %v601 = vunpack.c.l.b16 %v528
      %v602 = vunpack.c.l.b16 %v529
      %v603 = vunpack.c.l.b16 %v530
      %v604 = vunpack.c.l.b16 %v531
      %v605 = vunpack.c.l.b16 %v532
      %v606 = vunpack.c.l.b16 %v533
      %v607 = vunpack.c.l.b16 %v534
      %v608 = vunpack.c.l.b16 %v535
      %v609 = vunpack.c.l.b16 %v536
      %v610 = vunpack.c.l.b16 %v537
      %v611 = vunpack.c.l.b16 %v538
      %v612 = vunpack.c.l.b16 %v539
      %v613 = vunpack.c.l.b16 %v540
      %v614 = vunpack.c.l.b16 %v541
      %v615 = vunpack.c.l.b16 %v542
      %v616 = vunpack.c.l.b16 %v543
      %v617 = vunpack.c.l.b16 %v544
      %v618 = vunpack.c.l.b16 %v545
      %v619 = vunpack.c.l.b16 %v546
      %v620 = vunpack.c.l.b16 %v547
      %v621 = vunpack.c.l.b16 %v548
      %v622 = vunpack.c.l.b16 %v549
      %v623 = vunpack.c.l.b16 %v550
      %v624 = vunpack.c.l.b16 %v551
      %v625 = vunpack.c.l.b16 %v552
      %v626 = vunpack.c.l.b16 %v553
      %v627 = vunpack.c.l.b16 %v554
      %v628 = vpack.c.b16 %v597, %v596
      %v629 = vpack.c.b16 %v599, %v598
      %v630 = vpack.c.b16 %v601, %v600
      %v631 = vpack.c.b16 %v603, %v602
      %v632 = vpack.c.b16 %v605, %v604
      %v633 = vpack.c.b16 %v607, %v606
      %v634 = vpack.c.b16 %v609, %v608
      %v635 = vpack.c.b16 %v611, %v610
      %v636 = vpack.c.b16 %v613, %v612
      %v637 = vpack.c.b16 %v615, %v614
      %v638 = vpack.c.b16 %v617, %v616
      %v639 = vpack.c.b16 %v619, %v618
      %v640 = vpack.c.b16 %v621, %v620
      %v641 = vpack.c.b16 %v623, %v622
      %v642 = vpack.c.b16 %v625, %v624
      %v643 = vpack.c.b16 %v627, %v626
      %660 = vmatprep.subr.bf16.mxu0 0
      %661 = vmatpush1.bf16.msra.mxu0 %v628
      %662 = vmatprep.subr.bf16.mxu0 0
      %663 = vmatpush1.bf16.msra.mxu0 %v629
      %664 = vmatprep.subr.bf16.mxu0 0
      %665 = vmatpush1.bf16.msra.mxu0 %v630
      %666 = vmatprep.subr.bf16.mxu0 0
      %667 = vmatpush1.bf16.msra.mxu0 %v631
      %668 = vmatprep.subr.bf16.mxu0 0
      %669 = vmatpush1.bf16.msra.mxu0 %v632
      %670 = vmatprep.subr.bf16.mxu0 0
      %671 = vmatpush1.bf16.msra.mxu0 %v633
      %672 = vmatprep.subr.bf16.mxu0 0
      %673 = vmatpush1.bf16.msra.mxu0 %v634
      %674 = vmatprep.subr.bf16.mxu0 0
      %675 = vmatpush1.bf16.msra.mxu0 %v635
      %676 = vmatprep.subr.bf16.mxu0 0
      %677 = vmatpush1.bf16.msra.mxu0 %v636
      %678 = vmatprep.subr.bf16.mxu0 0
      %679 = vmatpush1.bf16.msra.mxu0 %v637
      %680 = vmatprep.subr.bf16.mxu0 0
      %681 = vmatpush1.bf16.msra.mxu0 %v638
      %682 = vmatprep.subr.bf16.mxu0 0
      %683 = vmatpush1.bf16.msra.mxu0 %v639
      %684 = vmatprep.subr.bf16.mxu0 0
      %685 = vmatpush1.bf16.msra.mxu0 %v640
      %686 = vmatprep.subr.bf16.mxu0 0
      %687 = vmatpush1.bf16.msra.mxu0 %v641
      %688 = vmatprep.subr.bf16.mxu0 0
      %689 = vmatpush1.bf16.msra.mxu0 %v642
      %690 = vmatprep.subr.bf16.mxu0 0
      %691 = vmatpush1.bf16.msra.mxu0 %v643
      %692 = vmatprep.mubr.bf16.mxu0 %v561
      %693 = vmatmul.mubr.bf16.gmra.mrb[0].mxu0 %v560
      %v694 = vpop.f32.mrb[0].mxu0
      %v695 = vadd.f32 0.0, %v694
      %v696 = vpop.f32.mrb[0].mxu0
      %v697 = vpop.f32.mrb[0].mxu0
      %v698 = vpop.f32.mrb[0].mxu0
      %699 = vdwg.mxu0
      %v700 = vadd.f32 %v516, %v695
      %s701 = scalar_lea.vmem %s1, 384
      %v702 = vld [vmem:[%s701] sm:$0xf]
      %v703 = vld [vmem:[%s701 + $0x4] sm:$0xf]
      %v704 = vld [vmem:[%s701 + $0x8] sm:$0xf]
      %v705 = vld [vmem:[%s701 + $0xc] sm:$0xf]
      %v706 = vld [vmem:[%s701 + $0x10] sm:$0xf]
      %v707 = vld [vmem:[%s701 + $0x14] sm:$0xf]
      %v708 = vld [vmem:[%s701 + $0x18] sm:$0xf]
      %v709 = vld [vmem:[%s701 + $0x1c] sm:$0xf]
      %v710 = vld [vmem:[%s701 + $0x20] sm:$0xf]
      %v711 = vld [vmem:[%s701 + $0x24] sm:$0xf]
      %v712 = vld [vmem:[%s701 + $0x28] sm:$0xf]
      %v713 = vld [vmem:[%s701 + $0x2c] sm:$0xf]
      %v714 = vld [vmem:[%s701 + $0x30] sm:$0xf]
      %v715 = vld [vmem:[%s701 + $0x34] sm:$0xf]
      %v716 = vld [vmem:[%s701 + $0x38] sm:$0xf]
      %v717 = vld [vmem:[%s701 + $0x3c] sm:$0xf]
      %v718 = vld [vmem:[%s701 + $0x40] sm:$0xf]
      %v719 = vld [vmem:[%s701 + $0x44] sm:$0xf]
      %v720 = vld [vmem:[%s701 + $0x48] sm:$0xf]
      %v721 = vld [vmem:[%s701 + $0x4c] sm:$0xf]
      %v722 = vld [vmem:[%s701 + $0x50] sm:$0xf]
      %v723 = vld [vmem:[%s701 + $0x54] sm:$0xf]
      %v724 = vld [vmem:[%s701 + $0x58] sm:$0xf]
      %v725 = vld [vmem:[%s701 + $0x5c] sm:$0xf]
      %v726 = vld [vmem:[%s701 + $0x60] sm:$0xf]
      %v727 = vld [vmem:[%s701 + $0x64] sm:$0xf]
      %v728 = vld [vmem:[%s701 + $0x68] sm:$0xf]
      %v729 = vld [vmem:[%s701 + $0x6c] sm:$0xf]
      %v730 = vld [vmem:[%s701 + $0x70] sm:$0xf]
      %v731 = vld [vmem:[%s701 + $0x74] sm:$0xf]
      %v732 = vld [vmem:[%s701 + $0x78] sm:$0xf]
      %v733 = vld [vmem:[%s701 + $0x7c] sm:$0xf]
      %v735 = vshrl.u32 %v558, 16
      %v737 = vrot.slane %v735, 1
      %v739 = vshrl.u32 %v559, 16
      %v741 = vrot.slane %v739, 1
      %v776 = vunpack.c.l.b16 %v702
      %v777 = vunpack.c.l.b16 %v703
      %v778 = vunpack.c.l.b16 %v704
      %v779 = vunpack.c.l.b16 %v705
      %v780 = vunpack.c.l.b16 %v706
      %v781 = vunpack.c.l.b16 %v707
      %v782 = vunpack.c.l.b16 %v708
      %v783 = vunpack.c.l.b16 %v709
      %v784 = vunpack.c.l.b16 %v710
      %v785 = vunpack.c.l.b16 %v711
      %v786 = vunpack.c.l.b16 %v712
      %v787 = vunpack.c.l.b16 %v713
      %v788 = vunpack.c.l.b16 %v714
      %v789 = vunpack.c.l.b16 %v715
      %v790 = vunpack.c.l.b16 %v716
      %v791 = vunpack.c.l.b16 %v717
      %v792 = vunpack.c.l.b16 %v718
      %v793 = vunpack.c.l.b16 %v719
      %v794 = vunpack.c.l.b16 %v720
      %v795 = vunpack.c.l.b16 %v721
      %v796 = vunpack.c.l.b16 %v722
      %v797 = vunpack.c.l.b16 %v723
      %v798 = vunpack.c.l.b16 %v724
      %v799 = vunpack.c.l.b16 %v725
      %v800 = vunpack.c.l.b16 %v726
      %v801 = vunpack.c.l.b16 %v727
      %v802 = vunpack.c.l.b16 %v728
      %v803 = vunpack.c.l.b16 %v729
      %v804 = vunpack.c.l.b16 %v730
      %v805 = vunpack.c.l.b16 %v731
      %v806 = vunpack.c.l.b16 %v732
      %v807 = vunpack.c.l.b16 %v733
      %v808 = vpack.c.b16 %v777, %v776
      %v809 = vpack.c.b16 %v779, %v778
      %v810 = vpack.c.b16 %v781, %v780
      %v811 = vpack.c.b16 %v783, %v782
      %v812 = vpack.c.b16 %v785, %v784
      %v813 = vpack.c.b16 %v787, %v786
      %v814 = vpack.c.b16 %v789, %v788
      %v815 = vpack.c.b16 %v791, %v790
      %v816 = vpack.c.b16 %v793, %v792
      %v817 = vpack.c.b16 %v795, %v794
      %v818 = vpack.c.b16 %v797, %v796
      %v819 = vpack.c.b16 %v799, %v798
      %v820 = vpack.c.b16 %v801, %v800
      %v821 = vpack.c.b16 %v803, %v802
      %v822 = vpack.c.b16 %v805, %v804
      %v823 = vpack.c.b16 %v807, %v806
      %840 = vmatprep.subr.bf16.mxu0 0
      %841 = vmatpush1.bf16.msra.mxu0 %v808
      %842 = vmatprep.subr.bf16.mxu0 0
      %843 = vmatpush1.bf16.msra.mxu0 %v809
      %844 = vmatprep.subr.bf16.mxu0 0
      %845 = vmatpush1.bf16.msra.mxu0 %v810
      %846 = vmatprep.subr.bf16.mxu0 0
      %847 = vmatpush1.bf16.msra.mxu0 %v811
      %848 = vmatprep.subr.bf16.mxu0 0
      %849 = vmatpush1.bf16.msra.mxu0 %v812
      %850 = vmatprep.subr.bf16.mxu0 0
      %851 = vmatpush1.bf16.msra.mxu0 %v813
      %852 = vmatprep.subr.bf16.mxu0 0
      %853 = vmatpush1.bf16.msra.mxu0 %v814
      %854 = vmatprep.subr.bf16.mxu0 0
      %855 = vmatpush1.bf16.msra.mxu0 %v815
      %856 = vmatprep.subr.bf16.mxu0 0
      %857 = vmatpush1.bf16.msra.mxu0 %v816
      %858 = vmatprep.subr.bf16.mxu0 0
      %859 = vmatpush1.bf16.msra.mxu0 %v817
      %860 = vmatprep.subr.bf16.mxu0 0
      %861 = vmatpush1.bf16.msra.mxu0 %v818
      %862 = vmatprep.subr.bf16.mxu0 0
      %863 = vmatpush1.bf16.msra.mxu0 %v819
      %864 = vmatprep.subr.bf16.mxu0 0
      %865 = vmatpush1.bf16.msra.mxu0 %v820
      %866 = vmatprep.subr.bf16.mxu0 0
      %867 = vmatpush1.bf16.msra.mxu0 %v821
      %868 = vmatprep.subr.bf16.mxu0 0
      %869 = vmatpush1.bf16.msra.mxu0 %v822
      %870 = vmatprep.subr.bf16.mxu0 0
      %871 = vmatpush1.bf16.msra.mxu0 %v823
      %872 = vmatprep.mubr.bf16.mxu0 %v741
      %873 = vmatmul.mubr.bf16.gmra.mrb[0].mxu0 %v737
      %v874 = vpop.f32.mrb[0].mxu0
      %v875 = vadd.f32 0.0, %v874
      %v876 = vpop.f32.mrb[0].mxu0
      %v877 = vpop.f32.mrb[0].mxu0
      %v878 = vpop.f32.mrb[0].mxu0
      %879 = vdwg.mxu0
      %v880 = vadd.f32 %v700, %v875
      %v881 = vld [vmem:[%s163] sm:$0x44]
      %s882 = scalar_lea.vmem %s1, 512
      %v883 = vld [vmem:[%s882] sm:$0xf]
      %v884 = vld [vmem:[%s882 + $0x4] sm:$0xf]
      %v885 = vld [vmem:[%s882 + $0x8] sm:$0xf]
      %v886 = vld [vmem:[%s882 + $0xc] sm:$0xf]
      %v887 = vld [vmem:[%s882 + $0x10] sm:$0xf]
      %v888 = vld [vmem:[%s882 + $0x14] sm:$0xf]
      %v889 = vld [vmem:[%s882 + $0x18] sm:$0xf]
      %v890 = vld [vmem:[%s882 + $0x1c] sm:$0xf]
      %v891 = vld [vmem:[%s882 + $0x20] sm:$0xf]
      %v892 = vld [vmem:[%s882 + $0x24] sm:$0xf]
      %v893 = vld [vmem:[%s882 + $0x28] sm:$0xf]
      %v894 = vld [vmem:[%s882 + $0x2c] sm:$0xf]
      %v895 = vld [vmem:[%s882 + $0x30] sm:$0xf]
      %v896 = vld [vmem:[%s882 + $0x34] sm:$0xf]
      %v897 = vld [vmem:[%s882 + $0x38] sm:$0xf]
      %v898 = vld [vmem:[%s882 + $0x3c] sm:$0xf]
      %v899 = vld [vmem:[%s882 + $0x40] sm:$0xf]
      %v900 = vld [vmem:[%s882 + $0x44] sm:$0xf]
      %v901 = vld [vmem:[%s882 + $0x48] sm:$0xf]
      %v902 = vld [vmem:[%s882 + $0x4c] sm:$0xf]
      %v903 = vld [vmem:[%s882 + $0x50] sm:$0xf]
      %v904 = vld [vmem:[%s882 + $0x54] sm:$0xf]
      %v905 = vld [vmem:[%s882 + $0x58] sm:$0xf]
      %v906 = vld [vmem:[%s882 + $0x5c] sm:$0xf]
      %v907 = vld [vmem:[%s882 + $0x60] sm:$0xf]
      %v908 = vld [vmem:[%s882 + $0x64] sm:$0xf]
      %v909 = vld [vmem:[%s882 + $0x68] sm:$0xf]
      %v910 = vld [vmem:[%s882 + $0x6c] sm:$0xf]
      %v911 = vld [vmem:[%s882 + $0x70] sm:$0xf]
      %v912 = vld [vmem:[%s882 + $0x74] sm:$0xf]
      %v913 = vld [vmem:[%s882 + $0x78] sm:$0xf]
      %v914 = vld [vmem:[%s882 + $0x7c] sm:$0xf]
      %v916 = vunpack.c.l.b16 %v881
      %v917 = vunpack.c.h.b16 %v881
      %v918 = vpack.c.b16 %v916, %v916
      %v919 = vpack.c.b16 %v917, %v917
      %v920 = vrot.slane %v918, 2
      %v921 = vrot.slane %v919, 2
      %v956 = vunpack.c.l.b16 %v883
      %v957 = vunpack.c.l.b16 %v884
      %v958 = vunpack.c.l.b16 %v885
      %v959 = vunpack.c.l.b16 %v886
      %v960 = vunpack.c.l.b16 %v887
      %v961 = vunpack.c.l.b16 %v888
      %v962 = vunpack.c.l.b16 %v889
      %v963 = vunpack.c.l.b16 %v890
      %v964 = vunpack.c.l.b16 %v891
      %v965 = vunpack.c.l.b16 %v892
      %v966 = vunpack.c.l.b16 %v893
      %v967 = vunpack.c.l.b16 %v894
      %v968 = vunpack.c.l.b16 %v895
      %v969 = vunpack.c.l.b16 %v896
      %v970 = vunpack.c.l.b16 %v897
      %v971 = vunpack.c.l.b16 %v898
      %v972 = vunpack.c.l.b16 %v899
      %v973 = vunpack.c.l.b16 %v900
      %v974 = vunpack.c.l.b16 %v901
      %v975 = vunpack.c.l.b16 %v902
      %v976 = vunpack.c.l.b16 %v903
      %v977 = vunpack.c.l.b16 %v904
      %v978 = vunpack.c.l.b16 %v905
      %v979 = vunpack.c.l.b16 %v906
      %v980 = vunpack.c.l.b16 %v907
      %v981 = vunpack.c.l.b16 %v908
      %v982 = vunpack.c.l.b16 %v909
      %v983 = vunpack.c.l.b16 %v910
      %v984 = vunpack.c.l.b16 %v911
      %v985 = vunpack.c.l.b16 %v912
      %v986 = vunpack.c.l.b16 %v913
      %v987 = vunpack.c.l.b16 %v914
      %v988 = vpack.c.b16 %v957, %v956
      %v989 = vpack.c.b16 %v959, %v958
      %v990 = vpack.c.b16 %v961, %v960
      %v991 = vpack.c.b16 %v963, %v962
      %v992 = vpack.c.b16 %v965, %v964
      %v993 = vpack.c.b16 %v967, %v966
      %v994 = vpack.c.b16 %v969, %v968
      %v995 = vpack.c.b16 %v971, %v970
      %v996 = vpack.c.b16 %v973, %v972
      %v997 = vpack.c.b16 %v975, %v974
      %v998 = vpack.c.b16 %v977, %v976
      %v999 = vpack.c.b16 %v979, %v978
      %v1000 = vpack.c.b16 %v981, %v980
      %v1001 = vpack.c.b16 %v983, %v982
      %v1002 = vpack.c.b16 %v985, %v984
      %v1003 = vpack.c.b16 %v987, %v986
      %1020 = vmatprep.subr.bf16.mxu0 0
      %1021 = vmatpush1.bf16.msra.mxu0 %v988
      %1022 = vmatprep.subr.bf16.mxu0 0
      %1023 = vmatpush1.bf16.msra.mxu0 %v989
      %1024 = vmatprep.subr.bf16.mxu0 0
      %1025 = vmatpush1.bf16.msra.mxu0 %v990
      %1026 = vmatprep.subr.bf16.mxu0 0
      %1027 = vmatpush1.bf16.msra.mxu0 %v991
      %1028 = vmatprep.subr.bf16.mxu0 0
      %1029 = vmatpush1.bf16.msra.mxu0 %v992
      %1030 = vmatprep.subr.bf16.mxu0 0
      %1031 = vmatpush1.bf16.msra.mxu0 %v993
      %1032 = vmatprep.subr.bf16.mxu0 0
      %1033 = vmatpush1.bf16.msra.mxu0 %v994
      %1034 = vmatprep.subr.bf16.mxu0 0
      %1035 = vmatpush1.bf16.msra.mxu0 %v995
      %1036 = vmatprep.subr.bf16.mxu0 0
      %1037 = vmatpush1.bf16.msra.mxu0 %v996
      %1038 = vmatprep.subr.bf16.mxu0 0
      %1039 = vmatpush1.bf16.msra.mxu0 %v997
      %1040 = vmatprep.subr.bf16.mxu0 0
      %1041 = vmatpush1.bf16.msra.mxu0 %v998
      %1042 = vmatprep.subr.bf16.mxu0 0
      %1043 = vmatpush1.bf16.msra.mxu0 %v999
      %1044 = vmatprep.subr.bf16.mxu0 0
      %1045 = vmatpush1.bf16.msra.mxu0 %v1000
      %1046 = vmatprep.subr.bf16.mxu0 0
      %1047 = vmatpush1.bf16.msra.mxu0 %v1001
      %1048 = vmatprep.subr.bf16.mxu0 0
      %1049 = vmatpush1.bf16.msra.mxu0 %v1002
      %1050 = vmatprep.subr.bf16.mxu0 0
      %1051 = vmatpush1.bf16.msra.mxu0 %v1003
      %1052 = vmatprep.mubr.bf16.mxu0 %v921
      %1053 = vmatmul.mubr.bf16.gmra.mrb[0].mxu0 %v920
      %v1054 = vpop.f32.mrb[0].mxu0
      %v1055 = vadd.f32 0.0, %v1054
      %v1056 = vpop.f32.mrb[0].mxu0
      %v1057 = vpop.f32.mrb[0].mxu0
      %v1058 = vpop.f32.mrb[0].mxu0
      %1059 = vdwg.mxu0
      %v1060 = vadd.f32 %v880, %v1055
      %s1061 = scalar_lea.vmem %s1, 640
      %v1062 = vld [vmem:[%s1061] sm:$0xf]
      %v1063 = vld [vmem:[%s1061 + $0x4] sm:$0xf]
      %v1064 = vld [vmem:[%s1061 + $0x8] sm:$0xf]
      %v1065 = vld [vmem:[%s1061 + $0xc] sm:$0xf]
      %v1066 = vld [vmem:[%s1061 + $0x10] sm:$0xf]
      %v1067 = vld [vmem:[%s1061 + $0x14] sm:$0xf]
      %v1068 = vld [vmem:[%s1061 + $0x18] sm:$0xf]
      %v1069 = vld [vmem:[%s1061 + $0x1c] sm:$0xf]
      %v1070 = vld [vmem:[%s1061 + $0x20] sm:$0xf]
      %v1071 = vld [vmem:[%s1061 + $0x24] sm:$0xf]
      %v1072 = vld [vmem:[%s1061 + $0x28] sm:$0xf]
      %v1073 = vld [vmem:[%s1061 + $0x2c] sm:$0xf]
      %v1074 = vld [vmem:[%s1061 + $0x30] sm:$0xf]
      %v1075 = vld [vmem:[%s1061 + $0x34] sm:$0xf]
      %v1076 = vld [vmem:[%s1061 + $0x38] sm:$0xf]
      %v1077 = vld [vmem:[%s1061 + $0x3c] sm:$0xf]
      %v1078 = vld [vmem:[%s1061 + $0x40] sm:$0xf]
      %v1079 = vld [vmem:[%s1061 + $0x44] sm:$0xf]
      %v1080 = vld [vmem:[%s1061 + $0x48] sm:$0xf]
      %v1081 = vld [vmem:[%s1061 + $0x4c] sm:$0xf]
      %v1082 = vld [vmem:[%s1061 + $0x50] sm:$0xf]
      %v1083 = vld [vmem:[%s1061 + $0x54] sm:$0xf]
      %v1084 = vld [vmem:[%s1061 + $0x58] sm:$0xf]
      %v1085 = vld [vmem:[%s1061 + $0x5c] sm:$0xf]
      %v1086 = vld [vmem:[%s1061 + $0x60] sm:$0xf]
      %v1087 = vld [vmem:[%s1061 + $0x64] sm:$0xf]
      %v1088 = vld [vmem:[%s1061 + $0x68] sm:$0xf]
      %v1089 = vld [vmem:[%s1061 + $0x6c] sm:$0xf]
      %v1090 = vld [vmem:[%s1061 + $0x70] sm:$0xf]
      %v1091 = vld [vmem:[%s1061 + $0x74] sm:$0xf]
      %v1092 = vld [vmem:[%s1061 + $0x78] sm:$0xf]
      %v1093 = vld [vmem:[%s1061 + $0x7c] sm:$0xf]
      %v1095 = vshrl.u32 %v918, 16
      %v1097 = vrot.slane %v1095, 2
      %v1099 = vshrl.u32 %v919, 16
      %v1101 = vrot.slane %v1099, 2
      %v1136 = vunpack.c.l.b16 %v1062
      %v1137 = vunpack.c.l.b16 %v1063
      %v1138 = vunpack.c.l.b16 %v1064
      %v1139 = vunpack.c.l.b16 %v1065
      %v1140 = vunpack.c.l.b16 %v1066
      %v1141 = vunpack.c.l.b16 %v1067
      %v1142 = vunpack.c.l.b16 %v1068
      %v1143 = vunpack.c.l.b16 %v1069
      %v1144 = vunpack.c.l.b16 %v1070
      %v1145 = vunpack.c.l.b16 %v1071
      %v1146 = vunpack.c.l.b16 %v1072
      %v1147 = vunpack.c.l.b16 %v1073
      %v1148 = vunpack.c.l.b16 %v1074
      %v1149 = vunpack.c.l.b16 %v1075
      %v1150 = vunpack.c.l.b16 %v1076
      %v1151 = vunpack.c.l.b16 %v1077
      %v1152 = vunpack.c.l.b16 %v1078
      %v1153 = vunpack.c.l.b16 %v1079
      %v1154 = vunpack.c.l.b16 %v1080
      %v1155 = vunpack.c.l.b16 %v1081
      %v1156 = vunpack.c.l.b16 %v1082
      %v1157 = vunpack.c.l.b16 %v1083
      %v1158 = vunpack.c.l.b16 %v1084
      %v1159 = vunpack.c.l.b16 %v1085
      %v1160 = vunpack.c.l.b16 %v1086
      %v1161 = vunpack.c.l.b16 %v1087
      %v1162 = vunpack.c.l.b16 %v1088
      %v1163 = vunpack.c.l.b16 %v1089
      %v1164 = vunpack.c.l.b16 %v1090
      %v1165 = vunpack.c.l.b16 %v1091
      %v1166 = vunpack.c.l.b16 %v1092
      %v1167 = vunpack.c.l.b16 %v1093
      %v1168 = vpack.c.b16 %v1137, %v1136
      %v1169 = vpack.c.b16 %v1139, %v1138
      %v1170 = vpack.c.b16 %v1141, %v1140
      %v1171 = vpack.c.b16 %v1143, %v1142
      %v1172 = vpack.c.b16 %v1145, %v1144
      %v1173 = vpack.c.b16 %v1147, %v1146
      %v1174 = vpack.c.b16 %v1149, %v1148
      %v1175 = vpack.c.b16 %v1151, %v1150
      %v1176 = vpack.c.b16 %v1153, %v1152
      %v1177 = vpack.c.b16 %v1155, %v1154
      %v1178 = vpack.c.b16 %v1157, %v1156
      %v1179 = vpack.c.b16 %v1159, %v1158
      %v1180 = vpack.c.b16 %v1161, %v1160
      %v1181 = vpack.c.b16 %v1163, %v1162
      %v1182 = vpack.c.b16 %v1165, %v1164
      %v1183 = vpack.c.b16 %v1167, %v1166
      %1200 = vmatprep.subr.bf16.mxu0 0
      %1201 = vmatpush1.bf16.msra.mxu0 %v1168
      %1202 = vmatprep.subr.bf16.mxu0 0
      %1203 = vmatpush1.bf16.msra.mxu0 %v1169
      %1204 = vmatprep.subr.bf16.mxu0 0
      %1205 = vmatpush1.bf16.msra.mxu0 %v1170
      %1206 = vmatprep.subr.bf16.mxu0 0
      %1207 = vmatpush1.bf16.msra.mxu0 %v1171
      %1208 = vmatprep.subr.bf16.mxu0 0
      %1209 = vmatpush1.bf16.msra.mxu0 %v1172
      %1210 = vmatprep.subr.bf16.mxu0 0
      %1211 = vmatpush1.bf16.msra.mxu0 %v1173
      %1212 = vmatprep.subr.bf16.mxu0 0
      %1213 = vmatpush1.bf16.msra.mxu0 %v1174
      %1214 = vmatprep.subr.bf16.mxu0 0
      %1215 = vmatpush1.bf16.msra.mxu0 %v1175
      %1216 = vmatprep.subr.bf16.mxu0 0
      %1217 = vmatpush1.bf16.msra.mxu0 %v1176
      %1218 = vmatprep.subr.bf16.mxu0 0
      %1219 = vmatpush1.bf16.msra.mxu0 %v1177
      %1220 = vmatprep.subr.bf16.mxu0 0
      %1221 = vmatpush1.bf16.msra.mxu0 %v1178
      %1222 = vmatprep.subr.bf16.mxu0 0
      %1223 = vmatpush1.bf16.msra.mxu0 %v1179
      %1224 = vmatprep.subr.bf16.mxu0 0
      %1225 = vmatpush1.bf16.msra.mxu0 %v1180
      %1226 = vmatprep.subr.bf16.mxu0 0
      %1227 = vmatpush1.bf16.msra.mxu0 %v1181
      %1228 = vmatprep.subr.bf16.mxu0 0
      %1229 = vmatpush1.bf16.msra.mxu0 %v1182
      %1230 = vmatprep.subr.bf16.mxu0 0
      %1231 = vmatpush1.bf16.msra.mxu0 %v1183
      %1232 = vmatprep.mubr.bf16.mxu0 %v1101
      %1233 = vmatmul.mubr.bf16.gmra.mrb[0].mxu0 %v1097
      %v1234 = vpop.f32.mrb[0].mxu0
      %v1235 = vadd.f32 0.0, %v1234
      %v1236 = vpop.f32.mrb[0].mxu0
      %v1237 = vpop.f32.mrb[0].mxu0
      %v1238 = vpop.f32.mrb[0].mxu0
      %1239 = vdwg.mxu0
      %v1240 = vadd.f32 %v1060, %v1235
      %v1241 = vld [vmem:[%s163] sm:$0x88]
      %s1242 = scalar_lea.vmem %s1, 768
      %v1243 = vld [vmem:[%s1242] sm:$0xf]
      %v1244 = vld [vmem:[%s1242 + $0x4] sm:$0xf]
      %v1245 = vld [vmem:[%s1242 + $0x8] sm:$0xf]
      %v1246 = vld [vmem:[%s1242 + $0xc] sm:$0xf]
      %v1247 = vld [vmem:[%s1242 + $0x10] sm:$0xf]
      %v1248 = vld [vmem:[%s1242 + $0x14] sm:$0xf]
      %v1249 = vld [vmem:[%s1242 + $0x18] sm:$0xf]
      %v1250 = vld [vmem:[%s1242 + $0x1c] sm:$0xf]
      %v1251 = vld [vmem:[%s1242 + $0x20] sm:$0xf]
      %v1252 = vld [vmem:[%s1242 + $0x24] sm:$0xf]
      %v1253 = vld [vmem:[%s1242 + $0x28] sm:$0xf]
      %v1254 = vld [vmem:[%s1242 + $0x2c] sm:$0xf]
      %v1255 = vld [vmem:[%s1242 + $0x30] sm:$0xf]
      %v1256 = vld [vmem:[%s1242 + $0x34] sm:$0xf]
      %v1257 = vld [vmem:[%s1242 + $0x38] sm:$0xf]
      %v1258 = vld [vmem:[%s1242 + $0x3c] sm:$0xf]
      %v1259 = vld [vmem:[%s1242 + $0x40] sm:$0xf]
      %v1260 = vld [vmem:[%s1242 + $0x44] sm:$0xf]
      %v1261 = vld [vmem:[%s1242 + $0x48] sm:$0xf]
      %v1262 = vld [vmem:[%s1242 + $0x4c] sm:$0xf]
      %v1263 = vld [vmem:[%s1242 + $0x50] sm:$0xf]
      %v1264 = vld [vmem:[%s1242 + $0x54] sm:$0xf]
      %v1265 = vld [vmem:[%s1242 + $0x58] sm:$0xf]
      %v1266 = vld [vmem:[%s1242 + $0x5c] sm:$0xf]
      %v1267 = vld [vmem:[%s1242 + $0x60] sm:$0xf]
      %v1268 = vld [vmem:[%s1242 + $0x64] sm:$0xf]
      %v1269 = vld [vmem:[%s1242 + $0x68] sm:$0xf]
      %v1270 = vld [vmem:[%s1242 + $0x6c] sm:$0xf]
      %v1271 = vld [vmem:[%s1242 + $0x70] sm:$0xf]
      %v1272 = vld [vmem:[%s1242 + $0x74] sm:$0xf]
      %v1273 = vld [vmem:[%s1242 + $0x78] sm:$0xf]
      %v1274 = vld [vmem:[%s1242 + $0x7c] sm:$0xf]
      %v1276 = vunpack.c.l.b16 %v1241
      %v1277 = vunpack.c.h.b16 %v1241
      %v1278 = vpack.c.b16 %v1276, %v1276
      %v1279 = vpack.c.b16 %v1277, %v1277
      %v1280 = vrot.slane %v1278, 3
      %v1281 = vrot.slane %v1279, 3
      %v1316 = vunpack.c.l.b16 %v1243
      %v1317 = vunpack.c.l.b16 %v1244
      %v1318 = vunpack.c.l.b16 %v1245
      %v1319 = vunpack.c.l.b16 %v1246
      %v1320 = vunpack.c.l.b16 %v1247
      %v1321 = vunpack.c.l.b16 %v1248
      %v1322 = vunpack.c.l.b16 %v1249
      %v1323 = vunpack.c.l.b16 %v1250
      %v1324 = vunpack.c.l.b16 %v1251
      %v1325 = vunpack.c.l.b16 %v1252
      %v1326 = vunpack.c.l.b16 %v1253
      %v1327 = vunpack.c.l.b16 %v1254
      %v1328 = vunpack.c.l.b16 %v1255
      %v1329 = vunpack.c.l.b16 %v1256
      %v1330 = vunpack.c.l.b16 %v1257
      %v1331 = vunpack.c.l.b16 %v1258
      %v1332 = vunpack.c.l.b16 %v1259
      %v1333 = vunpack.c.l.b16 %v1260
      %v1334 = vunpack.c.l.b16 %v1261
      %v1335 = vunpack.c.l.b16 %v1262
      %v1336 = vunpack.c.l.b16 %v1263
      %v1337 = vunpack.c.l.b16 %v1264
      %v1338 = vunpack.c.l.b16 %v1265
      %v1339 = vunpack.c.l.b16 %v1266
      %v1340 = vunpack.c.l.b16 %v1267
      %v1341 = vunpack.c.l.b16 %v1268
      %v1342 = vunpack.c.l.b16 %v1269
      %v1343 = vunpack.c.l.b16 %v1270
      %v1344 = vunpack.c.l.b16 %v1271
      %v1345 = vunpack.c.l.b16 %v1272
      %v1346 = vunpack.c.l.b16 %v1273
      %v1347 = vunpack.c.l.b16 %v1274
      %v1348 = vpack.c.b16 %v1317, %v1316
      %v1349 = vpack.c.b16 %v1319, %v1318
      %v1350 = vpack.c.b16 %v1321, %v1320
      %v1351 = vpack.c.b16 %v1323, %v1322
      %v1352 = vpack.c.b16 %v1325, %v1324
      %v1353 = vpack.c.b16 %v1327, %v1326
      %v1354 = vpack.c.b16 %v1329, %v1328
      %v1355 = vpack.c.b16 %v1331, %v1330
      %v1356 = vpack.c.b16 %v1333, %v1332
      %v1357 = vpack.c.b16 %v1335, %v1334
      %v1358 = vpack.c.b16 %v1337, %v1336
      %v1359 = vpack.c.b16 %v1339, %v1338
      %v1360 = vpack.c.b16 %v1341, %v1340
      %v1361 = vpack.c.b16 %v1343, %v1342
      %v1362 = vpack.c.b16 %v1345, %v1344
      %v1363 = vpack.c.b16 %v1347, %v1346
      %1380 = vmatprep.subr.bf16.mxu0 0
      %1381 = vmatpush1.bf16.msra.mxu0 %v1348
      %1382 = vmatprep.subr.bf16.mxu0 0
      %1383 = vmatpush1.bf16.msra.mxu0 %v1349
      %1384 = vmatprep.subr.bf16.mxu0 0
      %1385 = vmatpush1.bf16.msra.mxu0 %v1350
      %1386 = vmatprep.subr.bf16.mxu0 0
      %1387 = vmatpush1.bf16.msra.mxu0 %v1351
      %1388 = vmatprep.subr.bf16.mxu0 0
      %1389 = vmatpush1.bf16.msra.mxu0 %v1352
      %1390 = vmatprep.subr.bf16.mxu0 0
      %1391 = vmatpush1.bf16.msra.mxu0 %v1353
      %1392 = vmatprep.subr.bf16.mxu0 0
      %1393 = vmatpush1.bf16.msra.mxu0 %v1354
      %1394 = vmatprep.subr.bf16.mxu0 0
      %1395 = vmatpush1.bf16.msra.mxu0 %v1355
      %1396 = vmatprep.subr.bf16.mxu0 0
      %1397 = vmatpush1.bf16.msra.mxu0 %v1356
      %1398 = vmatprep.subr.bf16.mxu0 0
      %1399 = vmatpush1.bf16.msra.mxu0 %v1357
      %1400 = vmatprep.subr.bf16.mxu0 0
      %1401 = vmatpush1.bf16.msra.mxu0 %v1358
      %1402 = vmatprep.subr.bf16.mxu0 0
      %1403 = vmatpush1.bf16.msra.mxu0 %v1359
      %1404 = vmatprep.subr.bf16.mxu0 0
      %1405 = vmatpush1.bf16.msra.mxu0 %v1360
      %1406 = vmatprep.subr.bf16.mxu0 0
      %1407 = vmatpush1.bf16.msra.mxu0 %v1361
      %1408 = vmatprep.subr.bf16.mxu0 0
      %1409 = vmatpush1.bf16.msra.mxu0 %v1362
      %1410 = vmatprep.subr.bf16.mxu0 0
      %1411 = vmatpush1.bf16.msra.mxu0 %v1363
      %1412 = vmatprep.mubr.bf16.mxu0 %v1281
      %1413 = vmatmul.mubr.bf16.gmra.mrb[0].mxu0 %v1280
      %v1414 = vpop.f32.mrb[0].mxu0
      %v1415 = vadd.f32 0.0, %v1414
      %v1416 = vpop.f32.mrb[0].mxu0
      %v1417 = vpop.f32.mrb[0].mxu0
      %v1418 = vpop.f32.mrb[0].mxu0
      %1419 = vdwg.mxu0
      %v1420 = vadd.f32 %v1240, %v1415
      %s1421 = scalar_lea.vmem %s1, 896
      %v1422 = vld [vmem:[%s1421] sm:$0xf]
      %v1423 = vld [vmem:[%s1421 + $0x4] sm:$0xf]
      %v1424 = vld [vmem:[%s1421 + $0x8] sm:$0xf]
      %v1425 = vld [vmem:[%s1421 + $0xc] sm:$0xf]
      %v1426 = vld [vmem:[%s1421 + $0x10] sm:$0xf]
      %v1427 = vld [vmem:[%s1421 + $0x14] sm:$0xf]
      %v1428 = vld [vmem:[%s1421 + $0x18] sm:$0xf]
      %v1429 = vld [vmem:[%s1421 + $0x1c] sm:$0xf]
      %v1430 = vld [vmem:[%s1421 + $0x20] sm:$0xf]
      %v1431 = vld [vmem:[%s1421 + $0x24] sm:$0xf]
      %v1432 = vld [vmem:[%s1421 + $0x28] sm:$0xf]
      %v1433 = vld [vmem:[%s1421 + $0x2c] sm:$0xf]
      %v1434 = vld [vmem:[%s1421 + $0x30] sm:$0xf]
      %v1435 = vld [vmem:[%s1421 + $0x34] sm:$0xf]
      %v1436 = vld [vmem:[%s1421 + $0x38] sm:$0xf]
      %v1437 = vld [vmem:[%s1421 + $0x3c] sm:$0xf]
      %v1438 = vld [vmem:[%s1421 + $0x40] sm:$0xf]
      %v1439 = vld [vmem:[%s1421 + $0x44] sm:$0xf]
      %v1440 = vld [vmem:[%s1421 + $0x48] sm:$0xf]
      %v1441 = vld [vmem:[%s1421 + $0x4c] sm:$0xf]
      %v1442 = vld [vmem:[%s1421 + $0x50] sm:$0xf]
      %v1443 = vld [vmem:[%s1421 + $0x54] sm:$0xf]
      %v1444 = vld [vmem:[%s1421 + $0x58] sm:$0xf]
      %v1445 = vld [vmem:[%s1421 + $0x5c] sm:$0xf]
      %v1446 = vld [vmem:[%s1421 + $0x60] sm:$0xf]
      %v1447 = vld [vmem:[%s1421 + $0x64] sm:$0xf]
      %v1448 = vld [vmem:[%s1421 + $0x68] sm:$0xf]
      %v1449 = vld [vmem:[%s1421 + $0x6c] sm:$0xf]
      %v1450 = vld [vmem:[%s1421 + $0x70] sm:$0xf]
      %v1451 = vld [vmem:[%s1421 + $0x74] sm:$0xf]
      %v1452 = vld [vmem:[%s1421 + $0x78] sm:$0xf]
      %v1453 = vld [vmem:[%s1421 + $0x7c] sm:$0xf]
      %v1455 = vshrl.u32 %v1278, 16
      %v1457 = vrot.slane %v1455, 3
      %v1459 = vshrl.u32 %v1279, 16
      %v1461 = vrot.slane %v1459, 3
      %v1496 = vunpack.c.l.b16 %v1422
      %v1497 = vunpack.c.l.b16 %v1423
      %v1498 = vunpack.c.l.b16 %v1424
      %v1499 = vunpack.c.l.b16 %v1425
      %v1500 = vunpack.c.l.b16 %v1426
      %v1501 = vunpack.c.l.b16 %v1427
      %v1502 = vunpack.c.l.b16 %v1428
      %v1503 = vunpack.c.l.b16 %v1429
      %v1504 = vunpack.c.l.b16 %v1430
      %v1505 = vunpack.c.l.b16 %v1431
      %v1506 = vunpack.c.l.b16 %v1432
      %v1507 = vunpack.c.l.b16 %v1433
      %v1508 = vunpack.c.l.b16 %v1434
      %v1509 = vunpack.c.l.b16 %v1435
      %v1510 = vunpack.c.l.b16 %v1436
      %v1511 = vunpack.c.l.b16 %v1437
      %v1512 = vunpack.c.l.b16 %v1438
      %v1513 = vunpack.c.l.b16 %v1439
      %v1514 = vunpack.c.l.b16 %v1440
      %v1515 = vunpack.c.l.b16 %v1441
      %v1516 = vunpack.c.l.b16 %v1442
      %v1517 = vunpack.c.l.b16 %v1443
      %v1518 = vunpack.c.l.b16 %v1444
      %v1519 = vunpack.c.l.b16 %v1445
      %v1520 = vunpack.c.l.b16 %v1446
      %v1521 = vunpack.c.l.b16 %v1447
      %v1522 = vunpack.c.l.b16 %v1448
      %v1523 = vunpack.c.l.b16 %v1449
      %v1524 = vunpack.c.l.b16 %v1450
      %v1525 = vunpack.c.l.b16 %v1451
      %v1526 = vunpack.c.l.b16 %v1452
      %v1527 = vunpack.c.l.b16 %v1453
      %v1528 = vpack.c.b16 %v1497, %v1496
      %v1529 = vpack.c.b16 %v1499, %v1498
      %v1530 = vpack.c.b16 %v1501, %v1500
      %v1531 = vpack.c.b16 %v1503, %v1502
      %v1532 = vpack.c.b16 %v1505, %v1504
      %v1533 = vpack.c.b16 %v1507, %v1506
      %v1534 = vpack.c.b16 %v1509, %v1508
      %v1535 = vpack.c.b16 %v1511, %v1510
      %v1536 = vpack.c.b16 %v1513, %v1512
      %v1537 = vpack.c.b16 %v1515, %v1514
      %v1538 = vpack.c.b16 %v1517, %v1516
      %v1539 = vpack.c.b16 %v1519, %v1518
      %v1540 = vpack.c.b16 %v1521, %v1520
      %v1541 = vpack.c.b16 %v1523, %v1522
      %v1542 = vpack.c.b16 %v1525, %v1524
      %v1543 = vpack.c.b16 %v1527, %v1526
      %1560 = vmatprep.subr.bf16.mxu0 0
      %1561 = vmatpush1.bf16.msra.mxu0 %v1528
      %1562 = vmatprep.subr.bf16.mxu0 0
      %1563 = vmatpush1.bf16.msra.mxu0 %v1529
      %1564 = vmatprep.subr.bf16.mxu0 0
      %1565 = vmatpush1.bf16.msra.mxu0 %v1530
      %1566 = vmatprep.subr.bf16.mxu0 0
      %1567 = vmatpush1.bf16.msra.mxu0 %v1531
      %1568 = vmatprep.subr.bf16.mxu0 0
      %1569 = vmatpush1.bf16.msra.mxu0 %v1532
      %1570 = vmatprep.subr.bf16.mxu0 0
      %1571 = vmatpush1.bf16.msra.mxu0 %v1533
      %1572 = vmatprep.subr.bf16.mxu0 0
      %1573 = vmatpush1.bf16.msra.mxu0 %v1534
      %1574 = vmatprep.subr.bf16.mxu0 0
      %1575 = vmatpush1.bf16.msra.mxu0 %v1535
      %1576 = vmatprep.subr.bf16.mxu0 0
      %1577 = vmatpush1.bf16.msra.mxu0 %v1536
      %1578 = vmatprep.subr.bf16.mxu0 0
      %1579 = vmatpush1.bf16.msra.mxu0 %v1537
      %1580 = vmatprep.subr.bf16.mxu0 0
      %1581 = vmatpush1.bf16.msra.mxu0 %v1538
      %1582 = vmatprep.subr.bf16.mxu0 0
      %1583 = vmatpush1.bf16.msra.mxu0 %v1539
      %1584 = vmatprep.subr.bf16.mxu0 0
      %1585 = vmatpush1.bf16.msra.mxu0 %v1540
      %1586 = vmatprep.subr.bf16.mxu0 0
      %1587 = vmatpush1.bf16.msra.mxu0 %v1541
      %1588 = vmatprep.subr.bf16.mxu0 0
      %1589 = vmatpush1.bf16.msra.mxu0 %v1542
      %1590 = vmatprep.subr.bf16.mxu0 0
      %1591 = vmatpush1.bf16.msra.mxu0 %v1543
      %1592 = vmatprep.mubr.bf16.mxu0 %v1461
      %1593 = vmatmul.mubr.bf16.gmra.mrb[0].mxu0 %v1457
      %v1594 = vpop.f32.mrb[0].mxu0
      %v1595 = vadd.f32 0.0, %v1594
      %v1596 = vpop.f32.mrb[0].mxu0
      %v1597 = vpop.f32.mrb[0].mxu0
      %v1598 = vpop.f32.mrb[0].mxu0
      %1599 = vdwg.mxu0
      %v1600 = vadd.f32 %v1420, %v1595
      %v1601 = vld [vmem:[%s163 + $0x8] sm:$0x11]
      %s1602 = scalar_lea.vmem %s1, 1024
      %v1603 = vld [vmem:[%s1602] sm:$0xf]
      %v1604 = vld [vmem:[%s1602 + $0x4] sm:$0xf]
      %v1605 = vld [vmem:[%s1602 + $0x8] sm:$0xf]
      %v1606 = vld [vmem:[%s1602 + $0xc] sm:$0xf]
      %v1607 = vld [vmem:[%s1602 + $0x10] sm:$0xf]
      %v1608 = vld [vmem:[%s1602 + $0x14] sm:$0xf]
      %v1609 = vld [vmem:[%s1602 + $0x18] sm:$0xf]
      %v1610 = vld [vmem:[%s1602 + $0x1c] sm:$0xf]
      %v1611 = vld [vmem:[%s1602 + $0x20] sm:$0xf]
      %v1612 = vld [vmem:[%s1602 + $0x24] sm:$0xf]
      %v1613 = vld [vmem:[%s1602 + $0x28] sm:$0xf]
      %v1614 = vld [vmem:[%s1602 + $0x2c] sm:$0xf]
      %v1615 = vld [vmem:[%s1602 + $0x30] sm:$0xf]
      %v1616 = vld [vmem:[%s1602 + $0x34] sm:$0xf]
      %v1617 = vld [vmem:[%s1602 + $0x38] sm:$0xf]
      %v1618 = vld [vmem:[%s1602 + $0x3c] sm:$0xf]
      %v1619 = vld [vmem:[%s1602 + $0x40] sm:$0xf]
      %v1620 = vld [vmem:[%s1602 + $0x44] sm:$0xf]
      %v1621 = vld [vmem:[%s1602 + $0x48] sm:$0xf]
      %v1622 = vld [vmem:[%s1602 + $0x4c] sm:$0xf]
      %v1623 = vld [vmem:[%s1602 + $0x50] sm:$0xf]
      %v1624 = vld [vmem:[%s1602 + $0x54] sm:$0xf]
      %v1625 = vld [vmem:[%s1602 + $0x58] sm:$0xf]
      %v1626 = vld [vmem:[%s1602 + $0x5c] sm:$0xf]
      %v1627 = vld [vmem:[%s1602 + $0x60] sm:$0xf]
      %v1628 = vld [vmem:[%s1602 + $0x64] sm:$0xf]
      %v1629 = vld [vmem:[%s1602 + $0x68] sm:$0xf]
      %v1630 = vld [vmem:[%s1602 + $0x6c] sm:$0xf]
      %v1631 = vld [vmem:[%s1602 + $0x70] sm:$0xf]
      %v1632 = vld [vmem:[%s1602 + $0x74] sm:$0xf]
      %v1633 = vld [vmem:[%s1602 + $0x78] sm:$0xf]
      %v1634 = vld [vmem:[%s1602 + $0x7c] sm:$0xf]
      %v1636 = vunpack.c.l.b16 %v1601
      %v1637 = vunpack.c.h.b16 %v1601
      %v1638 = vpack.c.b16 %v1636, %v1636
      %v1639 = vpack.c.b16 %v1637, %v1637
      %v1674 = vunpack.c.l.b16 %v1603
      %v1675 = vunpack.c.l.b16 %v1604
      %v1676 = vunpack.c.l.b16 %v1605
      %v1677 = vunpack.c.l.b16 %v1606
      %v1678 = vunpack.c.l.b16 %v1607
      %v1679 = vunpack.c.l.b16 %v1608
      %v1680 = vunpack.c.l.b16 %v1609
      %v1681 = vunpack.c.l.b16 %v1610
      %v1682 = vunpack.c.l.b16 %v1611
      %v1683 = vunpack.c.l.b16 %v1612
      %v1684 = vunpack.c.l.b16 %v1613
      %v1685 = vunpack.c.l.b16 %v1614
      %v1686 = vunpack.c.l.b16 %v1615
      %v1687 = vunpack.c.l.b16 %v1616
      %v1688 = vunpack.c.l.b16 %v1617
      %v1689 = vunpack.c.l.b16 %v1618
      %v1690 = vunpack.c.l.b16 %v1619
      %v1691 = vunpack.c.l.b16 %v1620
      %v1692 = vunpack.c.l.b16 %v1621
      %v1693 = vunpack.c.l.b16 %v1622
      %v1694 = vunpack.c.l.b16 %v1623
      %v1695 = vunpack.c.l.b16 %v1624
      %v1696 = vunpack.c.l.b16 %v1625
      %v1697 = vunpack.c.l.b16 %v1626
      %v1698 = vunpack.c.l.b16 %v1627
      %v1699 = vunpack.c.l.b16 %v1628
      %v1700 = vunpack.c.l.b16 %v1629
      %v1701 = vunpack.c.l.b16 %v1630
      %v1702 = vunpack.c.l.b16 %v1631
      %v1703 = vunpack.c.l.b16 %v1632
      %v1704 = vunpack.c.l.b16 %v1633
      %v1705 = vunpack.c.l.b16 %v1634
      %v1706 = vpack.c.b16 %v1675, %v1674
      %v1707 = vpack.c.b16 %v1677, %v1676
      %v1708 = vpack.c.b16 %v1679, %v1678
      %v1709 = vpack.c.b16 %v1681, %v1680
      %v1710 = vpack.c.b16 %v1683, %v1682
      %v1711 = vpack.c.b16 %v1685, %v1684
      %v1712 = vpack.c.b16 %v1687, %v1686
      %v1713 = vpack.c.b16 %v1689, %v1688
      %v1714 = vpack.c.b16 %v1691, %v1690
      %v1715 = vpack.c.b16 %v1693, %v1692
      %v1716 = vpack.c.b16 %v1695, %v1694
      %v1717 = vpack.c.b16 %v1697, %v1696
      %v1718 = vpack.c.b16 %v1699, %v1698
      %v1719 = vpack.c.b16 %v1701, %v1700
      %v1720 = vpack.c.b16 %v1703, %v1702
      %v1721 = vpack.c.b16 %v1705, %v1704
      %1738 = vmatprep.subr.bf16.mxu0 0
      %1739 = vmatpush1.bf16.msra.mxu0 %v1706
      %1740 = vmatprep.subr.bf16.mxu0 0
      %1741 = vmatpush1.bf16.msra.mxu0 %v1707
      %1742 = vmatprep.subr.bf16.mxu0 0
      %1743 = vmatpush1.bf16.msra.mxu0 %v1708
      %1744 = vmatprep.subr.bf16.mxu0 0
      %1745 = vmatpush1.bf16.msra.mxu0 %v1709
      %1746 = vmatprep.subr.bf16.mxu0 0
      %1747 = vmatpush1.bf16.msra.mxu0 %v1710
      %1748 = vmatprep.subr.bf16.mxu0 0
      %1749 = vmatpush1.bf16.msra.mxu0 %v1711
      %1750 = vmatprep.subr.bf16.mxu0 0
      %1751 = vmatpush1.bf16.msra.mxu0 %v1712
      %1752 = vmatprep.subr.bf16.mxu0 0
      %1753 = vmatpush1.bf16.msra.mxu0 %v1713
      %1754 = vmatprep.subr.bf16.mxu0 0
      %1755 = vmatpush1.bf16.msra.mxu0 %v1714
      %1756 = vmatprep.subr.bf16.mxu0 0
      %1757 = vmatpush1.bf16.msra.mxu0 %v1715
      %1758 = vmatprep.subr.bf16.mxu0 0
      %1759 = vmatpush1.bf16.msra.mxu0 %v1716
      %1760 = vmatprep.subr.bf16.mxu0 0
      %1761 = vmatpush1.bf16.msra.mxu0 %v1717
      %1762 = vmatprep.subr.bf16.mxu0 0
      %1763 = vmatpush1.bf16.msra.mxu0 %v1718
      %1764 = vmatprep.subr.bf16.mxu0 0
      %1765 = vmatpush1.bf16.msra.mxu0 %v1719
      %1766 = vmatprep.subr.bf16.mxu0 0
      %1767 = vmatpush1.bf16.msra.mxu0 %v1720
      %1768 = vmatprep.subr.bf16.mxu0 0
      %1769 = vmatpush1.bf16.msra.mxu0 %v1721
      %1770 = vmatprep.mubr.bf16.mxu0 %v1639
      %1771 = vmatmul.mubr.bf16.gmra.mrb[0].mxu0 %v1638
      %v1772 = vpop.f32.mrb[0].mxu0
      %v1773 = vadd.f32 0.0, %v1772
      %v1774 = vpop.f32.mrb[0].mxu0
      %v1775 = vpop.f32.mrb[0].mxu0
      %v1776 = vpop.f32.mrb[0].mxu0
      %1777 = vdwg.mxu0
      %v1778 = vadd.f32 %v1600, %v1773
      %s1779 = scalar_lea.vmem %s1, 1152
      %v1780 = vld [vmem:[%s1779] sm:$0xf]
      %v1781 = vld [vmem:[%s1779 + $0x4] sm:$0xf]
      %v1782 = vld [vmem:[%s1779 + $0x8] sm:$0xf]
      %v1783 = vld [vmem:[%s1779 + $0xc] sm:$0xf]
      %v1784 = vld [vmem:[%s1779 + $0x10] sm:$0xf]
      %v1785 = vld [vmem:[%s1779 + $0x14] sm:$0xf]
      %v1786 = vld [vmem:[%s1779 + $0x18] sm:$0xf]
      %v1787 = vld [vmem:[%s1779 + $0x1c] sm:$0xf]
      %v1788 = vld [vmem:[%s1779 + $0x20] sm:$0xf]
      %v1789 = vld [vmem:[%s1779 + $0x24] sm:$0xf]
      %v1790 = vld [vmem:[%s1779 + $0x28] sm:$0xf]
      %v1791 = vld [vmem:[%s1779 + $0x2c] sm:$0xf]
      %v1792 = vld [vmem:[%s1779 + $0x30] sm:$0xf]
      %v1793 = vld [vmem:[%s1779 + $0x34] sm:$0xf]
      %v1794 = vld [vmem:[%s1779 + $0x38] sm:$0xf]
      %v1795 = vld [vmem:[%s1779 + $0x3c] sm:$0xf]
      %v1796 = vld [vmem:[%s1779 + $0x40] sm:$0xf]
      %v1797 = vld [vmem:[%s1779 + $0x44] sm:$0xf]
      %v1798 = vld [vmem:[%s1779 + $0x48] sm:$0xf]
      %v1799 = vld [vmem:[%s1779 + $0x4c] sm:$0xf]
      %v1800 = vld [vmem:[%s1779 + $0x50] sm:$0xf]
      %v1801 = vld [vmem:[%s1779 + $0x54] sm:$0xf]
      %v1802 = vld [vmem:[%s1779 + $0x58] sm:$0xf]
      %v1803 = vld [vmem:[%s1779 + $0x5c] sm:$0xf]
      %v1804 = vld [vmem:[%s1779 + $0x60] sm:$0xf]
      %v1805 = vld [vmem:[%s1779 + $0x64] sm:$0xf]
      %v1806 = vld [vmem:[%s1779 + $0x68] sm:$0xf]
      %v1807 = vld [vmem:[%s1779 + $0x6c] sm:$0xf]
      %v1808 = vld [vmem:[%s1779 + $0x70] sm:$0xf]
      %v1809 = vld [vmem:[%s1779 + $0x74] sm:$0xf]
      %v1810 = vld [vmem:[%s1779 + $0x78] sm:$0xf]
      %v1811 = vld [vmem:[%s1779 + $0x7c] sm:$0xf]
      %v1813 = vshrl.u32 %v1638, 16
      %v1816 = vshrl.u32 %v1639, 16
      %v1852 = vunpack.c.l.b16 %v1780
      %v1853 = vunpack.c.l.b16 %v1781
      %v1854 = vunpack.c.l.b16 %v1782
      %v1855 = vunpack.c.l.b16 %v1783
      %v1856 = vunpack.c.l.b16 %v1784
      %v1857 = vunpack.c.l.b16 %v1785
      %v1858 = vunpack.c.l.b16 %v1786
      %v1859 = vunpack.c.l.b16 %v1787
      %v1860 = vunpack.c.l.b16 %v1788
      %v1861 = vunpack.c.l.b16 %v1789
      %v1862 = vunpack.c.l.b16 %v1790
      %v1863 = vunpack.c.l.b16 %v1791
      %v1864 = vunpack.c.l.b16 %v1792
      %v1865 = vunpack.c.l.b16 %v1793
      %v1866 = vunpack.c.l.b16 %v1794
      %v1867 = vunpack.c.l.b16 %v1795
      %v1868 = vunpack.c.l.b16 %v1796
      %v1869 = vunpack.c.l.b16 %v1797
      %v1870 = vunpack.c.l.b16 %v1798
      %v1871 = vunpack.c.l.b16 %v1799
      %v1872 = vunpack.c.l.b16 %v1800
      %v1873 = vunpack.c.l.b16 %v1801
      %v1874 = vunpack.c.l.b16 %v1802
      %v1875 = vunpack.c.l.b16 %v1803
      %v1876 = vunpack.c.l.b16 %v1804
      %v1877 = vunpack.c.l.b16 %v1805
      %v1878 = vunpack.c.l.b16 %v1806
      %v1879 = vunpack.c.l.b16 %v1807
      %v1880 = vunpack.c.l.b16 %v1808
      %v1881 = vunpack.c.l.b16 %v1809
      %v1882 = vunpack.c.l.b16 %v1810
      %v1883 = vunpack.c.l.b16 %v1811
      %v1884 = vpack.c.b16 %v1853, %v1852
      %v1885 = vpack.c.b16 %v1855, %v1854
      %v1886 = vpack.c.b16 %v1857, %v1856
      %v1887 = vpack.c.b16 %v1859, %v1858
      %v1888 = vpack.c.b16 %v1861, %v1860
      %v1889 = vpack.c.b16 %v1863, %v1862
      %v1890 = vpack.c.b16 %v1865, %v1864
      %v1891 = vpack.c.b16 %v1867, %v1866
      %v1892 = vpack.c.b16 %v1869, %v1868
      %v1893 = vpack.c.b16 %v1871, %v1870
      %v1894 = vpack.c.b16 %v1873, %v1872
      %v1895 = vpack.c.b16 %v1875, %v1874
      %v1896 = vpack.c.b16 %v1877, %v1876
      %v1897 = vpack.c.b16 %v1879, %v1878
      %v1898 = vpack.c.b16 %v1881, %v1880
      %v1899 = vpack.c.b16 %v1883, %v1882
      %1916 = vmatprep.subr.bf16.mxu0 0
      %1917 = vmatpush1.bf16.msra.mxu0 %v1884
      %1918 = vmatprep.subr.bf16.mxu0 0
      %1919 = vmatpush1.bf16.msra.mxu0 %v1885
      %1920 = vmatprep.subr.bf16.mxu0 0
      %1921 = vmatpush1.bf16.msra.mxu0 %v1886
      %1922 = vmatprep.subr.bf16.mxu0 0
      %1923 = vmatpush1.bf16.msra.mxu0 %v1887
      %1924 = vmatprep.subr.bf16.mxu0 0
      %1925 = vmatpush1.bf16.msra.mxu0 %v1888
      %1926 = vmatprep.subr.bf16.mxu0 0
      %1927 = vmatpush1.bf16.msra.mxu0 %v1889
      %1928 = vmatprep.subr.bf16.mxu0 0
      %1929 = vmatpush1.bf16.msra.mxu0 %v1890
      %1930 = vmatprep.subr.bf16.mxu0 0
      %1931 = vmatpush1.bf16.msra.mxu0 %v1891
      %1932 = vmatprep.subr.bf16.mxu0 0
      %1933 = vmatpush1.bf16.msra.mxu0 %v1892
      %1934 = vmatprep.subr.bf16.mxu0 0
      %1935 = vmatpush1.bf16.msra.mxu0 %v1893
      %1936 = vmatprep.subr.bf16.mxu0 0
      %1937 = vmatpush1.bf16.msra.mxu0 %v1894
      %1938 = vmatprep.subr.bf16.mxu0 0
      %1939 = vmatpush1.bf16.msra.mxu0 %v1895
      %1940 = vmatprep.subr.bf16.mxu0 0
      %1941 = vmatpush1.bf16.msra.mxu0 %v1896
      %1942 = vmatprep.subr.bf16.mxu0 0
      %1943 = vmatpush1.bf16.msra.mxu0 %v1897
      %1944 = vmatprep.subr.bf16.mxu0 0
      %1945 = vmatpush1.bf16.msra.mxu0 %v1898
      %1946 = vmatprep.subr.bf16.mxu0 0
      %1947 = vmatpush1.bf16.msra.mxu0 %v1899
      %1948 = vmatprep.mubr.bf16.mxu0 %v1816
      %1949 = vmatmul.mubr.bf16.gmra.mrb[0].mxu0 %v1813
      %v1950 = vpop.f32.mrb[0].mxu0
      %v1951 = vadd.f32 0.0, %v1950
      %v1952 = vpop.f32.mrb[0].mxu0
      %v1953 = vpop.f32.mrb[0].mxu0
      %v1954 = vpop.f32.mrb[0].mxu0
      %1955 = vdwg.mxu0
      %v1956 = vadd.f32 %v1778, %v1951
      %v1957 = vld [vmem:[%s163 + $0x8] sm:$0x22]
      %s1958 = scalar_lea.vmem %s1, 1280
      %v1959 = vld [vmem:[%s1958] sm:$0xf]
      %v1960 = vld [vmem:[%s1958 + $0x4] sm:$0xf]
      %v1961 = vld [vmem:[%s1958 + $0x8] sm:$0xf]
      %v1962 = vld [vmem:[%s1958 + $0xc] sm:$0xf]
      %v1963 = vld [vmem:[%s1958 + $0x10] sm:$0xf]
      %v1964 = vld [vmem:[%s1958 + $0x14] sm:$0xf]
      %v1965 = vld [vmem:[%s1958 + $0x18] sm:$0xf]
      %v1966 = vld [vmem:[%s1958 + $0x1c] sm:$0xf]
      %v1967 = vld [vmem:[%s1958 + $0x20] sm:$0xf]
      %v1968 = vld [vmem:[%s1958 + $0x24] sm:$0xf]
      %v1969 = vld [vmem:[%s1958 + $0x28] sm:$0xf]
      %v1970 = vld [vmem:[%s1958 + $0x2c] sm:$0xf]
      %v1971 = vld [vmem:[%s1958 + $0x30] sm:$0xf]
      %v1972 = vld [vmem:[%s1958 + $0x34] sm:$0xf]
      %v1973 = vld [vmem:[%s1958 + $0x38] sm:$0xf]
      %v1974 = vld [vmem:[%s1958 + $0x3c] sm:$0xf]
      %v1975 = vld [vmem:[%s1958 + $0x40] sm:$0xf]
      %v1976 = vld [vmem:[%s1958 + $0x44] sm:$0xf]
      %v1977 = vld [vmem:[%s1958 + $0x48] sm:$0xf]
      %v1978 = vld [vmem:[%s1958 + $0x4c] sm:$0xf]
      %v1979 = vld [vmem:[%s1958 + $0x50] sm:$0xf]
      %v1980 = vld [vmem:[%s1958 + $0x54] sm:$0xf]
      %v1981 = vld [vmem:[%s1958 + $0x58] sm:$0xf]
      %v1982 = vld [vmem:[%s1958 + $0x5c] sm:$0xf]
      %v1983 = vld [vmem:[%s1958 + $0x60] sm:$0xf]
      %v1984 = vld [vmem:[%s1958 + $0x64] sm:$0xf]
      %v1985 = vld [vmem:[%s1958 + $0x68] sm:$0xf]
      %v1986 = vld [vmem:[%s1958 + $0x6c] sm:$0xf]
      %v1987 = vld [vmem:[%s1958 + $0x70] sm:$0xf]
      %v1988 = vld [vmem:[%s1958 + $0x74] sm:$0xf]
      %v1989 = vld [vmem:[%s1958 + $0x78] sm:$0xf]
      %v1990 = vld [vmem:[%s1958 + $0x7c] sm:$0xf]
      %v1992 = vunpack.c.l.b16 %v1957
      %v1993 = vunpack.c.h.b16 %v1957
      %v1994 = vpack.c.b16 %v1992, %v1992
      %v1995 = vpack.c.b16 %v1993, %v1993
      %v1996 = vrot.slane %v1994, 1
      %v1997 = vrot.slane %v1995, 1
      %v2032 = vunpack.c.l.b16 %v1959
      %v2033 = vunpack.c.l.b16 %v1960
      %v2034 = vunpack.c.l.b16 %v1961
      %v2035 = vunpack.c.l.b16 %v1962
      %v2036 = vunpack.c.l.b16 %v1963
      %v2037 = vunpack.c.l.b16 %v1964
      %v2038 = vunpack.c.l.b16 %v1965
      %v2039 = vunpack.c.l.b16 %v1966
      %v2040 = vunpack.c.l.b16 %v1967
      %v2041 = vunpack.c.l.b16 %v1968
      %v2042 = vunpack.c.l.b16 %v1969
      %v2043 = vunpack.c.l.b16 %v1970
      %v2044 = vunpack.c.l.b16 %v1971
      %v2045 = vunpack.c.l.b16 %v1972
      %v2046 = vunpack.c.l.b16 %v1973
      %v2047 = vunpack.c.l.b16 %v1974
      %v2048 = vunpack.c.l.b16 %v1975
      %v2049 = vunpack.c.l.b16 %v1976
      %v2050 = vunpack.c.l.b16 %v1977
      %v2051 = vunpack.c.l.b16 %v1978
      %v2052 = vunpack.c.l.b16 %v1979
      %v2053 = vunpack.c.l.b16 %v1980
      %v2054 = vunpack.c.l.b16 %v1981
      %v2055 = vunpack.c.l.b16 %v1982
      %v2056 = vunpack.c.l.b16 %v1983
      %v2057 = vunpack.c.l.b16 %v1984
      %v2058 = vunpack.c.l.b16 %v1985
      %v2059 = vunpack.c.l.b16 %v1986
      %v2060 = vunpack.c.l.b16 %v1987
      %v2061 = vunpack.c.l.b16 %v1988
      %v2062 = vunpack.c.l.b16 %v1989
      %v2063 = vunpack.c.l.b16 %v1990
      %v2064 = vpack.c.b16 %v2033, %v2032
      %v2065 = vpack.c.b16 %v2035, %v2034
      %v2066 = vpack.c.b16 %v2037, %v2036
      %v2067 = vpack.c.b16 %v2039, %v2038
      %v2068 = vpack.c.b16 %v2041, %v2040
      %v2069 = vpack.c.b16 %v2043, %v2042
      %v2070 = vpack.c.b16 %v2045, %v2044
      %v2071 = vpack.c.b16 %v2047, %v2046
      %v2072 = vpack.c.b16 %v2049, %v2048
      %v2073 = vpack.c.b16 %v2051, %v2050
      %v2074 = vpack.c.b16 %v2053, %v2052
      %v2075 = vpack.c.b16 %v2055, %v2054
      %v2076 = vpack.c.b16 %v2057, %v2056
      %v2077 = vpack.c.b16 %v2059, %v2058
      %v2078 = vpack.c.b16 %v2061, %v2060
      %v2079 = vpack.c.b16 %v2063, %v2062
      %2096 = vmatprep.subr.bf16.mxu0 0
      %2097 = vmatpush1.bf16.msra.mxu0 %v2064
      %2098 = vmatprep.subr.bf16.mxu0 0
      %2099 = vmatpush1.bf16.msra.mxu0 %v2065
      %2100 = vmatprep.subr.bf16.mxu0 0
      %2101 = vmatpush1.bf16.msra.mxu0 %v2066
      %2102 = vmatprep.subr.bf16.mxu0 0
      %2103 = vmatpush1.bf16.msra.mxu0 %v2067
      %2104 = vmatprep.subr.bf16.mxu0 0
      %2105 = vmatpush1.bf16.msra.mxu0 %v2068
      %2106 = vmatprep.subr.bf16.mxu0 0
      %2107 = vmatpush1.bf16.msra.mxu0 %v2069
      %2108 = vmatprep.subr.bf16.mxu0 0
      %2109 = vmatpush1.bf16.msra.mxu0 %v2070
      %2110 = vmatprep.subr.bf16.mxu0 0
      %2111 = vmatpush1.bf16.msra.mxu0 %v2071
      %2112 = vmatprep.subr.bf16.mxu0 0
      %2113 = vmatpush1.bf16.msra.mxu0 %v2072
      %2114 = vmatprep.subr.bf16.mxu0 0
      %2115 = vmatpush1.bf16.msra.mxu0 %v2073
      %2116 = vmatprep.subr.bf16.mxu0 0
      %2117 = vmatpush1.bf16.msra.mxu0 %v2074
      %2118 = vmatprep.subr.bf16.mxu0 0
      %2119 = vmatpush1.bf16.msra.mxu0 %v2075
      %2120 = vmatprep.subr.bf16.mxu0 0
      %2121 = vmatpush1.bf16.msra.mxu0 %v2076
      %2122 = vmatprep.subr.bf16.mxu0 0
      %2123 = vmatpush1.bf16.msra.mxu0 %v2077
      %2124 = vmatprep.subr.bf16.mxu0 0
      %2125 = vmatpush1.bf16.msra.mxu0 %v2078
      %2126 = vmatprep.subr.bf16.mxu0 0
      %2127 = vmatpush1.bf16.msra.mxu0 %v2079
      %2128 = vmatprep.mubr.bf16.mxu0 %v1997
      %2129 = vmatmul.mubr.bf16.gmra.mrb[0].mxu0 %v1996
      %v2130 = vpop.f32.mrb[0].mxu0
      %v2131 = vadd.f32 0.0, %v2130
      %v2132 = vpop.f32.mrb[0].mxu0
      %v2133 = vpop.f32.mrb[0].mxu0
      %v2134 = vpop.f32.mrb[0].mxu0
      %2135 = vdwg.mxu0
      %v2136 = vadd.f32 %v1956, %v2131
      %s2137 = scalar_lea.vmem %s1, 1408
      %v2138 = vld [vmem:[%s2137] sm:$0xf]
      %v2139 = vld [vmem:[%s2137 + $0x4] sm:$0xf]
      %v2140 = vld [vmem:[%s2137 + $0x8] sm:$0xf]
      %v2141 = vld [vmem:[%s2137 + $0xc] sm:$0xf]
      %v2142 = vld [vmem:[%s2137 + $0x10] sm:$0xf]
      %v2143 = vld [vmem:[%s2137 + $0x14] sm:$0xf]
      %v2144 = vld [vmem:[%s2137 + $0x18] sm:$0xf]
      %v2145 = vld [vmem:[%s2137 + $0x1c] sm:$0xf]
      %v2146 = vld [vmem:[%s2137 + $0x20] sm:$0xf]
      %v2147 = vld [vmem:[%s2137 + $0x24] sm:$0xf]
      %v2148 = vld [vmem:[%s2137 + $0x28] sm:$0xf]
      %v2149 = vld [vmem:[%s2137 + $0x2c] sm:$0xf]
      %v2150 = vld [vmem:[%s2137 + $0x30] sm:$0xf]
      %v2151 = vld [vmem:[%s2137 + $0x34] sm:$0xf]
      %v2152 = vld [vmem:[%s2137 + $0x38] sm:$0xf]
      %v2153 = vld [vmem:[%s2137 + $0x3c] sm:$0xf]
      %v2154 = vld [vmem:[%s2137 + $0x40] sm:$0xf]
      %v2155 = vld [vmem:[%s2137 + $0x44] sm:$0xf]
      %v2156 = vld [vmem:[%s2137 + $0x48] sm:$0xf]
      %v2157 = vld [vmem:[%s2137 + $0x4c] sm:$0xf]
      %v2158 = vld [vmem:[%s2137 + $0x50] sm:$0xf]
      %v2159 = vld [vmem:[%s2137 + $0x54] sm:$0xf]
      %v2160 = vld [vmem:[%s2137 + $0x58] sm:$0xf]
      %v2161 = vld [vmem:[%s2137 + $0x5c] sm:$0xf]
      %v2162 = vld [vmem:[%s2137 + $0x60] sm:$0xf]
      %v2163 = vld [vmem:[%s2137 + $0x64] sm:$0xf]
      %v2164 = vld [vmem:[%s2137 + $0x68] sm:$0xf]
      %v2165 = vld [vmem:[%s2137 + $0x6c] sm:$0xf]
      %v2166 = vld [vmem:[%s2137 + $0x70] sm:$0xf]
      %v2167 = vld [vmem:[%s2137 + $0x74] sm:$0xf]
      %v2168 = vld [vmem:[%s2137 + $0x78] sm:$0xf]
      %v2169 = vld [vmem:[%s2137 + $0x7c] sm:$0xf]
      %v2171 = vshrl.u32 %v1994, 16
      %v2173 = vrot.slane %v2171, 1
      %v2175 = vshrl.u32 %v1995, 16
      %v2177 = vrot.slane %v2175, 1
      %v2212 = vunpack.c.l.b16 %v2138
      %v2213 = vunpack.c.l.b16 %v2139
      %v2214 = vunpack.c.l.b16 %v2140
      %v2215 = vunpack.c.l.b16 %v2141
      %v2216 = vunpack.c.l.b16 %v2142
      %v2217 = vunpack.c.l.b16 %v2143
      %v2218 = vunpack.c.l.b16 %v2144
      %v2219 = vunpack.c.l.b16 %v2145
      %v2220 = vunpack.c.l.b16 %v2146
      %v2221 = vunpack.c.l.b16 %v2147
      %v2222 = vunpack.c.l.b16 %v2148
      %v2223 = vunpack.c.l.b16 %v2149
      %v2224 = vunpack.c.l.b16 %v2150
      %v2225 = vunpack.c.l.b16 %v2151
      %v2226 = vunpack.c.l.b16 %v2152
      %v2227 = vunpack.c.l.b16 %v2153
      %v2228 = vunpack.c.l.b16 %v2154
      %v2229 = vunpack.c.l.b16 %v2155
      %v2230 = vunpack.c.l.b16 %v2156
      %v2231 = vunpack.c.l.b16 %v2157
      %v2232 = vunpack.c.l.b16 %v2158
      %v2233 = vunpack.c.l.b16 %v2159
      %v2234 = vunpack.c.l.b16 %v2160
      %v2235 = vunpack.c.l.b16 %v2161
      %v2236 = vunpack.c.l.b16 %v2162
      %v2237 = vunpack.c.l.b16 %v2163
      %v2238 = vunpack.c.l.b16 %v2164
      %v2239 = vunpack.c.l.b16 %v2165
      %v2240 = vunpack.c.l.b16 %v2166
      %v2241 = vunpack.c.l.b16 %v2167
      %v2242 = vunpack.c.l.b16 %v2168
      %v2243 = vunpack.c.l.b16 %v2169
      %v2244 = vpack.c.b16 %v2213, %v2212
      %v2245 = vpack.c.b16 %v2215, %v2214
      %v2246 = vpack.c.b16 %v2217, %v2216
      %v2247 = vpack.c.b16 %v2219, %v2218
      %v2248 = vpack.c.b16 %v2221, %v2220
      %v2249 = vpack.c.b16 %v2223, %v2222
      %v2250 = vpack.c.b16 %v2225, %v2224
      %v2251 = vpack.c.b16 %v2227, %v2226
      %v2252 = vpack.c.b16 %v2229, %v2228
      %v2253 = vpack.c.b16 %v2231, %v2230
      %v2254 = vpack.c.b16 %v2233, %v2232
      %v2255 = vpack.c.b16 %v2235, %v2234
      %v2256 = vpack.c.b16 %v2237, %v2236
      %v2257 = vpack.c.b16 %v2239, %v2238
      %v2258 = vpack.c.b16 %v2241, %v2240
      %v2259 = vpack.c.b16 %v2243, %v2242
      %2276 = vmatprep.subr.bf16.mxu0 0
      %2277 = vmatpush1.bf16.msra.mxu0 %v2244
      %2278 = vmatprep.subr.bf16.mxu0 0
      %2279 = vmatpush1.bf16.msra.mxu0 %v2245
      %2280 = vmatprep.subr.bf16.mxu0 0
      %2281 = vmatpush1.bf16.msra.mxu0 %v2246
      %2282 = vmatprep.subr.bf16.mxu0 0
      %2283 = vmatpush1.bf16.msra.mxu0 %v2247
      %2284 = vmatprep.subr.bf16.mxu0 0
      %2285 = vmatpush1.bf16.msra.mxu0 %v2248
      %2286 = vmatprep.subr.bf16.mxu0 0
      %2287 = vmatpush1.bf16.msra.mxu0 %v2249
      %2288 = vmatprep.subr.bf16.mxu0 0
      %2289 = vmatpush1.bf16.msra.mxu0 %v2250
      %2290 = vmatprep.subr.bf16.mxu0 0
      %2291 = vmatpush1.bf16.msra.mxu0 %v2251
      %2292 = vmatprep.subr.bf16.mxu0 0
      %2293 = vmatpush1.bf16.msra.mxu0 %v2252
      %2294 = vmatprep.subr.bf16.mxu0 0
      %2295 = vmatpush1.bf16.msra.mxu0 %v2253
      %2296 = vmatprep.subr.bf16.mxu0 0
      %2297 = vmatpush1.bf16.msra.mxu0 %v2254
      %2298 = vmatprep.subr.bf16.mxu0 0
      %2299 = vmatpush1.bf16.msra.mxu0 %v2255
      %2300 = vmatprep.subr.bf16.mxu0 0
      %2301 = vmatpush1.bf16.msra.mxu0 %v2256
      %2302 = vmatprep.subr.bf16.mxu0 0
      %2303 = vmatpush1.bf16.msra.mxu0 %v2257
      %2304 = vmatprep.subr.bf16.mxu0 0
      %2305 = vmatpush1.bf16.msra.mxu0 %v2258
      %2306 = vmatprep.subr.bf16.mxu0 0
      %2307 = vmatpush1.bf16.msra.mxu0 %v2259
      %2308 = vmatprep.mubr.bf16.mxu0 %v2177
      %2309 = vmatmul.mubr.bf16.gmra.mrb[0].mxu0 %v2173
      %v2310 = vpop.f32.mrb[0].mxu0
      %v2311 = vadd.f32 0.0, %v2310
      %v2312 = vpop.f32.mrb[0].mxu0
      %v2313 = vpop.f32.mrb[0].mxu0
      %v2314 = vpop.f32.mrb[0].mxu0
      %2315 = vdwg.mxu0
      %v2316 = vadd.f32 %v2136, %v2311
      %v2317 = vld [vmem:[%s163 + $0x8] sm:$0x44]
      %s2318 = scalar_lea.vmem %s1, 1536
      %v2319 = vld [vmem:[%s2318] sm:$0xf]
      %v2320 = vld [vmem:[%s2318 + $0x4] sm:$0xf]
      %v2321 = vld [vmem:[%s2318 + $0x8] sm:$0xf]
      %v2322 = vld [vmem:[%s2318 + $0xc] sm:$0xf]
      %v2323 = vld [vmem:[%s2318 + $0x10] sm:$0xf]
      %v2324 = vld [vmem:[%s2318 + $0x14] sm:$0xf]
      %v2325 = vld [vmem:[%s2318 + $0x18] sm:$0xf]
      %v2326 = vld [vmem:[%s2318 + $0x1c] sm:$0xf]
      %v2327 = vld [vmem:[%s2318 + $0x20] sm:$0xf]
      %v2328 = vld [vmem:[%s2318 + $0x24] sm:$0xf]
      %v2329 = vld [vmem:[%s2318 + $0x28] sm:$0xf]
      %v2330 = vld [vmem:[%s2318 + $0x2c] sm:$0xf]
      %v2331 = vld [vmem:[%s2318 + $0x30] sm:$0xf]
      %v2332 = vld [vmem:[%s2318 + $0x34] sm:$0xf]
      %v2333 = vld [vmem:[%s2318 + $0x38] sm:$0xf]
      %v2334 = vld [vmem:[%s2318 + $0x3c] sm:$0xf]
      %v2335 = vld [vmem:[%s2318 + $0x40] sm:$0xf]
      %v2336 = vld [vmem:[%s2318 + $0x44] sm:$0xf]
      %v2337 = vld [vmem:[%s2318 + $0x48] sm:$0xf]
      %v2338 = vld [vmem:[%s2318 + $0x4c] sm:$0xf]
      %v2339 = vld [vmem:[%s2318 + $0x50] sm:$0xf]
      %v2340 = vld [vmem:[%s2318 + $0x54] sm:$0xf]
      %v2341 = vld [vmem:[%s2318 + $0x58] sm:$0xf]
      %v2342 = vld [vmem:[%s2318 + $0x5c] sm:$0xf]
      %v2343 = vld [vmem:[%s2318 + $0x60] sm:$0xf]
      %v2344 = vld [vmem:[%s2318 + $0x64] sm:$0xf]
      %v2345 = vld [vmem:[%s2318 + $0x68] sm:$0xf]
      %v2346 = vld [vmem:[%s2318 + $0x6c] sm:$0xf]
      %v2347 = vld [vmem:[%s2318 + $0x70] sm:$0xf]
      %v2348 = vld [vmem:[%s2318 + $0x74] sm:$0xf]
      %v2349 = vld [vmem:[%s2318 + $0x78] sm:$0xf]
      %v2350 = vld [vmem:[%s2318 + $0x7c] sm:$0xf]
      %v2352 = vunpack.c.l.b16 %v2317
      %v2353 = vunpack.c.h.b16 %v2317
      %v2354 = vpack.c.b16 %v2352, %v2352
      %v2355 = vpack.c.b16 %v2353, %v2353
      %v2356 = vrot.slane %v2354, 2
      %v2357 = vrot.slane %v2355, 2
      %v2392 = vunpack.c.l.b16 %v2319
      %v2393 = vunpack.c.l.b16 %v2320
      %v2394 = vunpack.c.l.b16 %v2321
      %v2395 = vunpack.c.l.b16 %v2322
      %v2396 = vunpack.c.l.b16 %v2323
      %v2397 = vunpack.c.l.b16 %v2324
      %v2398 = vunpack.c.l.b16 %v2325
      %v2399 = vunpack.c.l.b16 %v2326
      %v2400 = vunpack.c.l.b16 %v2327
      %v2401 = vunpack.c.l.b16 %v2328
      %v2402 = vunpack.c.l.b16 %v2329
      %v2403 = vunpack.c.l.b16 %v2330
      %v2404 = vunpack.c.l.b16 %v2331
      %v2405 = vunpack.c.l.b16 %v2332
      %v2406 = vunpack.c.l.b16 %v2333
      %v2407 = vunpack.c.l.b16 %v2334
      %v2408 = vunpack.c.l.b16 %v2335
      %v2409 = vunpack.c.l.b16 %v2336
      %v2410 = vunpack.c.l.b16 %v2337
      %v2411 = vunpack.c.l.b16 %v2338
      %v2412 = vunpack.c.l.b16 %v2339
      %v2413 = vunpack.c.l.b16 %v2340
      %v2414 = vunpack.c.l.b16 %v2341
      %v2415 = vunpack.c.l.b16 %v2342
      %v2416 = vunpack.c.l.b16 %v2343
      %v2417 = vunpack.c.l.b16 %v2344
      %v2418 = vunpack.c.l.b16 %v2345
      %v2419 = vunpack.c.l.b16 %v2346
      %v2420 = vunpack.c.l.b16 %v2347
      %v2421 = vunpack.c.l.b16 %v2348
      %v2422 = vunpack.c.l.b16 %v2349
      %v2423 = vunpack.c.l.b16 %v2350
      %v2424 = vpack.c.b16 %v2393, %v2392
      %v2425 = vpack.c.b16 %v2395, %v2394
      %v2426 = vpack.c.b16 %v2397, %v2396
      %v2427 = vpack.c.b16 %v2399, %v2398
      %v2428 = vpack.c.b16 %v2401, %v2400
      %v2429 = vpack.c.b16 %v2403, %v2402
      %v2430 = vpack.c.b16 %v2405, %v2404
      %v2431 = vpack.c.b16 %v2407, %v2406
      %v2432 = vpack.c.b16 %v2409, %v2408
      %v2433 = vpack.c.b16 %v2411, %v2410
      %v2434 = vpack.c.b16 %v2413, %v2412
      %v2435 = vpack.c.b16 %v2415, %v2414
      %v2436 = vpack.c.b16 %v2417, %v2416
      %v2437 = vpack.c.b16 %v2419, %v2418
      %v2438 = vpack.c.b16 %v2421, %v2420
      %v2439 = vpack.c.b16 %v2423, %v2422
      %2456 = vmatprep.subr.bf16.mxu0 0
      %2457 = vmatpush1.bf16.msra.mxu0 %v2424
      %2458 = vmatprep.subr.bf16.mxu0 0
      %2459 = vmatpush1.bf16.msra.mxu0 %v2425
      %2460 = vmatprep.subr.bf16.mxu0 0
      %2461 = vmatpush1.bf16.msra.mxu0 %v2426
      %2462 = vmatprep.subr.bf16.mxu0 0
      %2463 = vmatpush1.bf16.msra.mxu0 %v2427
      %2464 = vmatprep.subr.bf16.mxu0 0
      %2465 = vmatpush1.bf16.msra.mxu0 %v2428
      %2466 = vmatprep.subr.bf16.mxu0 0
      %2467 = vmatpush1.bf16.msra.mxu0 %v2429
      %2468 = vmatprep.subr.bf16.mxu0 0
      %2469 = vmatpush1.bf16.msra.mxu0 %v2430
      %2470 = vmatprep.subr.bf16.mxu0 0
      %2471 = vmatpush1.bf16.msra.mxu0 %v2431
      %2472 = vmatprep.subr.bf16.mxu0 0
      %2473 = vmatpush1.bf16.msra.mxu0 %v2432
      %2474 = vmatprep.subr.bf16.mxu0 0
      %2475 = vmatpush1.bf16.msra.mxu0 %v2433
      %2476 = vmatprep.subr.bf16.mxu0 0
      %2477 = vmatpush1.bf16.msra.mxu0 %v2434
      %2478 = vmatprep.subr.bf16.mxu0 0
      %2479 = vmatpush1.bf16.msra.mxu0 %v2435
      %2480 = vmatprep.subr.bf16.mxu0 0
      %2481 = vmatpush1.bf16.msra.mxu0 %v2436
      %2482 = vmatprep.subr.bf16.mxu0 0
      %2483 = vmatpush1.bf16.msra.mxu0 %v2437
      %2484 = vmatprep.subr.bf16.mxu0 0
      %2485 = vmatpush1.bf16.msra.mxu0 %v2438
      %2486 = vmatprep.subr.bf16.mxu0 0
      %2487 = vmatpush1.bf16.msra.mxu0 %v2439
      %2488 = vmatprep.mubr.bf16.mxu0 %v2357
      %2489 = vmatmul.mubr.bf16.gmra.mrb[0].mxu0 %v2356
      %v2490 = vpop.f32.mrb[0].mxu0
      %v2491 = vadd.f32 0.0, %v2490
      %v2492 = vpop.f32.mrb[0].mxu0
      %v2493 = vpop.f32.mrb[0].mxu0
      %v2494 = vpop.f32.mrb[0].mxu0
      %2495 = vdwg.mxu0
      %v2496 = vadd.f32 %v2316, %v2491
      %s2497 = scalar_lea.vmem %s1, 1664
      %v2498 = vld [vmem:[%s2497] sm:$0xf]
      %v2499 = vld [vmem:[%s2497 + $0x4] sm:$0xf]
      %v2500 = vld [vmem:[%s2497 + $0x8] sm:$0xf]
      %v2501 = vld [vmem:[%s2497 + $0xc] sm:$0xf]
      %v2502 = vld [vmem:[%s2497 + $0x10] sm:$0xf]
      %v2503 = vld [vmem:[%s2497 + $0x14] sm:$0xf]
      %v2504 = vld [vmem:[%s2497 + $0x18] sm:$0xf]
      %v2505 = vld [vmem:[%s2497 + $0x1c] sm:$0xf]
      %v2506 = vld [vmem:[%s2497 + $0x20] sm:$0xf]
      %v2507 = vld [vmem:[%s2497 + $0x24] sm:$0xf]
      %v2508 = vld [vmem:[%s2497 + $0x28] sm:$0xf]
      %v2509 = vld [vmem:[%s2497 + $0x2c] sm:$0xf]
      %v2510 = vld [vmem:[%s2497 + $0x30] sm:$0xf]
      %v2511 = vld [vmem:[%s2497 + $0x34] sm:$0xf]
      %v2512 = vld [vmem:[%s2497 + $0x38] sm:$0xf]
      %v2513 = vld [vmem:[%s2497 + $0x3c] sm:$0xf]
      %v2514 = vld [vmem:[%s2497 + $0x40] sm:$0xf]
      %v2515 = vld [vmem:[%s2497 + $0x44] sm:$0xf]
      %v2516 = vld [vmem:[%s2497 + $0x48] sm:$0xf]
      %v2517 = vld [vmem:[%s2497 + $0x4c] sm:$0xf]
      %v2518 = vld [vmem:[%s2497 + $0x50] sm:$0xf]
      %v2519 = vld [vmem:[%s2497 + $0x54] sm:$0xf]
      %v2520 = vld [vmem:[%s2497 + $0x58] sm:$0xf]
      %v2521 = vld [vmem:[%s2497 + $0x5c] sm:$0xf]
      %v2522 = vld [vmem:[%s2497 + $0x60] sm:$0xf]
      %v2523 = vld [vmem:[%s2497 + $0x64] sm:$0xf]
      %v2524 = vld [vmem:[%s2497 + $0x68] sm:$0xf]
      %v2525 = vld [vmem:[%s2497 + $0x6c] sm:$0xf]
      %v2526 = vld [vmem:[%s2497 + $0x70] sm:$0xf]
      %v2527 = vld [vmem:[%s2497 + $0x74] sm:$0xf]
      %v2528 = vld [vmem:[%s2497 + $0x78] sm:$0xf]
      %v2529 = vld [vmem:[%s2497 + $0x7c] sm:$0xf]
      %v2531 = vshrl.u32 %v2354, 16
      %v2533 = vrot.slane %v2531, 2
      %v2535 = vshrl.u32 %v2355, 16
      %v2537 = vrot.slane %v2535, 2
      %v2572 = vunpack.c.l.b16 %v2498
      %v2573 = vunpack.c.l.b16 %v2499
      %v2574 = vunpack.c.l.b16 %v2500
      %v2575 = vunpack.c.l.b16 %v2501
      %v2576 = vunpack.c.l.b16 %v2502
      %v2577 = vunpack.c.l.b16 %v2503
      %v2578 = vunpack.c.l.b16 %v2504
      %v2579 = vunpack.c.l.b16 %v2505
      %v2580 = vunpack.c.l.b16 %v2506
      %v2581 = vunpack.c.l.b16 %v2507
      %v2582 = vunpack.c.l.b16 %v2508
      %v2583 = vunpack.c.l.b16 %v2509
      %v2584 = vunpack.c.l.b16 %v2510
      %v2585 = vunpack.c.l.b16 %v2511
      %v2586 = vunpack.c.l.b16 %v2512
      %v2587 = vunpack.c.l.b16 %v2513
      %v2588 = vunpack.c.l.b16 %v2514
      %v2589 = vunpack.c.l.b16 %v2515
      %v2590 = vunpack.c.l.b16 %v2516
      %v2591 = vunpack.c.l.b16 %v2517
      %v2592 = vunpack.c.l.b16 %v2518
      %v2593 = vunpack.c.l.b16 %v2519
      %v2594 = vunpack.c.l.b16 %v2520
      %v2595 = vunpack.c.l.b16 %v2521
      %v2596 = vunpack.c.l.b16 %v2522
      %v2597 = vunpack.c.l.b16 %v2523
      %v2598 = vunpack.c.l.b16 %v2524
      %v2599 = vunpack.c.l.b16 %v2525
      %v2600 = vunpack.c.l.b16 %v2526
      %v2601 = vunpack.c.l.b16 %v2527
      %v2602 = vunpack.c.l.b16 %v2528
      %v2603 = vunpack.c.l.b16 %v2529
      %v2604 = vpack.c.b16 %v2573, %v2572
      %v2605 = vpack.c.b16 %v2575, %v2574
      %v2606 = vpack.c.b16 %v2577, %v2576
      %v2607 = vpack.c.b16 %v2579, %v2578
      %v2608 = vpack.c.b16 %v2581, %v2580
      %v2609 = vpack.c.b16 %v2583, %v2582
      %v2610 = vpack.c.b16 %v2585, %v2584
      %v2611 = vpack.c.b16 %v2587, %v2586
      %v2612 = vpack.c.b16 %v2589, %v2588
      %v2613 = vpack.c.b16 %v2591, %v2590
      %v2614 = vpack.c.b16 %v2593, %v2592
      %v2615 = vpack.c.b16 %v2595, %v2594
      %v2616 = vpack.c.b16 %v2597, %v2596
      %v2617 = vpack.c.b16 %v2599, %v2598
      %v2618 = vpack.c.b16 %v2601, %v2600
      %v2619 = vpack.c.b16 %v2603, %v2602
      %2636 = vmatprep.subr.bf16.mxu0 0
      %2637 = vmatpush1.bf16.msra.mxu0 %v2604
      %2638 = vmatprep.subr.bf16.mxu0 0
      %2639 = vmatpush1.bf16.msra.mxu0 %v2605
      %2640 = vmatprep.subr.bf16.mxu0 0
      %2641 = vmatpush1.bf16.msra.mxu0 %v2606
      %2642 = vmatprep.subr.bf16.mxu0 0
      %2643 = vmatpush1.bf16.msra.mxu0 %v2607
      %2644 = vmatprep.subr.bf16.mxu0 0
      %2645 = vmatpush1.bf16.msra.mxu0 %v2608
      %2646 = vmatprep.subr.bf16.mxu0 0
      %2647 = vmatpush1.bf16.msra.mxu0 %v2609
      %2648 = vmatprep.subr.bf16.mxu0 0
      %2649 = vmatpush1.bf16.msra.mxu0 %v2610
      %2650 = vmatprep.subr.bf16.mxu0 0
      %2651 = vmatpush1.bf16.msra.mxu0 %v2611
      %2652 = vmatprep.subr.bf16.mxu0 0
      %2653 = vmatpush1.bf16.msra.mxu0 %v2612
      %2654 = vmatprep.subr.bf16.mxu0 0
      %2655 = vmatpush1.bf16.msra.mxu0 %v2613
      %2656 = vmatprep.subr.bf16.mxu0 0
      %2657 = vmatpush1.bf16.msra.mxu0 %v2614
      %2658 = vmatprep.subr.bf16.mxu0 0
      %2659 = vmatpush1.bf16.msra.mxu0 %v2615
      %2660 = vmatprep.subr.bf16.mxu0 0
      %2661 = vmatpush1.bf16.msra.mxu0 %v2616
      %2662 = vmatprep.subr.bf16.mxu0 0
      %2663 = vmatpush1.bf16.msra.mxu0 %v2617
      %2664 = vmatprep.subr.bf16.mxu0 0
      %2665 = vmatpush1.bf16.msra.mxu0 %v2618
      %2666 = vmatprep.subr.bf16.mxu0 0
      %2667 = vmatpush1.bf16.msra.mxu0 %v2619
      %2668 = vmatprep.mubr.bf16.mxu0 %v2537
      %2669 = vmatmul.mubr.bf16.gmra.mrb[0].mxu0 %v2533
      %v2670 = vpop.f32.mrb[0].mxu0
      %v2671 = vadd.f32 0.0, %v2670
      %v2672 = vpop.f32.mrb[0].mxu0
      %v2673 = vpop.f32.mrb[0].mxu0
      %v2674 = vpop.f32.mrb[0].mxu0
      %2675 = vdwg.mxu0
      %v2676 = vadd.f32 %v2496, %v2671
      %v2677 = vld [vmem:[%s163 + $0x8] sm:$0x88]
      %s2678 = scalar_lea.vmem %s1, 1792
      %v2679 = vld [vmem:[%s2678] sm:$0xf]
      %v2680 = vld [vmem:[%s2678 + $0x4] sm:$0xf]
      %v2681 = vld [vmem:[%s2678 + $0x8] sm:$0xf]
      %v2682 = vld [vmem:[%s2678 + $0xc] sm:$0xf]
      %v2683 = vld [vmem:[%s2678 + $0x10] sm:$0xf]
      %v2684 = vld [vmem:[%s2678 + $0x14] sm:$0xf]
      %v2685 = vld [vmem:[%s2678 + $0x18] sm:$0xf]
      %v2686 = vld [vmem:[%s2678 + $0x1c] sm:$0xf]
      %v2687 = vld [vmem:[%s2678 + $0x20] sm:$0xf]
      %v2688 = vld [vmem:[%s2678 + $0x24] sm:$0xf]
      %v2689 = vld [vmem:[%s2678 + $0x28] sm:$0xf]
      %v2690 = vld [vmem:[%s2678 + $0x2c] sm:$0xf]
      %v2691 = vld [vmem:[%s2678 + $0x30] sm:$0xf]
      %v2692 = vld [vmem:[%s2678 + $0x34] sm:$0xf]
      %v2693 = vld [vmem:[%s2678 + $0x38] sm:$0xf]
      %v2694 = vld [vmem:[%s2678 + $0x3c] sm:$0xf]
      %v2695 = vld [vmem:[%s2678 + $0x40] sm:$0xf]
      %v2696 = vld [vmem:[%s2678 + $0x44] sm:$0xf]
      %v2697 = vld [vmem:[%s2678 + $0x48] sm:$0xf]
      %v2698 = vld [vmem:[%s2678 + $0x4c] sm:$0xf]
      %v2699 = vld [vmem:[%s2678 + $0x50] sm:$0xf]
      %v2700 = vld [vmem:[%s2678 + $0x54] sm:$0xf]
      %v2701 = vld [vmem:[%s2678 + $0x58] sm:$0xf]
      %v2702 = vld [vmem:[%s2678 + $0x5c] sm:$0xf]
      %v2703 = vld [vmem:[%s2678 + $0x60] sm:$0xf]
      %v2704 = vld [vmem:[%s2678 + $0x64] sm:$0xf]
      %v2705 = vld [vmem:[%s2678 + $0x68] sm:$0xf]
      %v2706 = vld [vmem:[%s2678 + $0x6c] sm:$0xf]
      %v2707 = vld [vmem:[%s2678 + $0x70] sm:$0xf]
      %v2708 = vld [vmem:[%s2678 + $0x74] sm:$0xf]
      %v2709 = vld [vmem:[%s2678 + $0x78] sm:$0xf]
      %v2710 = vld [vmem:[%s2678 + $0x7c] sm:$0xf]
      %v2712 = vunpack.c.l.b16 %v2677
      %v2713 = vunpack.c.h.b16 %v2677
      %v2714 = vpack.c.b16 %v2712, %v2712
      %v2715 = vpack.c.b16 %v2713, %v2713
      %v2716 = vrot.slane %v2714, 3
      %v2717 = vrot.slane %v2715, 3
      %v2752 = vunpack.c.l.b16 %v2679
      %v2753 = vunpack.c.l.b16 %v2680
      %v2754 = vunpack.c.l.b16 %v2681
      %v2755 = vunpack.c.l.b16 %v2682
      %v2756 = vunpack.c.l.b16 %v2683
      %v2757 = vunpack.c.l.b16 %v2684
      %v2758 = vunpack.c.l.b16 %v2685
      %v2759 = vunpack.c.l.b16 %v2686
      %v2760 = vunpack.c.l.b16 %v2687
      %v2761 = vunpack.c.l.b16 %v2688
      %v2762 = vunpack.c.l.b16 %v2689
      %v2763 = vunpack.c.l.b16 %v2690
      %v2764 = vunpack.c.l.b16 %v2691
      %v2765 = vunpack.c.l.b16 %v2692
      %v2766 = vunpack.c.l.b16 %v2693
      %v2767 = vunpack.c.l.b16 %v2694
      %v2768 = vunpack.c.l.b16 %v2695
      %v2769 = vunpack.c.l.b16 %v2696
      %v2770 = vunpack.c.l.b16 %v2697
      %v2771 = vunpack.c.l.b16 %v2698
      %v2772 = vunpack.c.l.b16 %v2699
      %v2773 = vunpack.c.l.b16 %v2700
      %v2774 = vunpack.c.l.b16 %v2701
      %v2775 = vunpack.c.l.b16 %v2702
      %v2776 = vunpack.c.l.b16 %v2703
      %v2777 = vunpack.c.l.b16 %v2704
      %v2778 = vunpack.c.l.b16 %v2705
      %v2779 = vunpack.c.l.b16 %v2706
      %v2780 = vunpack.c.l.b16 %v2707
      %v2781 = vunpack.c.l.b16 %v2708
      %v2782 = vunpack.c.l.b16 %v2709
      %v2783 = vunpack.c.l.b16 %v2710
      %v2784 = vpack.c.b16 %v2753, %v2752
      %v2785 = vpack.c.b16 %v2755, %v2754
      %v2786 = vpack.c.b16 %v2757, %v2756
      %v2787 = vpack.c.b16 %v2759, %v2758
      %v2788 = vpack.c.b16 %v2761, %v2760
      %v2789 = vpack.c.b16 %v2763, %v2762
      %v2790 = vpack.c.b16 %v2765, %v2764
      %v2791 = vpack.c.b16 %v2767, %v2766
      %v2792 = vpack.c.b16 %v2769, %v2768
      %v2793 = vpack.c.b16 %v2771, %v2770
      %v2794 = vpack.c.b16 %v2773, %v2772
      %v2795 = vpack.c.b16 %v2775, %v2774
      %v2796 = vpack.c.b16 %v2777, %v2776
      %v2797 = vpack.c.b16 %v2779, %v2778
      %v2798 = vpack.c.b16 %v2781, %v2780
      %v2799 = vpack.c.b16 %v2783, %v2782
      %2816 = vmatprep.subr.bf16.mxu0 0
      %2817 = vmatpush1.bf16.msra.mxu0 %v2784
      %2818 = vmatprep.subr.bf16.mxu0 0
      %2819 = vmatpush1.bf16.msra.mxu0 %v2785
      %2820 = vmatprep.subr.bf16.mxu0 0
      %2821 = vmatpush1.bf16.msra.mxu0 %v2786
      %2822 = vmatprep.subr.bf16.mxu0 0
      %2823 = vmatpush1.bf16.msra.mxu0 %v2787
      %2824 = vmatprep.subr.bf16.mxu0 0
      %2825 = vmatpush1.bf16.msra.mxu0 %v2788
      %2826 = vmatprep.subr.bf16.mxu0 0
      %2827 = vmatpush1.bf16.msra.mxu0 %v2789
      %2828 = vmatprep.subr.bf16.mxu0 0
      %2829 = vmatpush1.bf16.msra.mxu0 %v2790
      %2830 = vmatprep.subr.bf16.mxu0 0
      %2831 = vmatpush1.bf16.msra.mxu0 %v2791
      %2832 = vmatprep.subr.bf16.mxu0 0
      %2833 = vmatpush1.bf16.msra.mxu0 %v2792
      %2834 = vmatprep.subr.bf16.mxu0 0
      %2835 = vmatpush1.bf16.msra.mxu0 %v2793
      %2836 = vmatprep.subr.bf16.mxu0 0
      %2837 = vmatpush1.bf16.msra.mxu0 %v2794
      %2838 = vmatprep.subr.bf16.mxu0 0
      %2839 = vmatpush1.bf16.msra.mxu0 %v2795
      %2840 = vmatprep.subr.bf16.mxu0 0
      %2841 = vmatpush1.bf16.msra.mxu0 %v2796
      %2842 = vmatprep.subr.bf16.mxu0 0
      %2843 = vmatpush1.bf16.msra.mxu0 %v2797
      %2844 = vmatprep.subr.bf16.mxu0 0
      %2845 = vmatpush1.bf16.msra.mxu0 %v2798
      %2846 = vmatprep.subr.bf16.mxu0 0
      %2847 = vmatpush1.bf16.msra.mxu0 %v2799
      %2848 = vmatprep.mubr.bf16.mxu0 %v2717
      %2849 = vmatmul.mubr.bf16.gmra.mrb[0].mxu0 %v2716
      %v2850 = vpop.f32.mrb[0].mxu0
      %v2851 = vadd.f32 0.0, %v2850
      %v2852 = vpop.f32.mrb[0].mxu0
      %v2853 = vpop.f32.mrb[0].mxu0
      %v2854 = vpop.f32.mrb[0].mxu0
      %2855 = vdwg.mxu0
      %v2856 = vadd.f32 %v2676, %v2851
      %s2857 = scalar_lea.vmem %s1, 1920
      %v2858 = vld [vmem:[%s2857] sm:$0xf]
      %v2859 = vld [vmem:[%s2857 + $0x4] sm:$0xf]
      %v2860 = vld [vmem:[%s2857 + $0x8] sm:$0xf]
      %v2861 = vld [vmem:[%s2857 + $0xc] sm:$0xf]
      %v2862 = vld [vmem:[%s2857 + $0x10] sm:$0xf]
      %v2863 = vld [vmem:[%s2857 + $0x14] sm:$0xf]
      %v2864 = vld [vmem:[%s2857 + $0x18] sm:$0xf]
      %v2865 = vld [vmem:[%s2857 + $0x1c] sm:$0xf]
      %v2866 = vld [vmem:[%s2857 + $0x20] sm:$0xf]
      %v2867 = vld [vmem:[%s2857 + $0x24] sm:$0xf]
      %v2868 = vld [vmem:[%s2857 + $0x28] sm:$0xf]
      %v2869 = vld [vmem:[%s2857 + $0x2c] sm:$0xf]
      %v2870 = vld [vmem:[%s2857 + $0x30] sm:$0xf]
      %v2871 = vld [vmem:[%s2857 + $0x34] sm:$0xf]
      %v2872 = vld [vmem:[%s2857 + $0x38] sm:$0xf]
      %v2873 = vld [vmem:[%s2857 + $0x3c] sm:$0xf]
      %v2874 = vld [vmem:[%s2857 + $0x40] sm:$0xf]
      %v2875 = vld [vmem:[%s2857 + $0x44] sm:$0xf]
      %v2876 = vld [vmem:[%s2857 + $0x48] sm:$0xf]
      %v2877 = vld [vmem:[%s2857 + $0x4c] sm:$0xf]
      %v2878 = vld [vmem:[%s2857 + $0x50] sm:$0xf]
      %v2879 = vld [vmem:[%s2857 + $0x54] sm:$0xf]
      %v2880 = vld [vmem:[%s2857 + $0x58] sm:$0xf]
      %v2881 = vld [vmem:[%s2857 + $0x5c] sm:$0xf]
      %v2882 = vld [vmem:[%s2857 + $0x60] sm:$0xf]
      %v2883 = vld [vmem:[%s2857 + $0x64] sm:$0xf]
      %v2884 = vld [vmem:[%s2857 + $0x68] sm:$0xf]
      %v2885 = vld [vmem:[%s2857 + $0x6c] sm:$0xf]
      %v2886 = vld [vmem:[%s2857 + $0x70] sm:$0xf]
      %v2887 = vld [vmem:[%s2857 + $0x74] sm:$0xf]
      %v2888 = vld [vmem:[%s2857 + $0x78] sm:$0xf]
      %v2889 = vld [vmem:[%s2857 + $0x7c] sm:$0xf]
      %v2891 = vshrl.u32 %v2714, 16
      %v2893 = vrot.slane %v2891, 3
      %v2895 = vshrl.u32 %v2715, 16
      %v2897 = vrot.slane %v2895, 3
      %v2932 = vunpack.c.l.b16 %v2858
      %v2933 = vunpack.c.l.b16 %v2859
      %v2934 = vunpack.c.l.b16 %v2860
      %v2935 = vunpack.c.l.b16 %v2861
      %v2936 = vunpack.c.l.b16 %v2862
      %v2937 = vunpack.c.l.b16 %v2863
      %v2938 = vunpack.c.l.b16 %v2864
      %v2939 = vunpack.c.l.b16 %v2865
      %v2940 = vunpack.c.l.b16 %v2866
      %v2941 = vunpack.c.l.b16 %v2867
      %v2942 = vunpack.c.l.b16 %v2868
      %v2943 = vunpack.c.l.b16 %v2869
      %v2944 = vunpack.c.l.b16 %v2870
      %v2945 = vunpack.c.l.b16 %v2871
      %v2946 = vunpack.c.l.b16 %v2872
      %v2947 = vunpack.c.l.b16 %v2873
      %v2948 = vunpack.c.l.b16 %v2874
      %v2949 = vunpack.c.l.b16 %v2875
      %v2950 = vunpack.c.l.b16 %v2876
      %v2951 = vunpack.c.l.b16 %v2877
      %v2952 = vunpack.c.l.b16 %v2878
      %v2953 = vunpack.c.l.b16 %v2879
      %v2954 = vunpack.c.l.b16 %v2880
      %v2955 = vunpack.c.l.b16 %v2881
      %v2956 = vunpack.c.l.b16 %v2882
      %v2957 = vunpack.c.l.b16 %v2883
      %v2958 = vunpack.c.l.b16 %v2884
      %v2959 = vunpack.c.l.b16 %v2885
      %v2960 = vunpack.c.l.b16 %v2886
      %v2961 = vunpack.c.l.b16 %v2887
      %v2962 = vunpack.c.l.b16 %v2888
      %v2963 = vunpack.c.l.b16 %v2889
      %v2964 = vpack.c.b16 %v2933, %v2932
      %v2965 = vpack.c.b16 %v2935, %v2934
      %v2966 = vpack.c.b16 %v2937, %v2936
      %v2967 = vpack.c.b16 %v2939, %v2938
      %v2968 = vpack.c.b16 %v2941, %v2940
      %v2969 = vpack.c.b16 %v2943, %v2942
      %v2970 = vpack.c.b16 %v2945, %v2944
      %v2971 = vpack.c.b16 %v2947, %v2946
      %v2972 = vpack.c.b16 %v2949, %v2948
      %v2973 = vpack.c.b16 %v2951, %v2950
      %v2974 = vpack.c.b16 %v2953, %v2952
      %v2975 = vpack.c.b16 %v2955, %v2954
      %v2976 = vpack.c.b16 %v2957, %v2956
      %v2977 = vpack.c.b16 %v2959, %v2958
      %v2978 = vpack.c.b16 %v2961, %v2960
      %v2979 = vpack.c.b16 %v2963, %v2962
      %2996 = vmatprep.subr.bf16.mxu0 0
      %2997 = vmatpush1.bf16.msra.mxu0 %v2964
      %2998 = vmatprep.subr.bf16.mxu0 0
      %2999 = vmatpush1.bf16.msra.mxu0 %v2965
      %3000 = vmatprep.subr.bf16.mxu0 0
      %3001 = vmatpush1.bf16.msra.mxu0 %v2966
      %3002 = vmatprep.subr.bf16.mxu0 0
      %3003 = vmatpush1.bf16.msra.mxu0 %v2967
      %3004 = vmatprep.subr.bf16.mxu0 0
      %3005 = vmatpush1.bf16.msra.mxu0 %v2968
      %3006 = vmatprep.subr.bf16.mxu0 0
      %3007 = vmatpush1.bf16.msra.mxu0 %v2969
      %3008 = vmatprep.subr.bf16.mxu0 0
      %3009 = vmatpush1.bf16.msra.mxu0 %v2970
      %3010 = vmatprep.subr.bf16.mxu0 0
      %3011 = vmatpush1.bf16.msra.mxu0 %v2971
      %3012 = vmatprep.subr.bf16.mxu0 0
      %3013 = vmatpush1.bf16.msra.mxu0 %v2972
      %3014 = vmatprep.subr.bf16.mxu0 0
      %3015 = vmatpush1.bf16.msra.mxu0 %v2973
      %3016 = vmatprep.subr.bf16.mxu0 0
      %3017 = vmatpush1.bf16.msra.mxu0 %v2974
      %3018 = vmatprep.subr.bf16.mxu0 0
      %3019 = vmatpush1.bf16.msra.mxu0 %v2975
      %3020 = vmatprep.subr.bf16.mxu0 0
      %3021 = vmatpush1.bf16.msra.mxu0 %v2976
      %3022 = vmatprep.subr.bf16.mxu0 0
      %3023 = vmatpush1.bf16.msra.mxu0 %v2977
      %3024 = vmatprep.subr.bf16.mxu0 0
      %3025 = vmatpush1.bf16.msra.mxu0 %v2978
      %3026 = vmatprep.subr.bf16.mxu0 0
      %3027 = vmatpush1.bf16.msra.mxu0 %v2979
      %3028 = vmatprep.mubr.bf16.mxu0 %v2897
      %3029 = vmatmul.mubr.bf16.gmra.mrb[0].mxu0 %v2893
      %v3030 = vpop.f32.mrb[0].mxu0
      %v3031 = vadd.f32 0.0, %v3030
      %v3032 = vpop.f32.mrb[0].mxu0
      %v3033 = vpop.f32.mrb[0].mxu0
      %v3034 = vpop.f32.mrb[0].mxu0
      %3035 = vdwg.mxu0
      %v3036 = vadd.f32 %v2856, %v3031
      %v3037 = vld [vmem:[%s2] sm:$0x1]
      %v3038 = vadd.f32 %v3036, %v3037
      %v3039 = vsub.f32 0.0, %v3038
      %v3040 = vmul.f32 %v3039, 1.442695
      %v3041 = vpow.pop %v3040
      %v3042 = vadd.f32 %v3041, 1.0
      %v3043 = vrcp.pop %v3042
      %3044 = vst [vmem:[%s166] sm:$0x1] %v3043
      %p3045 = scmp.lt.s32.totalorder %s14, 1
      %s3046 = scalar_select %p3045, %s14, 1
      %s3047 = scalar_lea.vmem %s3, %s3046
      // Predicated region
      $region33: #{discriminator_forward.7} parent=31 // pred_check
        %p3048 = pneg %p100
      $region34: #{discriminator_forward.7} parent=31 // pred_check_branch
        %3050 = sbr.rel (%p3048) target = $region36
      $region35: #{discriminator_forward.7} parent=31 // pred_region
        _
      $region36: #{discriminator_forward.7} parent=31 // pred_fallthru
        _
    $region32: #{discriminator_forward.7} parent=5 // pred_fallthru
      _
    %p3051 = scmp.le.s32.totalorder 2, %s9
    // Predicated region
    $region37: #{discriminator_forward.7} parent=5 // pred_check
      %p3052 = pneg %p3051
    $region38: #{discriminator_forward.7} parent=5 // pred_check_branch
      %3054 = sbr.rel (%p3052) target = $region40
    $region39: #{discriminator_forward.7} parent=5 // pred_region
      %s3055 = ssub.s32 %s9, 2
      // Predicated region
      $region41: #{discriminator_forward.7} parent=39 // pred_check
        %p3056 = pneg %p106
      $region42: #{discriminator_forward.7} parent=39 // pred_check_branch
        %3058 = sbr.rel (%p3056) target = $region44
      $region43: #{discriminator_forward.7} parent=39 // pred_region
        %p3059 = scmp.lt.s32.totalorder %s15, 1
        %s3060 = scalar_select %p3059, %s15, 1
        %s3061 = scalar_lea.vmem %s3, %s3060
      $region44: #{discriminator_forward.7} parent=39 // pred_fallthru
        _
    $region40: #{discriminator_forward.7} parent=5 // pred_fallthru
      _
  $region6: #{discriminator_forward.7} parent=0 // loop_footer
    %s13 = sadd.s32 1, %s9
  $region7: #{discriminator_forward.7} parent=0 // loop_footer_branch
    %8 = sbr.rel target = $region3
  $region8: #{discriminator_forward.7} parent=0 // loop_exit
    _

</llo_original>
